<compile_context>
chip_gen: v5e
topology: v5e:2x2
jax: 0.10.0
libtpu: 0.0.40
codegen_flags: <defaults>
</compile_context>

<pallas_src>
import functools

import numpy as np

import jax
import jax.numpy as jnp
from jax import lax
from jax.experimental import pallas as pl
from jax.experimental.pallas import tpu as pltpu


# ------------------------------ geometry ------------------------------------

def _conv_out(n, k, s, p):
    return (n + 2 * p - k) // s + 1


def _rup(x, m):
    return ((x + m - 1) // m) * m


def _network_dims(state_shape):
    c, h, w = state_shape
    assert c == 4, "FlappyBird model expects 4 stacked frames"
    oh1, ow1 = _conv_out(h, 5, 2, 2), _conv_out(w, 5, 2, 2)
    ph1, pw1 = oh1 // 2, ow1 // 2
    oh2, ow2 = _conv_out(ph1, 5, 2, 2), _conv_out(pw1, 5, 2, 2)
    ph2, pw2 = oh2 // 2, ow2 // 2
    oh3, ow3 = _conv_out(ph2, 3, 1, 1), _conv_out(pw2, 3, 1, 1)
    ph3, pw3 = oh3 // 2, ow3 // 2
    assert min(ph1, pw1, ph2, pw2, ph3, pw3) > 0, "input spatial size too small"
    return dict(PH1=ph1, PW1=pw1, PH2=ph2, PW2=pw2, PH3=ph3, PW3=pw3,
                FLAT=64 * ph3 * pw3)


# ------------------------ constant gather matrices ---------------------------
# Rows ordered (tap, pool_y, pool_x, n, oh, ow); each row is one-hot into the
# (n, h, w)-row-flattened input feature map (or all-zero for conv zero-padding
# / batch padding).  Built once in numpy at trace time (folded under jit).

def _conv_gather(nb, in_h, in_w, k, s, p, out_ph, out_pw, m_in_pad, m_out_pad):
    g = np.zeros((k * k * 4 * m_out_pad, m_in_pad), np.float32)
    for di in range(k):
        for dj in range(k):
            t = di * k + dj
            for py in range(2):
                for px in range(2):
                    grp = py * 2 + px
                    for n in range(nb):
                        for oy in range(out_ph):
                            for ox in range(out_pw):
                                m = n * out_ph * out_pw + oy * out_pw + ox
                                row = t * 4 * m_out_pad + grp * m_out_pad + m
                                hi = (2 * oy + py) * s + di - p
                                wi = (2 * ox + px) * s + dj - p
                                if 0 <= hi < in_h and 0 <= wi < in_w:
                                    g[row, n * in_h * in_w + hi * in_w + wi] = 1.0
    return g


def _flatten_gather(nb, s3, m_in_pad, nbp):
    # row q*nbp + n selects pooled3 row (n, spatial q) -> per-sample matrix.
    g = np.zeros((s3 * nbp, m_in_pad), np.float32)
    for q in range(s3):
        for n in range(nb):
            g[q * nbp + n, n * s3 + q] = 1.0
    return g


# ------------------------------ Pallas kernel --------------------------------

def _fused_forward_kernel(p1_ref, g2_ref, g3_ref, gf_ref,
                          w1_ref, b1_ref, w2_ref, b2_ref, w3_ref, b3_ref,
                          fw1_ref, fb1_ref, fw2_ref, fb2_ref, o_ref,
                          *, M1P, M2P, M3P, NBP, C1, C2, C3, T2, T3, S3):
    f32 = jnp.float32
    bf16 = jnp.bfloat16

    def mm(a, b):
        return jnp.dot(a, b, preferred_element_type=f32)

    def pool4(y, m):
        # 2x2 max-pool fused as a max over the 4 sublane-aligned row groups.
        return jnp.maximum(jnp.maximum(y[0 * m:1 * m], y[1 * m:2 * m]),
                           jnp.maximum(y[2 * m:3 * m], y[3 * m:4 * m]))

    # conv1: pre-built im2col patches (bf16, lane-padded) @ weights + bias,
    # ReLU, pool.
    y1 = jnp.maximum(mm(p1_ref[...], w1_ref[...]) + b1_ref[...], 0.0)
    a1 = pool4(y1, M1P).astype(bf16)                          # (M1P, C1)

    # conv2: in-VMEM im2col via 0/1 gather matmul + per-tap MXU matmuls.
    # Gather entries are exact copies of bf16 a1 values -> single exact cast.
    s2 = mm(g2_ref[...], a1).astype(bf16)                     # (T2*4*M2P, C1)
    r2 = 4 * M2P
    acc2 = mm(s2[0:r2, :], w2_ref[0:C1, :])
    for t in range(1, T2):
        acc2 = acc2 + mm(s2[t * r2:(t + 1) * r2, :],
                         w2_ref[t * C1:(t + 1) * C1, :])
    y2 = jnp.maximum(acc2 + b2_ref[...], 0.0)
    a2 = pool4(y2, M2P).astype(bf16)                          # (M2P, C2)

    # conv3: same gather + per-tap scheme.
    s3 = mm(g3_ref[...], a2).astype(bf16)                     # (T3*4*M3P, C2)
    r3 = 4 * M3P
    acc3 = mm(s3[0:r3, :], w3_ref[0:C2, :])
    for t in range(1, T3):
        acc3 = acc3 + mm(s3[t * r3:(t + 1) * r3, :],
                         w3_ref[t * C2:(t + 1) * C2, :])
    y3 = jnp.maximum(acc3 + b3_ref[...], 0.0)
    a3 = pool4(y3, M3P).astype(bf16)                          # (M3P, C3)

    # flatten (NHWC order; fc1 weights pre-permuted to match) + fc1 + ReLU + fc2.
    sf = mm(gf_ref[...], a3).astype(bf16)                     # (S3*NBP, C3)
    accf = mm(sf[0:NBP, :], fw1_ref[0:C3, :])
    for q in range(1, S3):
        accf = accf + mm(sf[q * NBP:(q + 1) * NBP, :],
                         fw1_ref[q * C3:(q + 1) * C3, :])
    h = jnp.maximum(accf + fb1_ref[...], 0.0).astype(bf16)
    out = mm(h, fw2_ref[...]) + fb2_ref[...]                  # (NBP, APAD)
    o_ref[...] = out.astype(o_ref.dtype)


# ------------------------------- wrapper -------------------------------------

def _conv1_patches(x_nhwc, n_tiles, nb, ph1, pw1, m1, m1p, k1p):
    """Host-side im2col for conv1 only, rows ordered (tile, py, px, n, oh, ow)."""
    N, H, W, C = x_nhwc.shape
    xp = jnp.pad(x_nhwc, ((0, 0), (2, 2), (2, 2), (0, 0)))
    cols = []
    for di in range(5):
        for dj in range(5):
            cols.append(lax.slice(
                xp, (0, di, dj, 0),
                (N, di + (2 * ph1 - 1) * 2 + 1, dj + (2 * pw1 - 1) * 2 + 1, C),
                (1, 2, 2, 1)))                                # (N, 2*PH1, 2*PW1, C)
    k1 = 25 * C
    pat = jnp.stack(cols, axis=3).reshape(N, 2 * ph1, 2 * pw1, k1)
    pat = pat.reshape(n_tiles, nb, ph1, 2, pw1, 2, k1)
    pat = pat.transpose(0, 3, 5, 1, 2, 4, 6)                  # (tiles,py,px,nb,PH,PW,K)
    pat = pat.reshape(n_tiles, 4, m1, k1)
    pat = jnp.pad(pat, ((0, 0), (0, 0), (0, m1p - m1), (0, k1p - k1)))
    return pat.reshape(n_tiles * 4 * m1p, k1p).astype(jnp.bfloat16)


def _pick_nb(N, d):
    """Largest batch tile (divisor of N, <=8) whose gather matrices fit a
    conservative VMEM budget (gathers grow quadratically in nb)."""
    best = 1
    for cand in range(1, min(N, 8) + 1):
        if N % cand:
            continue
        m1p = _rup(cand * d["PH1"] * d["PW1"], 8)
        m2p = _rup(cand * d["PH2"] * d["PW2"], 8)
        m3p = _rup(cand * d["PH3"] * d["PW3"], 8)
        gather_bytes = 2 * (25 * 4 * m2p * m1p + 9 * 4 * m3p * m2p)   # bf16
        if cand == 1 or 2 * gather_bytes <= 16 * 1024 * 1024:         # 2x buffers
            best = cand
    return best


def _forward_impl(params, state_nchw):
    """Forward pass of ActionValueModelFlappyBird.  Input: NCHW float32."""
    f32, bf16 = jnp.float32, jnp.bfloat16
    N, C, H, W = state_nchw.shape
    d = _network_dims((C, H, W))
    PH1, PW1, PH2, PW2, PH3, PW3 = (d["PH1"], d["PW1"], d["PH2"], d["PW2"],
                                    d["PH3"], d["PW3"])
    C1, C2, C3 = 32, 64, 64
    A = params["fw2"].shape[1]
    APAD = _rup(A, 128)
    S3 = PH3 * PW3

    nb = _pick_nb(N, d)
    n_tiles = N // nb

    M1, M2, M3 = nb * PH1 * PW1, nb * PH2 * PW2, nb * PH3 * PW3
    M1P, M2P, M3P, NBP = _rup(M1, 8), _rup(M2, 8), _rup(M3, 8), _rup(nb, 8)
    K1 = 25 * C
    K1P = _rup(K1, 128)                                       # lane-dense conv1 K

    # ---- operands -----------------------------------------------------------
    x = jnp.transpose(state_nchw, (0, 2, 3, 1)).astype(f32)   # NCHW -> NHWC
    p1 = _conv1_patches(x, n_tiles, nb, PH1, PW1, M1, M1P, K1P)

    g2 = jnp.asarray(_conv_gather(nb, PH1, PW1, 5, 2, 2, PH2, PW2, M1P, M2P), bf16)
    g3 = jnp.asarray(_conv_gather(nb, PH2, PW2, 3, 1, 1, PH3, PW3, M2P, M3P), bf16)
    gf = jnp.asarray(_flatten_gather(nb, S3, M3P, NBP), bf16)

    w1m = jnp.transpose(params["w1"], (2, 3, 1, 0)).reshape(K1, C1)
    w1m = jnp.pad(w1m, ((0, K1P - K1), (0, 0))).astype(bf16)  # zero K-pad rows
    w2m = jnp.transpose(params["w2"], (2, 3, 1, 0)).reshape(25 * C1, C2).astype(bf16)
    w3m = jnp.transpose(params["w3"], (2, 3, 1, 0)).reshape(9 * C2, C3).astype(bf16)
    b1m = params["b1"].reshape(1, C1).astype(f32)
    b2m = params["b2"].reshape(1, C2).astype(f32)
    b3m = params["b3"].reshape(1, C3).astype(f32)
    # fc1 weight: PyTorch (C,H,W)-flatten row order -> NHWC row order.
    fw1m = (params["fw1"].reshape(C3, PH3, PW3, 256)
            .transpose(1, 2, 0, 3).reshape(S3 * C3, 256).astype(bf16))
    fb1m = params["fb1"].reshape(1, 256).astype(f32)
    # fc2: pad output lanes to 128 so the final HBM store is lane-dense.
    fw2m = jnp.zeros((256, APAD), f32).at[:, :A].set(params["fw2"]).astype(bf16)
    fb2m = jnp.zeros((1, APAD), f32).at[0, :A].set(params["fb2"])

    kernel = functools.partial(
        _fused_forward_kernel,
        M1P=M1P, M2P=M2P, M3P=M3P, NBP=NBP,
        C1=C1, C2=C2, C3=C3, T2=25, T3=9, S3=S3)

    def whole(arr):
        return pl.BlockSpec(arr.shape, lambda i: (0, 0))

    out = pl.pallas_call(
        kernel,
        out_shape=jax.ShapeDtypeStruct((n_tiles * NBP, APAD), jnp.float32),
        grid=(n_tiles,),
        in_specs=[
            pl.BlockSpec((4 * M1P, K1P), lambda i: (i, 0)),   # per-tile patches
            whole(g2), whole(g3), whole(gf),
            whole(w1m), whole(b1m), whole(w2m), whole(b2m),
            whole(w3m), whole(b3m), whole(fw1m), whole(fb1m),
            whole(fw2m), whole(fb2m),
        ],
        out_specs=pl.BlockSpec((NBP, APAD), lambda i: (i, 0)),
        compiler_params=pltpu.CompilerParams(
            dimension_semantics=("parallel",),
            vmem_limit_bytes=48 * 1024 * 1024),
    )(p1, g2, g3, gf, w1m, b1m, w2m, b2m, w3m, b3m, fw1m, fb1m, fw2m, fb2m)

    q = out.reshape(n_tiles, NBP, APAD)[:, :nb, :A]
    return q.reshape(N, A)


forward = jax.jit(_forward_impl)


# ------------------------------- params --------------------------------------

def init_params(state_shape, action_shape, key):
    """Deterministic synthetic parameters in PyTorch layouts."""
    d = _network_dims(state_shape)
    keys = jax.random.split(key, 10)

    def rnd(k, shape, scale):
        return jax.random.normal(k, shape, dtype=jnp.float32) * scale

    return {
        "w1": rnd(keys[0], (32, 4, 5, 5), 0.05),  "b1": rnd(keys[1], (32,), 0.05),
        "w2": rnd(keys[2], (64, 32, 5, 5), 0.02), "b2": rnd(keys[3], (64,), 0.02),
        "w3": rnd(keys[4], (64, 64, 3, 3), 0.03), "b3": rnd(keys[5], (64,), 0.03),
        "fw1": rnd(keys[6], (d["FLAT"], 256), 0.05), "fb1": rnd(keys[7], (256,), 0.05),
        "fw2": rnd(keys[8], (256, action_shape), 0.05),
        "fb2": rnd(keys[9], (action_shape,), 0.05),
    }


# ---------------------- independent pure-JAX reference -----------------------

def _reference_forward(params, state_nchw):
    """XLA conv / reduce_window reference at matching (bf16 operand) precision."""
    f32, bf16 = jnp.float32, jnp.bfloat16

    def conv_block(x, w, b, stride, pad):
        y = lax.conv_general_dilated(
            x.astype(bf16), w.astype(bf16), (stride, stride),
            ((pad, pad), (pad, pad)),
            dimension_numbers=("NCHW", "OIHW", "NCHW"),
            preferred_element_type=f32)
        y = jnp.maximum(y + b.reshape(1, -1, 1, 1).astype(f32), 0.0)
        return lax.reduce_window(y, -jnp.inf, lax.max,
                                 (1, 1, 2, 2), (1, 1, 2, 2), "VALID")

    x = conv_block(state_nchw.astype(f32), params["w1"], params["b1"], 2, 2)
    x = conv_block(x, params["w2"], params["b2"], 2, 2)
    x = conv_block(x, params["w3"], params["b3"], 1, 1)
    x = x.reshape(x.shape[0], -1)                # PyTorch (C,H,W) flatten order
    h = jnp.maximum(jnp.dot(x.astype(bf16), params["fw1"].astype(bf16),
                            preferred_element_type=f32) + params["fb1"], 0.0)
    return (jnp.dot(h.astype(bf16), params["fw2"].astype(bf16),
                    preferred_element_type=f32) + params["fb2"])


# --------------------------------- main ---------------------------------------

if __name__ == "__main__":
    # Small FlappyBird-like config: 4 stacked frames, 32x32, 2 actions.
    state_shape = (4, 32, 32)
    action_shape = 2
    batch = 12                      # -> 2 grid steps of 6 samples (tests tiling)

    key = jax.random.PRNGKey(0)
    k_param, k_in = jax.random.split(key)
    params = init_params(state_shape, action_shape, k_param)
    state = jax.random.uniform(k_in, (batch,) + state_shape, dtype=jnp.float32)

    q_values = forward(params, state)
    q_values = jax.block_until_ready(q_values)

    q_ref = jax.block_until_ready(_reference_forward(params, state))
    np.testing.assert_allclose(np.asarray(q_values), np.asarray(q_ref),
                               rtol=2e-3, atol=2e-3)
    assert q_values.shape == (batch, action_shape)

    print("KERNEL_OK")
</pallas_src>

<mosaic_0001>
module attributes {stable_mosaic.version = 11 : i64} {
  func.func @_fused_forward_kernel(%arg0: i32, %arg1: memref<1536x128xbf16, #tpu.memory_space<vmem>>, %arg2: memref<2400x384xbf16, #tpu.memory_space<vmem>>, %arg3: memref<288x24xbf16, #tpu.memory_space<vmem>>, %arg4: memref<8x8xbf16, #tpu.memory_space<vmem>>, %arg5: memref<128x32xbf16, #tpu.memory_space<vmem>>, %arg6: memref<1x32xf32, #tpu.memory_space<vmem>>, %arg7: memref<800x64xbf16, #tpu.memory_space<vmem>>, %arg8: memref<1x64xf32, #tpu.memory_space<vmem>>, %arg9: memref<576x64xbf16, #tpu.memory_space<vmem>>, %arg10: memref<1x64xf32, #tpu.memory_space<vmem>>, %arg11: memref<64x256xbf16, #tpu.memory_space<vmem>>, %arg12: memref<1x256xf32, #tpu.memory_space<vmem>>, %arg13: memref<256x128xbf16, #tpu.memory_space<vmem>>, %arg14: memref<1x128xf32, #tpu.memory_space<vmem>>, %arg15: memref<8x128xf32, #tpu.memory_space<vmem>>) attributes {dimension_semantics = [#tpu.dimension_semantics<parallel>], iteration_bounds = array<i64: 2>, scalar_prefetch = 0 : i64, scratch_operands = 0 : i64, tpu.core_type = #tpu.core_type<tc>, window_params = [{transform_indices = @transform_0, window_bounds = array<i64: 1536, 128>}, {pipeline_mode = #tpu.pipeline_mode<synchronous>, transform_indices = @transform_1, window_bounds = array<i64: 2400, 384>}, {pipeline_mode = #tpu.pipeline_mode<synchronous>, transform_indices = @transform_2, window_bounds = array<i64: 288, 24>}, {pipeline_mode = #tpu.pipeline_mode<synchronous>, transform_indices = @transform_3, window_bounds = array<i64: 8, 8>}, {pipeline_mode = #tpu.pipeline_mode<synchronous>, transform_indices = @transform_4, window_bounds = array<i64: 128, 32>}, {pipeline_mode = #tpu.pipeline_mode<synchronous>, transform_indices = @transform_5, window_bounds = array<i64: 1, 32>}, {pipeline_mode = #tpu.pipeline_mode<synchronous>, transform_indices = @transform_6, window_bounds = array<i64: 800, 64>}, {pipeline_mode = #tpu.pipeline_mode<synchronous>, transform_indices = @transform_7, window_bounds = array<i64: 1, 64>}, {pipeline_mode = #tpu.pipeline_mode<synchronous>, transform_indices = @transform_8, window_bounds = array<i64: 576, 64>}, {pipeline_mode = #tpu.pipeline_mode<synchronous>, transform_indices = @transform_9, window_bounds = array<i64: 1, 64>}, {pipeline_mode = #tpu.pipeline_mode<synchronous>, transform_indices = @transform_10, window_bounds = array<i64: 64, 256>}, {pipeline_mode = #tpu.pipeline_mode<synchronous>, transform_indices = @transform_11, window_bounds = array<i64: 1, 256>}, {pipeline_mode = #tpu.pipeline_mode<synchronous>, transform_indices = @transform_12, window_bounds = array<i64: 256, 128>}, {pipeline_mode = #tpu.pipeline_mode<synchronous>, transform_indices = @transform_13, window_bounds = array<i64: 1, 128>}, {transform_indices = @transform_14, window_bounds = array<i64: 8, 128>}]} {
    %c0 = arith.constant 0 : index
    %c0_0 = arith.constant 0 : index
    %0 = vector.load %arg1[%c0, %c0_0] : memref<1536x128xbf16, #tpu.memory_space<vmem>>, vector<1536x128xbf16>
    %c0_1 = arith.constant 0 : index
    %c0_2 = arith.constant 0 : index
    %1 = vector.load %arg5[%c0_1, %c0_2] : memref<128x32xbf16, #tpu.memory_space<vmem>>, vector<128x32xbf16>
    %cst = arith.constant dense<0.000000e+00> : vector<1536x32xf32>
    %2 = tpu.matmul %0, %1, %cst {dimension_numbers = #tpu.dot_dimension_numbers<[1], [0], [0], [1], [0, 0, 1, 1], [], []>} : vector<1536x128xbf16>, vector<128x32xbf16>, vector<1536x32xf32> -> vector<1536x32xf32>
    %c0_3 = arith.constant 0 : index
    %c0_4 = arith.constant 0 : index
    %3 = vector.load %arg6[%c0_3, %c0_4] : memref<1x32xf32, #tpu.memory_space<vmem>>, vector<1x32xf32>
    %4 = vector.broadcast %3 : vector<1x32xf32> to vector<1536x32xf32>
    %5 = arith.addf %2, %4 : vector<1536x32xf32>
    %cst_5 = arith.constant 0.000000e+00 : f32
    %6 = vector.broadcast %cst_5 : f32 to vector<1536x32xf32>
    %7 = arith.maximumf %5, %6 : vector<1536x32xf32>
    %8 = vector.extract_strided_slice %7 {offsets = [0, 0], sizes = [384, 32], strides = [1, 1]} : vector<1536x32xf32> to vector<384x32xf32>
    %9 = vector.extract_strided_slice %7 {offsets = [384, 0], sizes = [384, 32], strides = [1, 1]} : vector<1536x32xf32> to vector<384x32xf32>
    %10 = arith.maximumf %8, %9 : vector<384x32xf32>
    %11 = vector.extract_strided_slice %7 {offsets = [768, 0], sizes = [384, 32], strides = [1, 1]} : vector<1536x32xf32> to vector<384x32xf32>
    %12 = vector.extract_strided_slice %7 {offsets = [1152, 0], sizes = [384, 32], strides = [1, 1]} : vector<1536x32xf32> to vector<384x32xf32>
    %13 = arith.maximumf %11, %12 : vector<384x32xf32>
    %14 = arith.maximumf %10, %13 : vector<384x32xf32>
    %15 = arith.truncf %14 : vector<384x32xf32> to vector<384x32xbf16>
    %c0_6 = arith.constant 0 : index
    %c0_7 = arith.constant 0 : index
    %16 = vector.load %arg2[%c0_6, %c0_7] : memref<2400x384xbf16, #tpu.memory_space<vmem>>, vector<2400x384xbf16>
    %cst_8 = arith.constant dense<0.000000e+00> : vector<2400x32xf32>
    %17 = tpu.matmul %16, %15, %cst_8 {dimension_numbers = #tpu.dot_dimension_numbers<[1], [0], [0], [1], [0, 0, 1, 1], [], []>} : vector<2400x384xbf16>, vector<384x32xbf16>, vector<2400x32xf32> -> vector<2400x32xf32>
    %18 = arith.truncf %17 : vector<2400x32xf32> to vector<2400x32xbf16>
    %19 = vector.extract_strided_slice %18 {offsets = [0, 0], sizes = [96, 32], strides = [1, 1]} : vector<2400x32xbf16> to vector<96x32xbf16>
    %c0_9 = arith.constant 0 : index
    %c0_10 = arith.constant 0 : index
    %20 = vector.load %arg7[%c0_9, %c0_10] : memref<800x64xbf16, #tpu.memory_space<vmem>>, vector<32x64xbf16>
    %cst_11 = arith.constant dense<0.000000e+00> : vector<96x64xf32>
    %21 = tpu.matmul %19, %20, %cst_11 {dimension_numbers = #tpu.dot_dimension_numbers<[1], [0], [0], [1], [0, 0, 1, 1], [], []>} : vector<96x32xbf16>, vector<32x64xbf16>, vector<96x64xf32> -> vector<96x64xf32>
    %22 = vector.extract_strided_slice %18 {offsets = [96, 0], sizes = [96, 32], strides = [1, 1]} : vector<2400x32xbf16> to vector<96x32xbf16>
    %c32 = arith.constant 32 : index
    %c0_12 = arith.constant 0 : index
    %23 = vector.load %arg7[%c32, %c0_12] : memref<800x64xbf16, #tpu.memory_space<vmem>>, vector<32x64xbf16>
    %cst_13 = arith.constant dense<0.000000e+00> : vector<96x64xf32>
    %24 = tpu.matmul %22, %23, %cst_13 {dimension_numbers = #tpu.dot_dimension_numbers<[1], [0], [0], [1], [0, 0, 1, 1], [], []>} : vector<96x32xbf16>, vector<32x64xbf16>, vector<96x64xf32> -> vector<96x64xf32>
    %25 = arith.addf %21, %24 : vector<96x64xf32>
    %26 = vector.extract_strided_slice %18 {offsets = [192, 0], sizes = [96, 32], strides = [1, 1]} : vector<2400x32xbf16> to vector<96x32xbf16>
    %c64 = arith.constant 64 : index
    %c0_14 = arith.constant 0 : index
    %27 = vector.load %arg7[%c64, %c0_14] : memref<800x64xbf16, #tpu.memory_space<vmem>>, vector<32x64xbf16>
    %cst_15 = arith.constant dense<0.000000e+00> : vector<96x64xf32>
    %28 = tpu.matmul %26, %27, %cst_15 {dimension_numbers = #tpu.dot_dimension_numbers<[1], [0], [0], [1], [0, 0, 1, 1], [], []>} : vector<96x32xbf16>, vector<32x64xbf16>, vector<96x64xf32> -> vector<96x64xf32>
    %29 = arith.addf %25, %28 : vector<96x64xf32>
    %30 = vector.extract_strided_slice %18 {offsets = [288, 0], sizes = [96, 32], strides = [1, 1]} : vector<2400x32xbf16> to vector<96x32xbf16>
    %c96 = arith.constant 96 : index
    %c0_16 = arith.constant 0 : index
    %31 = vector.load %arg7[%c96, %c0_16] : memref<800x64xbf16, #tpu.memory_space<vmem>>, vector<32x64xbf16>
    %cst_17 = arith.constant dense<0.000000e+00> : vector<96x64xf32>
    %32 = tpu.matmul %30, %31, %cst_17 {dimension_numbers = #tpu.dot_dimension_numbers<[1], [0], [0], [1], [0, 0, 1, 1], [], []>} : vector<96x32xbf16>, vector<32x64xbf16>, vector<96x64xf32> -> vector<96x64xf32>
    %33 = arith.addf %29, %32 : vector<96x64xf32>
    %34 = vector.extract_strided_slice %18 {offsets = [384, 0], sizes = [96, 32], strides = [1, 1]} : vector<2400x32xbf16> to vector<96x32xbf16>
    %c128 = arith.constant 128 : index
    %c0_18 = arith.constant 0 : index
    %35 = vector.load %arg7[%c128, %c0_18] : memref<800x64xbf16, #tpu.memory_space<vmem>>, vector<32x64xbf16>
    %cst_19 = arith.constant dense<0.000000e+00> : vector<96x64xf32>
    %36 = tpu.matmul %34, %35, %cst_19 {dimension_numbers = #tpu.dot_dimension_numbers<[1], [0], [0], [1], [0, 0, 1, 1], [], []>} : vector<96x32xbf16>, vector<32x64xbf16>, vector<96x64xf32> -> vector<96x64xf32>
    %37 = arith.addf %33, %36 : vector<96x64xf32>
    %38 = vector.extract_strided_slice %18 {offsets = [480, 0], sizes = [96, 32], strides = [1, 1]} : vector<2400x32xbf16> to vector<96x32xbf16>
    %c160 = arith.constant 160 : index
    %c0_20 = arith.constant 0 : index
    %39 = vector.load %arg7[%c160, %c0_20] : memref<800x64xbf16, #tpu.memory_space<vmem>>, vector<32x64xbf16>
    %cst_21 = arith.constant dense<0.000000e+00> : vector<96x64xf32>
    %40 = tpu.matmul %38, %39, %cst_21 {dimension_numbers = #tpu.dot_dimension_numbers<[1], [0], [0], [1], [0, 0, 1, 1], [], []>} : vector<96x32xbf16>, vector<32x64xbf16>, vector<96x64xf32> -> vector<96x64xf32>
    %41 = arith.addf %37, %40 : vector<96x64xf32>
    %42 = vector.extract_strided_slice %18 {offsets = [576, 0], sizes = [96, 32], strides = [1, 1]} : vector<2400x32xbf16> to vector<96x32xbf16>
    %c192 = arith.constant 192 : index
    %c0_22 = arith.constant 0 : index
    %43 = vector.load %arg7[%c192, %c0_22] : memref<800x64xbf16, #tpu.memory_space<vmem>>, vector<32x64xbf16>
    %cst_23 = arith.constant dense<0.000000e+00> : vector<96x64xf32>
    %44 = tpu.matmul %42, %43, %cst_23 {dimension_numbers = #tpu.dot_dimension_numbers<[1], [0], [0], [1], [0, 0, 1, 1], [], []>} : vector<96x32xbf16>, vector<32x64xbf16>, vector<96x64xf32> -> vector<96x64xf32>
    %45 = arith.addf %41, %44 : vector<96x64xf32>
    %46 = vector.extract_strided_slice %18 {offsets = [672, 0], sizes = [96, 32], strides = [1, 1]} : vector<2400x32xbf16> to vector<96x32xbf16>
    %c224 = arith.constant 224 : index
    %c0_24 = arith.constant 0 : index
    %47 = vector.load %arg7[%c224, %c0_24] : memref<800x64xbf16, #tpu.memory_space<vmem>>, vector<32x64xbf16>
    %cst_25 = arith.constant dense<0.000000e+00> : vector<96x64xf32>
    %48 = tpu.matmul %46, %47, %cst_25 {dimension_numbers = #tpu.dot_dimension_numbers<[1], [0], [0], [1], [0, 0, 1, 1], [], []>} : vector<96x32xbf16>, vector<32x64xbf16>, vector<96x64xf32> -> vector<96x64xf32>
    %49 = arith.addf %45, %48 : vector<96x64xf32>
    %50 = vector.extract_strided_slice %18 {offsets = [768, 0], sizes = [96, 32], strides = [1, 1]} : vector<2400x32xbf16> to vector<96x32xbf16>
    %c256 = arith.constant 256 : index
    %c0_26 = arith.constant 0 : index
    %51 = vector.load %arg7[%c256, %c0_26] : memref<800x64xbf16, #tpu.memory_space<vmem>>, vector<32x64xbf16>
    %cst_27 = arith.constant dense<0.000000e+00> : vector<96x64xf32>
    %52 = tpu.matmul %50, %51, %cst_27 {dimension_numbers = #tpu.dot_dimension_numbers<[1], [0], [0], [1], [0, 0, 1, 1], [], []>} : vector<96x32xbf16>, vector<32x64xbf16>, vector<96x64xf32> -> vector<96x64xf32>
    %53 = arith.addf %49, %52 : vector<96x64xf32>
    %54 = vector.extract_strided_slice %18 {offsets = [864, 0], sizes = [96, 32], strides = [1, 1]} : vector<2400x32xbf16> to vector<96x32xbf16>
    %c288 = arith.constant 288 : index
    %c0_28 = arith.constant 0 : index
    %55 = vector.load %arg7[%c288, %c0_28] : memref<800x64xbf16, #tpu.memory_space<vmem>>, vector<32x64xbf16>
    %cst_29 = arith.constant dense<0.000000e+00> : vector<96x64xf32>
    %56 = tpu.matmul %54, %55, %cst_29 {dimension_numbers = #tpu.dot_dimension_numbers<[1], [0], [0], [1], [0, 0, 1, 1], [], []>} : vector<96x32xbf16>, vector<32x64xbf16>, vector<96x64xf32> -> vector<96x64xf32>
    %57 = arith.addf %53, %56 : vector<96x64xf32>
    %58 = vector.extract_strided_slice %18 {offsets = [960, 0], sizes = [96, 32], strides = [1, 1]} : vector<2400x32xbf16> to vector<96x32xbf16>
    %c320 = arith.constant 320 : index
    %c0_30 = arith.constant 0 : index
    %59 = vector.load %arg7[%c320, %c0_30] : memref<800x64xbf16, #tpu.memory_space<vmem>>, vector<32x64xbf16>
    %cst_31 = arith.constant dense<0.000000e+00> : vector<96x64xf32>
    %60 = tpu.matmul %58, %59, %cst_31 {dimension_numbers = #tpu.dot_dimension_numbers<[1], [0], [0], [1], [0, 0, 1, 1], [], []>} : vector<96x32xbf16>, vector<32x64xbf16>, vector<96x64xf32> -> vector<96x64xf32>
    %61 = arith.addf %57, %60 : vector<96x64xf32>
    %62 = vector.extract_strided_slice %18 {offsets = [1056, 0], sizes = [96, 32], strides = [1, 1]} : vector<2400x32xbf16> to vector<96x32xbf16>
    %c352 = arith.constant 352 : index
    %c0_32 = arith.constant 0 : index
    %63 = vector.load %arg7[%c352, %c0_32] : memref<800x64xbf16, #tpu.memory_space<vmem>>, vector<32x64xbf16>
    %cst_33 = arith.constant dense<0.000000e+00> : vector<96x64xf32>
    %64 = tpu.matmul %62, %63, %cst_33 {dimension_numbers = #tpu.dot_dimension_numbers<[1], [0], [0], [1], [0, 0, 1, 1], [], []>} : vector<96x32xbf16>, vector<32x64xbf16>, vector<96x64xf32> -> vector<96x64xf32>
    %65 = arith.addf %61, %64 : vector<96x64xf32>
    %66 = vector.extract_strided_slice %18 {offsets = [1152, 0], sizes = [96, 32], strides = [1, 1]} : vector<2400x32xbf16> to vector<96x32xbf16>
    %c384 = arith.constant 384 : index
    %c0_34 = arith.constant 0 : index
    %67 = vector.load %arg7[%c384, %c0_34] : memref<800x64xbf16, #tpu.memory_space<vmem>>, vector<32x64xbf16>
    %cst_35 = arith.constant dense<0.000000e+00> : vector<96x64xf32>
    %68 = tpu.matmul %66, %67, %cst_35 {dimension_numbers = #tpu.dot_dimension_numbers<[1], [0], [0], [1], [0, 0, 1, 1], [], []>} : vector<96x32xbf16>, vector<32x64xbf16>, vector<96x64xf32> -> vector<96x64xf32>
    %69 = arith.addf %65, %68 : vector<96x64xf32>
    %70 = vector.extract_strided_slice %18 {offsets = [1248, 0], sizes = [96, 32], strides = [1, 1]} : vector<2400x32xbf16> to vector<96x32xbf16>
    %c416 = arith.constant 416 : index
    %c0_36 = arith.constant 0 : index
    %71 = vector.load %arg7[%c416, %c0_36] : memref<800x64xbf16, #tpu.memory_space<vmem>>, vector<32x64xbf16>
    %cst_37 = arith.constant dense<0.000000e+00> : vector<96x64xf32>
    %72 = tpu.matmul %70, %71, %cst_37 {dimension_numbers = #tpu.dot_dimension_numbers<[1], [0], [0], [1], [0, 0, 1, 1], [], []>} : vector<96x32xbf16>, vector<32x64xbf16>, vector<96x64xf32> -> vector<96x64xf32>
    %73 = arith.addf %69, %72 : vector<96x64xf32>
    %74 = vector.extract_strided_slice %18 {offsets = [1344, 0], sizes = [96, 32], strides = [1, 1]} : vector<2400x32xbf16> to vector<96x32xbf16>
    %c448 = arith.constant 448 : index
    %c0_38 = arith.constant 0 : index
    %75 = vector.load %arg7[%c448, %c0_38] : memref<800x64xbf16, #tpu.memory_space<vmem>>, vector<32x64xbf16>
    %cst_39 = arith.constant dense<0.000000e+00> : vector<96x64xf32>
    %76 = tpu.matmul %74, %75, %cst_39 {dimension_numbers = #tpu.dot_dimension_numbers<[1], [0], [0], [1], [0, 0, 1, 1], [], []>} : vector<96x32xbf16>, vector<32x64xbf16>, vector<96x64xf32> -> vector<96x64xf32>
    %77 = arith.addf %73, %76 : vector<96x64xf32>
    %78 = vector.extract_strided_slice %18 {offsets = [1440, 0], sizes = [96, 32], strides = [1, 1]} : vector<2400x32xbf16> to vector<96x32xbf16>
    %c480 = arith.constant 480 : index
    %c0_40 = arith.constant 0 : index
    %79 = vector.load %arg7[%c480, %c0_40] : memref<800x64xbf16, #tpu.memory_space<vmem>>, vector<32x64xbf16>
    %cst_41 = arith.constant dense<0.000000e+00> : vector<96x64xf32>
    %80 = tpu.matmul %78, %79, %cst_41 {dimension_numbers = #tpu.dot_dimension_numbers<[1], [0], [0], [1], [0, 0, 1, 1], [], []>} : vector<96x32xbf16>, vector<32x64xbf16>, vector<96x64xf32> -> vector<96x64xf32>
    %81 = arith.addf %77, %80 : vector<96x64xf32>
    %82 = vector.extract_strided_slice %18 {offsets = [1536, 0], sizes = [96, 32], strides = [1, 1]} : vector<2400x32xbf16> to vector<96x32xbf16>
    %c512 = arith.constant 512 : index
    %c0_42 = arith.constant 0 : index
    %83 = vector.load %arg7[%c512, %c0_42] : memref<800x64xbf16, #tpu.memory_space<vmem>>, vector<32x64xbf16>
    %cst_43 = arith.constant dense<0.000000e+00> : vector<96x64xf32>
    %84 = tpu.matmul %82, %83, %cst_43 {dimension_numbers = #tpu.dot_dimension_numbers<[1], [0], [0], [1], [0, 0, 1, 1], [], []>} : vector<96x32xbf16>, vector<32x64xbf16>, vector<96x64xf32> -> vector<96x64xf32>
    %85 = arith.addf %81, %84 : vector<96x64xf32>
    %86 = vector.extract_strided_slice %18 {offsets = [1632, 0], sizes = [96, 32], strides = [1, 1]} : vector<2400x32xbf16> to vector<96x32xbf16>
    %c544 = arith.constant 544 : index
    %c0_44 = arith.constant 0 : index
    %87 = vector.load %arg7[%c544, %c0_44] : memref<800x64xbf16, #tpu.memory_space<vmem>>, vector<32x64xbf16>
    %cst_45 = arith.constant dense<0.000000e+00> : vector<96x64xf32>
    %88 = tpu.matmul %86, %87, %cst_45 {dimension_numbers = #tpu.dot_dimension_numbers<[1], [0], [0], [1], [0, 0, 1, 1], [], []>} : vector<96x32xbf16>, vector<32x64xbf16>, vector<96x64xf32> -> vector<96x64xf32>
    %89 = arith.addf %85, %88 : vector<96x64xf32>
    %90 = vector.extract_strided_slice %18 {offsets = [1728, 0], sizes = [96, 32], strides = [1, 1]} : vector<2400x32xbf16> to vector<96x32xbf16>
    %c576 = arith.constant 576 : index
    %c0_46 = arith.constant 0 : index
    %91 = vector.load %arg7[%c576, %c0_46] : memref<800x64xbf16, #tpu.memory_space<vmem>>, vector<32x64xbf16>
    %cst_47 = arith.constant dense<0.000000e+00> : vector<96x64xf32>
    %92 = tpu.matmul %90, %91, %cst_47 {dimension_numbers = #tpu.dot_dimension_numbers<[1], [0], [0], [1], [0, 0, 1, 1], [], []>} : vector<96x32xbf16>, vector<32x64xbf16>, vector<96x64xf32> -> vector<96x64xf32>
    %93 = arith.addf %89, %92 : vector<96x64xf32>
    %94 = vector.extract_strided_slice %18 {offsets = [1824, 0], sizes = [96, 32], strides = [1, 1]} : vector<2400x32xbf16> to vector<96x32xbf16>
    %c608 = arith.constant 608 : index
    %c0_48 = arith.constant 0 : index
    %95 = vector.load %arg7[%c608, %c0_48] : memref<800x64xbf16, #tpu.memory_space<vmem>>, vector<32x64xbf16>
    %cst_49 = arith.constant dense<0.000000e+00> : vector<96x64xf32>
    %96 = tpu.matmul %94, %95, %cst_49 {dimension_numbers = #tpu.dot_dimension_numbers<[1], [0], [0], [1], [0, 0, 1, 1], [], []>} : vector<96x32xbf16>, vector<32x64xbf16>, vector<96x64xf32> -> vector<96x64xf32>
    %97 = arith.addf %93, %96 : vector<96x64xf32>
    %98 = vector.extract_strided_slice %18 {offsets = [1920, 0], sizes = [96, 32], strides = [1, 1]} : vector<2400x32xbf16> to vector<96x32xbf16>
    %c640 = arith.constant 640 : index
    %c0_50 = arith.constant 0 : index
    %99 = vector.load %arg7[%c640, %c0_50] : memref<800x64xbf16, #tpu.memory_space<vmem>>, vector<32x64xbf16>
    %cst_51 = arith.constant dense<0.000000e+00> : vector<96x64xf32>
    %100 = tpu.matmul %98, %99, %cst_51 {dimension_numbers = #tpu.dot_dimension_numbers<[1], [0], [0], [1], [0, 0, 1, 1], [], []>} : vector<96x32xbf16>, vector<32x64xbf16>, vector<96x64xf32> -> vector<96x64xf32>
    %101 = arith.addf %97, %100 : vector<96x64xf32>
    %102 = vector.extract_strided_slice %18 {offsets = [2016, 0], sizes = [96, 32], strides = [1, 1]} : vector<2400x32xbf16> to vector<96x32xbf16>
    %c672 = arith.constant 672 : index
    %c0_52 = arith.constant 0 : index
    %103 = vector.load %arg7[%c672, %c0_52] : memref<800x64xbf16, #tpu.memory_space<vmem>>, vector<32x64xbf16>
    %cst_53 = arith.constant dense<0.000000e+00> : vector<96x64xf32>
    %104 = tpu.matmul %102, %103, %cst_53 {dimension_numbers = #tpu.dot_dimension_numbers<[1], [0], [0], [1], [0, 0, 1, 1], [], []>} : vector<96x32xbf16>, vector<32x64xbf16>, vector<96x64xf32> -> vector<96x64xf32>
    %105 = arith.addf %101, %104 : vector<96x64xf32>
    %106 = vector.extract_strided_slice %18 {offsets = [2112, 0], sizes = [96, 32], strides = [1, 1]} : vector<2400x32xbf16> to vector<96x32xbf16>
    %c704 = arith.constant 704 : index
    %c0_54 = arith.constant 0 : index
    %107 = vector.load %arg7[%c704, %c0_54] : memref<800x64xbf16, #tpu.memory_space<vmem>>, vector<32x64xbf16>
    %cst_55 = arith.constant dense<0.000000e+00> : vector<96x64xf32>
    %108 = tpu.matmul %106, %107, %cst_55 {dimension_numbers = #tpu.dot_dimension_numbers<[1], [0], [0], [1], [0, 0, 1, 1], [], []>} : vector<96x32xbf16>, vector<32x64xbf16>, vector<96x64xf32> -> vector<96x64xf32>
    %109 = arith.addf %105, %108 : vector<96x64xf32>
    %110 = vector.extract_strided_slice %18 {offsets = [2208, 0], sizes = [96, 32], strides = [1, 1]} : vector<2400x32xbf16> to vector<96x32xbf16>
    %c736 = arith.constant 736 : index
    %c0_56 = arith.constant 0 : index
    %111 = vector.load %arg7[%c736, %c0_56] : memref<800x64xbf16, #tpu.memory_space<vmem>>, vector<32x64xbf16>
    %cst_57 = arith.constant dense<0.000000e+00> : vector<96x64xf32>
    %112 = tpu.matmul %110, %111, %cst_57 {dimension_numbers = #tpu.dot_dimension_numbers<[1], [0], [0], [1], [0, 0, 1, 1], [], []>} : vector<96x32xbf16>, vector<32x64xbf16>, vector<96x64xf32> -> vector<96x64xf32>
    %113 = arith.addf %109, %112 : vector<96x64xf32>
    %114 = vector.extract_strided_slice %18 {offsets = [2304, 0], sizes = [96, 32], strides = [1, 1]} : vector<2400x32xbf16> to vector<96x32xbf16>
    %c768 = arith.constant 768 : index
    %c0_58 = arith.constant 0 : index
    %115 = vector.load %arg7[%c768, %c0_58] : memref<800x64xbf16, #tpu.memory_space<vmem>>, vector<32x64xbf16>
    %cst_59 = arith.constant dense<0.000000e+00> : vector<96x64xf32>
    %116 = tpu.matmul %114, %115, %cst_59 {dimension_numbers = #tpu.dot_dimension_numbers<[1], [0], [0], [1], [0, 0, 1, 1], [], []>} : vector<96x32xbf16>, vector<32x64xbf16>, vector<96x64xf32> -> vector<96x64xf32>
    %117 = arith.addf %113, %116 : vector<96x64xf32>
    %c0_60 = arith.constant 0 : index
    %c0_61 = arith.constant 0 : index
    %118 = vector.load %arg8[%c0_60, %c0_61] : memref<1x64xf32, #tpu.memory_space<vmem>>, vector<1x64xf32>
    %119 = vector.broadcast %118 : vector<1x64xf32> to vector<96x64xf32>
    %120 = arith.addf %117, %119 : vector<96x64xf32>
    %cst_62 = arith.constant 0.000000e+00 : f32
    %121 = vector.broadcast %cst_62 : f32 to vector<96x64xf32>
    %122 = arith.maximumf %120, %121 : vector<96x64xf32>
    %123 = vector.extract_strided_slice %122 {offsets = [0, 0], sizes = [24, 64], strides = [1, 1]} : vector<96x64xf32> to vector<24x64xf32>
    %124 = vector.extract_strided_slice %122 {offsets = [24, 0], sizes = [24, 64], strides = [1, 1]} : vector<96x64xf32> to vector<24x64xf32>
    %125 = arith.maximumf %123, %124 : vector<24x64xf32>
    %126 = vector.extract_strided_slice %122 {offsets = [48, 0], sizes = [24, 64], strides = [1, 1]} : vector<96x64xf32> to vector<24x64xf32>
    %127 = vector.extract_strided_slice %122 {offsets = [72, 0], sizes = [24, 64], strides = [1, 1]} : vector<96x64xf32> to vector<24x64xf32>
    %128 = arith.maximumf %126, %127 : vector<24x64xf32>
    %129 = arith.maximumf %125, %128 : vector<24x64xf32>
    %130 = arith.truncf %129 : vector<24x64xf32> to vector<24x64xbf16>
    %c0_63 = arith.constant 0 : index
    %c0_64 = arith.constant 0 : index
    %131 = vector.load %arg3[%c0_63, %c0_64] : memref<288x24xbf16, #tpu.memory_space<vmem>>, vector<288x24xbf16>
    %cst_65 = arith.constant dense<0.000000e+00> : vector<288x64xf32>
    %132 = tpu.matmul %131, %130, %cst_65 {dimension_numbers = #tpu.dot_dimension_numbers<[1], [0], [0], [1], [0, 0, 1, 1], [], []>} : vector<288x24xbf16>, vector<24x64xbf16>, vector<288x64xf32> -> vector<288x64xf32>
    %133 = arith.truncf %132 : vector<288x64xf32> to vector<288x64xbf16>
    %134 = vector.extract_strided_slice %133 {offsets = [0, 0], sizes = [32, 64], strides = [1, 1]} : vector<288x64xbf16> to vector<32x64xbf16>
    %c0_66 = arith.constant 0 : index
    %c0_67 = arith.constant 0 : index
    %135 = vector.load %arg9[%c0_66, %c0_67] : memref<576x64xbf16, #tpu.memory_space<vmem>>, vector<64x64xbf16>
    %cst_68 = arith.constant dense<0.000000e+00> : vector<32x64xf32>
    %136 = tpu.matmul %134, %135, %cst_68 {dimension_numbers = #tpu.dot_dimension_numbers<[1], [0], [0], [1], [0, 0, 1, 1], [], []>} : vector<32x64xbf16>, vector<64x64xbf16>, vector<32x64xf32> -> vector<32x64xf32>
    %137 = vector.extract_strided_slice %133 {offsets = [32, 0], sizes = [32, 64], strides = [1, 1]} : vector<288x64xbf16> to vector<32x64xbf16>
    %c64_69 = arith.constant 64 : index
    %c0_70 = arith.constant 0 : index
    %138 = vector.load %arg9[%c64_69, %c0_70] : memref<576x64xbf16, #tpu.memory_space<vmem>>, vector<64x64xbf16>
    %cst_71 = arith.constant dense<0.000000e+00> : vector<32x64xf32>
    %139 = tpu.matmul %137, %138, %cst_71 {dimension_numbers = #tpu.dot_dimension_numbers<[1], [0], [0], [1], [0, 0, 1, 1], [], []>} : vector<32x64xbf16>, vector<64x64xbf16>, vector<32x64xf32> -> vector<32x64xf32>
    %140 = arith.addf %136, %139 : vector<32x64xf32>
    %141 = vector.extract_strided_slice %133 {offsets = [64, 0], sizes = [32, 64], strides = [1, 1]} : vector<288x64xbf16> to vector<32x64xbf16>
    %c128_72 = arith.constant 128 : index
    %c0_73 = arith.constant 0 : index
    %142 = vector.load %arg9[%c128_72, %c0_73] : memref<576x64xbf16, #tpu.memory_space<vmem>>, vector<64x64xbf16>
    %cst_74 = arith.constant dense<0.000000e+00> : vector<32x64xf32>
    %143 = tpu.matmul %141, %142, %cst_74 {dimension_numbers = #tpu.dot_dimension_numbers<[1], [0], [0], [1], [0, 0, 1, 1], [], []>} : vector<32x64xbf16>, vector<64x64xbf16>, vector<32x64xf32> -> vector<32x64xf32>
    %144 = arith.addf %140, %143 : vector<32x64xf32>
    %145 = vector.extract_strided_slice %133 {offsets = [96, 0], sizes = [32, 64], strides = [1, 1]} : vector<288x64xbf16> to vector<32x64xbf16>
    %c192_75 = arith.constant 192 : index
    %c0_76 = arith.constant 0 : index
    %146 = vector.load %arg9[%c192_75, %c0_76] : memref<576x64xbf16, #tpu.memory_space<vmem>>, vector<64x64xbf16>
    %cst_77 = arith.constant dense<0.000000e+00> : vector<32x64xf32>
    %147 = tpu.matmul %145, %146, %cst_77 {dimension_numbers = #tpu.dot_dimension_numbers<[1], [0], [0], [1], [0, 0, 1, 1], [], []>} : vector<32x64xbf16>, vector<64x64xbf16>, vector<32x64xf32> -> vector<32x64xf32>
    %148 = arith.addf %144, %147 : vector<32x64xf32>
    %149 = vector.extract_strided_slice %133 {offsets = [128, 0], sizes = [32, 64], strides = [1, 1]} : vector<288x64xbf16> to vector<32x64xbf16>
    %c256_78 = arith.constant 256 : index
    %c0_79 = arith.constant 0 : index
    %150 = vector.load %arg9[%c256_78, %c0_79] : memref<576x64xbf16, #tpu.memory_space<vmem>>, vector<64x64xbf16>
    %cst_80 = arith.constant dense<0.000000e+00> : vector<32x64xf32>
    %151 = tpu.matmul %149, %150, %cst_80 {dimension_numbers = #tpu.dot_dimension_numbers<[1], [0], [0], [1], [0, 0, 1, 1], [], []>} : vector<32x64xbf16>, vector<64x64xbf16>, vector<32x64xf32> -> vector<32x64xf32>
    %152 = arith.addf %148, %151 : vector<32x64xf32>
    %153 = vector.extract_strided_slice %133 {offsets = [160, 0], sizes = [32, 64], strides = [1, 1]} : vector<288x64xbf16> to vector<32x64xbf16>
    %c320_81 = arith.constant 320 : index
    %c0_82 = arith.constant 0 : index
    %154 = vector.load %arg9[%c320_81, %c0_82] : memref<576x64xbf16, #tpu.memory_space<vmem>>, vector<64x64xbf16>
    %cst_83 = arith.constant dense<0.000000e+00> : vector<32x64xf32>
    %155 = tpu.matmul %153, %154, %cst_83 {dimension_numbers = #tpu.dot_dimension_numbers<[1], [0], [0], [1], [0, 0, 1, 1], [], []>} : vector<32x64xbf16>, vector<64x64xbf16>, vector<32x64xf32> -> vector<32x64xf32>
    %156 = arith.addf %152, %155 : vector<32x64xf32>
    %157 = vector.extract_strided_slice %133 {offsets = [192, 0], sizes = [32, 64], strides = [1, 1]} : vector<288x64xbf16> to vector<32x64xbf16>
    %c384_84 = arith.constant 384 : index
    %c0_85 = arith.constant 0 : index
    %158 = vector.load %arg9[%c384_84, %c0_85] : memref<576x64xbf16, #tpu.memory_space<vmem>>, vector<64x64xbf16>
    %cst_86 = arith.constant dense<0.000000e+00> : vector<32x64xf32>
    %159 = tpu.matmul %157, %158, %cst_86 {dimension_numbers = #tpu.dot_dimension_numbers<[1], [0], [0], [1], [0, 0, 1, 1], [], []>} : vector<32x64xbf16>, vector<64x64xbf16>, vector<32x64xf32> -> vector<32x64xf32>
    %160 = arith.addf %156, %159 : vector<32x64xf32>
    %161 = vector.extract_strided_slice %133 {offsets = [224, 0], sizes = [32, 64], strides = [1, 1]} : vector<288x64xbf16> to vector<32x64xbf16>
    %c448_87 = arith.constant 448 : index
    %c0_88 = arith.constant 0 : index
    %162 = vector.load %arg9[%c448_87, %c0_88] : memref<576x64xbf16, #tpu.memory_space<vmem>>, vector<64x64xbf16>
    %cst_89 = arith.constant dense<0.000000e+00> : vector<32x64xf32>
    %163 = tpu.matmul %161, %162, %cst_89 {dimension_numbers = #tpu.dot_dimension_numbers<[1], [0], [0], [1], [0, 0, 1, 1], [], []>} : vector<32x64xbf16>, vector<64x64xbf16>, vector<32x64xf32> -> vector<32x64xf32>
    %164 = arith.addf %160, %163 : vector<32x64xf32>
    %165 = vector.extract_strided_slice %133 {offsets = [256, 0], sizes = [32, 64], strides = [1, 1]} : vector<288x64xbf16> to vector<32x64xbf16>
    %c512_90 = arith.constant 512 : index
    %c0_91 = arith.constant 0 : index
    %166 = vector.load %arg9[%c512_90, %c0_91] : memref<576x64xbf16, #tpu.memory_space<vmem>>, vector<64x64xbf16>
    %cst_92 = arith.constant dense<0.000000e+00> : vector<32x64xf32>
    %167 = tpu.matmul %165, %166, %cst_92 {dimension_numbers = #tpu.dot_dimension_numbers<[1], [0], [0], [1], [0, 0, 1, 1], [], []>} : vector<32x64xbf16>, vector<64x64xbf16>, vector<32x64xf32> -> vector<32x64xf32>
    %168 = arith.addf %164, %167 : vector<32x64xf32>
    %c0_93 = arith.constant 0 : index
    %c0_94 = arith.constant 0 : index
    %169 = vector.load %arg10[%c0_93, %c0_94] : memref<1x64xf32, #tpu.memory_space<vmem>>, vector<1x64xf32>
    %170 = vector.broadcast %169 : vector<1x64xf32> to vector<32x64xf32>
    %171 = arith.addf %168, %170 : vector<32x64xf32>
    %cst_95 = arith.constant 0.000000e+00 : f32
    %172 = vector.broadcast %cst_95 : f32 to vector<32x64xf32>
    %173 = arith.maximumf %171, %172 : vector<32x64xf32>
    %174 = vector.extract_strided_slice %173 {offsets = [0, 0], sizes = [8, 64], strides = [1, 1]} : vector<32x64xf32> to vector<8x64xf32>
    %175 = vector.extract_strided_slice %173 {offsets = [8, 0], sizes = [8, 64], strides = [1, 1]} : vector<32x64xf32> to vector<8x64xf32>
    %176 = arith.maximumf %174, %175 : vector<8x64xf32>
    %177 = vector.extract_strided_slice %173 {offsets = [16, 0], sizes = [8, 64], strides = [1, 1]} : vector<32x64xf32> to vector<8x64xf32>
    %178 = vector.extract_strided_slice %173 {offsets = [24, 0], sizes = [8, 64], strides = [1, 1]} : vector<32x64xf32> to vector<8x64xf32>
    %179 = arith.maximumf %177, %178 : vector<8x64xf32>
    %180 = arith.maximumf %176, %179 : vector<8x64xf32>
    %181 = arith.truncf %180 : vector<8x64xf32> to vector<8x64xbf16>
    %c0_96 = arith.constant 0 : index
    %c0_97 = arith.constant 0 : index
    %182 = vector.load %arg4[%c0_96, %c0_97] : memref<8x8xbf16, #tpu.memory_space<vmem>>, vector<8x8xbf16>
    %cst_98 = arith.constant dense<0.000000e+00> : vector<8x64xf32>
    %183 = tpu.matmul %182, %181, %cst_98 {dimension_numbers = #tpu.dot_dimension_numbers<[1], [0], [0], [1], [0, 0, 1, 1], [], []>} : vector<8x8xbf16>, vector<8x64xbf16>, vector<8x64xf32> -> vector<8x64xf32>
    %184 = arith.truncf %183 : vector<8x64xf32> to vector<8x64xbf16>
    %c0_99 = arith.constant 0 : index
    %c0_100 = arith.constant 0 : index
    %185 = vector.load %arg11[%c0_99, %c0_100] : memref<64x256xbf16, #tpu.memory_space<vmem>>, vector<64x256xbf16>
    %cst_101 = arith.constant dense<0.000000e+00> : vector<8x256xf32>
    %186 = tpu.matmul %184, %185, %cst_101 {dimension_numbers = #tpu.dot_dimension_numbers<[1], [0], [0], [1], [0, 0, 1, 1], [], []>} : vector<8x64xbf16>, vector<64x256xbf16>, vector<8x256xf32> -> vector<8x256xf32>
    %c0_102 = arith.constant 0 : index
    %c0_103 = arith.constant 0 : index
    %187 = vector.load %arg12[%c0_102, %c0_103] : memref<1x256xf32, #tpu.memory_space<vmem>>, vector<1x256xf32>
    %188 = vector.broadcast %187 : vector<1x256xf32> to vector<8x256xf32>
    %189 = arith.addf %186, %188 : vector<8x256xf32>
    %cst_104 = arith.constant 0.000000e+00 : f32
    %190 = vector.broadcast %cst_104 : f32 to vector<8x256xf32>
    %191 = arith.maximumf %189, %190 : vector<8x256xf32>
    %192 = arith.truncf %191 : vector<8x256xf32> to vector<8x256xbf16>
    %c0_105 = arith.constant 0 : index
    %c0_106 = arith.constant 0 : index
    %193 = vector.load %arg13[%c0_105, %c0_106] : memref<256x128xbf16, #tpu.memory_space<vmem>>, vector<256x128xbf16>
    %cst_107 = arith.constant dense<0.000000e+00> : vector<8x128xf32>
    %194 = tpu.matmul %192, %193, %cst_107 {dimension_numbers = #tpu.dot_dimension_numbers<[1], [0], [0], [1], [0, 0, 1, 1], [], []>} : vector<8x256xbf16>, vector<256x128xbf16>, vector<8x128xf32> -> vector<8x128xf32>
    %c0_108 = arith.constant 0 : index
    %c0_109 = arith.constant 0 : index
    %195 = vector.load %arg14[%c0_108, %c0_109] : memref<1x128xf32, #tpu.memory_space<vmem>>, vector<1x128xf32>
    %196 = vector.broadcast %195 : vector<1x128xf32> to vector<8x128xf32>
    %197 = arith.addf %194, %196 : vector<8x128xf32>
    %c0_110 = arith.constant 0 : index
    %c0_111 = arith.constant 0 : index
    %198 = vector.load %arg15[%c0_110, %c0_111] : memref<8x128xf32, #tpu.memory_space<vmem>>, vector<8x128xf32>
    tpu.vector_store %arg15[%c0_110, %c0_111], %197 {strides = array<i32>} : memref<8x128xf32, #tpu.memory_space<vmem>>, vector<8x128xf32>,
    return
  }
  func.func @transform_0(%arg0: i32) -> (i32, i32) {
    %c0_i32 = arith.constant 0 : i32
    %c0_i32_0 = arith.constant 0 : i32
    return %arg0, %c0_i32 : i32, i32
  }
  func.func @transform_1(%arg0: i32) -> (i32, i32) {
    %c0_i32 = arith.constant 0 : i32
    %c0_i32_0 = arith.constant 0 : i32
    %c0_i32_1 = arith.constant 0 : i32
    return %c0_i32, %c0_i32_0 : i32, i32
  }
  func.func @transform_2(%arg0: i32) -> (i32, i32) {
    %c0_i32 = arith.constant 0 : i32
    %c0_i32_0 = arith.constant 0 : i32
    %c0_i32_1 = arith.constant 0 : i32
    return %c0_i32, %c0_i32_0 : i32, i32
  }
  func.func @transform_3(%arg0: i32) -> (i32, i32) {
    %c0_i32 = arith.constant 0 : i32
    %c0_i32_0 = arith.constant 0 : i32
    %c0_i32_1 = arith.constant 0 : i32
    return %c0_i32, %c0_i32_0 : i32, i32
  }
  func.func @transform_4(%arg0: i32) -> (i32, i32) {
    %c0_i32 = arith.constant 0 : i32
    %c0_i32_0 = arith.constant 0 : i32
    %c0_i32_1 = arith.constant 0 : i32
    return %c0_i32, %c0_i32_0 : i32, i32
  }
  func.func @transform_5(%arg0: i32) -> (i32, i32) {
    %c0_i32 = arith.constant 0 : i32
    %c0_i32_0 = arith.constant 0 : i32
    %c0_i32_1 = arith.constant 0 : i32
    return %c0_i32, %c0_i32_0 : i32, i32
  }
  func.func @transform_6(%arg0: i32) -> (i32, i32) {
    %c0_i32 = arith.constant 0 : i32
    %c0_i32_0 = arith.constant 0 : i32
    %c0_i32_1 = arith.constant 0 : i32
    return %c0_i32, %c0_i32_0 : i32, i32
  }
  func.func @transform_7(%arg0: i32) -> (i32, i32) {
    %c0_i32 = arith.constant 0 : i32
    %c0_i32_0 = arith.constant 0 : i32
    %c0_i32_1 = arith.constant 0 : i32
    return %c0_i32, %c0_i32_0 : i32, i32
  }
  func.func @transform_8(%arg0: i32) -> (i32, i32) {
    %c0_i32 = arith.constant 0 : i32
    %c0_i32_0 = arith.constant 0 : i32
    %c0_i32_1 = arith.constant 0 : i32
    return %c0_i32, %c0_i32_0 : i32, i32
  }
  func.func @transform_9(%arg0: i32) -> (i32, i32) {
    %c0_i32 = arith.constant 0 : i32
    %c0_i32_0 = arith.constant 0 : i32
    %c0_i32_1 = arith.constant 0 : i32
    return %c0_i32, %c0_i32_0 : i32, i32
  }
  func.func @transform_10(%arg0: i32) -> (i32, i32) {
    %c0_i32 = arith.constant 0 : i32
    %c0_i32_0 = arith.constant 0 : i32
    %c0_i32_1 = arith.constant 0 : i32
    return %c0_i32, %c0_i32_0 : i32, i32
  }
  func.func @transform_11(%arg0: i32) -> (i32, i32) {
    %c0_i32 = arith.constant 0 : i32
    %c0_i32_0 = arith.constant 0 : i32
    %c0_i32_1 = arith.constant 0 : i32
    return %c0_i32, %c0_i32_0 : i32, i32
  }
  func.func @transform_12(%arg0: i32) -> (i32, i32) {
    %c0_i32 = arith.constant 0 : i32
    %c0_i32_0 = arith.constant 0 : i32
    %c0_i32_1 = arith.constant 0 : i32
    return %c0_i32, %c0_i32_0 : i32, i32
  }
  func.func @transform_13(%arg0: i32) -> (i32, i32) {
    %c0_i32 = arith.constant 0 : i32
    %c0_i32_0 = arith.constant 0 : i32
    %c0_i32_1 = arith.constant 0 : i32
    return %c0_i32, %c0_i32_0 : i32, i32
  }
  func.func @transform_14(%arg0: i32) -> (i32, i32) {
    %c0_i32 = arith.constant 0 : i32
    %c0_i32_0 = arith.constant 0 : i32
    return %arg0, %c0_i32 : i32, i32
  }
}

</mosaic_0001>

<llo_original>
// kernel: _forward_impl.1
$region0: #{_forward_impl.1}
  #allocation0 [shape = 'u32[]', space=smem, size = 0x4, offset = 0x4, fixed_abs, tag = 'smem constant byte address 0x4 - core index']
  #allocation1 [shape = 'u32[72,128]{1,0:T(1,128)}', space=vmem, size = 0x9000, scoped, tag = 'internal scratch']
  %s0 = inlined_call_operand.vmem [shape: bf16[3072,128], index: 0, kind: input, shape index: {}]
  %s1 = inlined_call_operand.vmem [shape: bf16[2400,384], index: 1, kind: input, shape index: {}]
  %s2 = inlined_call_operand.vmem [shape: bf16[288,24], index: 2, kind: input, shape index: {}]
  %s3 = inlined_call_operand.vmem [shape: bf16[8,8], index: 3, kind: input, shape index: {}]
  %s4 = inlined_call_operand.vmem [shape: bf16[128,32], index: 4, kind: input, shape index: {}]
  %s5 = inlined_call_operand.vmem [shape: f32[1,32], index: 5, kind: input, shape index: {}]
  %s6 = inlined_call_operand.vmem [shape: bf16[800,64], index: 6, kind: input, shape index: {}]
  %s7 = inlined_call_operand.vmem [shape: f32[1,64], index: 7, kind: input, shape index: {}]
  %s8 = inlined_call_operand.vmem [shape: bf16[576,64], index: 8, kind: input, shape index: {}]
  %s9 = inlined_call_operand.vmem [shape: f32[1,64], index: 9, kind: input, shape index: {}]
  %s10 = inlined_call_operand.vmem [shape: bf16[64,256], index: 10, kind: input, shape index: {}]
  %s11 = inlined_call_operand.vmem [shape: f32[1,256], index: 11, kind: input, shape index: {}]
  %s12 = inlined_call_operand.vmem [shape: bf16[256,128], index: 12, kind: input, shape index: {}]
  %s13 = inlined_call_operand.vmem [shape: f32[1,128], index: 13, kind: input, shape index: {}]
  %s14 = inlined_call_operand.vmem [shape: f32[16,128], index: 14, kind: output, shape index: {}]
  %s15 = sld [smem:[#allocation0]]
  $region89: #{_forward_impl.1} parent=0
    _
  %s17 = ssub.s32 1, %s15
  %s18 = scalar_select 0, %s17, %s15
  loop: start=0, step=1, limit=4
  $region2: #{_forward_impl.1} parent=0 // loop_pre_header
    _
  $region3: #{_forward_impl.1} parent=0 // loop_header
    %s20 = sphi 0, %s24
    %p21 = scmp.ge.s32.totalorder %s20, 4
    %s30 = sphi 0, %s32
    %s33 = sphi 0, %s30
    %s34 = sphi 0, %s33
    %s50 = sphi 0, %s34
    %s54 = sphi 0, %s54
    %s56 = sphi 0, %s54
    %s57 = sphi 0, %s56
    %s71 = sphi 0, %s57
    %s75 = sphi 0, %s75
    %s77 = sphi 0, %s75
    %s78 = sphi 0, %s77
    %s92 = sphi 0, %s78
    %s96 = sphi 0, %s96
    %s98 = sphi 0, %s96
    %s99 = sphi 0, %s98
    %s113 = sphi 0, %s99
    %s117 = sphi 0, %s117
    %s119 = sphi 0, %s117
    %s120 = sphi 0, %s119
    %s134 = sphi 0, %s120
    %s138 = sphi 0, %s138
    %s140 = sphi 0, %s138
    %s141 = sphi 0, %s140
    %s155 = sphi 0, %s141
    %s159 = sphi 0, %s159
    %s161 = sphi 0, %s159
    %s162 = sphi 0, %s161
    %s176 = sphi 0, %s162
    %s180 = sphi 0, %s180
    %s182 = sphi 0, %s180
    %s183 = sphi 0, %s182
    %s197 = sphi 0, %s183
    %s201 = sphi 0, %s201
    %s203 = sphi 0, %s201
    %s204 = sphi 0, %s203
    %s218 = sphi 0, %s204
    %s222 = sphi 0, %s222
    %s224 = sphi 0, %s222
    %s225 = sphi 0, %s224
    %s239 = sphi 0, %s225
    %s243 = sphi 0, %s243
    %s245 = sphi 0, %s243
    %s246 = sphi 0, %s245
    %s260 = sphi 0, %s246
    %s264 = sphi 0, %s264
    %s266 = sphi 0, %s264
    %s267 = sphi 0, %s266
    %s281 = sphi 0, %s267
    %s285 = sphi 0, %s285
    %s287 = sphi 0, %s285
    %s288 = sphi 0, %s287
    %s302 = sphi 0, %s288
    %s306 = sphi 0, %s306
    %s308 = sphi 0, %s306
    %s309 = sphi 0, %s308
    %s323 = sphi 0, %s309
    %s329 = sphi 0, %s331
    %s332 = sphi 0, %s329
    %s333 = sphi 0, %s332
    %s349 = sphi 0, %s333
  $region4: #{_forward_impl.1} parent=0 // loop_header_branch
    %23 = sbr.rel (%p21) target = $region8
  $region5: #{_forward_impl.1} parent=0 // loop_body
    %s25 = ssub.s32 %s20, 1
    %s26 = ssub.s32 %s20, 2
    %s27 = sadd.s32 %s20, 1
    %s28 = ssub.s32 %s20, %s27
    %p29 = scmp.eq.s32.totalorder %s28, 0
    %s31 = sadd.s32 %s30, 1
    %s32 = scalar_select %p29, %s30, %s31
    %p35 = pneg %p29
    %p36 = scmp.eq.s32.totalorder %s20, 1
    %p37 = por %p35, %p36
    %p38 = scmp.ne.s32.totalorder %s30, %s33
    %p39 = scmp.eq.s32.totalorder %s20, 0
    %p40 = por %p38, %p39
    %p41 = scmp.ne.s32.totalorder %s30, %s33
    %p42 = scmp.eq.s32.totalorder %s25, 1
    %p43 = por %p41, %p42
    %p44 = scmp.ne.s32.totalorder %s33, %s34
    %p45 = scmp.eq.s32.totalorder %s25, 0
    %p46 = por %p44, %p45
    %p47 = scmp.ne.s32.totalorder %s33, %s34
    %p48 = scmp.eq.s32.totalorder %s26, 1
    %p49 = por %p47, %p48
    %p51 = scmp.ne.s32.totalorder %s34, %s50
    %p52 = scmp.eq.s32.totalorder %s26, 0
    %p53 = por %p51, %p52
    %s55 = sadd.s32 %s54, 1
    %p58 = scmp.eq.s32.totalorder %s20, 1
    %p59 = scmp.ne.s32.totalorder %s54, %s56
    %p60 = scmp.eq.s32.totalorder %s20, 0
    %p61 = por %p59, %p60
    %p62 = scmp.ne.s32.totalorder %s54, %s56
    %p63 = scmp.eq.s32.totalorder %s25, 1
    %p64 = por %p62, %p63
    %p65 = scmp.ne.s32.totalorder %s56, %s57
    %p66 = scmp.eq.s32.totalorder %s25, 0
    %p67 = por %p65, %p66
    %p68 = scmp.ne.s32.totalorder %s56, %s57
    %p69 = scmp.eq.s32.totalorder %s26, 1
    %p70 = por %p68, %p69
    %p72 = scmp.ne.s32.totalorder %s57, %s71
    %p73 = scmp.eq.s32.totalorder %s26, 0
    %p74 = por %p72, %p73
    %s76 = sadd.s32 %s75, 1
    %p79 = scmp.eq.s32.totalorder %s20, 1
    %p80 = scmp.ne.s32.totalorder %s75, %s77
    %p81 = scmp.eq.s32.totalorder %s20, 0
    %p82 = por %p80, %p81
    %p83 = scmp.ne.s32.totalorder %s75, %s77
    %p84 = scmp.eq.s32.totalorder %s25, 1
    %p85 = por %p83, %p84
    %p86 = scmp.ne.s32.totalorder %s77, %s78
    %p87 = scmp.eq.s32.totalorder %s25, 0
    %p88 = por %p86, %p87
    %p89 = scmp.ne.s32.totalorder %s77, %s78
    %p90 = scmp.eq.s32.totalorder %s26, 1
    %p91 = por %p89, %p90
    %p93 = scmp.ne.s32.totalorder %s78, %s92
    %p94 = scmp.eq.s32.totalorder %s26, 0
    %p95 = por %p93, %p94
    %s97 = sadd.s32 %s96, 1
    %p100 = scmp.eq.s32.totalorder %s20, 1
    %p101 = scmp.ne.s32.totalorder %s96, %s98
    %p102 = scmp.eq.s32.totalorder %s20, 0
    %p103 = por %p101, %p102
    %p104 = scmp.ne.s32.totalorder %s96, %s98
    %p105 = scmp.eq.s32.totalorder %s25, 1
    %p106 = por %p104, %p105
    %p107 = scmp.ne.s32.totalorder %s98, %s99
    %p108 = scmp.eq.s32.totalorder %s25, 0
    %p109 = por %p107, %p108
    %p110 = scmp.ne.s32.totalorder %s98, %s99
    %p111 = scmp.eq.s32.totalorder %s26, 1
    %p112 = por %p110, %p111
    %p114 = scmp.ne.s32.totalorder %s99, %s113
    %p115 = scmp.eq.s32.totalorder %s26, 0
    %p116 = por %p114, %p115
    %s118 = sadd.s32 %s117, 1
    %p121 = scmp.eq.s32.totalorder %s20, 1
    %p122 = scmp.ne.s32.totalorder %s117, %s119
    %p123 = scmp.eq.s32.totalorder %s20, 0
    %p124 = por %p122, %p123
    %p125 = scmp.ne.s32.totalorder %s117, %s119
    %p126 = scmp.eq.s32.totalorder %s25, 1
    %p127 = por %p125, %p126
    %p128 = scmp.ne.s32.totalorder %s119, %s120
    %p129 = scmp.eq.s32.totalorder %s25, 0
    %p130 = por %p128, %p129
    %p131 = scmp.ne.s32.totalorder %s119, %s120
    %p132 = scmp.eq.s32.totalorder %s26, 1
    %p133 = por %p131, %p132
    %p135 = scmp.ne.s32.totalorder %s120, %s134
    %p136 = scmp.eq.s32.totalorder %s26, 0
    %p137 = por %p135, %p136
    %s139 = sadd.s32 %s138, 1
    %p142 = scmp.eq.s32.totalorder %s20, 1
    %p143 = scmp.ne.s32.totalorder %s138, %s140
    %p144 = scmp.eq.s32.totalorder %s20, 0
    %p145 = por %p143, %p144
    %p146 = scmp.ne.s32.totalorder %s138, %s140
    %p147 = scmp.eq.s32.totalorder %s25, 1
    %p148 = por %p146, %p147
    %p149 = scmp.ne.s32.totalorder %s140, %s141
    %p150 = scmp.eq.s32.totalorder %s25, 0
    %p151 = por %p149, %p150
    %p152 = scmp.ne.s32.totalorder %s140, %s141
    %p153 = scmp.eq.s32.totalorder %s26, 1
    %p154 = por %p152, %p153
    %p156 = scmp.ne.s32.totalorder %s141, %s155
    %p157 = scmp.eq.s32.totalorder %s26, 0
    %p158 = por %p156, %p157
    %s160 = sadd.s32 %s159, 1
    %p163 = scmp.eq.s32.totalorder %s20, 1
    %p164 = scmp.ne.s32.totalorder %s159, %s161
    %p165 = scmp.eq.s32.totalorder %s20, 0
    %p166 = por %p164, %p165
    %p167 = scmp.ne.s32.totalorder %s159, %s161
    %p168 = scmp.eq.s32.totalorder %s25, 1
    %p169 = por %p167, %p168
    %p170 = scmp.ne.s32.totalorder %s161, %s162
    %p171 = scmp.eq.s32.totalorder %s25, 0
    %p172 = por %p170, %p171
    %p173 = scmp.ne.s32.totalorder %s161, %s162
    %p174 = scmp.eq.s32.totalorder %s26, 1
    %p175 = por %p173, %p174
    %p177 = scmp.ne.s32.totalorder %s162, %s176
    %p178 = scmp.eq.s32.totalorder %s26, 0
    %p179 = por %p177, %p178
    %s181 = sadd.s32 %s180, 1
    %p184 = scmp.eq.s32.totalorder %s20, 1
    %p185 = scmp.ne.s32.totalorder %s180, %s182
    %p186 = scmp.eq.s32.totalorder %s20, 0
    %p187 = por %p185, %p186
    %p188 = scmp.ne.s32.totalorder %s180, %s182
    %p189 = scmp.eq.s32.totalorder %s25, 1
    %p190 = por %p188, %p189
    %p191 = scmp.ne.s32.totalorder %s182, %s183
    %p192 = scmp.eq.s32.totalorder %s25, 0
    %p193 = por %p191, %p192
    %p194 = scmp.ne.s32.totalorder %s182, %s183
    %p195 = scmp.eq.s32.totalorder %s26, 1
    %p196 = por %p194, %p195
    %p198 = scmp.ne.s32.totalorder %s183, %s197
    %p199 = scmp.eq.s32.totalorder %s26, 0
    %p200 = por %p198, %p199
    %s202 = sadd.s32 %s201, 1
    %p205 = scmp.eq.s32.totalorder %s20, 1
    %p206 = scmp.ne.s32.totalorder %s201, %s203
    %p207 = scmp.eq.s32.totalorder %s20, 0
    %p208 = por %p206, %p207
    %p209 = scmp.ne.s32.totalorder %s201, %s203
    %p210 = scmp.eq.s32.totalorder %s25, 1
    %p211 = por %p209, %p210
    %p212 = scmp.ne.s32.totalorder %s203, %s204
    %p213 = scmp.eq.s32.totalorder %s25, 0
    %p214 = por %p212, %p213
    %p215 = scmp.ne.s32.totalorder %s203, %s204
    %p216 = scmp.eq.s32.totalorder %s26, 1
    %p217 = por %p215, %p216
    %p219 = scmp.ne.s32.totalorder %s204, %s218
    %p220 = scmp.eq.s32.totalorder %s26, 0
    %p221 = por %p219, %p220
    %s223 = sadd.s32 %s222, 1
    %p226 = scmp.eq.s32.totalorder %s20, 1
    %p227 = scmp.ne.s32.totalorder %s222, %s224
    %p228 = scmp.eq.s32.totalorder %s20, 0
    %p229 = por %p227, %p228
    %p230 = scmp.ne.s32.totalorder %s222, %s224
    %p231 = scmp.eq.s32.totalorder %s25, 1
    %p232 = por %p230, %p231
    %p233 = scmp.ne.s32.totalorder %s224, %s225
    %p234 = scmp.eq.s32.totalorder %s25, 0
    %p235 = por %p233, %p234
    %p236 = scmp.ne.s32.totalorder %s224, %s225
    %p237 = scmp.eq.s32.totalorder %s26, 1
    %p238 = por %p236, %p237
    %p240 = scmp.ne.s32.totalorder %s225, %s239
    %p241 = scmp.eq.s32.totalorder %s26, 0
    %p242 = por %p240, %p241
    %s244 = sadd.s32 %s243, 1
    %p247 = scmp.eq.s32.totalorder %s20, 1
    %p248 = scmp.ne.s32.totalorder %s243, %s245
    %p249 = scmp.eq.s32.totalorder %s20, 0
    %p250 = por %p248, %p249
    %p251 = scmp.ne.s32.totalorder %s243, %s245
    %p252 = scmp.eq.s32.totalorder %s25, 1
    %p253 = por %p251, %p252
    %p254 = scmp.ne.s32.totalorder %s245, %s246
    %p255 = scmp.eq.s32.totalorder %s25, 0
    %p256 = por %p254, %p255
    %p257 = scmp.ne.s32.totalorder %s245, %s246
    %p258 = scmp.eq.s32.totalorder %s26, 1
    %p259 = por %p257, %p258
    %p261 = scmp.ne.s32.totalorder %s246, %s260
    %p262 = scmp.eq.s32.totalorder %s26, 0
    %p263 = por %p261, %p262
    %s265 = sadd.s32 %s264, 1
    %p268 = scmp.eq.s32.totalorder %s20, 1
    %p269 = scmp.ne.s32.totalorder %s264, %s266
    %p270 = scmp.eq.s32.totalorder %s20, 0
    %p271 = por %p269, %p270
    %p272 = scmp.ne.s32.totalorder %s264, %s266
    %p273 = scmp.eq.s32.totalorder %s25, 1
    %p274 = por %p272, %p273
    %p275 = scmp.ne.s32.totalorder %s266, %s267
    %p276 = scmp.eq.s32.totalorder %s25, 0
    %p277 = por %p275, %p276
    %p278 = scmp.ne.s32.totalorder %s266, %s267
    %p279 = scmp.eq.s32.totalorder %s26, 1
    %p280 = por %p278, %p279
    %p282 = scmp.ne.s32.totalorder %s267, %s281
    %p283 = scmp.eq.s32.totalorder %s26, 0
    %p284 = por %p282, %p283
    %s286 = sadd.s32 %s285, 1
    %p289 = scmp.eq.s32.totalorder %s20, 1
    %p290 = scmp.ne.s32.totalorder %s285, %s287
    %p291 = scmp.eq.s32.totalorder %s20, 0
    %p292 = por %p290, %p291
    %p293 = scmp.ne.s32.totalorder %s285, %s287
    %p294 = scmp.eq.s32.totalorder %s25, 1
    %p295 = por %p293, %p294
    %p296 = scmp.ne.s32.totalorder %s287, %s288
    %p297 = scmp.eq.s32.totalorder %s25, 0
    %p298 = por %p296, %p297
    %p299 = scmp.ne.s32.totalorder %s287, %s288
    %p300 = scmp.eq.s32.totalorder %s26, 1
    %p301 = por %p299, %p300
    %p303 = scmp.ne.s32.totalorder %s288, %s302
    %p304 = scmp.eq.s32.totalorder %s26, 0
    %p305 = por %p303, %p304
    %s307 = sadd.s32 %s306, 1
    %p310 = scmp.eq.s32.totalorder %s20, 1
    %p311 = scmp.ne.s32.totalorder %s306, %s308
    %p312 = scmp.eq.s32.totalorder %s20, 0
    %p313 = por %p311, %p312
    %p314 = scmp.ne.s32.totalorder %s306, %s308
    %p315 = scmp.eq.s32.totalorder %s25, 1
    %p316 = por %p314, %p315
    %p317 = scmp.ne.s32.totalorder %s308, %s309
    %p318 = scmp.eq.s32.totalorder %s25, 0
    %p319 = por %p317, %p318
    %p320 = scmp.ne.s32.totalorder %s308, %s309
    %p321 = scmp.eq.s32.totalorder %s26, 1
    %p322 = por %p320, %p321
    %p324 = scmp.ne.s32.totalorder %s309, %s323
    %p325 = scmp.eq.s32.totalorder %s26, 0
    %p326 = por %p324, %p325
    %s327 = ssub.s32 %s20, %s27
    %p328 = scmp.eq.s32.totalorder %s327, 0
    %s330 = sadd.s32 %s329, 1
    %s331 = scalar_select %p328, %s329, %s330
    %p334 = pneg %p328
    %p335 = scmp.eq.s32.totalorder %s20, 1
    %p336 = por %p334, %p335
    %p337 = scmp.ne.s32.totalorder %s329, %s332
    %p338 = scmp.eq.s32.totalorder %s20, 0
    %p339 = por %p337, %p338
    %p340 = scmp.ne.s32.totalorder %s329, %s332
    %p341 = scmp.eq.s32.totalorder %s25, 1
    %p342 = por %p340, %p341
    %p343 = scmp.ne.s32.totalorder %s332, %s333
    %p344 = scmp.eq.s32.totalorder %s25, 0
    %p345 = por %p343, %p344
    %p346 = scmp.ne.s32.totalorder %s332, %s333
    %p347 = scmp.eq.s32.totalorder %s26, 1
    %p348 = por %p346, %p347
    %p350 = scmp.ne.s32.totalorder %s333, %s349
    %p351 = scmp.eq.s32.totalorder %s26, 0
    %p352 = por %p350, %p351
    %p353 = scmp.le.s32.totalorder 1, %s20
    %p354 = scmp.lt.s32.totalorder %s20, 3
    %p355 = pnand %p353, %p354
    %p356 = pneg %p355
    // Predicated region
    $region9: #{_forward_impl.1} parent=5 // pred_check
      _
    $region10: #{_forward_impl.1} parent=5 // pred_check_branch
      %358 = sbr.rel (%p355) target = $region12
    $region11: #{_forward_impl.1} parent=5 // pred_region
      %s359 = ssub.s32 %s20, 1
      // Predicated region
      $region13: #{_forward_impl.1} parent=11 // pred_check
        %p360 = pneg %p67
      $region14: #{_forward_impl.1} parent=11 // pred_check_branch
        %362 = sbr.rel (%p360) target = $region16
      $region15: #{_forward_impl.1} parent=11 // pred_region
        _
      $region16: #{_forward_impl.1} parent=11 // pred_fallthru
        _
      // Predicated region
      $region17: #{_forward_impl.1} parent=11 // pred_check
        %p363 = pneg %p88
      $region18: #{_forward_impl.1} parent=11 // pred_check_branch
        %365 = sbr.rel (%p363) target = $region20
      $region19: #{_forward_impl.1} parent=11 // pred_region
        _
      $region20: #{_forward_impl.1} parent=11 // pred_fallthru
        _
      // Predicated region
      $region21: #{_forward_impl.1} parent=11 // pred_check
        %p366 = pneg %p109
      $region22: #{_forward_impl.1} parent=11 // pred_check_branch
        %368 = sbr.rel (%p366) target = $region24
      $region23: #{_forward_impl.1} parent=11 // pred_region
        _
      $region24: #{_forward_impl.1} parent=11 // pred_fallthru
        _
      // Predicated region
      $region25: #{_forward_impl.1} parent=11 // pred_check
        %p369 = pneg %p130
      $region26: #{_forward_impl.1} parent=11 // pred_check_branch
        %371 = sbr.rel (%p369) target = $region28
      $region27: #{_forward_impl.1} parent=11 // pred_region
        _
      $region28: #{_forward_impl.1} parent=11 // pred_fallthru
        _
      // Predicated region
      $region29: #{_forward_impl.1} parent=11 // pred_check
        %p372 = pneg %p151
      $region30: #{_forward_impl.1} parent=11 // pred_check_branch
        %374 = sbr.rel (%p372) target = $region32
      $region31: #{_forward_impl.1} parent=11 // pred_region
        _
      $region32: #{_forward_impl.1} parent=11 // pred_fallthru
        _
      // Predicated region
      $region33: #{_forward_impl.1} parent=11 // pred_check
        %p375 = pneg %p172
      $region34: #{_forward_impl.1} parent=11 // pred_check_branch
        %377 = sbr.rel (%p375) target = $region36
      $region35: #{_forward_impl.1} parent=11 // pred_region
        _
      $region36: #{_forward_impl.1} parent=11 // pred_fallthru
        _
      // Predicated region
      $region37: #{_forward_impl.1} parent=11 // pred_check
        %p378 = pneg %p193
      $region38: #{_forward_impl.1} parent=11 // pred_check_branch
        %380 = sbr.rel (%p378) target = $region40
      $region39: #{_forward_impl.1} parent=11 // pred_region
        _
      $region40: #{_forward_impl.1} parent=11 // pred_fallthru
        _
      // Predicated region
      $region41: #{_forward_impl.1} parent=11 // pred_check
        %p381 = pneg %p214
      $region42: #{_forward_impl.1} parent=11 // pred_check_branch
        %383 = sbr.rel (%p381) target = $region44
      $region43: #{_forward_impl.1} parent=11 // pred_region
        _
      $region44: #{_forward_impl.1} parent=11 // pred_fallthru
        _
      // Predicated region
      $region45: #{_forward_impl.1} parent=11 // pred_check
        %p384 = pneg %p235
      $region46: #{_forward_impl.1} parent=11 // pred_check_branch
        %386 = sbr.rel (%p384) target = $region48
      $region47: #{_forward_impl.1} parent=11 // pred_region
        _
      $region48: #{_forward_impl.1} parent=11 // pred_fallthru
        _
      // Predicated region
      $region49: #{_forward_impl.1} parent=11 // pred_check
        %p387 = pneg %p256
      $region50: #{_forward_impl.1} parent=11 // pred_check_branch
        %389 = sbr.rel (%p387) target = $region52
      $region51: #{_forward_impl.1} parent=11 // pred_region
        _
      $region52: #{_forward_impl.1} parent=11 // pred_fallthru
        _
      // Predicated region
      $region53: #{_forward_impl.1} parent=11 // pred_check
        %p390 = pneg %p277
      $region54: #{_forward_impl.1} parent=11 // pred_check_branch
        %392 = sbr.rel (%p390) target = $region56
      $region55: #{_forward_impl.1} parent=11 // pred_region
        _
      $region56: #{_forward_impl.1} parent=11 // pred_fallthru
        _
      // Predicated region
      $region57: #{_forward_impl.1} parent=11 // pred_check
        %p393 = pneg %p298
      $region58: #{_forward_impl.1} parent=11 // pred_check_branch
        %395 = sbr.rel (%p393) target = $region60
      $region59: #{_forward_impl.1} parent=11 // pred_region
        _
      $region60: #{_forward_impl.1} parent=11 // pred_fallthru
        _
      // Predicated region
      $region61: #{_forward_impl.1} parent=11 // pred_check
        %p396 = pneg %p319
      $region62: #{_forward_impl.1} parent=11 // pred_check_branch
        %398 = sbr.rel (%p396) target = $region64
      $region63: #{_forward_impl.1} parent=11 // pred_region
        _
      $region64: #{_forward_impl.1} parent=11 // pred_fallthru
        _
    $region12: #{_forward_impl.1} parent=5 // pred_fallthru
      _
    %p399 = scmp.lt.s32.totalorder %s20, 2
    // Predicated region
    $region65: #{_forward_impl.1} parent=5 // pred_check
      %p400 = pneg %p399
    $region66: #{_forward_impl.1} parent=5 // pred_check_branch
      %402 = sbr.rel (%p400) target = $region68
    $region67: #{_forward_impl.1} parent=5 // pred_region
      // Predicated region
      $region69: #{_forward_impl.1} parent=67 // pred_check
        %p403 = pneg %p40
      $region70: #{_forward_impl.1} parent=67 // pred_check_branch
        %405 = sbr.rel (%p403) target = $region72
      $region71: #{_forward_impl.1} parent=67 // pred_region
        %s406 = smul.u32 192, %s20
        %p407 = scmp.lt.s32.totalorder %s406, 383
        %s408 = scalar_select %p407, %s406, 383
        %s409 = smul.addr %s408, 4
        %s410 = scalar_lea.vmem %s0, %s409
        %s411 = smul.u32 192, %s20
      $region72: #{_forward_impl.1} parent=67 // pred_fallthru
        _
    $region68: #{_forward_impl.1} parent=5 // pred_fallthru
      _
    %p412 = scmp.le.s32.totalorder 1, %s20
    %p413 = scmp.lt.s32.totalorder %s20, 3
    %p414 = pnand %p412, %p413
    %p415 = pneg %p414
    // Predicated region
    $region73: #{_forward_impl.1} parent=5 // pred_check
      _
    $region74: #{_forward_impl.1} parent=5 // pred_check_branch
      %417 = sbr.rel (%p414) target = $region76
    $region75: #{_forward_impl.1} parent=5 // pred_region
      %s418 = ssub.s32 %s20, 1
      %s419 = smul.u32 192, %s25
      %p420 = scmp.lt.s32.totalorder %s419, 383
      %s421 = scalar_select %p420, %s419, 383
      %s422 = smul.addr %s421, 4
      %s423 = scalar_lea.vmem %s0, %s422
      %p424 = pneg %p46
      %p425 = pneg %p43
      %p426 = pneg %p67
      %p427 = pneg %p64
      %p428 = pneg %p88
      %p429 = pneg %p85
      %p430 = pneg %p109
      %p431 = pneg %p106
      %p432 = pneg %p130
      %p433 = pneg %p127
      %p434 = pneg %p151
      %p435 = pneg %p148
      %p436 = pneg %p172
      %p437 = pneg %p169
      %p438 = pneg %p193
      %p439 = pneg %p190
      %p440 = pneg %p214
      %p441 = pneg %p211
      %p442 = pneg %p235
      %p443 = pneg %p232
      %p444 = pneg %p256
      %p445 = pneg %p253
      %p446 = pneg %p277
      %p447 = pneg %p274
      %p448 = pneg %p298
      %p449 = pneg %p295
      %p450 = pneg %p319
      %p451 = pneg %p316
      %p452 = pneg %p345
      %p453 = pneg %p342
      %p454 = scmp.lt.s32.totalorder %s25, 1
      %s455 = scalar_select %p454, %s25, 1
      %s456 = smul.addr %s455, 8
      %s457 = scalar_lea.vmem %s14, %s456
      %s458 = smul.u32 192, %s25
      %p459 = scmp.lt.s32.totalorder %s458, 383
      %s460 = scalar_select %p459, %s458, 383
      %s461 = smul.addr %s460, 4
      %s462 = scalar_lea.vmem %s0, %s461
      %s463 = smul.u32 192, %s25
      %p464 = scmp.lt.s32.totalorder %s25, 1
      %s465 = scalar_select %p464, %s25, 1
      %s466 = smul.addr %s465, 8
      %s467 = scalar_lea.vmem %s14, %s466
      %v469 = vld [vmem:[%s462] sm:$0xf]
      %v470 = vld [vmem:[%s462 + $0x4] sm:$0xf]
      %v471 = vld [vmem:[%s462 + $0x8] sm:$0xf]
      %v472 = vld [vmem:[%s462 + $0xc] sm:$0xf]
      %v473 = vld [vmem:[%s462 + $0x10] sm:$0xf]
      %v474 = vld [vmem:[%s462 + $0x14] sm:$0xf]
      %v475 = vld [vmem:[%s462 + $0x18] sm:$0xf]
      %v476 = vld [vmem:[%s462 + $0x1c] sm:$0xf]
      %v477 = vld [vmem:[%s462 + $0x20] sm:$0xf]
      %v478 = vld [vmem:[%s462 + $0x24] sm:$0xf]
      %v479 = vld [vmem:[%s462 + $0x28] sm:$0xf]
      %v480 = vld [vmem:[%s462 + $0x2c] sm:$0xf]
      %v481 = vld [vmem:[%s462 + $0x30] sm:$0xf]
      %v482 = vld [vmem:[%s462 + $0x34] sm:$0xf]
      %v483 = vld [vmem:[%s462 + $0x38] sm:$0xf]
      %v484 = vld [vmem:[%s462 + $0x3c] sm:$0xf]
      %v485 = vld [vmem:[%s462 + $0x40] sm:$0xf]
      %v486 = vld [vmem:[%s462 + $0x44] sm:$0xf]
      %v487 = vld [vmem:[%s462 + $0x48] sm:$0xf]
      %v488 = vld [vmem:[%s462 + $0x4c] sm:$0xf]
      %v489 = vld [vmem:[%s462 + $0x50] sm:$0xf]
      %v490 = vld [vmem:[%s462 + $0x54] sm:$0xf]
      %v491 = vld [vmem:[%s462 + $0x58] sm:$0xf]
      %v492 = vld [vmem:[%s462 + $0x5c] sm:$0xf]
      %v493 = vld [vmem:[%s462 + $0x60] sm:$0xf]
      %v494 = vld [vmem:[%s462 + $0x64] sm:$0xf]
      %v495 = vld [vmem:[%s462 + $0x68] sm:$0xf]
      %v496 = vld [vmem:[%s462 + $0x6c] sm:$0xf]
      %v497 = vld [vmem:[%s462 + $0x70] sm:$0xf]
      %v498 = vld [vmem:[%s462 + $0x74] sm:$0xf]
      %v499 = vld [vmem:[%s462 + $0x78] sm:$0xf]
      %v500 = vld [vmem:[%s462 + $0x7c] sm:$0xf]
      %v501 = vld [vmem:[%s462 + $0x80] sm:$0xf]
      %v502 = vld [vmem:[%s462 + $0x84] sm:$0xf]
      %v503 = vld [vmem:[%s462 + $0x88] sm:$0xf]
      %v504 = vld [vmem:[%s462 + $0x8c] sm:$0xf]
      %v505 = vld [vmem:[%s462 + $0x90] sm:$0xf]
      %v506 = vld [vmem:[%s462 + $0x94] sm:$0xf]
      %v507 = vld [vmem:[%s462 + $0x98] sm:$0xf]
      %v508 = vld [vmem:[%s462 + $0x9c] sm:$0xf]
      %v509 = vld [vmem:[%s462 + $0xa0] sm:$0xf]
      %v510 = vld [vmem:[%s462 + $0xa4] sm:$0xf]
      %v511 = vld [vmem:[%s462 + $0xa8] sm:$0xf]
      %v512 = vld [vmem:[%s462 + $0xac] sm:$0xf]
      %v513 = vld [vmem:[%s462 + $0xb0] sm:$0xf]
      %v514 = vld [vmem:[%s462 + $0xb4] sm:$0xf]
      %v515 = vld [vmem:[%s462 + $0xb8] sm:$0xf]
      %v516 = vld [vmem:[%s462 + $0xbc] sm:$0xf]
      %v517 = vld [vmem:[%s462 + $0xc0] sm:$0xf]
      %v518 = vld [vmem:[%s462 + $0xc4] sm:$0xf]
      %v519 = vld [vmem:[%s462 + $0xc8] sm:$0xf]
      %v520 = vld [vmem:[%s462 + $0xcc] sm:$0xf]
      %v521 = vld [vmem:[%s462 + $0xd0] sm:$0xf]
      %v522 = vld [vmem:[%s462 + $0xd4] sm:$0xf]
      %v523 = vld [vmem:[%s462 + $0xd8] sm:$0xf]
      %v524 = vld [vmem:[%s462 + $0xdc] sm:$0xf]
      %v525 = vld [vmem:[%s462 + $0xe0] sm:$0xf]
      %v526 = vld [vmem:[%s462 + $0xe4] sm:$0xf]
      %v527 = vld [vmem:[%s462 + $0xe8] sm:$0xf]
      %v528 = vld [vmem:[%s462 + $0xec] sm:$0xf]
      %v529 = vld [vmem:[%s462 + $0xf0] sm:$0xf]
      %v530 = vld [vmem:[%s462 + $0xf4] sm:$0xf]
      %v531 = vld [vmem:[%s462 + $0xf8] sm:$0xf]
      %v532 = vld [vmem:[%s462 + $0xfc] sm:$0xf]
      %v533 = vld [vmem:[%s462 + $0x100] sm:$0xf]
      %v534 = vld [vmem:[%s462 + $0x104] sm:$0xf]
      %v535 = vld [vmem:[%s462 + $0x108] sm:$0xf]
      %v536 = vld [vmem:[%s462 + $0x10c] sm:$0xf]
      %v537 = vld [vmem:[%s462 + $0x110] sm:$0xf]
      %v538 = vld [vmem:[%s462 + $0x114] sm:$0xf]
      %v539 = vld [vmem:[%s462 + $0x118] sm:$0xf]
      %v540 = vld [vmem:[%s462 + $0x11c] sm:$0xf]
      %v541 = vld [vmem:[%s462 + $0x120] sm:$0xf]
      %v542 = vld [vmem:[%s462 + $0x124] sm:$0xf]
      %v543 = vld [vmem:[%s462 + $0x128] sm:$0xf]
      %v544 = vld [vmem:[%s462 + $0x12c] sm:$0xf]
      %v545 = vld [vmem:[%s462 + $0x130] sm:$0xf]
      %v546 = vld [vmem:[%s462 + $0x134] sm:$0xf]
      %v547 = vld [vmem:[%s462 + $0x138] sm:$0xf]
      %v548 = vld [vmem:[%s462 + $0x13c] sm:$0xf]
      %v549 = vld [vmem:[%s462 + $0x140] sm:$0xf]
      %v550 = vld [vmem:[%s462 + $0x144] sm:$0xf]
      %v551 = vld [vmem:[%s462 + $0x148] sm:$0xf]
      %v552 = vld [vmem:[%s462 + $0x14c] sm:$0xf]
      %v553 = vld [vmem:[%s462 + $0x150] sm:$0xf]
      %v554 = vld [vmem:[%s462 + $0x154] sm:$0xf]
      %v555 = vld [vmem:[%s462 + $0x158] sm:$0xf]
      %v556 = vld [vmem:[%s462 + $0x15c] sm:$0xf]
      %v557 = vld [vmem:[%s462 + $0x160] sm:$0xf]
      %v558 = vld [vmem:[%s462 + $0x164] sm:$0xf]
      %v559 = vld [vmem:[%s462 + $0x168] sm:$0xf]
      %v560 = vld [vmem:[%s462 + $0x16c] sm:$0xf]
      %v561 = vld [vmem:[%s462 + $0x170] sm:$0xf]
      %v562 = vld [vmem:[%s462 + $0x174] sm:$0xf]
      %v563 = vld [vmem:[%s462 + $0x178] sm:$0xf]
      %v564 = vld [vmem:[%s462 + $0x17c] sm:$0xf]
      %v565 = vld [vmem:[%s462 + $0x180] sm:$0xf]
      %v566 = vld [vmem:[%s462 + $0x184] sm:$0xf]
      %v567 = vld [vmem:[%s462 + $0x188] sm:$0xf]
      %v568 = vld [vmem:[%s462 + $0x18c] sm:$0xf]
      %v569 = vld [vmem:[%s462 + $0x190] sm:$0xf]
      %v570 = vld [vmem:[%s462 + $0x194] sm:$0xf]
      %v571 = vld [vmem:[%s462 + $0x198] sm:$0xf]
      %v572 = vld [vmem:[%s462 + $0x19c] sm:$0xf]
      %v573 = vld [vmem:[%s462 + $0x1a0] sm:$0xf]
      %v574 = vld [vmem:[%s462 + $0x1a4] sm:$0xf]
      %v575 = vld [vmem:[%s462 + $0x1a8] sm:$0xf]
      %v576 = vld [vmem:[%s462 + $0x1ac] sm:$0xf]
      %v577 = vld [vmem:[%s462 + $0x1b0] sm:$0xf]
      %v578 = vld [vmem:[%s462 + $0x1b4] sm:$0xf]
      %v579 = vld [vmem:[%s462 + $0x1b8] sm:$0xf]
      %v580 = vld [vmem:[%s462 + $0x1bc] sm:$0xf]
      %v581 = vld [vmem:[%s462 + $0x1c0] sm:$0xf]
      %v582 = vld [vmem:[%s462 + $0x1c4] sm:$0xf]
      %v583 = vld [vmem:[%s462 + $0x1c8] sm:$0xf]
      %v584 = vld [vmem:[%s462 + $0x1cc] sm:$0xf]
      %v585 = vld [vmem:[%s462 + $0x1d0] sm:$0xf]
      %v586 = vld [vmem:[%s462 + $0x1d4] sm:$0xf]
      %v587 = vld [vmem:[%s462 + $0x1d8] sm:$0xf]
      %v588 = vld [vmem:[%s462 + $0x1dc] sm:$0xf]
      %v589 = vld [vmem:[%s462 + $0x1e0] sm:$0xf]
      %v590 = vld [vmem:[%s462 + $0x1e4] sm:$0xf]
      %v591 = vld [vmem:[%s462 + $0x1e8] sm:$0xf]
      %v592 = vld [vmem:[%s462 + $0x1ec] sm:$0xf]
      %v593 = vld [vmem:[%s462 + $0x1f0] sm:$0xf]
      %v594 = vld [vmem:[%s462 + $0x1f4] sm:$0xf]
      %v595 = vld [vmem:[%s462 + $0x1f8] sm:$0xf]
      %v596 = vld [vmem:[%s462 + $0x1fc] sm:$0xf]
      %v597 = vld [vmem:[%s462 + $0x200] sm:$0xf]
      %v598 = vld [vmem:[%s462 + $0x204] sm:$0xf]
      %v599 = vld [vmem:[%s462 + $0x208] sm:$0xf]
      %v600 = vld [vmem:[%s462 + $0x20c] sm:$0xf]
      %v601 = vld [vmem:[%s462 + $0x210] sm:$0xf]
      %v602 = vld [vmem:[%s462 + $0x214] sm:$0xf]
      %v603 = vld [vmem:[%s462 + $0x218] sm:$0xf]
      %v604 = vld [vmem:[%s462 + $0x21c] sm:$0xf]
      %v605 = vld [vmem:[%s462 + $0x220] sm:$0xf]
      %v606 = vld [vmem:[%s462 + $0x224] sm:$0xf]
      %v607 = vld [vmem:[%s462 + $0x228] sm:$0xf]
      %v608 = vld [vmem:[%s462 + $0x22c] sm:$0xf]
      %v609 = vld [vmem:[%s462 + $0x230] sm:$0xf]
      %v610 = vld [vmem:[%s462 + $0x234] sm:$0xf]
      %v611 = vld [vmem:[%s462 + $0x238] sm:$0xf]
      %v612 = vld [vmem:[%s462 + $0x23c] sm:$0xf]
      %v613 = vld [vmem:[%s462 + $0x240] sm:$0xf]
      %v614 = vld [vmem:[%s462 + $0x244] sm:$0xf]
      %v615 = vld [vmem:[%s462 + $0x248] sm:$0xf]
      %v616 = vld [vmem:[%s462 + $0x24c] sm:$0xf]
      %v617 = vld [vmem:[%s462 + $0x250] sm:$0xf]
      %v618 = vld [vmem:[%s462 + $0x254] sm:$0xf]
      %v619 = vld [vmem:[%s462 + $0x258] sm:$0xf]
      %v620 = vld [vmem:[%s462 + $0x25c] sm:$0xf]
      %v621 = vld [vmem:[%s462 + $0x260] sm:$0xf]
      %v622 = vld [vmem:[%s462 + $0x264] sm:$0xf]
      %v623 = vld [vmem:[%s462 + $0x268] sm:$0xf]
      %v624 = vld [vmem:[%s462 + $0x26c] sm:$0xf]
      %v625 = vld [vmem:[%s462 + $0x270] sm:$0xf]
      %v626 = vld [vmem:[%s462 + $0x274] sm:$0xf]
      %v627 = vld [vmem:[%s462 + $0x278] sm:$0xf]
      %v628 = vld [vmem:[%s462 + $0x27c] sm:$0xf]
      %v629 = vld [vmem:[%s462 + $0x280] sm:$0xf]
      %v630 = vld [vmem:[%s462 + $0x284] sm:$0xf]
      %v631 = vld [vmem:[%s462 + $0x288] sm:$0xf]
      %v632 = vld [vmem:[%s462 + $0x28c] sm:$0xf]
      %v633 = vld [vmem:[%s462 + $0x290] sm:$0xf]
      %v634 = vld [vmem:[%s462 + $0x294] sm:$0xf]
      %v635 = vld [vmem:[%s462 + $0x298] sm:$0xf]
      %v636 = vld [vmem:[%s462 + $0x29c] sm:$0xf]
      %v637 = vld [vmem:[%s462 + $0x2a0] sm:$0xf]
      %v638 = vld [vmem:[%s462 + $0x2a4] sm:$0xf]
      %v639 = vld [vmem:[%s462 + $0x2a8] sm:$0xf]
      %v640 = vld [vmem:[%s462 + $0x2ac] sm:$0xf]
      %v641 = vld [vmem:[%s462 + $0x2b0] sm:$0xf]
      %v642 = vld [vmem:[%s462 + $0x2b4] sm:$0xf]
      %v643 = vld [vmem:[%s462 + $0x2b8] sm:$0xf]
      %v644 = vld [vmem:[%s462 + $0x2bc] sm:$0xf]
      %v645 = vld [vmem:[%s462 + $0x2c0] sm:$0xf]
      %v646 = vld [vmem:[%s462 + $0x2c4] sm:$0xf]
      %v647 = vld [vmem:[%s462 + $0x2c8] sm:$0xf]
      %v648 = vld [vmem:[%s462 + $0x2cc] sm:$0xf]
      %v649 = vld [vmem:[%s462 + $0x2d0] sm:$0xf]
      %v650 = vld [vmem:[%s462 + $0x2d4] sm:$0xf]
      %v651 = vld [vmem:[%s462 + $0x2d8] sm:$0xf]
      %v652 = vld [vmem:[%s462 + $0x2dc] sm:$0xf]
      %v653 = vld [vmem:[%s462 + $0x2e0] sm:$0xf]
      %v654 = vld [vmem:[%s462 + $0x2e4] sm:$0xf]
      %v655 = vld [vmem:[%s462 + $0x2e8] sm:$0xf]
      %v656 = vld [vmem:[%s462 + $0x2ec] sm:$0xf]
      %v657 = vld [vmem:[%s462 + $0x2f0] sm:$0xf]
      %v658 = vld [vmem:[%s462 + $0x2f4] sm:$0xf]
      %v659 = vld [vmem:[%s462 + $0x2f8] sm:$0xf]
      %v660 = vld [vmem:[%s462 + $0x2fc] sm:$0xf]
      %v661 = vld [vmem:[%s4] sm:$0xf]
      %v662 = vld [vmem:[%s4 + $0x4] sm:$0xf]
      %v663 = vld [vmem:[%s4 + $0x8] sm:$0xf]
      %v664 = vld [vmem:[%s4 + $0xc] sm:$0xf]
      %v665 = vld [vmem:[%s4 + $0x10] sm:$0xf]
      %v666 = vld [vmem:[%s4 + $0x14] sm:$0xf]
      %v667 = vld [vmem:[%s4 + $0x18] sm:$0xf]
      %v668 = vld [vmem:[%s4 + $0x1c] sm:$0xf]
      %v669 = vld [vmem:[%s4 + $0x20] sm:$0xf]
      %v670 = vld [vmem:[%s4 + $0x24] sm:$0xf]
      %v671 = vld [vmem:[%s4 + $0x28] sm:$0xf]
      %v672 = vld [vmem:[%s4 + $0x2c] sm:$0xf]
      %v673 = vld [vmem:[%s4 + $0x30] sm:$0xf]
      %v674 = vld [vmem:[%s4 + $0x34] sm:$0xf]
      %v675 = vld [vmem:[%s4 + $0x38] sm:$0xf]
      %v676 = vld [vmem:[%s4 + $0x3c] sm:$0xf]
      %v677 = vld [vmem:[%s5] sm:$0x1]
      %v679 = vperm.slane %v677, 0
      %v873 = vunpack.c.l.b16 %v469
      %v874 = vunpack.c.l.b16 %v470
      %v875 = vunpack.c.l.b16 %v471
      %v876 = vunpack.c.l.b16 %v472
      %v877 = vunpack.c.l.b16 %v473
      %v878 = vunpack.c.l.b16 %v474
      %v879 = vunpack.c.l.b16 %v475
      %v880 = vunpack.c.l.b16 %v476
      %v881 = vunpack.c.l.b16 %v477
      %v882 = vunpack.c.l.b16 %v478
      %v883 = vunpack.c.l.b16 %v479
      %v884 = vunpack.c.l.b16 %v480
      %v885 = vunpack.c.l.b16 %v481
      %v886 = vunpack.c.l.b16 %v482
      %v887 = vunpack.c.l.b16 %v483
      %v888 = vunpack.c.l.b16 %v484
      %v889 = vunpack.c.l.b16 %v485
      %v890 = vunpack.c.l.b16 %v486
      %v891 = vunpack.c.l.b16 %v487
      %v892 = vunpack.c.l.b16 %v488
      %v893 = vunpack.c.l.b16 %v489
      %v894 = vunpack.c.l.b16 %v490
      %v895 = vunpack.c.l.b16 %v491
      %v896 = vunpack.c.l.b16 %v492
      %v897 = vunpack.c.l.b16 %v493
      %v898 = vunpack.c.l.b16 %v494
      %v899 = vunpack.c.l.b16 %v495
      %v900 = vunpack.c.l.b16 %v496
      %v901 = vunpack.c.l.b16 %v497
      %v902 = vunpack.c.l.b16 %v498
      %v903 = vunpack.c.l.b16 %v499
      %v904 = vunpack.c.l.b16 %v500
      %v905 = vunpack.c.l.b16 %v501
      %v906 = vunpack.c.l.b16 %v502
      %v907 = vunpack.c.l.b16 %v503
      %v908 = vunpack.c.l.b16 %v504
      %v909 = vunpack.c.l.b16 %v505
      %v910 = vunpack.c.l.b16 %v506
      %v911 = vunpack.c.l.b16 %v507
      %v912 = vunpack.c.l.b16 %v508
      %v913 = vunpack.c.l.b16 %v509
      %v914 = vunpack.c.l.b16 %v510
      %v915 = vunpack.c.l.b16 %v511
      %v916 = vunpack.c.l.b16 %v512
      %v917 = vunpack.c.l.b16 %v513
      %v918 = vunpack.c.l.b16 %v514
      %v919 = vunpack.c.l.b16 %v515
      %v920 = vunpack.c.l.b16 %v516
      %v921 = vunpack.c.l.b16 %v517
      %v922 = vunpack.c.l.b16 %v518
      %v923 = vunpack.c.l.b16 %v519
      %v924 = vunpack.c.l.b16 %v520
      %v925 = vunpack.c.l.b16 %v521
      %v926 = vunpack.c.l.b16 %v522
      %v927 = vunpack.c.l.b16 %v523
      %v928 = vunpack.c.l.b16 %v524
      %v929 = vunpack.c.l.b16 %v525
      %v930 = vunpack.c.l.b16 %v526
      %v931 = vunpack.c.l.b16 %v527
      %v932 = vunpack.c.l.b16 %v528
      %v933 = vunpack.c.l.b16 %v529
      %v934 = vunpack.c.l.b16 %v530
      %v935 = vunpack.c.l.b16 %v531
      %v936 = vunpack.c.l.b16 %v532
      %v937 = vunpack.c.l.b16 %v533
      %v938 = vunpack.c.l.b16 %v534
      %v939 = vunpack.c.l.b16 %v535
      %v940 = vunpack.c.l.b16 %v536
      %v941 = vunpack.c.l.b16 %v537
      %v942 = vunpack.c.l.b16 %v538
      %v943 = vunpack.c.l.b16 %v539
      %v944 = vunpack.c.l.b16 %v540
      %v945 = vunpack.c.l.b16 %v541
      %v946 = vunpack.c.l.b16 %v542
      %v947 = vunpack.c.l.b16 %v543
      %v948 = vunpack.c.l.b16 %v544
      %v949 = vunpack.c.l.b16 %v545
      %v950 = vunpack.c.l.b16 %v546
      %v951 = vunpack.c.l.b16 %v547
      %v952 = vunpack.c.l.b16 %v548
      %v953 = vunpack.c.l.b16 %v549
      %v954 = vunpack.c.l.b16 %v550
      %v955 = vunpack.c.l.b16 %v551
      %v956 = vunpack.c.l.b16 %v552
      %v957 = vunpack.c.l.b16 %v553
      %v958 = vunpack.c.l.b16 %v554
      %v959 = vunpack.c.l.b16 %v555
      %v960 = vunpack.c.l.b16 %v556
      %v961 = vunpack.c.l.b16 %v557
      %v962 = vunpack.c.l.b16 %v558
      %v963 = vunpack.c.l.b16 %v559
      %v964 = vunpack.c.l.b16 %v560
      %v965 = vunpack.c.l.b16 %v561
      %v966 = vunpack.c.l.b16 %v562
      %v967 = vunpack.c.l.b16 %v563
      %v968 = vunpack.c.l.b16 %v564
      %v969 = vunpack.c.l.b16 %v565
      %v970 = vunpack.c.l.b16 %v566
      %v971 = vunpack.c.l.b16 %v567
      %v972 = vunpack.c.l.b16 %v568
      %v973 = vunpack.c.l.b16 %v569
      %v974 = vunpack.c.l.b16 %v570
      %v975 = vunpack.c.l.b16 %v571
      %v976 = vunpack.c.l.b16 %v572
      %v977 = vunpack.c.l.b16 %v573
      %v978 = vunpack.c.l.b16 %v574
      %v979 = vunpack.c.l.b16 %v575
      %v980 = vunpack.c.l.b16 %v576
      %v981 = vunpack.c.l.b16 %v577
      %v982 = vunpack.c.l.b16 %v578
      %v983 = vunpack.c.l.b16 %v579
      %v984 = vunpack.c.l.b16 %v580
      %v985 = vunpack.c.l.b16 %v581
      %v986 = vunpack.c.l.b16 %v582
      %v987 = vunpack.c.l.b16 %v583
      %v988 = vunpack.c.l.b16 %v584
      %v989 = vunpack.c.l.b16 %v585
      %v990 = vunpack.c.l.b16 %v586
      %v991 = vunpack.c.l.b16 %v587
      %v992 = vunpack.c.l.b16 %v588
      %v993 = vunpack.c.l.b16 %v589
      %v994 = vunpack.c.l.b16 %v590
      %v995 = vunpack.c.l.b16 %v591
      %v996 = vunpack.c.l.b16 %v592
      %v997 = vunpack.c.l.b16 %v593
      %v998 = vunpack.c.l.b16 %v594
      %v999 = vunpack.c.l.b16 %v595
      %v1000 = vunpack.c.l.b16 %v596
      %v1001 = vunpack.c.l.b16 %v597
      %v1002 = vunpack.c.l.b16 %v598
      %v1003 = vunpack.c.l.b16 %v599
      %v1004 = vunpack.c.l.b16 %v600
      %v1005 = vunpack.c.l.b16 %v601
      %v1006 = vunpack.c.l.b16 %v602
      %v1007 = vunpack.c.l.b16 %v603
      %v1008 = vunpack.c.l.b16 %v604
      %v1009 = vunpack.c.l.b16 %v605
      %v1010 = vunpack.c.l.b16 %v606
      %v1011 = vunpack.c.l.b16 %v607
      %v1012 = vunpack.c.l.b16 %v608
      %v1013 = vunpack.c.l.b16 %v609
      %v1014 = vunpack.c.l.b16 %v610
      %v1015 = vunpack.c.l.b16 %v611
      %v1016 = vunpack.c.l.b16 %v612
      %v1017 = vunpack.c.l.b16 %v613
      %v1018 = vunpack.c.l.b16 %v614
      %v1019 = vunpack.c.l.b16 %v615
      %v1020 = vunpack.c.l.b16 %v616
      %v1021 = vunpack.c.l.b16 %v617
      %v1022 = vunpack.c.l.b16 %v618
      %v1023 = vunpack.c.l.b16 %v619
      %v1024 = vunpack.c.l.b16 %v620
      %v1025 = vunpack.c.l.b16 %v621
      %v1026 = vunpack.c.l.b16 %v622
      %v1027 = vunpack.c.l.b16 %v623
      %v1028 = vunpack.c.l.b16 %v624
      %v1029 = vunpack.c.l.b16 %v625
      %v1030 = vunpack.c.l.b16 %v626
      %v1031 = vunpack.c.l.b16 %v627
      %v1032 = vunpack.c.l.b16 %v628
      %v1033 = vunpack.c.l.b16 %v629
      %v1034 = vunpack.c.l.b16 %v630
      %v1035 = vunpack.c.l.b16 %v631
      %v1036 = vunpack.c.l.b16 %v632
      %v1037 = vunpack.c.l.b16 %v633
      %v1038 = vunpack.c.l.b16 %v634
      %v1039 = vunpack.c.l.b16 %v635
      %v1040 = vunpack.c.l.b16 %v636
      %v1041 = vunpack.c.l.b16 %v637
      %v1042 = vunpack.c.l.b16 %v638
      %v1043 = vunpack.c.l.b16 %v639
      %v1044 = vunpack.c.l.b16 %v640
      %v1045 = vunpack.c.l.b16 %v641
      %v1046 = vunpack.c.l.b16 %v642
      %v1047 = vunpack.c.l.b16 %v643
      %v1048 = vunpack.c.l.b16 %v644
      %v1049 = vunpack.c.l.b16 %v645
      %v1050 = vunpack.c.l.b16 %v646
      %v1051 = vunpack.c.l.b16 %v647
      %v1052 = vunpack.c.l.b16 %v648
      %v1053 = vunpack.c.l.b16 %v649
      %v1054 = vunpack.c.l.b16 %v650
      %v1055 = vunpack.c.l.b16 %v651
      %v1056 = vunpack.c.l.b16 %v652
      %v1057 = vunpack.c.l.b16 %v653
      %v1058 = vunpack.c.l.b16 %v654
      %v1059 = vunpack.c.l.b16 %v655
      %v1060 = vunpack.c.l.b16 %v656
      %v1061 = vunpack.c.l.b16 %v657
      %v1062 = vunpack.c.l.b16 %v658
      %v1063 = vunpack.c.l.b16 %v659
      %v1064 = vunpack.c.l.b16 %v660
      %v1065 = vpack.c.b16 %v874, %v873
      %v1066 = vpack.c.b16 %v876, %v875
      %v1067 = vpack.c.b16 %v878, %v877
      %v1068 = vpack.c.b16 %v880, %v879
      %v1069 = vpack.c.b16 %v882, %v881
      %v1070 = vpack.c.b16 %v884, %v883
      %v1071 = vpack.c.b16 %v886, %v885
      %v1072 = vpack.c.b16 %v888, %v887
      %v1073 = vpack.c.b16 %v890, %v889
      %v1074 = vpack.c.b16 %v892, %v891
      %v1075 = vpack.c.b16 %v894, %v893
      %v1076 = vpack.c.b16 %v896, %v895
      %v1077 = vpack.c.b16 %v898, %v897
      %v1078 = vpack.c.b16 %v900, %v899
      %v1079 = vpack.c.b16 %v902, %v901
      %v1080 = vpack.c.b16 %v904, %v903
      %v1081 = vpack.c.b16 %v906, %v905
      %v1082 = vpack.c.b16 %v908, %v907
      %v1083 = vpack.c.b16 %v910, %v909
      %v1084 = vpack.c.b16 %v912, %v911
      %v1085 = vpack.c.b16 %v914, %v913
      %v1086 = vpack.c.b16 %v916, %v915
      %v1087 = vpack.c.b16 %v918, %v917
      %v1088 = vpack.c.b16 %v920, %v919
      %v1089 = vpack.c.b16 %v922, %v921
      %v1090 = vpack.c.b16 %v924, %v923
      %v1091 = vpack.c.b16 %v926, %v925
      %v1092 = vpack.c.b16 %v928, %v927
      %v1093 = vpack.c.b16 %v930, %v929
      %v1094 = vpack.c.b16 %v932, %v931
      %v1095 = vpack.c.b16 %v934, %v933
      %v1096 = vpack.c.b16 %v936, %v935
      %v1097 = vpack.c.b16 %v938, %v937
      %v1098 = vpack.c.b16 %v940, %v939
      %v1099 = vpack.c.b16 %v942, %v941
      %v1100 = vpack.c.b16 %v944, %v943
      %v1101 = vpack.c.b16 %v946, %v945
      %v1102 = vpack.c.b16 %v948, %v947
      %v1103 = vpack.c.b16 %v950, %v949
      %v1104 = vpack.c.b16 %v952, %v951
      %v1105 = vpack.c.b16 %v954, %v953
      %v1106 = vpack.c.b16 %v956, %v955
      %v1107 = vpack.c.b16 %v958, %v957
      %v1108 = vpack.c.b16 %v960, %v959
      %v1109 = vpack.c.b16 %v962, %v961
      %v1110 = vpack.c.b16 %v964, %v963
      %v1111 = vpack.c.b16 %v966, %v965
      %v1112 = vpack.c.b16 %v968, %v967
      %v1113 = vpack.c.b16 %v970, %v969
      %v1114 = vpack.c.b16 %v972, %v971
      %v1115 = vpack.c.b16 %v974, %v973
      %v1116 = vpack.c.b16 %v976, %v975
      %v1117 = vpack.c.b16 %v978, %v977
      %v1118 = vpack.c.b16 %v980, %v979
      %v1119 = vpack.c.b16 %v982, %v981
      %v1120 = vpack.c.b16 %v984, %v983
      %v1121 = vpack.c.b16 %v986, %v985
      %v1122 = vpack.c.b16 %v988, %v987
      %v1123 = vpack.c.b16 %v990, %v989
      %v1124 = vpack.c.b16 %v992, %v991
      %v1125 = vpack.c.b16 %v994, %v993
      %v1126 = vpack.c.b16 %v996, %v995
      %v1127 = vpack.c.b16 %v998, %v997
      %v1128 = vpack.c.b16 %v1000, %v999
      %v1129 = vpack.c.b16 %v1002, %v1001
      %v1130 = vpack.c.b16 %v1004, %v1003
      %v1131 = vpack.c.b16 %v1006, %v1005
      %v1132 = vpack.c.b16 %v1008, %v1007
      %v1133 = vpack.c.b16 %v1010, %v1009
      %v1134 = vpack.c.b16 %v1012, %v1011
      %v1135 = vpack.c.b16 %v1014, %v1013
      %v1136 = vpack.c.b16 %v1016, %v1015
      %v1137 = vpack.c.b16 %v1018, %v1017
      %v1138 = vpack.c.b16 %v1020, %v1019
      %v1139 = vpack.c.b16 %v1022, %v1021
      %v1140 = vpack.c.b16 %v1024, %v1023
      %v1141 = vpack.c.b16 %v1026, %v1025
      %v1142 = vpack.c.b16 %v1028, %v1027
      %v1143 = vpack.c.b16 %v1030, %v1029
      %v1144 = vpack.c.b16 %v1032, %v1031
      %v1145 = vpack.c.b16 %v1034, %v1033
      %v1146 = vpack.c.b16 %v1036, %v1035
      %v1147 = vpack.c.b16 %v1038, %v1037
      %v1148 = vpack.c.b16 %v1040, %v1039
      %v1149 = vpack.c.b16 %v1042, %v1041
      %v1150 = vpack.c.b16 %v1044, %v1043
      %v1151 = vpack.c.b16 %v1046, %v1045
      %v1152 = vpack.c.b16 %v1048, %v1047
      %v1153 = vpack.c.b16 %v1050, %v1049
      %v1154 = vpack.c.b16 %v1052, %v1051
      %v1155 = vpack.c.b16 %v1054, %v1053
      %v1156 = vpack.c.b16 %v1056, %v1055
      %v1157 = vpack.c.b16 %v1058, %v1057
      %v1158 = vpack.c.b16 %v1060, %v1059
      %v1159 = vpack.c.b16 %v1062, %v1061
      %v1160 = vpack.c.b16 %v1064, %v1063
      %v1273 = vunpack.c.l.b16 %v661
      %v1274 = vunpack.c.l.b16 %v662
      %v1275 = vunpack.c.l.b16 %v663
      %v1276 = vunpack.c.l.b16 %v664
      %v1277 = vunpack.c.l.b16 %v665
      %v1278 = vunpack.c.l.b16 %v666
      %v1279 = vunpack.c.l.b16 %v667
      %v1280 = vunpack.c.l.b16 %v668
      %v1281 = vunpack.c.l.b16 %v669
      %v1282 = vunpack.c.l.b16 %v670
      %v1283 = vunpack.c.l.b16 %v671
      %v1284 = vunpack.c.l.b16 %v672
      %v1285 = vunpack.c.l.b16 %v673
      %v1286 = vunpack.c.l.b16 %v674
      %v1287 = vunpack.c.l.b16 %v675
      %v1288 = vunpack.c.l.b16 %v676
      %v1289 = vpack.c.b16 %v1274, %v1273
      %v1290 = vpack.c.b16 %v1276, %v1275
      %v1291 = vpack.c.b16 %v1278, %v1277
      %v1292 = vpack.c.b16 %v1280, %v1279
      %v1293 = vpack.c.b16 %v1282, %v1281
      %v1294 = vpack.c.b16 %v1284, %v1283
      %v1295 = vpack.c.b16 %v1286, %v1285
      %v1296 = vpack.c.b16 %v1288, %v1287
      %1305 = vmatpush.bf16.msra.mxu0 %v1296
      %1306 = vmatpush.bf16.msra.mxu0 %v1295
      %1307 = vmatpush.bf16.msra.mxu0 %v1294
      %1308 = vmatpush.bf16.msra.mxu0 %v1293
      %1309 = vmatpush.bf16.msra.mxu0 %v1292
      %1310 = vmatpush.bf16.msra.mxu0 %v1291
      %1311 = vmatpush.bf16.msra.mxu0 %v1290
      %1312 = vmatpush.bf16.msra.mxu0 %v1289
      %1313 = vmatmul.bf16.gmra.mxu0 %v1065
      %v1314 = vpop.f32.mrf.mxu0
      %v1315 = vadd.f32 %v679, %v1314
      %v1316 = vpop.f32.mrf.mxu0
      %v1317 = vadd.f32 %v679, %v1316
      %1318 = vmatmul.bf16.gmra.mxu0 %v1066
      %v1319 = vpop.f32.mrf.mxu0
      %v1320 = vadd.f32 %v679, %v1319
      %v1321 = vpop.f32.mrf.mxu0
      %v1322 = vadd.f32 %v679, %v1321
      %1323 = vmatmul.bf16.gmra.mxu0 %v1067
      %v1324 = vpop.f32.mrf.mxu0
      %v1325 = vadd.f32 %v679, %v1324
      %v1326 = vpop.f32.mrf.mxu0
      %v1327 = vadd.f32 %v679, %v1326
      %1328 = vmatmul.bf16.gmra.mxu0 %v1068
      %v1329 = vpop.f32.mrf.mxu0
      %v1330 = vadd.f32 %v679, %v1329
      %v1331 = vpop.f32.mrf.mxu0
      %v1332 = vadd.f32 %v679, %v1331
      %1333 = vmatmul.bf16.gmra.mxu0 %v1069
      %v1334 = vpop.f32.mrf.mxu0
      %v1335 = vadd.f32 %v679, %v1334
      %v1336 = vpop.f32.mrf.mxu0
      %v1337 = vadd.f32 %v679, %v1336
      %1338 = vmatmul.bf16.gmra.mxu0 %v1070
      %v1339 = vpop.f32.mrf.mxu0
      %v1340 = vadd.f32 %v679, %v1339
      %v1341 = vpop.f32.mrf.mxu0
      %v1342 = vadd.f32 %v679, %v1341
      %1343 = vmatmul.bf16.gmra.mxu0 %v1071
      %v1344 = vpop.f32.mrf.mxu0
      %v1345 = vadd.f32 %v679, %v1344
      %v1346 = vpop.f32.mrf.mxu0
      %v1347 = vadd.f32 %v679, %v1346
      %1348 = vmatmul.bf16.gmra.mxu0 %v1072
      %v1349 = vpop.f32.mrf.mxu0
      %v1350 = vadd.f32 %v679, %v1349
      %v1351 = vpop.f32.mrf.mxu0
      %v1352 = vadd.f32 %v679, %v1351
      %1353 = vmatmul.bf16.gmra.mxu0 %v1073
      %v1354 = vpop.f32.mrf.mxu0
      %v1355 = vadd.f32 %v679, %v1354
      %v1356 = vpop.f32.mrf.mxu0
      %v1357 = vadd.f32 %v679, %v1356
      %1358 = vmatmul.bf16.gmra.mxu0 %v1074
      %v1359 = vpop.f32.mrf.mxu0
      %v1360 = vadd.f32 %v679, %v1359
      %v1361 = vpop.f32.mrf.mxu0
      %v1362 = vadd.f32 %v679, %v1361
      %1363 = vmatmul.bf16.gmra.mxu0 %v1075
      %v1364 = vpop.f32.mrf.mxu0
      %v1365 = vadd.f32 %v679, %v1364
      %v1366 = vpop.f32.mrf.mxu0
      %v1367 = vadd.f32 %v679, %v1366
      %1368 = vmatmul.bf16.gmra.mxu0 %v1076
      %v1369 = vpop.f32.mrf.mxu0
      %v1370 = vadd.f32 %v679, %v1369
      %v1371 = vpop.f32.mrf.mxu0
      %v1372 = vadd.f32 %v679, %v1371
      %1373 = vmatmul.bf16.gmra.mxu0 %v1077
      %v1374 = vpop.f32.mrf.mxu0
      %v1375 = vadd.f32 %v679, %v1374
      %v1376 = vpop.f32.mrf.mxu0
      %v1377 = vadd.f32 %v679, %v1376
      %1378 = vmatmul.bf16.gmra.mxu0 %v1078
      %v1379 = vpop.f32.mrf.mxu0
      %v1380 = vadd.f32 %v679, %v1379
      %v1381 = vpop.f32.mrf.mxu0
      %v1382 = vadd.f32 %v679, %v1381
      %1383 = vmatmul.bf16.gmra.mxu0 %v1079
      %v1384 = vpop.f32.mrf.mxu0
      %v1385 = vadd.f32 %v679, %v1384
      %v1386 = vpop.f32.mrf.mxu0
      %v1387 = vadd.f32 %v679, %v1386
      %1388 = vmatmul.bf16.gmra.mxu0 %v1080
      %v1389 = vpop.f32.mrf.mxu0
      %v1390 = vadd.f32 %v679, %v1389
      %v1391 = vpop.f32.mrf.mxu0
      %v1392 = vadd.f32 %v679, %v1391
      %1393 = vmatmul.bf16.gmra.mxu0 %v1081
      %v1394 = vpop.f32.mrf.mxu0
      %v1395 = vadd.f32 %v679, %v1394
      %v1396 = vpop.f32.mrf.mxu0
      %v1397 = vadd.f32 %v679, %v1396
      %1398 = vmatmul.bf16.gmra.mxu0 %v1082
      %v1399 = vpop.f32.mrf.mxu0
      %v1400 = vadd.f32 %v679, %v1399
      %v1401 = vpop.f32.mrf.mxu0
      %v1402 = vadd.f32 %v679, %v1401
      %1403 = vmatmul.bf16.gmra.mxu0 %v1083
      %v1404 = vpop.f32.mrf.mxu0
      %v1405 = vadd.f32 %v679, %v1404
      %v1406 = vpop.f32.mrf.mxu0
      %v1407 = vadd.f32 %v679, %v1406
      %1408 = vmatmul.bf16.gmra.mxu0 %v1084
      %v1409 = vpop.f32.mrf.mxu0
      %v1410 = vadd.f32 %v679, %v1409
      %v1411 = vpop.f32.mrf.mxu0
      %v1412 = vadd.f32 %v679, %v1411
      %1413 = vmatmul.bf16.gmra.mxu0 %v1085
      %v1414 = vpop.f32.mrf.mxu0
      %v1415 = vadd.f32 %v679, %v1414
      %v1416 = vpop.f32.mrf.mxu0
      %v1417 = vadd.f32 %v679, %v1416
      %1418 = vmatmul.bf16.gmra.mxu0 %v1086
      %v1419 = vpop.f32.mrf.mxu0
      %v1420 = vadd.f32 %v679, %v1419
      %v1421 = vpop.f32.mrf.mxu0
      %v1422 = vadd.f32 %v679, %v1421
      %1423 = vmatmul.bf16.gmra.mxu0 %v1087
      %v1424 = vpop.f32.mrf.mxu0
      %v1425 = vadd.f32 %v679, %v1424
      %v1426 = vpop.f32.mrf.mxu0
      %v1427 = vadd.f32 %v679, %v1426
      %1428 = vmatmul.bf16.gmra.mxu0 %v1088
      %v1429 = vpop.f32.mrf.mxu0
      %v1430 = vadd.f32 %v679, %v1429
      %v1431 = vpop.f32.mrf.mxu0
      %v1432 = vadd.f32 %v679, %v1431
      %1433 = vmatmul.bf16.gmra.mxu0 %v1089
      %v1434 = vpop.f32.mrf.mxu0
      %v1435 = vadd.f32 %v679, %v1434
      %v1436 = vpop.f32.mrf.mxu0
      %v1437 = vadd.f32 %v679, %v1436
      %1438 = vmatmul.bf16.gmra.mxu0 %v1090
      %v1439 = vpop.f32.mrf.mxu0
      %v1440 = vadd.f32 %v679, %v1439
      %v1441 = vpop.f32.mrf.mxu0
      %v1442 = vadd.f32 %v679, %v1441
      %1443 = vmatmul.bf16.gmra.mxu0 %v1091
      %v1444 = vpop.f32.mrf.mxu0
      %v1445 = vadd.f32 %v679, %v1444
      %v1446 = vpop.f32.mrf.mxu0
      %v1447 = vadd.f32 %v679, %v1446
      %1448 = vmatmul.bf16.gmra.mxu0 %v1092
      %v1449 = vpop.f32.mrf.mxu0
      %v1450 = vadd.f32 %v679, %v1449
      %v1451 = vpop.f32.mrf.mxu0
      %v1452 = vadd.f32 %v679, %v1451
      %1453 = vmatmul.bf16.gmra.mxu0 %v1093
      %v1454 = vpop.f32.mrf.mxu0
      %v1455 = vadd.f32 %v679, %v1454
      %v1456 = vpop.f32.mrf.mxu0
      %v1457 = vadd.f32 %v679, %v1456
      %1458 = vmatmul.bf16.gmra.mxu0 %v1094
      %v1459 = vpop.f32.mrf.mxu0
      %v1460 = vadd.f32 %v679, %v1459
      %v1461 = vpop.f32.mrf.mxu0
      %v1462 = vadd.f32 %v679, %v1461
      %1463 = vmatmul.bf16.gmra.mxu0 %v1095
      %v1464 = vpop.f32.mrf.mxu0
      %v1465 = vadd.f32 %v679, %v1464
      %v1466 = vpop.f32.mrf.mxu0
      %v1467 = vadd.f32 %v679, %v1466
      %1468 = vmatmul.bf16.gmra.mxu0 %v1096
      %v1469 = vpop.f32.mrf.mxu0
      %v1470 = vadd.f32 %v679, %v1469
      %v1471 = vpop.f32.mrf.mxu0
      %v1472 = vadd.f32 %v679, %v1471
      %1473 = vmatmul.bf16.gmra.mxu0 %v1097
      %v1474 = vpop.f32.mrf.mxu0
      %v1475 = vadd.f32 %v679, %v1474
      %v1476 = vpop.f32.mrf.mxu0
      %v1477 = vadd.f32 %v679, %v1476
      %1478 = vmatmul.bf16.gmra.mxu0 %v1098
      %v1479 = vpop.f32.mrf.mxu0
      %v1480 = vadd.f32 %v679, %v1479
      %v1481 = vpop.f32.mrf.mxu0
      %v1482 = vadd.f32 %v679, %v1481
      %1483 = vmatmul.bf16.gmra.mxu0 %v1099
      %v1484 = vpop.f32.mrf.mxu0
      %v1485 = vadd.f32 %v679, %v1484
      %v1486 = vpop.f32.mrf.mxu0
      %v1487 = vadd.f32 %v679, %v1486
      %1488 = vmatmul.bf16.gmra.mxu0 %v1100
      %v1489 = vpop.f32.mrf.mxu0
      %v1490 = vadd.f32 %v679, %v1489
      %v1491 = vpop.f32.mrf.mxu0
      %v1492 = vadd.f32 %v679, %v1491
      %1493 = vmatmul.bf16.gmra.mxu0 %v1101
      %v1494 = vpop.f32.mrf.mxu0
      %v1495 = vadd.f32 %v679, %v1494
      %v1496 = vpop.f32.mrf.mxu0
      %v1497 = vadd.f32 %v679, %v1496
      %1498 = vmatmul.bf16.gmra.mxu0 %v1102
      %v1499 = vpop.f32.mrf.mxu0
      %v1500 = vadd.f32 %v679, %v1499
      %v1501 = vpop.f32.mrf.mxu0
      %v1502 = vadd.f32 %v679, %v1501
      %1503 = vmatmul.bf16.gmra.mxu0 %v1103
      %v1504 = vpop.f32.mrf.mxu0
      %v1505 = vadd.f32 %v679, %v1504
      %v1506 = vpop.f32.mrf.mxu0
      %v1507 = vadd.f32 %v679, %v1506
      %1508 = vmatmul.bf16.gmra.mxu0 %v1104
      %v1509 = vpop.f32.mrf.mxu0
      %v1510 = vadd.f32 %v679, %v1509
      %v1511 = vpop.f32.mrf.mxu0
      %v1512 = vadd.f32 %v679, %v1511
      %1513 = vmatmul.bf16.gmra.mxu0 %v1105
      %v1514 = vpop.f32.mrf.mxu0
      %v1515 = vadd.f32 %v679, %v1514
      %v1516 = vpop.f32.mrf.mxu0
      %v1517 = vadd.f32 %v679, %v1516
      %1518 = vmatmul.bf16.gmra.mxu0 %v1106
      %v1519 = vpop.f32.mrf.mxu0
      %v1520 = vadd.f32 %v679, %v1519
      %v1521 = vpop.f32.mrf.mxu0
      %v1522 = vadd.f32 %v679, %v1521
      %1523 = vmatmul.bf16.gmra.mxu0 %v1107
      %v1524 = vpop.f32.mrf.mxu0
      %v1525 = vadd.f32 %v679, %v1524
      %v1526 = vpop.f32.mrf.mxu0
      %v1527 = vadd.f32 %v679, %v1526
      %1528 = vmatmul.bf16.gmra.mxu0 %v1108
      %v1529 = vpop.f32.mrf.mxu0
      %v1530 = vadd.f32 %v679, %v1529
      %v1531 = vpop.f32.mrf.mxu0
      %v1532 = vadd.f32 %v679, %v1531
      %1533 = vmatmul.bf16.gmra.mxu0 %v1109
      %v1534 = vpop.f32.mrf.mxu0
      %v1535 = vadd.f32 %v679, %v1534
      %v1536 = vpop.f32.mrf.mxu0
      %v1537 = vadd.f32 %v679, %v1536
      %1538 = vmatmul.bf16.gmra.mxu0 %v1110
      %v1539 = vpop.f32.mrf.mxu0
      %v1540 = vadd.f32 %v679, %v1539
      %v1541 = vpop.f32.mrf.mxu0
      %v1542 = vadd.f32 %v679, %v1541
      %1543 = vmatmul.bf16.gmra.mxu0 %v1111
      %v1544 = vpop.f32.mrf.mxu0
      %v1545 = vadd.f32 %v679, %v1544
      %v1546 = vpop.f32.mrf.mxu0
      %v1547 = vadd.f32 %v679, %v1546
      %1548 = vmatmul.bf16.gmra.mxu0 %v1112
      %v1549 = vpop.f32.mrf.mxu0
      %v1550 = vadd.f32 %v679, %v1549
      %v1551 = vpop.f32.mrf.mxu0
      %v1552 = vadd.f32 %v679, %v1551
      %1553 = vmatmul.bf16.gmra.mxu0 %v1113
      %v1554 = vpop.f32.mrf.mxu0
      %v1555 = vadd.f32 %v679, %v1554
      %v1556 = vpop.f32.mrf.mxu0
      %v1557 = vadd.f32 %v679, %v1556
      %1558 = vmatmul.bf16.gmra.mxu0 %v1114
      %v1559 = vpop.f32.mrf.mxu0
      %v1560 = vadd.f32 %v679, %v1559
      %v1561 = vpop.f32.mrf.mxu0
      %v1562 = vadd.f32 %v679, %v1561
      %1563 = vmatmul.bf16.gmra.mxu0 %v1115
      %v1564 = vpop.f32.mrf.mxu0
      %v1565 = vadd.f32 %v679, %v1564
      %v1566 = vpop.f32.mrf.mxu0
      %v1567 = vadd.f32 %v679, %v1566
      %1568 = vmatmul.bf16.gmra.mxu0 %v1116
      %v1569 = vpop.f32.mrf.mxu0
      %v1570 = vadd.f32 %v679, %v1569
      %v1571 = vpop.f32.mrf.mxu0
      %v1572 = vadd.f32 %v679, %v1571
      %1573 = vmatmul.bf16.gmra.mxu0 %v1117
      %v1574 = vpop.f32.mrf.mxu0
      %v1575 = vadd.f32 %v679, %v1574
      %v1576 = vpop.f32.mrf.mxu0
      %v1577 = vadd.f32 %v679, %v1576
      %1578 = vmatmul.bf16.gmra.mxu0 %v1118
      %v1579 = vpop.f32.mrf.mxu0
      %v1580 = vadd.f32 %v679, %v1579
      %v1581 = vpop.f32.mrf.mxu0
      %v1582 = vadd.f32 %v679, %v1581
      %1583 = vmatmul.bf16.gmra.mxu0 %v1119
      %v1584 = vpop.f32.mrf.mxu0
      %v1585 = vadd.f32 %v679, %v1584
      %v1586 = vpop.f32.mrf.mxu0
      %v1587 = vadd.f32 %v679, %v1586
      %1588 = vmatmul.bf16.gmra.mxu0 %v1120
      %v1589 = vpop.f32.mrf.mxu0
      %v1590 = vadd.f32 %v679, %v1589
      %v1591 = vpop.f32.mrf.mxu0
      %v1592 = vadd.f32 %v679, %v1591
      %1593 = vmatmul.bf16.gmra.mxu0 %v1121
      %v1594 = vpop.f32.mrf.mxu0
      %v1595 = vadd.f32 %v679, %v1594
      %v1596 = vpop.f32.mrf.mxu0
      %v1597 = vadd.f32 %v679, %v1596
      %1598 = vmatmul.bf16.gmra.mxu0 %v1122
      %v1599 = vpop.f32.mrf.mxu0
      %v1600 = vadd.f32 %v679, %v1599
      %v1601 = vpop.f32.mrf.mxu0
      %v1602 = vadd.f32 %v679, %v1601
      %1603 = vmatmul.bf16.gmra.mxu0 %v1123
      %v1604 = vpop.f32.mrf.mxu0
      %v1605 = vadd.f32 %v679, %v1604
      %v1606 = vpop.f32.mrf.mxu0
      %v1607 = vadd.f32 %v679, %v1606
      %1608 = vmatmul.bf16.gmra.mxu0 %v1124
      %v1609 = vpop.f32.mrf.mxu0
      %v1610 = vadd.f32 %v679, %v1609
      %v1611 = vpop.f32.mrf.mxu0
      %v1612 = vadd.f32 %v679, %v1611
      %1613 = vmatmul.bf16.gmra.mxu0 %v1125
      %v1614 = vpop.f32.mrf.mxu0
      %v1615 = vadd.f32 %v679, %v1614
      %v1616 = vpop.f32.mrf.mxu0
      %v1617 = vadd.f32 %v679, %v1616
      %1618 = vmatmul.bf16.gmra.mxu0 %v1126
      %v1619 = vpop.f32.mrf.mxu0
      %v1620 = vadd.f32 %v679, %v1619
      %v1621 = vpop.f32.mrf.mxu0
      %v1622 = vadd.f32 %v679, %v1621
      %1623 = vmatmul.bf16.gmra.mxu0 %v1127
      %v1624 = vpop.f32.mrf.mxu0
      %v1625 = vadd.f32 %v679, %v1624
      %v1626 = vpop.f32.mrf.mxu0
      %v1627 = vadd.f32 %v679, %v1626
      %1628 = vmatmul.bf16.gmra.mxu0 %v1128
      %v1629 = vpop.f32.mrf.mxu0
      %v1630 = vadd.f32 %v679, %v1629
      %v1631 = vpop.f32.mrf.mxu0
      %v1632 = vadd.f32 %v679, %v1631
      %1633 = vmatmul.bf16.gmra.mxu0 %v1129
      %v1634 = vpop.f32.mrf.mxu0
      %v1635 = vadd.f32 %v679, %v1634
      %v1636 = vpop.f32.mrf.mxu0
      %v1637 = vadd.f32 %v679, %v1636
      %1638 = vmatmul.bf16.gmra.mxu0 %v1130
      %v1639 = vpop.f32.mrf.mxu0
      %v1640 = vadd.f32 %v679, %v1639
      %v1641 = vpop.f32.mrf.mxu0
      %v1642 = vadd.f32 %v679, %v1641
      %1643 = vmatmul.bf16.gmra.mxu0 %v1131
      %v1644 = vpop.f32.mrf.mxu0
      %v1645 = vadd.f32 %v679, %v1644
      %v1646 = vpop.f32.mrf.mxu0
      %v1647 = vadd.f32 %v679, %v1646
      %1648 = vmatmul.bf16.gmra.mxu0 %v1132
      %v1649 = vpop.f32.mrf.mxu0
      %v1650 = vadd.f32 %v679, %v1649
      %v1651 = vpop.f32.mrf.mxu0
      %v1652 = vadd.f32 %v679, %v1651
      %1653 = vmatmul.bf16.gmra.mxu0 %v1133
      %v1654 = vpop.f32.mrf.mxu0
      %v1655 = vadd.f32 %v679, %v1654
      %v1656 = vpop.f32.mrf.mxu0
      %v1657 = vadd.f32 %v679, %v1656
      %1658 = vmatmul.bf16.gmra.mxu0 %v1134
      %v1659 = vpop.f32.mrf.mxu0
      %v1660 = vadd.f32 %v679, %v1659
      %v1661 = vpop.f32.mrf.mxu0
      %v1662 = vadd.f32 %v679, %v1661
      %1663 = vmatmul.bf16.gmra.mxu0 %v1135
      %v1664 = vpop.f32.mrf.mxu0
      %v1665 = vadd.f32 %v679, %v1664
      %v1666 = vpop.f32.mrf.mxu0
      %v1667 = vadd.f32 %v679, %v1666
      %1668 = vmatmul.bf16.gmra.mxu0 %v1136
      %v1669 = vpop.f32.mrf.mxu0
      %v1670 = vadd.f32 %v679, %v1669
      %v1671 = vpop.f32.mrf.mxu0
      %v1672 = vadd.f32 %v679, %v1671
      %1673 = vmatmul.bf16.gmra.mxu0 %v1137
      %v1674 = vpop.f32.mrf.mxu0
      %v1675 = vadd.f32 %v679, %v1674
      %v1676 = vpop.f32.mrf.mxu0
      %v1677 = vadd.f32 %v679, %v1676
      %1678 = vmatmul.bf16.gmra.mxu0 %v1138
      %v1679 = vpop.f32.mrf.mxu0
      %v1680 = vadd.f32 %v679, %v1679
      %v1681 = vpop.f32.mrf.mxu0
      %v1682 = vadd.f32 %v679, %v1681
      %1683 = vmatmul.bf16.gmra.mxu0 %v1139
      %v1684 = vpop.f32.mrf.mxu0
      %v1685 = vadd.f32 %v679, %v1684
      %v1686 = vpop.f32.mrf.mxu0
      %v1687 = vadd.f32 %v679, %v1686
      %1688 = vmatmul.bf16.gmra.mxu0 %v1140
      %v1689 = vpop.f32.mrf.mxu0
      %v1690 = vadd.f32 %v679, %v1689
      %v1691 = vpop.f32.mrf.mxu0
      %v1692 = vadd.f32 %v679, %v1691
      %1693 = vmatmul.bf16.gmra.mxu0 %v1141
      %v1694 = vpop.f32.mrf.mxu0
      %v1695 = vadd.f32 %v679, %v1694
      %v1696 = vpop.f32.mrf.mxu0
      %v1697 = vadd.f32 %v679, %v1696
      %1698 = vmatmul.bf16.gmra.mxu0 %v1142
      %v1699 = vpop.f32.mrf.mxu0
      %v1700 = vadd.f32 %v679, %v1699
      %v1701 = vpop.f32.mrf.mxu0
      %v1702 = vadd.f32 %v679, %v1701
      %1703 = vmatmul.bf16.gmra.mxu0 %v1143
      %v1704 = vpop.f32.mrf.mxu0
      %v1705 = vadd.f32 %v679, %v1704
      %v1706 = vpop.f32.mrf.mxu0
      %v1707 = vadd.f32 %v679, %v1706
      %1708 = vmatmul.bf16.gmra.mxu0 %v1144
      %v1709 = vpop.f32.mrf.mxu0
      %v1710 = vadd.f32 %v679, %v1709
      %v1711 = vpop.f32.mrf.mxu0
      %v1712 = vadd.f32 %v679, %v1711
      %1713 = vmatmul.bf16.gmra.mxu0 %v1145
      %v1714 = vpop.f32.mrf.mxu0
      %v1715 = vadd.f32 %v679, %v1714
      %v1716 = vpop.f32.mrf.mxu0
      %v1717 = vadd.f32 %v679, %v1716
      %1718 = vmatmul.bf16.gmra.mxu0 %v1146
      %v1719 = vpop.f32.mrf.mxu0
      %v1720 = vadd.f32 %v679, %v1719
      %v1721 = vpop.f32.mrf.mxu0
      %v1722 = vadd.f32 %v679, %v1721
      %1723 = vmatmul.bf16.gmra.mxu0 %v1147
      %v1724 = vpop.f32.mrf.mxu0
      %v1725 = vadd.f32 %v679, %v1724
      %v1726 = vpop.f32.mrf.mxu0
      %v1727 = vadd.f32 %v679, %v1726
      %1728 = vmatmul.bf16.gmra.mxu0 %v1148
      %v1729 = vpop.f32.mrf.mxu0
      %v1730 = vadd.f32 %v679, %v1729
      %v1731 = vpop.f32.mrf.mxu0
      %v1732 = vadd.f32 %v679, %v1731
      %1733 = vmatmul.bf16.gmra.mxu0 %v1149
      %v1734 = vpop.f32.mrf.mxu0
      %v1735 = vadd.f32 %v679, %v1734
      %v1736 = vpop.f32.mrf.mxu0
      %v1737 = vadd.f32 %v679, %v1736
      %1738 = vmatmul.bf16.gmra.mxu0 %v1150
      %v1739 = vpop.f32.mrf.mxu0
      %v1740 = vadd.f32 %v679, %v1739
      %v1741 = vpop.f32.mrf.mxu0
      %v1742 = vadd.f32 %v679, %v1741
      %1743 = vmatmul.bf16.gmra.mxu0 %v1151
      %v1744 = vpop.f32.mrf.mxu0
      %v1745 = vadd.f32 %v679, %v1744
      %v1746 = vpop.f32.mrf.mxu0
      %v1747 = vadd.f32 %v679, %v1746
      %1748 = vmatmul.bf16.gmra.mxu0 %v1152
      %v1749 = vpop.f32.mrf.mxu0
      %v1750 = vadd.f32 %v679, %v1749
      %v1751 = vpop.f32.mrf.mxu0
      %v1752 = vadd.f32 %v679, %v1751
      %1753 = vmatmul.bf16.gmra.mxu0 %v1153
      %v1754 = vpop.f32.mrf.mxu0
      %v1755 = vadd.f32 %v679, %v1754
      %v1756 = vpop.f32.mrf.mxu0
      %v1757 = vadd.f32 %v679, %v1756
      %1758 = vmatmul.bf16.gmra.mxu0 %v1154
      %v1759 = vpop.f32.mrf.mxu0
      %v1760 = vadd.f32 %v679, %v1759
      %v1761 = vpop.f32.mrf.mxu0
      %v1762 = vadd.f32 %v679, %v1761
      %1763 = vmatmul.bf16.gmra.mxu0 %v1155
      %v1764 = vpop.f32.mrf.mxu0
      %v1765 = vadd.f32 %v679, %v1764
      %v1766 = vpop.f32.mrf.mxu0
      %v1767 = vadd.f32 %v679, %v1766
      %1768 = vmatmul.bf16.gmra.mxu0 %v1156
      %v1769 = vpop.f32.mrf.mxu0
      %v1770 = vadd.f32 %v679, %v1769
      %v1771 = vpop.f32.mrf.mxu0
      %v1772 = vadd.f32 %v679, %v1771
      %1773 = vmatmul.bf16.gmra.mxu0 %v1157
      %v1774 = vpop.f32.mrf.mxu0
      %v1775 = vadd.f32 %v679, %v1774
      %v1776 = vpop.f32.mrf.mxu0
      %v1777 = vadd.f32 %v679, %v1776
      %1778 = vmatmul.bf16.gmra.mxu0 %v1158
      %v1779 = vpop.f32.mrf.mxu0
      %v1780 = vadd.f32 %v679, %v1779
      %v1781 = vpop.f32.mrf.mxu0
      %v1782 = vadd.f32 %v679, %v1781
      %1783 = vmatmul.bf16.gmra.mxu0 %v1159
      %v1784 = vpop.f32.mrf.mxu0
      %v1785 = vadd.f32 %v679, %v1784
      %v1786 = vpop.f32.mrf.mxu0
      %v1787 = vadd.f32 %v679, %v1786
      %1788 = vmatmul.bf16.gmra.mxu0 %v1160
      %v1789 = vpop.f32.mrf.mxu0
      %v1790 = vadd.f32 %v679, %v1789
      %v1791 = vpop.f32.mrf.mxu0
      %v1792 = vadd.f32 %v679, %v1791
      %1793 = vdwg.mxu0
      %v1794 = vmax.f32 %v1315, 0.0
      %v1795 = vmax.f32 %v1317, 0.0
      %v1796 = vmax.f32 %v1320, 0.0
      %v1797 = vmax.f32 %v1322, 0.0
      %v1798 = vmax.f32 %v1325, 0.0
      %v1799 = vmax.f32 %v1327, 0.0
      %v1800 = vmax.f32 %v1330, 0.0
      %v1801 = vmax.f32 %v1332, 0.0
      %v1802 = vmax.f32 %v1335, 0.0
      %v1803 = vmax.f32 %v1337, 0.0
      %v1804 = vmax.f32 %v1340, 0.0
      %v1805 = vmax.f32 %v1342, 0.0
      %v1806 = vmax.f32 %v1345, 0.0
      %v1807 = vmax.f32 %v1347, 0.0
      %v1808 = vmax.f32 %v1350, 0.0
      %v1809 = vmax.f32 %v1352, 0.0
      %v1810 = vmax.f32 %v1355, 0.0
      %v1811 = vmax.f32 %v1357, 0.0
      %v1812 = vmax.f32 %v1360, 0.0
      %v1813 = vmax.f32 %v1362, 0.0
      %v1814 = vmax.f32 %v1365, 0.0
      %v1815 = vmax.f32 %v1367, 0.0
      %v1816 = vmax.f32 %v1370, 0.0
      %v1817 = vmax.f32 %v1372, 0.0
      %v1818 = vmax.f32 %v1375, 0.0
      %v1819 = vmax.f32 %v1377, 0.0
      %v1820 = vmax.f32 %v1380, 0.0
      %v1821 = vmax.f32 %v1382, 0.0
      %v1822 = vmax.f32 %v1385, 0.0
      %v1823 = vmax.f32 %v1387, 0.0
      %v1824 = vmax.f32 %v1390, 0.0
      %v1825 = vmax.f32 %v1392, 0.0
      %v1826 = vmax.f32 %v1395, 0.0
      %v1827 = vmax.f32 %v1397, 0.0
      %v1828 = vmax.f32 %v1400, 0.0
      %v1829 = vmax.f32 %v1402, 0.0
      %v1830 = vmax.f32 %v1405, 0.0
      %v1831 = vmax.f32 %v1407, 0.0
      %v1832 = vmax.f32 %v1410, 0.0
      %v1833 = vmax.f32 %v1412, 0.0
      %v1834 = vmax.f32 %v1415, 0.0
      %v1835 = vmax.f32 %v1417, 0.0
      %v1836 = vmax.f32 %v1420, 0.0
      %v1837 = vmax.f32 %v1422, 0.0
      %v1838 = vmax.f32 %v1425, 0.0
      %v1839 = vmax.f32 %v1427, 0.0
      %v1840 = vmax.f32 %v1430, 0.0
      %v1841 = vmax.f32 %v1432, 0.0
      %v1842 = vmax.f32 %v1435, 0.0
      %v1843 = vmax.f32 %v1437, 0.0
      %v1844 = vmax.f32 %v1440, 0.0
      %v1845 = vmax.f32 %v1442, 0.0
      %v1846 = vmax.f32 %v1445, 0.0
      %v1847 = vmax.f32 %v1447, 0.0
      %v1848 = vmax.f32 %v1450, 0.0
      %v1849 = vmax.f32 %v1452, 0.0
      %v1850 = vmax.f32 %v1455, 0.0
      %v1851 = vmax.f32 %v1457, 0.0
      %v1852 = vmax.f32 %v1460, 0.0
      %v1853 = vmax.f32 %v1462, 0.0
      %v1854 = vmax.f32 %v1465, 0.0
      %v1855 = vmax.f32 %v1467, 0.0
      %v1856 = vmax.f32 %v1470, 0.0
      %v1857 = vmax.f32 %v1472, 0.0
      %v1858 = vmax.f32 %v1475, 0.0
      %v1859 = vmax.f32 %v1477, 0.0
      %v1860 = vmax.f32 %v1480, 0.0
      %v1861 = vmax.f32 %v1482, 0.0
      %v1862 = vmax.f32 %v1485, 0.0
      %v1863 = vmax.f32 %v1487, 0.0
      %v1864 = vmax.f32 %v1490, 0.0
      %v1865 = vmax.f32 %v1492, 0.0
      %v1866 = vmax.f32 %v1495, 0.0
      %v1867 = vmax.f32 %v1497, 0.0
      %v1868 = vmax.f32 %v1500, 0.0
      %v1869 = vmax.f32 %v1502, 0.0
      %v1870 = vmax.f32 %v1505, 0.0
      %v1871 = vmax.f32 %v1507, 0.0
      %v1872 = vmax.f32 %v1510, 0.0
      %v1873 = vmax.f32 %v1512, 0.0
      %v1874 = vmax.f32 %v1515, 0.0
      %v1875 = vmax.f32 %v1517, 0.0
      %v1876 = vmax.f32 %v1520, 0.0
      %v1877 = vmax.f32 %v1522, 0.0
      %v1878 = vmax.f32 %v1525, 0.0
      %v1879 = vmax.f32 %v1527, 0.0
      %v1880 = vmax.f32 %v1530, 0.0
      %v1881 = vmax.f32 %v1532, 0.0
      %v1882 = vmax.f32 %v1535, 0.0
      %v1883 = vmax.f32 %v1537, 0.0
      %v1884 = vmax.f32 %v1540, 0.0
      %v1885 = vmax.f32 %v1542, 0.0
      %v1886 = vmax.f32 %v1545, 0.0
      %v1887 = vmax.f32 %v1547, 0.0
      %v1888 = vmax.f32 %v1550, 0.0
      %v1889 = vmax.f32 %v1552, 0.0
      %v1890 = vmax.f32 %v1555, 0.0
      %v1891 = vmax.f32 %v1557, 0.0
      %v1892 = vmax.f32 %v1560, 0.0
      %v1893 = vmax.f32 %v1562, 0.0
      %v1894 = vmax.f32 %v1565, 0.0
      %v1895 = vmax.f32 %v1567, 0.0
      %v1896 = vmax.f32 %v1570, 0.0
      %v1897 = vmax.f32 %v1572, 0.0
      %v1898 = vmax.f32 %v1575, 0.0
      %v1899 = vmax.f32 %v1577, 0.0
      %v1900 = vmax.f32 %v1580, 0.0
      %v1901 = vmax.f32 %v1582, 0.0
      %v1902 = vmax.f32 %v1585, 0.0
      %v1903 = vmax.f32 %v1587, 0.0
      %v1904 = vmax.f32 %v1590, 0.0
      %v1905 = vmax.f32 %v1592, 0.0
      %v1906 = vmax.f32 %v1595, 0.0
      %v1907 = vmax.f32 %v1597, 0.0
      %v1908 = vmax.f32 %v1600, 0.0
      %v1909 = vmax.f32 %v1602, 0.0
      %v1910 = vmax.f32 %v1605, 0.0
      %v1911 = vmax.f32 %v1607, 0.0
      %v1912 = vmax.f32 %v1610, 0.0
      %v1913 = vmax.f32 %v1612, 0.0
      %v1914 = vmax.f32 %v1615, 0.0
      %v1915 = vmax.f32 %v1617, 0.0
      %v1916 = vmax.f32 %v1620, 0.0
      %v1917 = vmax.f32 %v1622, 0.0
      %v1918 = vmax.f32 %v1625, 0.0
      %v1919 = vmax.f32 %v1627, 0.0
      %v1920 = vmax.f32 %v1630, 0.0
      %v1921 = vmax.f32 %v1632, 0.0
      %v1922 = vmax.f32 %v1635, 0.0
      %v1923 = vmax.f32 %v1637, 0.0
      %v1924 = vmax.f32 %v1640, 0.0
      %v1925 = vmax.f32 %v1642, 0.0
      %v1926 = vmax.f32 %v1645, 0.0
      %v1927 = vmax.f32 %v1647, 0.0
      %v1928 = vmax.f32 %v1650, 0.0
      %v1929 = vmax.f32 %v1652, 0.0
      %v1930 = vmax.f32 %v1655, 0.0
      %v1931 = vmax.f32 %v1657, 0.0
      %v1932 = vmax.f32 %v1660, 0.0
      %v1933 = vmax.f32 %v1662, 0.0
      %v1934 = vmax.f32 %v1665, 0.0
      %v1935 = vmax.f32 %v1667, 0.0
      %v1936 = vmax.f32 %v1670, 0.0
      %v1937 = vmax.f32 %v1672, 0.0
      %v1938 = vmax.f32 %v1675, 0.0
      %v1939 = vmax.f32 %v1677, 0.0
      %v1940 = vmax.f32 %v1680, 0.0
      %v1941 = vmax.f32 %v1682, 0.0
      %v1942 = vmax.f32 %v1685, 0.0
      %v1943 = vmax.f32 %v1687, 0.0
      %v1944 = vmax.f32 %v1690, 0.0
      %v1945 = vmax.f32 %v1692, 0.0
      %v1946 = vmax.f32 %v1695, 0.0
      %v1947 = vmax.f32 %v1697, 0.0
      %v1948 = vmax.f32 %v1700, 0.0
      %v1949 = vmax.f32 %v1702, 0.0
      %v1950 = vmax.f32 %v1705, 0.0
      %v1951 = vmax.f32 %v1707, 0.0
      %v1952 = vmax.f32 %v1710, 0.0
      %v1953 = vmax.f32 %v1712, 0.0
      %v1954 = vmax.f32 %v1715, 0.0
      %v1955 = vmax.f32 %v1717, 0.0
      %v1956 = vmax.f32 %v1720, 0.0
      %v1957 = vmax.f32 %v1722, 0.0
      %v1958 = vmax.f32 %v1725, 0.0
      %v1959 = vmax.f32 %v1727, 0.0
      %v1960 = vmax.f32 %v1730, 0.0
      %v1961 = vmax.f32 %v1732, 0.0
      %v1962 = vmax.f32 %v1735, 0.0
      %v1963 = vmax.f32 %v1737, 0.0
      %v1964 = vmax.f32 %v1740, 0.0
      %v1965 = vmax.f32 %v1742, 0.0
      %v1966 = vmax.f32 %v1745, 0.0
      %v1967 = vmax.f32 %v1747, 0.0
      %v1968 = vmax.f32 %v1750, 0.0
      %v1969 = vmax.f32 %v1752, 0.0
      %v1970 = vmax.f32 %v1755, 0.0
      %v1971 = vmax.f32 %v1757, 0.0
      %v1972 = vmax.f32 %v1760, 0.0
      %v1973 = vmax.f32 %v1762, 0.0
      %v1974 = vmax.f32 %v1765, 0.0
      %v1975 = vmax.f32 %v1767, 0.0
      %v1976 = vmax.f32 %v1770, 0.0
      %v1977 = vmax.f32 %v1772, 0.0
      %v1978 = vmax.f32 %v1775, 0.0
      %v1979 = vmax.f32 %v1777, 0.0
      %v1980 = vmax.f32 %v1780, 0.0
      %v1981 = vmax.f32 %v1782, 0.0
      %v1982 = vmax.f32 %v1785, 0.0
      %v1983 = vmax.f32 %v1787, 0.0
      %v1984 = vmax.f32 %v1790, 0.0
      %v1985 = vmax.f32 %v1792, 0.0
      %v1986 = vmax.f32 %v1794, %v1842
      %v1987 = vmax.f32 %v1795, %v1843
      %v1988 = vmax.f32 %v1796, %v1844
      %v1989 = vmax.f32 %v1797, %v1845
      %v1990 = vmax.f32 %v1798, %v1846
      %v1991 = vmax.f32 %v1799, %v1847
      %v1992 = vmax.f32 %v1800, %v1848
      %v1993 = vmax.f32 %v1801, %v1849
      %v1994 = vmax.f32 %v1802, %v1850
      %v1995 = vmax.f32 %v1803, %v1851
      %v1996 = vmax.f32 %v1804, %v1852
      %v1997 = vmax.f32 %v1805, %v1853
      %v1998 = vmax.f32 %v1806, %v1854
      %v1999 = vmax.f32 %v1807, %v1855
      %v2000 = vmax.f32 %v1808, %v1856
      %v2001 = vmax.f32 %v1809, %v1857
      %v2002 = vmax.f32 %v1810, %v1858
      %v2003 = vmax.f32 %v1811, %v1859
      %v2004 = vmax.f32 %v1812, %v1860
      %v2005 = vmax.f32 %v1813, %v1861
      %v2006 = vmax.f32 %v1814, %v1862
      %v2007 = vmax.f32 %v1815, %v1863
      %v2008 = vmax.f32 %v1816, %v1864
      %v2009 = vmax.f32 %v1817, %v1865
      %v2010 = vmax.f32 %v1818, %v1866
      %v2011 = vmax.f32 %v1819, %v1867
      %v2012 = vmax.f32 %v1820, %v1868
      %v2013 = vmax.f32 %v1821, %v1869
      %v2014 = vmax.f32 %v1822, %v1870
      %v2015 = vmax.f32 %v1823, %v1871
      %v2016 = vmax.f32 %v1824, %v1872
      %v2017 = vmax.f32 %v1825, %v1873
      %v2018 = vmax.f32 %v1826, %v1874
      %v2019 = vmax.f32 %v1827, %v1875
      %v2020 = vmax.f32 %v1828, %v1876
      %v2021 = vmax.f32 %v1829, %v1877
      %v2022 = vmax.f32 %v1830, %v1878
      %v2023 = vmax.f32 %v1831, %v1879
      %v2024 = vmax.f32 %v1832, %v1880
      %v2025 = vmax.f32 %v1833, %v1881
      %v2026 = vmax.f32 %v1834, %v1882
      %v2027 = vmax.f32 %v1835, %v1883
      %v2028 = vmax.f32 %v1836, %v1884
      %v2029 = vmax.f32 %v1837, %v1885
      %v2030 = vmax.f32 %v1838, %v1886
      %v2031 = vmax.f32 %v1839, %v1887
      %v2032 = vmax.f32 %v1840, %v1888
      %v2033 = vmax.f32 %v1841, %v1889
      %v2034 = vmax.f32 %v1890, %v1938
      %v2035 = vmax.f32 %v1891, %v1939
      %v2036 = vmax.f32 %v1892, %v1940
      %v2037 = vmax.f32 %v1893, %v1941
      %v2038 = vmax.f32 %v1894, %v1942
      %v2039 = vmax.f32 %v1895, %v1943
      %v2040 = vmax.f32 %v1896, %v1944
      %v2041 = vmax.f32 %v1897, %v1945
      %v2042 = vmax.f32 %v1898, %v1946
      %v2043 = vmax.f32 %v1899, %v1947
      %v2044 = vmax.f32 %v1900, %v1948
      %v2045 = vmax.f32 %v1901, %v1949
      %v2046 = vmax.f32 %v1902, %v1950
      %v2047 = vmax.f32 %v1903, %v1951
      %v2048 = vmax.f32 %v1904, %v1952
      %v2049 = vmax.f32 %v1905, %v1953
      %v2050 = vmax.f32 %v1906, %v1954
      %v2051 = vmax.f32 %v1907, %v1955
      %v2052 = vmax.f32 %v1908, %v1956
      %v2053 = vmax.f32 %v1909, %v1957
      %v2054 = vmax.f32 %v1910, %v1958
      %v2055 = vmax.f32 %v1911, %v1959
      %v2056 = vmax.f32 %v1912, %v1960
      %v2057 = vmax.f32 %v1913, %v1961
      %v2058 = vmax.f32 %v1914, %v1962
      %v2059 = vmax.f32 %v1915, %v1963
      %v2060 = vmax.f32 %v1916, %v1964
      %v2061 = vmax.f32 %v1917, %v1965
      %v2062 = vmax.f32 %v1918, %v1966
      %v2063 = vmax.f32 %v1919, %v1967
      %v2064 = vmax.f32 %v1920, %v1968
      %v2065 = vmax.f32 %v1921, %v1969
      %v2066 = vmax.f32 %v1922, %v1970
      %v2067 = vmax.f32 %v1923, %v1971
      %v2068 = vmax.f32 %v1924, %v1972
      %v2069 = vmax.f32 %v1925, %v1973
      %v2070 = vmax.f32 %v1926, %v1974
      %v2071 = vmax.f32 %v1927, %v1975
      %v2072 = vmax.f32 %v1928, %v1976
      %v2073 = vmax.f32 %v1929, %v1977
      %v2074 = vmax.f32 %v1930, %v1978
      %v2075 = vmax.f32 %v1931, %v1979
      %v2076 = vmax.f32 %v1932, %v1980
      %v2077 = vmax.f32 %v1933, %v1981
      %v2078 = vmax.f32 %v1934, %v1982
      %v2079 = vmax.f32 %v1935, %v1983
      %v2080 = vmax.f32 %v1936, %v1984
      %v2081 = vmax.f32 %v1937, %v1985
      %v2082 = vmax.f32 %v1986, %v2034
      %v2083 = vmax.f32 %v1987, %v2035
      %v2084 = vmax.f32 %v1988, %v2036
      %v2085 = vmax.f32 %v1989, %v2037
      %v2086 = vmax.f32 %v1990, %v2038
      %v2087 = vmax.f32 %v1991, %v2039
      %v2088 = vmax.f32 %v1992, %v2040
      %v2089 = vmax.f32 %v1993, %v2041
      %v2090 = vmax.f32 %v1994, %v2042
      %v2091 = vmax.f32 %v1995, %v2043
      %v2092 = vmax.f32 %v1996, %v2044
      %v2093 = vmax.f32 %v1997, %v2045
      %v2094 = vmax.f32 %v1998, %v2046
      %v2095 = vmax.f32 %v1999, %v2047
      %v2096 = vmax.f32 %v2000, %v2048
      %v2097 = vmax.f32 %v2001, %v2049
      %v2098 = vmax.f32 %v2002, %v2050
      %v2099 = vmax.f32 %v2003, %v2051
      %v2100 = vmax.f32 %v2004, %v2052
      %v2101 = vmax.f32 %v2005, %v2053
      %v2102 = vmax.f32 %v2006, %v2054
      %v2103 = vmax.f32 %v2007, %v2055
      %v2104 = vmax.f32 %v2008, %v2056
      %v2105 = vmax.f32 %v2009, %v2057
      %v2106 = vmax.f32 %v2010, %v2058
      %v2107 = vmax.f32 %v2011, %v2059
      %v2108 = vmax.f32 %v2012, %v2060
      %v2109 = vmax.f32 %v2013, %v2061
      %v2110 = vmax.f32 %v2014, %v2062
      %v2111 = vmax.f32 %v2015, %v2063
      %v2112 = vmax.f32 %v2016, %v2064
      %v2113 = vmax.f32 %v2017, %v2065
      %v2114 = vmax.f32 %v2018, %v2066
      %v2115 = vmax.f32 %v2019, %v2067
      %v2116 = vmax.f32 %v2020, %v2068
      %v2117 = vmax.f32 %v2021, %v2069
      %v2118 = vmax.f32 %v2022, %v2070
      %v2119 = vmax.f32 %v2023, %v2071
      %v2120 = vmax.f32 %v2024, %v2072
      %v2121 = vmax.f32 %v2025, %v2073
      %v2122 = vmax.f32 %v2026, %v2074
      %v2123 = vmax.f32 %v2027, %v2075
      %v2124 = vmax.f32 %v2028, %v2076
      %v2125 = vmax.f32 %v2029, %v2077
      %v2126 = vmax.f32 %v2030, %v2078
      %v2127 = vmax.f32 %v2031, %v2079
      %v2128 = vmax.f32 %v2032, %v2080
      %v2129 = vmax.f32 %v2033, %v2081
      %v2130 = vpack.c.bf16 %v2083, %v2082
      %v2131 = vpack.c.bf16 %v2085, %v2084
      %v2132 = vpack.c.bf16 %v2087, %v2086
      %v2133 = vpack.c.bf16 %v2089, %v2088
      %v2134 = vpack.c.bf16 %v2091, %v2090
      %v2135 = vpack.c.bf16 %v2093, %v2092
      %v2136 = vpack.c.bf16 %v2095, %v2094
      %v2137 = vpack.c.bf16 %v2097, %v2096
      %v2138 = vpack.c.bf16 %v2099, %v2098
      %v2139 = vpack.c.bf16 %v2101, %v2100
      %v2140 = vpack.c.bf16 %v2103, %v2102
      %v2141 = vpack.c.bf16 %v2105, %v2104
      %v2142 = vpack.c.bf16 %v2107, %v2106
      %v2143 = vpack.c.bf16 %v2109, %v2108
      %v2144 = vpack.c.bf16 %v2111, %v2110
      %v2145 = vpack.c.bf16 %v2113, %v2112
      %v2146 = vpack.c.bf16 %v2115, %v2114
      %v2147 = vpack.c.bf16 %v2117, %v2116
      %v2148 = vpack.c.bf16 %v2119, %v2118
      %v2149 = vpack.c.bf16 %v2121, %v2120
      %v2150 = vpack.c.bf16 %v2123, %v2122
      %v2151 = vpack.c.bf16 %v2125, %v2124
      %v2152 = vpack.c.bf16 %v2127, %v2126
      %v2153 = vpack.c.bf16 %v2129, %v2128
      %v2154 = vld [vmem:[%s1] sm:$0xff]
      %v2155 = vld [vmem:[%s1 + $0x8] sm:$0xf]
      %v2156 = vld [vmem:[%s1 + $0xc] sm:$0xff]
      %v2157 = vld [vmem:[%s1 + $0x14] sm:$0xf]
      %v2158 = vld [vmem:[%s1 + $0x18] sm:$0xff]
      %v2159 = vld [vmem:[%s1 + $0x20] sm:$0xf]
      %v2160 = vld [vmem:[%s1 + $0x24] sm:$0xff]
      %v2161 = vld [vmem:[%s1 + $0x2c] sm:$0xf]
      %v2162 = vld [vmem:[%s1 + $0x30] sm:$0xff]
      %v2163 = vld [vmem:[%s1 + $0x38] sm:$0xf]
      %v2164 = vld [vmem:[%s1 + $0x3c] sm:$0xff]
      %v2165 = vld [vmem:[%s1 + $0x44] sm:$0xf]
      %v2166 = vld [vmem:[%s1 + $0x48] sm:$0xff]
      %v2167 = vld [vmem:[%s1 + $0x50] sm:$0xf]
      %v2168 = vld [vmem:[%s1 + $0x54] sm:$0xff]
      %v2169 = vld [vmem:[%s1 + $0x5c] sm:$0xf]
      %v2170 = vld [vmem:[%s1 + $0x60] sm:$0xff]
      %v2171 = vld [vmem:[%s1 + $0x68] sm:$0xf]
      %v2172 = vld [vmem:[%s1 + $0x6c] sm:$0xff]
      %v2173 = vld [vmem:[%s1 + $0x74] sm:$0xf]
      %v2174 = vld [vmem:[%s1 + $0x78] sm:$0xff]
      %v2175 = vld [vmem:[%s1 + $0x80] sm:$0xf]
      %v2176 = vld [vmem:[%s1 + $0x84] sm:$0xff]
      %v2177 = vld [vmem:[%s1 + $0x8c] sm:$0xf]
      %v2178 = vld [vmem:[%s1 + $0x90] sm:$0xff]
      %v2179 = vld [vmem:[%s1 + $0x98] sm:$0xf]
      %v2180 = vld [vmem:[%s1 + $0x9c] sm:$0xff]
      %v2181 = vld [vmem:[%s1 + $0xa4] sm:$0xf]
      %v2182 = vld [vmem:[%s1 + $0xa8] sm:$0xff]
      %v2183 = vld [vmem:[%s1 + $0xb0] sm:$0xf]
      %v2184 = vld [vmem:[%s1 + $0xb4] sm:$0xff]
      %v2185 = vld [vmem:[%s1 + $0xbc] sm:$0xf]
      %v2186 = vld [vmem:[%s1 + $0xc0] sm:$0xff]
      %v2187 = vld [vmem:[%s1 + $0xc8] sm:$0xf]
      %v2188 = vld [vmem:[%s1 + $0xcc] sm:$0xff]
      %v2189 = vld [vmem:[%s1 + $0xd4] sm:$0xf]
      %v2190 = vld [vmem:[%s1 + $0xd8] sm:$0xff]
      %v2191 = vld [vmem:[%s1 + $0xe0] sm:$0xf]
      %v2192 = vld [vmem:[%s1 + $0xe4] sm:$0xff]
      %v2193 = vld [vmem:[%s1 + $0xec] sm:$0xf]
      %v2194 = vld [vmem:[%s1 + $0xf0] sm:$0xff]
      %v2195 = vld [vmem:[%s1 + $0xf8] sm:$0xf]
      %v2196 = vld [vmem:[%s1 + $0xfc] sm:$0xff]
      %v2197 = vld [vmem:[%s1 + $0x104] sm:$0xf]
      %v2198 = vld [vmem:[%s1 + $0x108] sm:$0xff]
      %v2199 = vld [vmem:[%s1 + $0x110] sm:$0xf]
      %v2200 = vld [vmem:[%s1 + $0x114] sm:$0xff]
      %v2201 = vld [vmem:[%s1 + $0x11c] sm:$0xf]
      %v2202 = vld [vmem:[%s1 + $0x120] sm:$0xff]
      %v2203 = vld [vmem:[%s1 + $0x128] sm:$0xf]
      %v2204 = vld [vmem:[%s1 + $0x12c] sm:$0xff]
      %v2205 = vld [vmem:[%s1 + $0x134] sm:$0xf]
      %v2206 = vld [vmem:[%s1 + $0x138] sm:$0xff]
      %v2207 = vld [vmem:[%s1 + $0x140] sm:$0xf]
      %v2208 = vld [vmem:[%s1 + $0x144] sm:$0xff]
      %v2209 = vld [vmem:[%s1 + $0x14c] sm:$0xf]
      %v2210 = vld [vmem:[%s1 + $0x150] sm:$0xff]
      %v2211 = vld [vmem:[%s1 + $0x158] sm:$0xf]
      %v2212 = vld [vmem:[%s1 + $0x15c] sm:$0xff]
      %v2213 = vld [vmem:[%s1 + $0x164] sm:$0xf]
      %v2214 = vld [vmem:[%s1 + $0x168] sm:$0xff]
      %v2215 = vld [vmem:[%s1 + $0x170] sm:$0xf]
      %v2216 = vld [vmem:[%s1 + $0x174] sm:$0xff]
      %v2217 = vld [vmem:[%s1 + $0x17c] sm:$0xf]
      %v2218 = vld [vmem:[%s1 + $0x180] sm:$0xff]
      %v2219 = vld [vmem:[%s1 + $0x188] sm:$0xf]
      %v2220 = vld [vmem:[%s1 + $0x18c] sm:$0xff]
      %v2221 = vld [vmem:[%s1 + $0x194] sm:$0xf]
      %v2222 = vld [vmem:[%s1 + $0x198] sm:$0xff]
      %v2223 = vld [vmem:[%s1 + $0x1a0] sm:$0xf]
      %v2224 = vld [vmem:[%s1 + $0x1a4] sm:$0xff]
      %v2225 = vld [vmem:[%s1 + $0x1ac] sm:$0xf]
      %v2226 = vld [vmem:[%s1 + $0x1b0] sm:$0xff]
      %v2227 = vld [vmem:[%s1 + $0x1b8] sm:$0xf]
      %v2228 = vld [vmem:[%s1 + $0x1bc] sm:$0xff]
      %v2229 = vld [vmem:[%s1 + $0x1c4] sm:$0xf]
      %v2230 = vld [vmem:[%s1 + $0x1c8] sm:$0xff]
      %v2231 = vld [vmem:[%s1 + $0x1d0] sm:$0xf]
      %v2232 = vld [vmem:[%s1 + $0x1d4] sm:$0xff]
      %v2233 = vld [vmem:[%s1 + $0x1dc] sm:$0xf]
      %v2234 = vld [vmem:[%s1 + $0x1e0] sm:$0xff]
      %v2235 = vld [vmem:[%s1 + $0x1e8] sm:$0xf]
      %v2236 = vld [vmem:[%s1 + $0x1ec] sm:$0xff]
      %v2237 = vld [vmem:[%s1 + $0x1f4] sm:$0xf]
      %v2238 = vld [vmem:[%s1 + $0x1f8] sm:$0xff]
      %v2239 = vld [vmem:[%s1 + $0x200] sm:$0xf]
      %v2240 = vld [vmem:[%s1 + $0x204] sm:$0xff]
      %v2241 = vld [vmem:[%s1 + $0x20c] sm:$0xf]
      %v2242 = vld [vmem:[%s1 + $0x210] sm:$0xff]
      %v2243 = vld [vmem:[%s1 + $0x218] sm:$0xf]
      %v2244 = vld [vmem:[%s1 + $0x21c] sm:$0xff]
      %v2245 = vld [vmem:[%s1 + $0x224] sm:$0xf]
      %v2246 = vld [vmem:[%s1 + $0x228] sm:$0xff]
      %v2247 = vld [vmem:[%s1 + $0x230] sm:$0xf]
      %v2248 = vld [vmem:[%s1 + $0x234] sm:$0xff]
      %v2249 = vld [vmem:[%s1 + $0x23c] sm:$0xf]
      %v2250 = vld [vmem:[%s1 + $0x240] sm:$0xff]
      %v2251 = vld [vmem:[%s1 + $0x248] sm:$0xf]
      %v2252 = vld [vmem:[%s1 + $0x24c] sm:$0xff]
      %v2253 = vld [vmem:[%s1 + $0x254] sm:$0xf]
      %v2254 = vld [vmem:[%s1 + $0x258] sm:$0xff]
      %v2255 = vld [vmem:[%s1 + $0x260] sm:$0xf]
      %v2256 = vld [vmem:[%s1 + $0x264] sm:$0xff]
      %v2257 = vld [vmem:[%s1 + $0x26c] sm:$0xf]
      %v2258 = vld [vmem:[%s1 + $0x270] sm:$0xff]
      %v2259 = vld [vmem:[%s1 + $0x278] sm:$0xf]
      %v2260 = vld [vmem:[%s1 + $0x27c] sm:$0xff]
      %v2261 = vld [vmem:[%s1 + $0x284] sm:$0xf]
      %v2262 = vld [vmem:[%s1 + $0x288] sm:$0xff]
      %v2263 = vld [vmem:[%s1 + $0x290] sm:$0xf]
      %v2264 = vld [vmem:[%s1 + $0x294] sm:$0xff]
      %v2265 = vld [vmem:[%s1 + $0x29c] sm:$0xf]
      %v2266 = vld [vmem:[%s1 + $0x2a0] sm:$0xff]
      %v2267 = vld [vmem:[%s1 + $0x2a8] sm:$0xf]
      %v2268 = vld [vmem:[%s1 + $0x2ac] sm:$0xff]
      %v2269 = vld [vmem:[%s1 + $0x2b4] sm:$0xf]
      %v2270 = vld [vmem:[%s1 + $0x2b8] sm:$0xff]
      %v2271 = vld [vmem:[%s1 + $0x2c0] sm:$0xf]
      %v2272 = vld [vmem:[%s1 + $0x2c4] sm:$0xff]
      %v2273 = vld [vmem:[%s1 + $0x2cc] sm:$0xf]
      %v2274 = vld [vmem:[%s1 + $0x2d0] sm:$0xff]
      %v2275 = vld [vmem:[%s1 + $0x2d8] sm:$0xf]
      %v2276 = vld [vmem:[%s1 + $0x2dc] sm:$0xff]
      %v2277 = vld [vmem:[%s1 + $0x2e4] sm:$0xf]
      %v2278 = vld [vmem:[%s1 + $0x2e8] sm:$0xff]
      %v2279 = vld [vmem:[%s1 + $0x2f0] sm:$0xf]
      %v2280 = vld [vmem:[%s1 + $0x2f4] sm:$0xff]
      %v2281 = vld [vmem:[%s1 + $0x2fc] sm:$0xf]
      %v2282 = vld [vmem:[%s1 + $0x300] sm:$0xff]
      %v2283 = vld [vmem:[%s1 + $0x308] sm:$0xf]
      %v2284 = vld [vmem:[%s1 + $0x30c] sm:$0xff]
      %v2285 = vld [vmem:[%s1 + $0x314] sm:$0xf]
      %v2286 = vld [vmem:[%s1 + $0x318] sm:$0xff]
      %v2287 = vld [vmem:[%s1 + $0x320] sm:$0xf]
      %v2288 = vld [vmem:[%s1 + $0x324] sm:$0xff]
      %v2289 = vld [vmem:[%s1 + $0x32c] sm:$0xf]
      %v2290 = vld [vmem:[%s1 + $0x330] sm:$0xff]
      %v2291 = vld [vmem:[%s1 + $0x338] sm:$0xf]
      %v2292 = vld [vmem:[%s1 + $0x33c] sm:$0xff]
      %v2293 = vld [vmem:[%s1 + $0x344] sm:$0xf]
      %v2294 = vld [vmem:[%s1 + $0x348] sm:$0xff]
      %v2295 = vld [vmem:[%s1 + $0x350] sm:$0xf]
      %v2296 = vld [vmem:[%s1 + $0x354] sm:$0xff]
      %v2297 = vld [vmem:[%s1 + $0x35c] sm:$0xf]
      %v2298 = vld [vmem:[%s1 + $0x360] sm:$0xff]
      %v2299 = vld [vmem:[%s1 + $0x368] sm:$0xf]
      %v2300 = vld [vmem:[%s1 + $0x36c] sm:$0xff]
      %v2301 = vld [vmem:[%s1 + $0x374] sm:$0xf]
      %v2302 = vld [vmem:[%s1 + $0x378] sm:$0xff]
      %v2303 = vld [vmem:[%s1 + $0x380] sm:$0xf]
      %v2304 = vld [vmem:[%s1 + $0x384] sm:$0xff]
      %v2305 = vld [vmem:[%s1 + $0x38c] sm:$0xf]
      %v2306 = vld [vmem:[%s1 + $0x390] sm:$0xff]
      %v2307 = vld [vmem:[%s1 + $0x398] sm:$0xf]
      %v2308 = vld [vmem:[%s1 + $0x39c] sm:$0xff]
      %v2309 = vld [vmem:[%s1 + $0x3a4] sm:$0xf]
      %v2310 = vld [vmem:[%s1 + $0x3a8] sm:$0xff]
      %v2311 = vld [vmem:[%s1 + $0x3b0] sm:$0xf]
      %v2312 = vld [vmem:[%s1 + $0x3b4] sm:$0xff]
      %v2313 = vld [vmem:[%s1 + $0x3bc] sm:$0xf]
      %v2314 = vld [vmem:[%s1 + $0x3c0] sm:$0xff]
      %v2315 = vld [vmem:[%s1 + $0x3c8] sm:$0xf]
      %v2316 = vld [vmem:[%s1 + $0x3cc] sm:$0xff]
      %v2317 = vld [vmem:[%s1 + $0x3d4] sm:$0xf]
      %v2318 = vld [vmem:[%s1 + $0x3d8] sm:$0xff]
      %v2319 = vld [vmem:[%s1 + $0x3e0] sm:$0xf]
      %v2320 = vld [vmem:[%s1 + $0x3e4] sm:$0xff]
      %v2321 = vld [vmem:[%s1 + $0x3ec] sm:$0xf]
      %v2322 = vld [vmem:[%s1 + $0x3f0] sm:$0xff]
      %v2323 = vld [vmem:[%s1 + $0x3f8] sm:$0xf]
      %v2324 = vld [vmem:[%s1 + $0x3fc] sm:$0xff]
      %v2325 = vld [vmem:[%s1 + $0x404] sm:$0xf]
      %v2326 = vld [vmem:[%s1 + $0x408] sm:$0xff]
      %v2327 = vld [vmem:[%s1 + $0x410] sm:$0xf]
      %v2328 = vld [vmem:[%s1 + $0x414] sm:$0xff]
      %v2329 = vld [vmem:[%s1 + $0x41c] sm:$0xf]
      %v2330 = vld [vmem:[%s1 + $0x420] sm:$0xff]
      %v2331 = vld [vmem:[%s1 + $0x428] sm:$0xf]
      %v2332 = vld [vmem:[%s1 + $0x42c] sm:$0xff]
      %v2333 = vld [vmem:[%s1 + $0x434] sm:$0xf]
      %v2334 = vld [vmem:[%s1 + $0x438] sm:$0xff]
      %v2335 = vld [vmem:[%s1 + $0x440] sm:$0xf]
      %v2336 = vld [vmem:[%s1 + $0x444] sm:$0xff]
      %v2337 = vld [vmem:[%s1 + $0x44c] sm:$0xf]
      %v2338 = vld [vmem:[%s1 + $0x450] sm:$0xff]
      %v2339 = vld [vmem:[%s1 + $0x458] sm:$0xf]
      %v2340 = vld [vmem:[%s1 + $0x45c] sm:$0xff]
      %v2341 = vld [vmem:[%s1 + $0x464] sm:$0xf]
      %v2342 = vld [vmem:[%s1 + $0x468] sm:$0xff]
      %v2343 = vld [vmem:[%s1 + $0x470] sm:$0xf]
      %v2344 = vld [vmem:[%s1 + $0x474] sm:$0xff]
      %v2345 = vld [vmem:[%s1 + $0x47c] sm:$0xf]
      %v2346 = vld [vmem:[%s1 + $0x480] sm:$0xff]
      %v2347 = vld [vmem:[%s1 + $0x488] sm:$0xf]
      %v2348 = vld [vmem:[%s1 + $0x48c] sm:$0xff]
      %v2349 = vld [vmem:[%s1 + $0x494] sm:$0xf]
      %v2350 = vld [vmem:[%s1 + $0x498] sm:$0xff]
      %v2351 = vld [vmem:[%s1 + $0x4a0] sm:$0xf]
      %v2352 = vld [vmem:[%s1 + $0x4a4] sm:$0xff]
      %v2353 = vld [vmem:[%s1 + $0x4ac] sm:$0xf]
      %v2354 = vld [vmem:[%s1 + $0x4b0] sm:$0xff]
      %v2355 = vld [vmem:[%s1 + $0x4b8] sm:$0xf]
      %v2356 = vld [vmem:[%s1 + $0x4bc] sm:$0xff]
      %v2357 = vld [vmem:[%s1 + $0x4c4] sm:$0xf]
      %v2358 = vld [vmem:[%s1 + $0x4c8] sm:$0xff]
      %v2359 = vld [vmem:[%s1 + $0x4d0] sm:$0xf]
      %v2360 = vld [vmem:[%s1 + $0x4d4] sm:$0xff]
      %v2361 = vld [vmem:[%s1 + $0x4dc] sm:$0xf]
      %v2362 = vld [vmem:[%s1 + $0x4e0] sm:$0xff]
      %v2363 = vld [vmem:[%s1 + $0x4e8] sm:$0xf]
      %v2364 = vld [vmem:[%s1 + $0x4ec] sm:$0xff]
      %v2365 = vld [vmem:[%s1 + $0x4f4] sm:$0xf]
      %v2366 = vld [vmem:[%s1 + $0x4f8] sm:$0xff]
      %v2367 = vld [vmem:[%s1 + $0x500] sm:$0xf]
      %v2368 = vld [vmem:[%s1 + $0x504] sm:$0xff]
      %v2369 = vld [vmem:[%s1 + $0x50c] sm:$0xf]
      %v2370 = vld [vmem:[%s1 + $0x510] sm:$0xff]
      %v2371 = vld [vmem:[%s1 + $0x518] sm:$0xf]
      %v2372 = vld [vmem:[%s1 + $0x51c] sm:$0xff]
      %v2373 = vld [vmem:[%s1 + $0x524] sm:$0xf]
      %v2374 = vld [vmem:[%s1 + $0x528] sm:$0xff]
      %v2375 = vld [vmem:[%s1 + $0x530] sm:$0xf]
      %v2376 = vld [vmem:[%s1 + $0x534] sm:$0xff]
      %v2377 = vld [vmem:[%s1 + $0x53c] sm:$0xf]
      %v2378 = vld [vmem:[%s1 + $0x540] sm:$0xff]
      %v2379 = vld [vmem:[%s1 + $0x548] sm:$0xf]
      %v2380 = vld [vmem:[%s1 + $0x54c] sm:$0xff]
      %v2381 = vld [vmem:[%s1 + $0x554] sm:$0xf]
      %v2382 = vld [vmem:[%s1 + $0x558] sm:$0xff]
      %v2383 = vld [vmem:[%s1 + $0x560] sm:$0xf]
      %v2384 = vld [vmem:[%s1 + $0x564] sm:$0xff]
      %v2385 = vld [vmem:[%s1 + $0x56c] sm:$0xf]
      %v2386 = vld [vmem:[%s1 + $0x570] sm:$0xff]
      %v2387 = vld [vmem:[%s1 + $0x578] sm:$0xf]
      %v2388 = vld [vmem:[%s1 + $0x57c] sm:$0xff]
      %v2389 = vld [vmem:[%s1 + $0x584] sm:$0xf]
      %v2390 = vld [vmem:[%s1 + $0x588] sm:$0xff]
      %v2391 = vld [vmem:[%s1 + $0x590] sm:$0xf]
      %v2392 = vld [vmem:[%s1 + $0x594] sm:$0xff]
      %v2393 = vld [vmem:[%s1 + $0x59c] sm:$0xf]
      %v2394 = vld [vmem:[%s1 + $0x5a0] sm:$0xff]
      %v2395 = vld [vmem:[%s1 + $0x5a8] sm:$0xf]
      %v2396 = vld [vmem:[%s1 + $0x5ac] sm:$0xff]
      %v2397 = vld [vmem:[%s1 + $0x5b4] sm:$0xf]
      %v2398 = vld [vmem:[%s1 + $0x5b8] sm:$0xff]
      %v2399 = vld [vmem:[%s1 + $0x5c0] sm:$0xf]
      %v2400 = vld [vmem:[%s1 + $0x5c4] sm:$0xff]
      %v2401 = vld [vmem:[%s1 + $0x5cc] sm:$0xf]
      %v2402 = vld [vmem:[%s1 + $0x5d0] sm:$0xff]
      %v2403 = vld [vmem:[%s1 + $0x5d8] sm:$0xf]
      %v2404 = vld [vmem:[%s1 + $0x5dc] sm:$0xff]
      %v2405 = vld [vmem:[%s1 + $0x5e4] sm:$0xf]
      %v2406 = vld [vmem:[%s1 + $0x5e8] sm:$0xff]
      %v2407 = vld [vmem:[%s1 + $0x5f0] sm:$0xf]
      %v2408 = vld [vmem:[%s1 + $0x5f4] sm:$0xff]
      %v2409 = vld [vmem:[%s1 + $0x5fc] sm:$0xf]
      %v2410 = vld [vmem:[%s1 + $0x600] sm:$0xff]
      %v2411 = vld [vmem:[%s1 + $0x608] sm:$0xf]
      %v2412 = vld [vmem:[%s1 + $0x60c] sm:$0xff]
      %v2413 = vld [vmem:[%s1 + $0x614] sm:$0xf]
      %v2414 = vld [vmem:[%s1 + $0x618] sm:$0xff]
      %v2415 = vld [vmem:[%s1 + $0x620] sm:$0xf]
      %v2416 = vld [vmem:[%s1 + $0x624] sm:$0xff]
      %v2417 = vld [vmem:[%s1 + $0x62c] sm:$0xf]
      %v2418 = vld [vmem:[%s1 + $0x630] sm:$0xff]
      %v2419 = vld [vmem:[%s1 + $0x638] sm:$0xf]
      %v2420 = vld [vmem:[%s1 + $0x63c] sm:$0xff]
      %v2421 = vld [vmem:[%s1 + $0x644] sm:$0xf]
      %v2422 = vld [vmem:[%s1 + $0x648] sm:$0xff]
      %v2423 = vld [vmem:[%s1 + $0x650] sm:$0xf]
      %v2424 = vld [vmem:[%s1 + $0x654] sm:$0xff]
      %v2425 = vld [vmem:[%s1 + $0x65c] sm:$0xf]
      %v2426 = vld [vmem:[%s1 + $0x660] sm:$0xff]
      %v2427 = vld [vmem:[%s1 + $0x668] sm:$0xf]
      %v2428 = vld [vmem:[%s1 + $0x66c] sm:$0xff]
      %v2429 = vld [vmem:[%s1 + $0x674] sm:$0xf]
      %v2430 = vld [vmem:[%s1 + $0x678] sm:$0xff]
      %v2431 = vld [vmem:[%s1 + $0x680] sm:$0xf]
      %v2432 = vld [vmem:[%s1 + $0x684] sm:$0xff]
      %v2433 = vld [vmem:[%s1 + $0x68c] sm:$0xf]
      %v2434 = vld [vmem:[%s1 + $0x690] sm:$0xff]
      %v2435 = vld [vmem:[%s1 + $0x698] sm:$0xf]
      %v2436 = vld [vmem:[%s1 + $0x69c] sm:$0xff]
      %v2437 = vld [vmem:[%s1 + $0x6a4] sm:$0xf]
      %v2438 = vld [vmem:[%s1 + $0x6a8] sm:$0xff]
      %v2439 = vld [vmem:[%s1 + $0x6b0] sm:$0xf]
      %v2440 = vld [vmem:[%s1 + $0x6b4] sm:$0xff]
      %v2441 = vld [vmem:[%s1 + $0x6bc] sm:$0xf]
      %v2442 = vld [vmem:[%s1 + $0x6c0] sm:$0xff]
      %v2443 = vld [vmem:[%s1 + $0x6c8] sm:$0xf]
      %v2444 = vld [vmem:[%s1 + $0x6cc] sm:$0xff]
      %v2445 = vld [vmem:[%s1 + $0x6d4] sm:$0xf]
      %v2446 = vld [vmem:[%s1 + $0x6d8] sm:$0xff]
      %v2447 = vld [vmem:[%s1 + $0x6e0] sm:$0xf]
      %v2448 = vld [vmem:[%s1 + $0x6e4] sm:$0xff]
      %v2449 = vld [vmem:[%s1 + $0x6ec] sm:$0xf]
      %v2450 = vld [vmem:[%s1 + $0x6f0] sm:$0xff]
      %v2451 = vld [vmem:[%s1 + $0x6f8] sm:$0xf]
      %v2452 = vld [vmem:[%s1 + $0x6fc] sm:$0xff]
      %v2453 = vld [vmem:[%s1 + $0x704] sm:$0xf]
      %v2454 = vld [vmem:[%s1 + $0x708] sm:$0xff]
      %v2455 = vld [vmem:[%s1 + $0x710] sm:$0xf]
      %v2456 = vld [vmem:[%s1 + $0x714] sm:$0xff]
      %v2457 = vld [vmem:[%s1 + $0x71c] sm:$0xf]
      %v2458 = vld [vmem:[%s1 + $0x720] sm:$0xff]
      %v2459 = vld [vmem:[%s1 + $0x728] sm:$0xf]
      %v2460 = vld [vmem:[%s1 + $0x72c] sm:$0xff]
      %v2461 = vld [vmem:[%s1 + $0x734] sm:$0xf]
      %v2462 = vld [vmem:[%s1 + $0x738] sm:$0xff]
      %v2463 = vld [vmem:[%s1 + $0x740] sm:$0xf]
      %v2464 = vld [vmem:[%s1 + $0x744] sm:$0xff]
      %v2465 = vld [vmem:[%s1 + $0x74c] sm:$0xf]
      %v2466 = vld [vmem:[%s1 + $0x750] sm:$0xff]
      %v2467 = vld [vmem:[%s1 + $0x758] sm:$0xf]
      %v2468 = vld [vmem:[%s1 + $0x75c] sm:$0xff]
      %v2469 = vld [vmem:[%s1 + $0x764] sm:$0xf]
      %v2470 = vld [vmem:[%s1 + $0x768] sm:$0xff]
      %v2471 = vld [vmem:[%s1 + $0x770] sm:$0xf]
      %v2472 = vld [vmem:[%s1 + $0x774] sm:$0xff]
      %v2473 = vld [vmem:[%s1 + $0x77c] sm:$0xf]
      %v2474 = vld [vmem:[%s1 + $0x780] sm:$0xff]
      %v2475 = vld [vmem:[%s1 + $0x788] sm:$0xf]
      %v2476 = vld [vmem:[%s1 + $0x78c] sm:$0xff]
      %v2477 = vld [vmem:[%s1 + $0x794] sm:$0xf]
      %v2478 = vld [vmem:[%s1 + $0x798] sm:$0xff]
      %v2479 = vld [vmem:[%s1 + $0x7a0] sm:$0xf]
      %v2480 = vld [vmem:[%s1 + $0x7a4] sm:$0xff]
      %v2481 = vld [vmem:[%s1 + $0x7ac] sm:$0xf]
      %v2482 = vld [vmem:[%s1 + $0x7b0] sm:$0xff]
      %v2483 = vld [vmem:[%s1 + $0x7b8] sm:$0xf]
      %v2484 = vld [vmem:[%s1 + $0x7bc] sm:$0xff]
      %v2485 = vld [vmem:[%s1 + $0x7c4] sm:$0xf]
      %v2486 = vld [vmem:[%s1 + $0x7c8] sm:$0xff]
      %v2487 = vld [vmem:[%s1 + $0x7d0] sm:$0xf]
      %v2488 = vld [vmem:[%s1 + $0x7d4] sm:$0xff]
      %v2489 = vld [vmem:[%s1 + $0x7dc] sm:$0xf]
      %v2490 = vld [vmem:[%s1 + $0x7e0] sm:$0xff]
      %v2491 = vld [vmem:[%s1 + $0x7e8] sm:$0xf]
      %v2492 = vld [vmem:[%s1 + $0x7ec] sm:$0xff]
      %v2493 = vld [vmem:[%s1 + $0x7f4] sm:$0xf]
      %v2494 = vld [vmem:[%s1 + $0x7f8] sm:$0xff]
      %v2495 = vld [vmem:[%s1 + $0x800] sm:$0xf]
      %v2496 = vld [vmem:[%s1 + $0x804] sm:$0xff]
      %v2497 = vld [vmem:[%s1 + $0x80c] sm:$0xf]
      %v2498 = vld [vmem:[%s1 + $0x810] sm:$0xff]
      %v2499 = vld [vmem:[%s1 + $0x818] sm:$0xf]
      %v2500 = vld [vmem:[%s1 + $0x81c] sm:$0xff]
      %v2501 = vld [vmem:[%s1 + $0x824] sm:$0xf]
      %v2502 = vld [vmem:[%s1 + $0x828] sm:$0xff]
      %v2503 = vld [vmem:[%s1 + $0x830] sm:$0xf]
      %v2504 = vld [vmem:[%s1 + $0x834] sm:$0xff]
      %v2505 = vld [vmem:[%s1 + $0x83c] sm:$0xf]
      %v2506 = vld [vmem:[%s1 + $0x840] sm:$0xff]
      %v2507 = vld [vmem:[%s1 + $0x848] sm:$0xf]
      %v2508 = vld [vmem:[%s1 + $0x84c] sm:$0xff]
      %v2509 = vld [vmem:[%s1 + $0x854] sm:$0xf]
      %v2510 = vld [vmem:[%s1 + $0x858] sm:$0xff]
      %v2511 = vld [vmem:[%s1 + $0x860] sm:$0xf]
      %v2512 = vld [vmem:[%s1 + $0x864] sm:$0xff]
      %v2513 = vld [vmem:[%s1 + $0x86c] sm:$0xf]
      %v2514 = vld [vmem:[%s1 + $0x870] sm:$0xff]
      %v2515 = vld [vmem:[%s1 + $0x878] sm:$0xf]
      %v2516 = vld [vmem:[%s1 + $0x87c] sm:$0xff]
      %v2517 = vld [vmem:[%s1 + $0x884] sm:$0xf]
      %v2518 = vld [vmem:[%s1 + $0x888] sm:$0xff]
      %v2519 = vld [vmem:[%s1 + $0x890] sm:$0xf]
      %v2520 = vld [vmem:[%s1 + $0x894] sm:$0xff]
      %v2521 = vld [vmem:[%s1 + $0x89c] sm:$0xf]
      %v2522 = vld [vmem:[%s1 + $0x8a0] sm:$0xff]
      %v2523 = vld [vmem:[%s1 + $0x8a8] sm:$0xf]
      %v2524 = vld [vmem:[%s1 + $0x8ac] sm:$0xff]
      %v2525 = vld [vmem:[%s1 + $0x8b4] sm:$0xf]
      %v2526 = vld [vmem:[%s1 + $0x8b8] sm:$0xff]
      %v2527 = vld [vmem:[%s1 + $0x8c0] sm:$0xf]
      %v2528 = vld [vmem:[%s1 + $0x8c4] sm:$0xff]
      %v2529 = vld [vmem:[%s1 + $0x8cc] sm:$0xf]
      %v2530 = vld [vmem:[%s1 + $0x8d0] sm:$0xff]
      %v2531 = vld [vmem:[%s1 + $0x8d8] sm:$0xf]
      %v2532 = vld [vmem:[%s1 + $0x8dc] sm:$0xff]
      %v2533 = vld [vmem:[%s1 + $0x8e4] sm:$0xf]
      %v2534 = vld [vmem:[%s1 + $0x8e8] sm:$0xff]
      %v2535 = vld [vmem:[%s1 + $0x8f0] sm:$0xf]
      %v2536 = vld [vmem:[%s1 + $0x8f4] sm:$0xff]
      %v2537 = vld [vmem:[%s1 + $0x8fc] sm:$0xf]
      %v2538 = vld [vmem:[%s1 + $0x900] sm:$0xff]
      %v2539 = vld [vmem:[%s1 + $0x908] sm:$0xf]
      %v2540 = vld [vmem:[%s1 + $0x90c] sm:$0xff]
      %v2541 = vld [vmem:[%s1 + $0x914] sm:$0xf]
      %v2542 = vld [vmem:[%s1 + $0x918] sm:$0xff]
      %v2543 = vld [vmem:[%s1 + $0x920] sm:$0xf]
      %v2544 = vld [vmem:[%s1 + $0x924] sm:$0xff]
      %v2545 = vld [vmem:[%s1 + $0x92c] sm:$0xf]
      %v2546 = vld [vmem:[%s1 + $0x930] sm:$0xff]
      %v2547 = vld [vmem:[%s1 + $0x938] sm:$0xf]
      %v2548 = vld [vmem:[%s1 + $0x93c] sm:$0xff]
      %v2549 = vld [vmem:[%s1 + $0x944] sm:$0xf]
      %v2550 = vld [vmem:[%s1 + $0x948] sm:$0xff]
      %v2551 = vld [vmem:[%s1 + $0x950] sm:$0xf]
      %v2552 = vld [vmem:[%s1 + $0x954] sm:$0xff]
      %v2553 = vld [vmem:[%s1 + $0x95c] sm:$0xf]
      %v2554 = vld [vmem:[%s1 + $0x960] sm:$0xff]
      %v2555 = vld [vmem:[%s1 + $0x968] sm:$0xf]
      %v2556 = vld [vmem:[%s1 + $0x96c] sm:$0xff]
      %v2557 = vld [vmem:[%s1 + $0x974] sm:$0xf]
      %v2558 = vld [vmem:[%s1 + $0x978] sm:$0xff]
      %v2559 = vld [vmem:[%s1 + $0x980] sm:$0xf]
      %v2560 = vld [vmem:[%s1 + $0x984] sm:$0xff]
      %v2561 = vld [vmem:[%s1 + $0x98c] sm:$0xf]
      %v2562 = vld [vmem:[%s1 + $0x990] sm:$0xff]
      %v2563 = vld [vmem:[%s1 + $0x998] sm:$0xf]
      %v2564 = vld [vmem:[%s1 + $0x99c] sm:$0xff]
      %v2565 = vld [vmem:[%s1 + $0x9a4] sm:$0xf]
      %v2566 = vld [vmem:[%s1 + $0x9a8] sm:$0xff]
      %v2567 = vld [vmem:[%s1 + $0x9b0] sm:$0xf]
      %v2568 = vld [vmem:[%s1 + $0x9b4] sm:$0xff]
      %v2569 = vld [vmem:[%s1 + $0x9bc] sm:$0xf]
      %v2570 = vld [vmem:[%s1 + $0x9c0] sm:$0xff]
      %v2571 = vld [vmem:[%s1 + $0x9c8] sm:$0xf]
      %v2572 = vld [vmem:[%s1 + $0x9cc] sm:$0xff]
      %v2573 = vld [vmem:[%s1 + $0x9d4] sm:$0xf]
      %v2574 = vld [vmem:[%s1 + $0x9d8] sm:$0xff]
      %v2575 = vld [vmem:[%s1 + $0x9e0] sm:$0xf]
      %v2576 = vld [vmem:[%s1 + $0x9e4] sm:$0xff]
      %v2577 = vld [vmem:[%s1 + $0x9ec] sm:$0xf]
      %v2578 = vld [vmem:[%s1 + $0x9f0] sm:$0xff]
      %v2579 = vld [vmem:[%s1 + $0x9f8] sm:$0xf]
      %v2580 = vld [vmem:[%s1 + $0x9fc] sm:$0xff]
      %v2581 = vld [vmem:[%s1 + $0xa04] sm:$0xf]
      %v2582 = vld [vmem:[%s1 + $0xa08] sm:$0xff]
      %v2583 = vld [vmem:[%s1 + $0xa10] sm:$0xf]
      %v2584 = vld [vmem:[%s1 + $0xa14] sm:$0xff]
      %v2585 = vld [vmem:[%s1 + $0xa1c] sm:$0xf]
      %v2586 = vld [vmem:[%s1 + $0xa20] sm:$0xff]
      %v2587 = vld [vmem:[%s1 + $0xa28] sm:$0xf]
      %v2588 = vld [vmem:[%s1 + $0xa2c] sm:$0xff]
      %v2589 = vld [vmem:[%s1 + $0xa34] sm:$0xf]
      %v2590 = vld [vmem:[%s1 + $0xa38] sm:$0xff]
      %v2591 = vld [vmem:[%s1 + $0xa40] sm:$0xf]
      %v2592 = vld [vmem:[%s1 + $0xa44] sm:$0xff]
      %v2593 = vld [vmem:[%s1 + $0xa4c] sm:$0xf]
      %v2594 = vld [vmem:[%s1 + $0xa50] sm:$0xff]
      %v2595 = vld [vmem:[%s1 + $0xa58] sm:$0xf]
      %v2596 = vld [vmem:[%s1 + $0xa5c] sm:$0xff]
      %v2597 = vld [vmem:[%s1 + $0xa64] sm:$0xf]
      %v2598 = vld [vmem:[%s1 + $0xa68] sm:$0xff]
      %v2599 = vld [vmem:[%s1 + $0xa70] sm:$0xf]
      %v2600 = vld [vmem:[%s1 + $0xa74] sm:$0xff]
      %v2601 = vld [vmem:[%s1 + $0xa7c] sm:$0xf]
      %v2602 = vld [vmem:[%s1 + $0xa80] sm:$0xff]
      %v2603 = vld [vmem:[%s1 + $0xa88] sm:$0xf]
      %v2604 = vld [vmem:[%s1 + $0xa8c] sm:$0xff]
      %v2605 = vld [vmem:[%s1 + $0xa94] sm:$0xf]
      %v2606 = vld [vmem:[%s1 + $0xa98] sm:$0xff]
      %v2607 = vld [vmem:[%s1 + $0xaa0] sm:$0xf]
      %v2608 = vld [vmem:[%s1 + $0xaa4] sm:$0xff]
      %v2609 = vld [vmem:[%s1 + $0xaac] sm:$0xf]
      %v2610 = vld [vmem:[%s1 + $0xab0] sm:$0xff]
      %v2611 = vld [vmem:[%s1 + $0xab8] sm:$0xf]
      %v2612 = vld [vmem:[%s1 + $0xabc] sm:$0xff]
      %v2613 = vld [vmem:[%s1 + $0xac4] sm:$0xf]
      %v2614 = vld [vmem:[%s1 + $0xac8] sm:$0xff]
      %v2615 = vld [vmem:[%s1 + $0xad0] sm:$0xf]
      %v2616 = vld [vmem:[%s1 + $0xad4] sm:$0xff]
      %v2617 = vld [vmem:[%s1 + $0xadc] sm:$0xf]
      %v2618 = vld [vmem:[%s1 + $0xae0] sm:$0xff]
      %v2619 = vld [vmem:[%s1 + $0xae8] sm:$0xf]
      %v2620 = vld [vmem:[%s1 + $0xaec] sm:$0xff]
      %v2621 = vld [vmem:[%s1 + $0xaf4] sm:$0xf]
      %v2622 = vld [vmem:[%s1 + $0xaf8] sm:$0xff]
      %v2623 = vld [vmem:[%s1 + $0xb00] sm:$0xf]
      %v2624 = vld [vmem:[%s1 + $0xb04] sm:$0xff]
      %v2625 = vld [vmem:[%s1 + $0xb0c] sm:$0xf]
      %v2626 = vld [vmem:[%s1 + $0xb10] sm:$0xff]
      %v2627 = vld [vmem:[%s1 + $0xb18] sm:$0xf]
      %v2628 = vld [vmem:[%s1 + $0xb1c] sm:$0xff]
      %v2629 = vld [vmem:[%s1 + $0xb24] sm:$0xf]
      %v2630 = vld [vmem:[%s1 + $0xb28] sm:$0xff]
      %v2631 = vld [vmem:[%s1 + $0xb30] sm:$0xf]
      %v2632 = vld [vmem:[%s1 + $0xb34] sm:$0xff]
      %v2633 = vld [vmem:[%s1 + $0xb3c] sm:$0xf]
      %v2634 = vld [vmem:[%s1 + $0xb40] sm:$0xff]
      %v2635 = vld [vmem:[%s1 + $0xb48] sm:$0xf]
      %v2636 = vld [vmem:[%s1 + $0xb4c] sm:$0xff]
      %v2637 = vld [vmem:[%s1 + $0xb54] sm:$0xf]
      %v2638 = vld [vmem:[%s1 + $0xb58] sm:$0xff]
      %v2639 = vld [vmem:[%s1 + $0xb60] sm:$0xf]
      %v2640 = vld [vmem:[%s1 + $0xb64] sm:$0xff]
      %v2641 = vld [vmem:[%s1 + $0xb6c] sm:$0xf]
      %v2642 = vld [vmem:[%s1 + $0xb70] sm:$0xff]
      %v2643 = vld [vmem:[%s1 + $0xb78] sm:$0xf]
      %v2644 = vld [vmem:[%s1 + $0xb7c] sm:$0xff]
      %v2645 = vld [vmem:[%s1 + $0xb84] sm:$0xf]
      %v2646 = vld [vmem:[%s1 + $0xb88] sm:$0xff]
      %v2647 = vld [vmem:[%s1 + $0xb90] sm:$0xf]
      %v2648 = vld [vmem:[%s1 + $0xb94] sm:$0xff]
      %v2649 = vld [vmem:[%s1 + $0xb9c] sm:$0xf]
      %v2650 = vld [vmem:[%s1 + $0xba0] sm:$0xff]
      %v2651 = vld [vmem:[%s1 + $0xba8] sm:$0xf]
      %v2652 = vld [vmem:[%s1 + $0xbac] sm:$0xff]
      %v2653 = vld [vmem:[%s1 + $0xbb4] sm:$0xf]
      %v2654 = vld [vmem:[%s1 + $0xbb8] sm:$0xff]
      %v2655 = vld [vmem:[%s1 + $0xbc0] sm:$0xf]
      %v2656 = vld [vmem:[%s1 + $0xbc4] sm:$0xff]
      %v2657 = vld [vmem:[%s1 + $0xbcc] sm:$0xf]
      %v2658 = vld [vmem:[%s1 + $0xbd0] sm:$0xff]
      %v2659 = vld [vmem:[%s1 + $0xbd8] sm:$0xf]
      %v2660 = vld [vmem:[%s1 + $0xbdc] sm:$0xff]
      %v2661 = vld [vmem:[%s1 + $0xbe4] sm:$0xf]
      %v2662 = vld [vmem:[%s1 + $0xbe8] sm:$0xff]
      %v2663 = vld [vmem:[%s1 + $0xbf0] sm:$0xf]
      %v2664 = vld [vmem:[%s1 + $0xbf4] sm:$0xff]
      %v2665 = vld [vmem:[%s1 + $0xbfc] sm:$0xf]
      %v2666 = vld [vmem:[%s1 + $0xc00] sm:$0xff]
      %v2667 = vld [vmem:[%s1 + $0xc08] sm:$0xf]
      %v2668 = vld [vmem:[%s1 + $0xc0c] sm:$0xff]
      %v2669 = vld [vmem:[%s1 + $0xc14] sm:$0xf]
      %v2670 = vld [vmem:[%s1 + $0xc18] sm:$0xff]
      %v2671 = vld [vmem:[%s1 + $0xc20] sm:$0xf]
      %v2672 = vld [vmem:[%s1 + $0xc24] sm:$0xff]
      %v2673 = vld [vmem:[%s1 + $0xc2c] sm:$0xf]
      %v2674 = vld [vmem:[%s1 + $0xc30] sm:$0xff]
      %v2675 = vld [vmem:[%s1 + $0xc38] sm:$0xf]
      %v2676 = vld [vmem:[%s1 + $0xc3c] sm:$0xff]
      %v2677 = vld [vmem:[%s1 + $0xc44] sm:$0xf]
      %v2678 = vld [vmem:[%s1 + $0xc48] sm:$0xff]
      %v2679 = vld [vmem:[%s1 + $0xc50] sm:$0xf]
      %v2680 = vld [vmem:[%s1 + $0xc54] sm:$0xff]
      %v2681 = vld [vmem:[%s1 + $0xc5c] sm:$0xf]
      %v2682 = vld [vmem:[%s1 + $0xc60] sm:$0xff]
      %v2683 = vld [vmem:[%s1 + $0xc68] sm:$0xf]
      %v2684 = vld [vmem:[%s1 + $0xc6c] sm:$0xff]
      %v2685 = vld [vmem:[%s1 + $0xc74] sm:$0xf]
      %v2686 = vld [vmem:[%s1 + $0xc78] sm:$0xff]
      %v2687 = vld [vmem:[%s1 + $0xc80] sm:$0xf]
      %v2688 = vld [vmem:[%s1 + $0xc84] sm:$0xff]
      %v2689 = vld [vmem:[%s1 + $0xc8c] sm:$0xf]
      %v2690 = vld [vmem:[%s1 + $0xc90] sm:$0xff]
      %v2691 = vld [vmem:[%s1 + $0xc98] sm:$0xf]
      %v2692 = vld [vmem:[%s1 + $0xc9c] sm:$0xff]
      %v2693 = vld [vmem:[%s1 + $0xca4] sm:$0xf]
      %v2694 = vld [vmem:[%s1 + $0xca8] sm:$0xff]
      %v2695 = vld [vmem:[%s1 + $0xcb0] sm:$0xf]
      %v2696 = vld [vmem:[%s1 + $0xcb4] sm:$0xff]
      %v2697 = vld [vmem:[%s1 + $0xcbc] sm:$0xf]
      %v2698 = vld [vmem:[%s1 + $0xcc0] sm:$0xff]
      %v2699 = vld [vmem:[%s1 + $0xcc8] sm:$0xf]
      %v2700 = vld [vmem:[%s1 + $0xccc] sm:$0xff]
      %v2701 = vld [vmem:[%s1 + $0xcd4] sm:$0xf]
      %v2702 = vld [vmem:[%s1 + $0xcd8] sm:$0xff]
      %v2703 = vld [vmem:[%s1 + $0xce0] sm:$0xf]
      %v2704 = vld [vmem:[%s1 + $0xce4] sm:$0xff]
      %v2705 = vld [vmem:[%s1 + $0xcec] sm:$0xf]
      %v2706 = vld [vmem:[%s1 + $0xcf0] sm:$0xff]
      %v2707 = vld [vmem:[%s1 + $0xcf8] sm:$0xf]
      %v2708 = vld [vmem:[%s1 + $0xcfc] sm:$0xff]
      %v2709 = vld [vmem:[%s1 + $0xd04] sm:$0xf]
      %v2710 = vld [vmem:[%s1 + $0xd08] sm:$0xff]
      %v2711 = vld [vmem:[%s1 + $0xd10] sm:$0xf]
      %v2712 = vld [vmem:[%s1 + $0xd14] sm:$0xff]
      %v2713 = vld [vmem:[%s1 + $0xd1c] sm:$0xf]
      %v2714 = vld [vmem:[%s1 + $0xd20] sm:$0xff]
      %v2715 = vld [vmem:[%s1 + $0xd28] sm:$0xf]
      %v2716 = vld [vmem:[%s1 + $0xd2c] sm:$0xff]
      %v2717 = vld [vmem:[%s1 + $0xd34] sm:$0xf]
      %v2718 = vld [vmem:[%s1 + $0xd38] sm:$0xff]
      %v2719 = vld [vmem:[%s1 + $0xd40] sm:$0xf]
      %v2720 = vld [vmem:[%s1 + $0xd44] sm:$0xff]
      %v2721 = vld [vmem:[%s1 + $0xd4c] sm:$0xf]
      %v2722 = vld [vmem:[%s1 + $0xd50] sm:$0xff]
      %v2723 = vld [vmem:[%s1 + $0xd58] sm:$0xf]
      %v2724 = vld [vmem:[%s1 + $0xd5c] sm:$0xff]
      %v2725 = vld [vmem:[%s1 + $0xd64] sm:$0xf]
      %v2726 = vld [vmem:[%s1 + $0xd68] sm:$0xff]
      %v2727 = vld [vmem:[%s1 + $0xd70] sm:$0xf]
      %v2728 = vld [vmem:[%s1 + $0xd74] sm:$0xff]
      %v2729 = vld [vmem:[%s1 + $0xd7c] sm:$0xf]
      %v2730 = vld [vmem:[%s1 + $0xd80] sm:$0xff]
      %v2731 = vld [vmem:[%s1 + $0xd88] sm:$0xf]
      %v2732 = vld [vmem:[%s1 + $0xd8c] sm:$0xff]
      %v2733 = vld [vmem:[%s1 + $0xd94] sm:$0xf]
      %v2734 = vld [vmem:[%s1 + $0xd98] sm:$0xff]
      %v2735 = vld [vmem:[%s1 + $0xda0] sm:$0xf]
      %v2736 = vld [vmem:[%s1 + $0xda4] sm:$0xff]
      %v2737 = vld [vmem:[%s1 + $0xdac] sm:$0xf]
      %v2738 = vld [vmem:[%s1 + $0xdb0] sm:$0xff]
      %v2739 = vld [vmem:[%s1 + $0xdb8] sm:$0xf]
      %v2740 = vld [vmem:[%s1 + $0xdbc] sm:$0xff]
      %v2741 = vld [vmem:[%s1 + $0xdc4] sm:$0xf]
      %v2742 = vld [vmem:[%s1 + $0xdc8] sm:$0xff]
      %v2743 = vld [vmem:[%s1 + $0xdd0] sm:$0xf]
      %v2744 = vld [vmem:[%s1 + $0xdd4] sm:$0xff]
      %v2745 = vld [vmem:[%s1 + $0xddc] sm:$0xf]
      %v2746 = vld [vmem:[%s1 + $0xde0] sm:$0xff]
      %v2747 = vld [vmem:[%s1 + $0xde8] sm:$0xf]
      %v2748 = vld [vmem:[%s1 + $0xdec] sm:$0xff]
      %v2749 = vld [vmem:[%s1 + $0xdf4] sm:$0xf]
      %v2750 = vld [vmem:[%s1 + $0xdf8] sm:$0xff]
      %v2751 = vld [vmem:[%s1 + $0xe00] sm:$0xf]
      %v2752 = vld [vmem:[%s1 + $0xe04] sm:$0xff]
      %v2753 = vld [vmem:[%s1 + $0xe0c] sm:$0xf]
      %v3354 = vunpack.c.l.b16 %v2154
      %v3355 = vunpack.c.h.b16 %v2154
      %v3356 = vunpack.c.l.b16 %v2155
      %v3357 = vunpack.c.l.b16 %v2156
      %v3358 = vunpack.c.h.b16 %v2156
      %v3359 = vunpack.c.l.b16 %v2157
      %v3360 = vunpack.c.l.b16 %v2158
      %v3361 = vunpack.c.h.b16 %v2158
      %v3362 = vunpack.c.l.b16 %v2159
      %v3363 = vunpack.c.l.b16 %v2160
      %v3364 = vunpack.c.h.b16 %v2160
      %v3365 = vunpack.c.l.b16 %v2161
      %v3366 = vunpack.c.l.b16 %v2162
      %v3367 = vunpack.c.h.b16 %v2162
      %v3368 = vunpack.c.l.b16 %v2163
      %v3369 = vunpack.c.l.b16 %v2164
      %v3370 = vunpack.c.h.b16 %v2164
      %v3371 = vunpack.c.l.b16 %v2165
      %v3372 = vunpack.c.l.b16 %v2166
      %v3373 = vunpack.c.h.b16 %v2166
      %v3374 = vunpack.c.l.b16 %v2167
      %v3375 = vunpack.c.l.b16 %v2168
      %v3376 = vunpack.c.h.b16 %v2168
      %v3377 = vunpack.c.l.b16 %v2169
      %v3378 = vunpack.c.l.b16 %v2170
      %v3379 = vunpack.c.h.b16 %v2170
      %v3380 = vunpack.c.l.b16 %v2171
      %v3381 = vunpack.c.l.b16 %v2172
      %v3382 = vunpack.c.h.b16 %v2172
      %v3383 = vunpack.c.l.b16 %v2173
      %v3384 = vunpack.c.l.b16 %v2174
      %v3385 = vunpack.c.h.b16 %v2174
      %v3386 = vunpack.c.l.b16 %v2175
      %v3387 = vunpack.c.l.b16 %v2176
      %v3388 = vunpack.c.h.b16 %v2176
      %v3389 = vunpack.c.l.b16 %v2177
      %v3390 = vunpack.c.l.b16 %v2178
      %v3391 = vunpack.c.h.b16 %v2178
      %v3392 = vunpack.c.l.b16 %v2179
      %v3393 = vunpack.c.l.b16 %v2180
      %v3394 = vunpack.c.h.b16 %v2180
      %v3395 = vunpack.c.l.b16 %v2181
      %v3396 = vunpack.c.l.b16 %v2182
      %v3397 = vunpack.c.h.b16 %v2182
      %v3398 = vunpack.c.l.b16 %v2183
      %v3399 = vunpack.c.l.b16 %v2184
      %v3400 = vunpack.c.h.b16 %v2184
      %v3401 = vunpack.c.l.b16 %v2185
      %v3402 = vunpack.c.l.b16 %v2186
      %v3403 = vunpack.c.h.b16 %v2186
      %v3404 = vunpack.c.l.b16 %v2187
      %v3405 = vunpack.c.l.b16 %v2188
      %v3406 = vunpack.c.h.b16 %v2188
      %v3407 = vunpack.c.l.b16 %v2189
      %v3408 = vunpack.c.l.b16 %v2190
      %v3409 = vunpack.c.h.b16 %v2190
      %v3410 = vunpack.c.l.b16 %v2191
      %v3411 = vunpack.c.l.b16 %v2192
      %v3412 = vunpack.c.h.b16 %v2192
      %v3413 = vunpack.c.l.b16 %v2193
      %v3414 = vunpack.c.l.b16 %v2194
      %v3415 = vunpack.c.h.b16 %v2194
      %v3416 = vunpack.c.l.b16 %v2195
      %v3417 = vunpack.c.l.b16 %v2196
      %v3418 = vunpack.c.h.b16 %v2196
      %v3419 = vunpack.c.l.b16 %v2197
      %v3420 = vunpack.c.l.b16 %v2198
      %v3421 = vunpack.c.h.b16 %v2198
      %v3422 = vunpack.c.l.b16 %v2199
      %v3423 = vunpack.c.l.b16 %v2200
      %v3424 = vunpack.c.h.b16 %v2200
      %v3425 = vunpack.c.l.b16 %v2201
      %v3426 = vunpack.c.l.b16 %v2202
      %v3427 = vunpack.c.h.b16 %v2202
      %v3428 = vunpack.c.l.b16 %v2203
      %v3429 = vunpack.c.l.b16 %v2204
      %v3430 = vunpack.c.h.b16 %v2204
      %v3431 = vunpack.c.l.b16 %v2205
      %v3432 = vunpack.c.l.b16 %v2206
      %v3433 = vunpack.c.h.b16 %v2206
      %v3434 = vunpack.c.l.b16 %v2207
      %v3435 = vunpack.c.l.b16 %v2208
      %v3436 = vunpack.c.h.b16 %v2208
      %v3437 = vunpack.c.l.b16 %v2209
      %v3438 = vunpack.c.l.b16 %v2210
      %v3439 = vunpack.c.h.b16 %v2210
      %v3440 = vunpack.c.l.b16 %v2211
      %v3441 = vunpack.c.l.b16 %v2212
      %v3442 = vunpack.c.h.b16 %v2212
      %v3443 = vunpack.c.l.b16 %v2213
      %v3444 = vunpack.c.l.b16 %v2214
      %v3445 = vunpack.c.h.b16 %v2214
      %v3446 = vunpack.c.l.b16 %v2215
      %v3447 = vunpack.c.l.b16 %v2216
      %v3448 = vunpack.c.h.b16 %v2216
      %v3449 = vunpack.c.l.b16 %v2217
      %v3450 = vunpack.c.l.b16 %v2218
      %v3451 = vunpack.c.h.b16 %v2218
      %v3452 = vunpack.c.l.b16 %v2219
      %v3453 = vunpack.c.l.b16 %v2220
      %v3454 = vunpack.c.h.b16 %v2220
      %v3455 = vunpack.c.l.b16 %v2221
      %v3456 = vunpack.c.l.b16 %v2222
      %v3457 = vunpack.c.h.b16 %v2222
      %v3458 = vunpack.c.l.b16 %v2223
      %v3459 = vunpack.c.l.b16 %v2224
      %v3460 = vunpack.c.h.b16 %v2224
      %v3461 = vunpack.c.l.b16 %v2225
      %v3462 = vunpack.c.l.b16 %v2226
      %v3463 = vunpack.c.h.b16 %v2226
      %v3464 = vunpack.c.l.b16 %v2227
      %v3465 = vunpack.c.l.b16 %v2228
      %v3466 = vunpack.c.h.b16 %v2228
      %v3467 = vunpack.c.l.b16 %v2229
      %v3468 = vunpack.c.l.b16 %v2230
      %v3469 = vunpack.c.h.b16 %v2230
      %v3470 = vunpack.c.l.b16 %v2231
      %v3471 = vunpack.c.l.b16 %v2232
      %v3472 = vunpack.c.h.b16 %v2232
      %v3473 = vunpack.c.l.b16 %v2233
      %v3474 = vunpack.c.l.b16 %v2234
      %v3475 = vunpack.c.h.b16 %v2234
      %v3476 = vunpack.c.l.b16 %v2235
      %v3477 = vunpack.c.l.b16 %v2236
      %v3478 = vunpack.c.h.b16 %v2236
      %v3479 = vunpack.c.l.b16 %v2237
      %v3480 = vunpack.c.l.b16 %v2238
      %v3481 = vunpack.c.h.b16 %v2238
      %v3482 = vunpack.c.l.b16 %v2239
      %v3483 = vunpack.c.l.b16 %v2240
      %v3484 = vunpack.c.h.b16 %v2240
      %v3485 = vunpack.c.l.b16 %v2241
      %v3486 = vunpack.c.l.b16 %v2242
      %v3487 = vunpack.c.h.b16 %v2242
      %v3488 = vunpack.c.l.b16 %v2243
      %v3489 = vunpack.c.l.b16 %v2244
      %v3490 = vunpack.c.h.b16 %v2244
      %v3491 = vunpack.c.l.b16 %v2245
      %v3492 = vunpack.c.l.b16 %v2246
      %v3493 = vunpack.c.h.b16 %v2246
      %v3494 = vunpack.c.l.b16 %v2247
      %v3495 = vunpack.c.l.b16 %v2248
      %v3496 = vunpack.c.h.b16 %v2248
      %v3497 = vunpack.c.l.b16 %v2249
      %v3498 = vunpack.c.l.b16 %v2250
      %v3499 = vunpack.c.h.b16 %v2250
      %v3500 = vunpack.c.l.b16 %v2251
      %v3501 = vunpack.c.l.b16 %v2252
      %v3502 = vunpack.c.h.b16 %v2252
      %v3503 = vunpack.c.l.b16 %v2253
      %v3504 = vunpack.c.l.b16 %v2254
      %v3505 = vunpack.c.h.b16 %v2254
      %v3506 = vunpack.c.l.b16 %v2255
      %v3507 = vunpack.c.l.b16 %v2256
      %v3508 = vunpack.c.h.b16 %v2256
      %v3509 = vunpack.c.l.b16 %v2257
      %v3510 = vunpack.c.l.b16 %v2258
      %v3511 = vunpack.c.h.b16 %v2258
      %v3512 = vunpack.c.l.b16 %v2259
      %v3513 = vunpack.c.l.b16 %v2260
      %v3514 = vunpack.c.h.b16 %v2260
      %v3515 = vunpack.c.l.b16 %v2261
      %v3516 = vunpack.c.l.b16 %v2262
      %v3517 = vunpack.c.h.b16 %v2262
      %v3518 = vunpack.c.l.b16 %v2263
      %v3519 = vunpack.c.l.b16 %v2264
      %v3520 = vunpack.c.h.b16 %v2264
      %v3521 = vunpack.c.l.b16 %v2265
      %v3522 = vunpack.c.l.b16 %v2266
      %v3523 = vunpack.c.h.b16 %v2266
      %v3524 = vunpack.c.l.b16 %v2267
      %v3525 = vunpack.c.l.b16 %v2268
      %v3526 = vunpack.c.h.b16 %v2268
      %v3527 = vunpack.c.l.b16 %v2269
      %v3528 = vunpack.c.l.b16 %v2270
      %v3529 = vunpack.c.h.b16 %v2270
      %v3530 = vunpack.c.l.b16 %v2271
      %v3531 = vunpack.c.l.b16 %v2272
      %v3532 = vunpack.c.h.b16 %v2272
      %v3533 = vunpack.c.l.b16 %v2273
      %v3534 = vunpack.c.l.b16 %v2274
      %v3535 = vunpack.c.h.b16 %v2274
      %v3536 = vunpack.c.l.b16 %v2275
      %v3537 = vunpack.c.l.b16 %v2276
      %v3538 = vunpack.c.h.b16 %v2276
      %v3539 = vunpack.c.l.b16 %v2277
      %v3540 = vunpack.c.l.b16 %v2278
      %v3541 = vunpack.c.h.b16 %v2278
      %v3542 = vunpack.c.l.b16 %v2279
      %v3543 = vunpack.c.l.b16 %v2280
      %v3544 = vunpack.c.h.b16 %v2280
      %v3545 = vunpack.c.l.b16 %v2281
      %v3546 = vunpack.c.l.b16 %v2282
      %v3547 = vunpack.c.h.b16 %v2282
      %v3548 = vunpack.c.l.b16 %v2283
      %v3549 = vunpack.c.l.b16 %v2284
      %v3550 = vunpack.c.h.b16 %v2284
      %v3551 = vunpack.c.l.b16 %v2285
      %v3552 = vunpack.c.l.b16 %v2286
      %v3553 = vunpack.c.h.b16 %v2286
      %v3554 = vunpack.c.l.b16 %v2287
      %v3555 = vunpack.c.l.b16 %v2288
      %v3556 = vunpack.c.h.b16 %v2288
      %v3557 = vunpack.c.l.b16 %v2289
      %v3558 = vunpack.c.l.b16 %v2290
      %v3559 = vunpack.c.h.b16 %v2290
      %v3560 = vunpack.c.l.b16 %v2291
      %v3561 = vunpack.c.l.b16 %v2292
      %v3562 = vunpack.c.h.b16 %v2292
      %v3563 = vunpack.c.l.b16 %v2293
      %v3564 = vunpack.c.l.b16 %v2294
      %v3565 = vunpack.c.h.b16 %v2294
      %v3566 = vunpack.c.l.b16 %v2295
      %v3567 = vunpack.c.l.b16 %v2296
      %v3568 = vunpack.c.h.b16 %v2296
      %v3569 = vunpack.c.l.b16 %v2297
      %v3570 = vunpack.c.l.b16 %v2298
      %v3571 = vunpack.c.h.b16 %v2298
      %v3572 = vunpack.c.l.b16 %v2299
      %v3573 = vunpack.c.l.b16 %v2300
      %v3574 = vunpack.c.h.b16 %v2300
      %v3575 = vunpack.c.l.b16 %v2301
      %v3576 = vunpack.c.l.b16 %v2302
      %v3577 = vunpack.c.h.b16 %v2302
      %v3578 = vunpack.c.l.b16 %v2303
      %v3579 = vunpack.c.l.b16 %v2304
      %v3580 = vunpack.c.h.b16 %v2304
      %v3581 = vunpack.c.l.b16 %v2305
      %v3582 = vunpack.c.l.b16 %v2306
      %v3583 = vunpack.c.h.b16 %v2306
      %v3584 = vunpack.c.l.b16 %v2307
      %v3585 = vunpack.c.l.b16 %v2308
      %v3586 = vunpack.c.h.b16 %v2308
      %v3587 = vunpack.c.l.b16 %v2309
      %v3588 = vunpack.c.l.b16 %v2310
      %v3589 = vunpack.c.h.b16 %v2310
      %v3590 = vunpack.c.l.b16 %v2311
      %v3591 = vunpack.c.l.b16 %v2312
      %v3592 = vunpack.c.h.b16 %v2312
      %v3593 = vunpack.c.l.b16 %v2313
      %v3594 = vunpack.c.l.b16 %v2314
      %v3595 = vunpack.c.h.b16 %v2314
      %v3596 = vunpack.c.l.b16 %v2315
      %v3597 = vunpack.c.l.b16 %v2316
      %v3598 = vunpack.c.h.b16 %v2316
      %v3599 = vunpack.c.l.b16 %v2317
      %v3600 = vunpack.c.l.b16 %v2318
      %v3601 = vunpack.c.h.b16 %v2318
      %v3602 = vunpack.c.l.b16 %v2319
      %v3603 = vunpack.c.l.b16 %v2320
      %v3604 = vunpack.c.h.b16 %v2320
      %v3605 = vunpack.c.l.b16 %v2321
      %v3606 = vunpack.c.l.b16 %v2322
      %v3607 = vunpack.c.h.b16 %v2322
      %v3608 = vunpack.c.l.b16 %v2323
      %v3609 = vunpack.c.l.b16 %v2324
      %v3610 = vunpack.c.h.b16 %v2324
      %v3611 = vunpack.c.l.b16 %v2325
      %v3612 = vunpack.c.l.b16 %v2326
      %v3613 = vunpack.c.h.b16 %v2326
      %v3614 = vunpack.c.l.b16 %v2327
      %v3615 = vunpack.c.l.b16 %v2328
      %v3616 = vunpack.c.h.b16 %v2328
      %v3617 = vunpack.c.l.b16 %v2329
      %v3618 = vunpack.c.l.b16 %v2330
      %v3619 = vunpack.c.h.b16 %v2330
      %v3620 = vunpack.c.l.b16 %v2331
      %v3621 = vunpack.c.l.b16 %v2332
      %v3622 = vunpack.c.h.b16 %v2332
      %v3623 = vunpack.c.l.b16 %v2333
      %v3624 = vunpack.c.l.b16 %v2334
      %v3625 = vunpack.c.h.b16 %v2334
      %v3626 = vunpack.c.l.b16 %v2335
      %v3627 = vunpack.c.l.b16 %v2336
      %v3628 = vunpack.c.h.b16 %v2336
      %v3629 = vunpack.c.l.b16 %v2337
      %v3630 = vunpack.c.l.b16 %v2338
      %v3631 = vunpack.c.h.b16 %v2338
      %v3632 = vunpack.c.l.b16 %v2339
      %v3633 = vunpack.c.l.b16 %v2340
      %v3634 = vunpack.c.h.b16 %v2340
      %v3635 = vunpack.c.l.b16 %v2341
      %v3636 = vunpack.c.l.b16 %v2342
      %v3637 = vunpack.c.h.b16 %v2342
      %v3638 = vunpack.c.l.b16 %v2343
      %v3639 = vunpack.c.l.b16 %v2344
      %v3640 = vunpack.c.h.b16 %v2344
      %v3641 = vunpack.c.l.b16 %v2345
      %v3642 = vunpack.c.l.b16 %v2346
      %v3643 = vunpack.c.h.b16 %v2346
      %v3644 = vunpack.c.l.b16 %v2347
      %v3645 = vunpack.c.l.b16 %v2348
      %v3646 = vunpack.c.h.b16 %v2348
      %v3647 = vunpack.c.l.b16 %v2349
      %v3648 = vunpack.c.l.b16 %v2350
      %v3649 = vunpack.c.h.b16 %v2350
      %v3650 = vunpack.c.l.b16 %v2351
      %v3651 = vunpack.c.l.b16 %v2352
      %v3652 = vunpack.c.h.b16 %v2352
      %v3653 = vunpack.c.l.b16 %v2353
      %v3654 = vunpack.c.l.b16 %v2354
      %v3655 = vunpack.c.h.b16 %v2354
      %v3656 = vunpack.c.l.b16 %v2355
      %v3657 = vunpack.c.l.b16 %v2356
      %v3658 = vunpack.c.h.b16 %v2356
      %v3659 = vunpack.c.l.b16 %v2357
      %v3660 = vunpack.c.l.b16 %v2358
      %v3661 = vunpack.c.h.b16 %v2358
      %v3662 = vunpack.c.l.b16 %v2359
      %v3663 = vunpack.c.l.b16 %v2360
      %v3664 = vunpack.c.h.b16 %v2360
      %v3665 = vunpack.c.l.b16 %v2361
      %v3666 = vunpack.c.l.b16 %v2362
      %v3667 = vunpack.c.h.b16 %v2362
      %v3668 = vunpack.c.l.b16 %v2363
      %v3669 = vunpack.c.l.b16 %v2364
      %v3670 = vunpack.c.h.b16 %v2364
      %v3671 = vunpack.c.l.b16 %v2365
      %v3672 = vunpack.c.l.b16 %v2366
      %v3673 = vunpack.c.h.b16 %v2366
      %v3674 = vunpack.c.l.b16 %v2367
      %v3675 = vunpack.c.l.b16 %v2368
      %v3676 = vunpack.c.h.b16 %v2368
      %v3677 = vunpack.c.l.b16 %v2369
      %v3678 = vunpack.c.l.b16 %v2370
      %v3679 = vunpack.c.h.b16 %v2370
      %v3680 = vunpack.c.l.b16 %v2371
      %v3681 = vunpack.c.l.b16 %v2372
      %v3682 = vunpack.c.h.b16 %v2372
      %v3683 = vunpack.c.l.b16 %v2373
      %v3684 = vunpack.c.l.b16 %v2374
      %v3685 = vunpack.c.h.b16 %v2374
      %v3686 = vunpack.c.l.b16 %v2375
      %v3687 = vunpack.c.l.b16 %v2376
      %v3688 = vunpack.c.h.b16 %v2376
      %v3689 = vunpack.c.l.b16 %v2377
      %v3690 = vunpack.c.l.b16 %v2378
      %v3691 = vunpack.c.h.b16 %v2378
      %v3692 = vunpack.c.l.b16 %v2379
      %v3693 = vunpack.c.l.b16 %v2380
      %v3694 = vunpack.c.h.b16 %v2380
      %v3695 = vunpack.c.l.b16 %v2381
      %v3696 = vunpack.c.l.b16 %v2382
      %v3697 = vunpack.c.h.b16 %v2382
      %v3698 = vunpack.c.l.b16 %v2383
      %v3699 = vunpack.c.l.b16 %v2384
      %v3700 = vunpack.c.h.b16 %v2384
      %v3701 = vunpack.c.l.b16 %v2385
      %v3702 = vunpack.c.l.b16 %v2386
      %v3703 = vunpack.c.h.b16 %v2386
      %v3704 = vunpack.c.l.b16 %v2387
      %v3705 = vunpack.c.l.b16 %v2388
      %v3706 = vunpack.c.h.b16 %v2388
      %v3707 = vunpack.c.l.b16 %v2389
      %v3708 = vunpack.c.l.b16 %v2390
      %v3709 = vunpack.c.h.b16 %v2390
      %v3710 = vunpack.c.l.b16 %v2391
      %v3711 = vunpack.c.l.b16 %v2392
      %v3712 = vunpack.c.h.b16 %v2392
      %v3713 = vunpack.c.l.b16 %v2393
      %v3714 = vunpack.c.l.b16 %v2394
      %v3715 = vunpack.c.h.b16 %v2394
      %v3716 = vunpack.c.l.b16 %v2395
      %v3717 = vunpack.c.l.b16 %v2396
      %v3718 = vunpack.c.h.b16 %v2396
      %v3719 = vunpack.c.l.b16 %v2397
      %v3720 = vunpack.c.l.b16 %v2398
      %v3721 = vunpack.c.h.b16 %v2398
      %v3722 = vunpack.c.l.b16 %v2399
      %v3723 = vunpack.c.l.b16 %v2400
      %v3724 = vunpack.c.h.b16 %v2400
      %v3725 = vunpack.c.l.b16 %v2401
      %v3726 = vunpack.c.l.b16 %v2402
      %v3727 = vunpack.c.h.b16 %v2402
      %v3728 = vunpack.c.l.b16 %v2403
      %v3729 = vunpack.c.l.b16 %v2404
      %v3730 = vunpack.c.h.b16 %v2404
      %v3731 = vunpack.c.l.b16 %v2405
      %v3732 = vunpack.c.l.b16 %v2406
      %v3733 = vunpack.c.h.b16 %v2406
      %v3734 = vunpack.c.l.b16 %v2407
      %v3735 = vunpack.c.l.b16 %v2408
      %v3736 = vunpack.c.h.b16 %v2408
      %v3737 = vunpack.c.l.b16 %v2409
      %v3738 = vunpack.c.l.b16 %v2410
      %v3739 = vunpack.c.h.b16 %v2410
      %v3740 = vunpack.c.l.b16 %v2411
      %v3741 = vunpack.c.l.b16 %v2412
      %v3742 = vunpack.c.h.b16 %v2412
      %v3743 = vunpack.c.l.b16 %v2413
      %v3744 = vunpack.c.l.b16 %v2414
      %v3745 = vunpack.c.h.b16 %v2414
      %v3746 = vunpack.c.l.b16 %v2415
      %v3747 = vunpack.c.l.b16 %v2416
      %v3748 = vunpack.c.h.b16 %v2416
      %v3749 = vunpack.c.l.b16 %v2417
      %v3750 = vunpack.c.l.b16 %v2418
      %v3751 = vunpack.c.h.b16 %v2418
      %v3752 = vunpack.c.l.b16 %v2419
      %v3753 = vunpack.c.l.b16 %v2420
      %v3754 = vunpack.c.h.b16 %v2420
      %v3755 = vunpack.c.l.b16 %v2421
      %v3756 = vunpack.c.l.b16 %v2422
      %v3757 = vunpack.c.h.b16 %v2422
      %v3758 = vunpack.c.l.b16 %v2423
      %v3759 = vunpack.c.l.b16 %v2424
      %v3760 = vunpack.c.h.b16 %v2424
      %v3761 = vunpack.c.l.b16 %v2425
      %v3762 = vunpack.c.l.b16 %v2426
      %v3763 = vunpack.c.h.b16 %v2426
      %v3764 = vunpack.c.l.b16 %v2427
      %v3765 = vunpack.c.l.b16 %v2428
      %v3766 = vunpack.c.h.b16 %v2428
      %v3767 = vunpack.c.l.b16 %v2429
      %v3768 = vunpack.c.l.b16 %v2430
      %v3769 = vunpack.c.h.b16 %v2430
      %v3770 = vunpack.c.l.b16 %v2431
      %v3771 = vunpack.c.l.b16 %v2432
      %v3772 = vunpack.c.h.b16 %v2432
      %v3773 = vunpack.c.l.b16 %v2433
      %v3774 = vunpack.c.l.b16 %v2434
      %v3775 = vunpack.c.h.b16 %v2434
      %v3776 = vunpack.c.l.b16 %v2435
      %v3777 = vunpack.c.l.b16 %v2436
      %v3778 = vunpack.c.h.b16 %v2436
      %v3779 = vunpack.c.l.b16 %v2437
      %v3780 = vunpack.c.l.b16 %v2438
      %v3781 = vunpack.c.h.b16 %v2438
      %v3782 = vunpack.c.l.b16 %v2439
      %v3783 = vunpack.c.l.b16 %v2440
      %v3784 = vunpack.c.h.b16 %v2440
      %v3785 = vunpack.c.l.b16 %v2441
      %v3786 = vunpack.c.l.b16 %v2442
      %v3787 = vunpack.c.h.b16 %v2442
      %v3788 = vunpack.c.l.b16 %v2443
      %v3789 = vunpack.c.l.b16 %v2444
      %v3790 = vunpack.c.h.b16 %v2444
      %v3791 = vunpack.c.l.b16 %v2445
      %v3792 = vunpack.c.l.b16 %v2446
      %v3793 = vunpack.c.h.b16 %v2446
      %v3794 = vunpack.c.l.b16 %v2447
      %v3795 = vunpack.c.l.b16 %v2448
      %v3796 = vunpack.c.h.b16 %v2448
      %v3797 = vunpack.c.l.b16 %v2449
      %v3798 = vunpack.c.l.b16 %v2450
      %v3799 = vunpack.c.h.b16 %v2450
      %v3800 = vunpack.c.l.b16 %v2451
      %v3801 = vunpack.c.l.b16 %v2452
      %v3802 = vunpack.c.h.b16 %v2452
      %v3803 = vunpack.c.l.b16 %v2453
      %v3804 = vunpack.c.l.b16 %v2454
      %v3805 = vunpack.c.h.b16 %v2454
      %v3806 = vunpack.c.l.b16 %v2455
      %v3807 = vunpack.c.l.b16 %v2456
      %v3808 = vunpack.c.h.b16 %v2456
      %v3809 = vunpack.c.l.b16 %v2457
      %v3810 = vunpack.c.l.b16 %v2458
      %v3811 = vunpack.c.h.b16 %v2458
      %v3812 = vunpack.c.l.b16 %v2459
      %v3813 = vunpack.c.l.b16 %v2460
      %v3814 = vunpack.c.h.b16 %v2460
      %v3815 = vunpack.c.l.b16 %v2461
      %v3816 = vunpack.c.l.b16 %v2462
      %v3817 = vunpack.c.h.b16 %v2462
      %v3818 = vunpack.c.l.b16 %v2463
      %v3819 = vunpack.c.l.b16 %v2464
      %v3820 = vunpack.c.h.b16 %v2464
      %v3821 = vunpack.c.l.b16 %v2465
      %v3822 = vunpack.c.l.b16 %v2466
      %v3823 = vunpack.c.h.b16 %v2466
      %v3824 = vunpack.c.l.b16 %v2467
      %v3825 = vunpack.c.l.b16 %v2468
      %v3826 = vunpack.c.h.b16 %v2468
      %v3827 = vunpack.c.l.b16 %v2469
      %v3828 = vunpack.c.l.b16 %v2470
      %v3829 = vunpack.c.h.b16 %v2470
      %v3830 = vunpack.c.l.b16 %v2471
      %v3831 = vunpack.c.l.b16 %v2472
      %v3832 = vunpack.c.h.b16 %v2472
      %v3833 = vunpack.c.l.b16 %v2473
      %v3834 = vunpack.c.l.b16 %v2474
      %v3835 = vunpack.c.h.b16 %v2474
      %v3836 = vunpack.c.l.b16 %v2475
      %v3837 = vunpack.c.l.b16 %v2476
      %v3838 = vunpack.c.h.b16 %v2476
      %v3839 = vunpack.c.l.b16 %v2477
      %v3840 = vunpack.c.l.b16 %v2478
      %v3841 = vunpack.c.h.b16 %v2478
      %v3842 = vunpack.c.l.b16 %v2479
      %v3843 = vunpack.c.l.b16 %v2480
      %v3844 = vunpack.c.h.b16 %v2480
      %v3845 = vunpack.c.l.b16 %v2481
      %v3846 = vunpack.c.l.b16 %v2482
      %v3847 = vunpack.c.h.b16 %v2482
      %v3848 = vunpack.c.l.b16 %v2483
      %v3849 = vunpack.c.l.b16 %v2484
      %v3850 = vunpack.c.h.b16 %v2484
      %v3851 = vunpack.c.l.b16 %v2485
      %v3852 = vunpack.c.l.b16 %v2486
      %v3853 = vunpack.c.h.b16 %v2486
      %v3854 = vunpack.c.l.b16 %v2487
      %v3855 = vunpack.c.l.b16 %v2488
      %v3856 = vunpack.c.h.b16 %v2488
      %v3857 = vunpack.c.l.b16 %v2489
      %v3858 = vunpack.c.l.b16 %v2490
      %v3859 = vunpack.c.h.b16 %v2490
      %v3860 = vunpack.c.l.b16 %v2491
      %v3861 = vunpack.c.l.b16 %v2492
      %v3862 = vunpack.c.h.b16 %v2492
      %v3863 = vunpack.c.l.b16 %v2493
      %v3864 = vunpack.c.l.b16 %v2494
      %v3865 = vunpack.c.h.b16 %v2494
      %v3866 = vunpack.c.l.b16 %v2495
      %v3867 = vunpack.c.l.b16 %v2496
      %v3868 = vunpack.c.h.b16 %v2496
      %v3869 = vunpack.c.l.b16 %v2497
      %v3870 = vunpack.c.l.b16 %v2498
      %v3871 = vunpack.c.h.b16 %v2498
      %v3872 = vunpack.c.l.b16 %v2499
      %v3873 = vunpack.c.l.b16 %v2500
      %v3874 = vunpack.c.h.b16 %v2500
      %v3875 = vunpack.c.l.b16 %v2501
      %v3876 = vunpack.c.l.b16 %v2502
      %v3877 = vunpack.c.h.b16 %v2502
      %v3878 = vunpack.c.l.b16 %v2503
      %v3879 = vunpack.c.l.b16 %v2504
      %v3880 = vunpack.c.h.b16 %v2504
      %v3881 = vunpack.c.l.b16 %v2505
      %v3882 = vunpack.c.l.b16 %v2506
      %v3883 = vunpack.c.h.b16 %v2506
      %v3884 = vunpack.c.l.b16 %v2507
      %v3885 = vunpack.c.l.b16 %v2508
      %v3886 = vunpack.c.h.b16 %v2508
      %v3887 = vunpack.c.l.b16 %v2509
      %v3888 = vunpack.c.l.b16 %v2510
      %v3889 = vunpack.c.h.b16 %v2510
      %v3890 = vunpack.c.l.b16 %v2511
      %v3891 = vunpack.c.l.b16 %v2512
      %v3892 = vunpack.c.h.b16 %v2512
      %v3893 = vunpack.c.l.b16 %v2513
      %v3894 = vunpack.c.l.b16 %v2514
      %v3895 = vunpack.c.h.b16 %v2514
      %v3896 = vunpack.c.l.b16 %v2515
      %v3897 = vunpack.c.l.b16 %v2516
      %v3898 = vunpack.c.h.b16 %v2516
      %v3899 = vunpack.c.l.b16 %v2517
      %v3900 = vunpack.c.l.b16 %v2518
      %v3901 = vunpack.c.h.b16 %v2518
      %v3902 = vunpack.c.l.b16 %v2519
      %v3903 = vunpack.c.l.b16 %v2520
      %v3904 = vunpack.c.h.b16 %v2520
      %v3905 = vunpack.c.l.b16 %v2521
      %v3906 = vunpack.c.l.b16 %v2522
      %v3907 = vunpack.c.h.b16 %v2522
      %v3908 = vunpack.c.l.b16 %v2523
      %v3909 = vunpack.c.l.b16 %v2524
      %v3910 = vunpack.c.h.b16 %v2524
      %v3911 = vunpack.c.l.b16 %v2525
      %v3912 = vunpack.c.l.b16 %v2526
      %v3913 = vunpack.c.h.b16 %v2526
      %v3914 = vunpack.c.l.b16 %v2527
      %v3915 = vunpack.c.l.b16 %v2528
      %v3916 = vunpack.c.h.b16 %v2528
      %v3917 = vunpack.c.l.b16 %v2529
      %v3918 = vunpack.c.l.b16 %v2530
      %v3919 = vunpack.c.h.b16 %v2530
      %v3920 = vunpack.c.l.b16 %v2531
      %v3921 = vunpack.c.l.b16 %v2532
      %v3922 = vunpack.c.h.b16 %v2532
      %v3923 = vunpack.c.l.b16 %v2533
      %v3924 = vunpack.c.l.b16 %v2534
      %v3925 = vunpack.c.h.b16 %v2534
      %v3926 = vunpack.c.l.b16 %v2535
      %v3927 = vunpack.c.l.b16 %v2536
      %v3928 = vunpack.c.h.b16 %v2536
      %v3929 = vunpack.c.l.b16 %v2537
      %v3930 = vunpack.c.l.b16 %v2538
      %v3931 = vunpack.c.h.b16 %v2538
      %v3932 = vunpack.c.l.b16 %v2539
      %v3933 = vunpack.c.l.b16 %v2540
      %v3934 = vunpack.c.h.b16 %v2540
      %v3935 = vunpack.c.l.b16 %v2541
      %v3936 = vunpack.c.l.b16 %v2542
      %v3937 = vunpack.c.h.b16 %v2542
      %v3938 = vunpack.c.l.b16 %v2543
      %v3939 = vunpack.c.l.b16 %v2544
      %v3940 = vunpack.c.h.b16 %v2544
      %v3941 = vunpack.c.l.b16 %v2545
      %v3942 = vunpack.c.l.b16 %v2546
      %v3943 = vunpack.c.h.b16 %v2546
      %v3944 = vunpack.c.l.b16 %v2547
      %v3945 = vunpack.c.l.b16 %v2548
      %v3946 = vunpack.c.h.b16 %v2548
      %v3947 = vunpack.c.l.b16 %v2549
      %v3948 = vunpack.c.l.b16 %v2550
      %v3949 = vunpack.c.h.b16 %v2550
      %v3950 = vunpack.c.l.b16 %v2551
      %v3951 = vunpack.c.l.b16 %v2552
      %v3952 = vunpack.c.h.b16 %v2552
      %v3953 = vunpack.c.l.b16 %v2553
      %v3954 = vunpack.c.l.b16 %v2554
      %v3955 = vunpack.c.h.b16 %v2554
      %v3956 = vunpack.c.l.b16 %v2555
      %v3957 = vunpack.c.l.b16 %v2556
      %v3958 = vunpack.c.h.b16 %v2556
      %v3959 = vunpack.c.l.b16 %v2557
      %v3960 = vunpack.c.l.b16 %v2558
      %v3961 = vunpack.c.h.b16 %v2558
      %v3962 = vunpack.c.l.b16 %v2559
      %v3963 = vunpack.c.l.b16 %v2560
      %v3964 = vunpack.c.h.b16 %v2560
      %v3965 = vunpack.c.l.b16 %v2561
      %v3966 = vunpack.c.l.b16 %v2562
      %v3967 = vunpack.c.h.b16 %v2562
      %v3968 = vunpack.c.l.b16 %v2563
      %v3969 = vunpack.c.l.b16 %v2564
      %v3970 = vunpack.c.h.b16 %v2564
      %v3971 = vunpack.c.l.b16 %v2565
      %v3972 = vunpack.c.l.b16 %v2566
      %v3973 = vunpack.c.h.b16 %v2566
      %v3974 = vunpack.c.l.b16 %v2567
      %v3975 = vunpack.c.l.b16 %v2568
      %v3976 = vunpack.c.h.b16 %v2568
      %v3977 = vunpack.c.l.b16 %v2569
      %v3978 = vunpack.c.l.b16 %v2570
      %v3979 = vunpack.c.h.b16 %v2570
      %v3980 = vunpack.c.l.b16 %v2571
      %v3981 = vunpack.c.l.b16 %v2572
      %v3982 = vunpack.c.h.b16 %v2572
      %v3983 = vunpack.c.l.b16 %v2573
      %v3984 = vunpack.c.l.b16 %v2574
      %v3985 = vunpack.c.h.b16 %v2574
      %v3986 = vunpack.c.l.b16 %v2575
      %v3987 = vunpack.c.l.b16 %v2576
      %v3988 = vunpack.c.h.b16 %v2576
      %v3989 = vunpack.c.l.b16 %v2577
      %v3990 = vunpack.c.l.b16 %v2578
      %v3991 = vunpack.c.h.b16 %v2578
      %v3992 = vunpack.c.l.b16 %v2579
      %v3993 = vunpack.c.l.b16 %v2580
      %v3994 = vunpack.c.h.b16 %v2580
      %v3995 = vunpack.c.l.b16 %v2581
      %v3996 = vunpack.c.l.b16 %v2582
      %v3997 = vunpack.c.h.b16 %v2582
      %v3998 = vunpack.c.l.b16 %v2583
      %v3999 = vunpack.c.l.b16 %v2584
      %v4000 = vunpack.c.h.b16 %v2584
      %v4001 = vunpack.c.l.b16 %v2585
      %v4002 = vunpack.c.l.b16 %v2586
      %v4003 = vunpack.c.h.b16 %v2586
      %v4004 = vunpack.c.l.b16 %v2587
      %v4005 = vunpack.c.l.b16 %v2588
      %v4006 = vunpack.c.h.b16 %v2588
      %v4007 = vunpack.c.l.b16 %v2589
      %v4008 = vunpack.c.l.b16 %v2590
      %v4009 = vunpack.c.h.b16 %v2590
      %v4010 = vunpack.c.l.b16 %v2591
      %v4011 = vunpack.c.l.b16 %v2592
      %v4012 = vunpack.c.h.b16 %v2592
      %v4013 = vunpack.c.l.b16 %v2593
      %v4014 = vunpack.c.l.b16 %v2594
      %v4015 = vunpack.c.h.b16 %v2594
      %v4016 = vunpack.c.l.b16 %v2595
      %v4017 = vunpack.c.l.b16 %v2596
      %v4018 = vunpack.c.h.b16 %v2596
      %v4019 = vunpack.c.l.b16 %v2597
      %v4020 = vunpack.c.l.b16 %v2598
      %v4021 = vunpack.c.h.b16 %v2598
      %v4022 = vunpack.c.l.b16 %v2599
      %v4023 = vunpack.c.l.b16 %v2600
      %v4024 = vunpack.c.h.b16 %v2600
      %v4025 = vunpack.c.l.b16 %v2601
      %v4026 = vunpack.c.l.b16 %v2602
      %v4027 = vunpack.c.h.b16 %v2602
      %v4028 = vunpack.c.l.b16 %v2603
      %v4029 = vunpack.c.l.b16 %v2604
      %v4030 = vunpack.c.h.b16 %v2604
      %v4031 = vunpack.c.l.b16 %v2605
      %v4032 = vunpack.c.l.b16 %v2606
      %v4033 = vunpack.c.h.b16 %v2606
      %v4034 = vunpack.c.l.b16 %v2607
      %v4035 = vunpack.c.l.b16 %v2608
      %v4036 = vunpack.c.h.b16 %v2608
      %v4037 = vunpack.c.l.b16 %v2609
      %v4038 = vunpack.c.l.b16 %v2610
      %v4039 = vunpack.c.h.b16 %v2610
      %v4040 = vunpack.c.l.b16 %v2611
      %v4041 = vunpack.c.l.b16 %v2612
      %v4042 = vunpack.c.h.b16 %v2612
      %v4043 = vunpack.c.l.b16 %v2613
      %v4044 = vunpack.c.l.b16 %v2614
      %v4045 = vunpack.c.h.b16 %v2614
      %v4046 = vunpack.c.l.b16 %v2615
      %v4047 = vunpack.c.l.b16 %v2616
      %v4048 = vunpack.c.h.b16 %v2616
      %v4049 = vunpack.c.l.b16 %v2617
      %v4050 = vunpack.c.l.b16 %v2618
      %v4051 = vunpack.c.h.b16 %v2618
      %v4052 = vunpack.c.l.b16 %v2619
      %v4053 = vunpack.c.l.b16 %v2620
      %v4054 = vunpack.c.h.b16 %v2620
      %v4055 = vunpack.c.l.b16 %v2621
      %v4056 = vunpack.c.l.b16 %v2622
      %v4057 = vunpack.c.h.b16 %v2622
      %v4058 = vunpack.c.l.b16 %v2623
      %v4059 = vunpack.c.l.b16 %v2624
      %v4060 = vunpack.c.h.b16 %v2624
      %v4061 = vunpack.c.l.b16 %v2625
      %v4062 = vunpack.c.l.b16 %v2626
      %v4063 = vunpack.c.h.b16 %v2626
      %v4064 = vunpack.c.l.b16 %v2627
      %v4065 = vunpack.c.l.b16 %v2628
      %v4066 = vunpack.c.h.b16 %v2628
      %v4067 = vunpack.c.l.b16 %v2629
      %v4068 = vunpack.c.l.b16 %v2630
      %v4069 = vunpack.c.h.b16 %v2630
      %v4070 = vunpack.c.l.b16 %v2631
      %v4071 = vunpack.c.l.b16 %v2632
      %v4072 = vunpack.c.h.b16 %v2632
      %v4073 = vunpack.c.l.b16 %v2633
      %v4074 = vunpack.c.l.b16 %v2634
      %v4075 = vunpack.c.h.b16 %v2634
      %v4076 = vunpack.c.l.b16 %v2635
      %v4077 = vunpack.c.l.b16 %v2636
      %v4078 = vunpack.c.h.b16 %v2636
      %v4079 = vunpack.c.l.b16 %v2637
      %v4080 = vunpack.c.l.b16 %v2638
      %v4081 = vunpack.c.h.b16 %v2638
      %v4082 = vunpack.c.l.b16 %v2639
      %v4083 = vunpack.c.l.b16 %v2640
      %v4084 = vunpack.c.h.b16 %v2640
      %v4085 = vunpack.c.l.b16 %v2641
      %v4086 = vunpack.c.l.b16 %v2642
      %v4087 = vunpack.c.h.b16 %v2642
      %v4088 = vunpack.c.l.b16 %v2643
      %v4089 = vunpack.c.l.b16 %v2644
      %v4090 = vunpack.c.h.b16 %v2644
      %v4091 = vunpack.c.l.b16 %v2645
      %v4092 = vunpack.c.l.b16 %v2646
      %v4093 = vunpack.c.h.b16 %v2646
      %v4094 = vunpack.c.l.b16 %v2647
      %v4095 = vunpack.c.l.b16 %v2648
      %v4096 = vunpack.c.h.b16 %v2648
      %v4097 = vunpack.c.l.b16 %v2649
      %v4098 = vunpack.c.l.b16 %v2650
      %v4099 = vunpack.c.h.b16 %v2650
      %v4100 = vunpack.c.l.b16 %v2651
      %v4101 = vunpack.c.l.b16 %v2652
      %v4102 = vunpack.c.h.b16 %v2652
      %v4103 = vunpack.c.l.b16 %v2653
      %v4104 = vunpack.c.l.b16 %v2654
      %v4105 = vunpack.c.h.b16 %v2654
      %v4106 = vunpack.c.l.b16 %v2655
      %v4107 = vunpack.c.l.b16 %v2656
      %v4108 = vunpack.c.h.b16 %v2656
      %v4109 = vunpack.c.l.b16 %v2657
      %v4110 = vunpack.c.l.b16 %v2658
      %v4111 = vunpack.c.h.b16 %v2658
      %v4112 = vunpack.c.l.b16 %v2659
      %v4113 = vunpack.c.l.b16 %v2660
      %v4114 = vunpack.c.h.b16 %v2660
      %v4115 = vunpack.c.l.b16 %v2661
      %v4116 = vunpack.c.l.b16 %v2662
      %v4117 = vunpack.c.h.b16 %v2662
      %v4118 = vunpack.c.l.b16 %v2663
      %v4119 = vunpack.c.l.b16 %v2664
      %v4120 = vunpack.c.h.b16 %v2664
      %v4121 = vunpack.c.l.b16 %v2665
      %v4122 = vunpack.c.l.b16 %v2666
      %v4123 = vunpack.c.h.b16 %v2666
      %v4124 = vunpack.c.l.b16 %v2667
      %v4125 = vunpack.c.l.b16 %v2668
      %v4126 = vunpack.c.h.b16 %v2668
      %v4127 = vunpack.c.l.b16 %v2669
      %v4128 = vunpack.c.l.b16 %v2670
      %v4129 = vunpack.c.h.b16 %v2670
      %v4130 = vunpack.c.l.b16 %v2671
      %v4131 = vunpack.c.l.b16 %v2672
      %v4132 = vunpack.c.h.b16 %v2672
      %v4133 = vunpack.c.l.b16 %v2673
      %v4134 = vunpack.c.l.b16 %v2674
      %v4135 = vunpack.c.h.b16 %v2674
      %v4136 = vunpack.c.l.b16 %v2675
      %v4137 = vunpack.c.l.b16 %v2676
      %v4138 = vunpack.c.h.b16 %v2676
      %v4139 = vunpack.c.l.b16 %v2677
      %v4140 = vunpack.c.l.b16 %v2678
      %v4141 = vunpack.c.h.b16 %v2678
      %v4142 = vunpack.c.l.b16 %v2679
      %v4143 = vunpack.c.l.b16 %v2680
      %v4144 = vunpack.c.h.b16 %v2680
      %v4145 = vunpack.c.l.b16 %v2681
      %v4146 = vunpack.c.l.b16 %v2682
      %v4147 = vunpack.c.h.b16 %v2682
      %v4148 = vunpack.c.l.b16 %v2683
      %v4149 = vunpack.c.l.b16 %v2684
      %v4150 = vunpack.c.h.b16 %v2684
      %v4151 = vunpack.c.l.b16 %v2685
      %v4152 = vunpack.c.l.b16 %v2686
      %v4153 = vunpack.c.h.b16 %v2686
      %v4154 = vunpack.c.l.b16 %v2687
      %v4155 = vunpack.c.l.b16 %v2688
      %v4156 = vunpack.c.h.b16 %v2688
      %v4157 = vunpack.c.l.b16 %v2689
      %v4158 = vunpack.c.l.b16 %v2690
      %v4159 = vunpack.c.h.b16 %v2690
      %v4160 = vunpack.c.l.b16 %v2691
      %v4161 = vunpack.c.l.b16 %v2692
      %v4162 = vunpack.c.h.b16 %v2692
      %v4163 = vunpack.c.l.b16 %v2693
      %v4164 = vunpack.c.l.b16 %v2694
      %v4165 = vunpack.c.h.b16 %v2694
      %v4166 = vunpack.c.l.b16 %v2695
      %v4167 = vunpack.c.l.b16 %v2696
      %v4168 = vunpack.c.h.b16 %v2696
      %v4169 = vunpack.c.l.b16 %v2697
      %v4170 = vunpack.c.l.b16 %v2698
      %v4171 = vunpack.c.h.b16 %v2698
      %v4172 = vunpack.c.l.b16 %v2699
      %v4173 = vunpack.c.l.b16 %v2700
      %v4174 = vunpack.c.h.b16 %v2700
      %v4175 = vunpack.c.l.b16 %v2701
      %v4176 = vunpack.c.l.b16 %v2702
      %v4177 = vunpack.c.h.b16 %v2702
      %v4178 = vunpack.c.l.b16 %v2703
      %v4179 = vunpack.c.l.b16 %v2704
      %v4180 = vunpack.c.h.b16 %v2704
      %v4181 = vunpack.c.l.b16 %v2705
      %v4182 = vunpack.c.l.b16 %v2706
      %v4183 = vunpack.c.h.b16 %v2706
      %v4184 = vunpack.c.l.b16 %v2707
      %v4185 = vunpack.c.l.b16 %v2708
      %v4186 = vunpack.c.h.b16 %v2708
      %v4187 = vunpack.c.l.b16 %v2709
      %v4188 = vunpack.c.l.b16 %v2710
      %v4189 = vunpack.c.h.b16 %v2710
      %v4190 = vunpack.c.l.b16 %v2711
      %v4191 = vunpack.c.l.b16 %v2712
      %v4192 = vunpack.c.h.b16 %v2712
      %v4193 = vunpack.c.l.b16 %v2713
      %v4194 = vunpack.c.l.b16 %v2714
      %v4195 = vunpack.c.h.b16 %v2714
      %v4196 = vunpack.c.l.b16 %v2715
      %v4197 = vunpack.c.l.b16 %v2716
      %v4198 = vunpack.c.h.b16 %v2716
      %v4199 = vunpack.c.l.b16 %v2717
      %v4200 = vunpack.c.l.b16 %v2718
      %v4201 = vunpack.c.h.b16 %v2718
      %v4202 = vunpack.c.l.b16 %v2719
      %v4203 = vunpack.c.l.b16 %v2720
      %v4204 = vunpack.c.h.b16 %v2720
      %v4205 = vunpack.c.l.b16 %v2721
      %v4206 = vunpack.c.l.b16 %v2722
      %v4207 = vunpack.c.h.b16 %v2722
      %v4208 = vunpack.c.l.b16 %v2723
      %v4209 = vunpack.c.l.b16 %v2724
      %v4210 = vunpack.c.h.b16 %v2724
      %v4211 = vunpack.c.l.b16 %v2725
      %v4212 = vunpack.c.l.b16 %v2726
      %v4213 = vunpack.c.h.b16 %v2726
      %v4214 = vunpack.c.l.b16 %v2727
      %v4215 = vunpack.c.l.b16 %v2728
      %v4216 = vunpack.c.h.b16 %v2728
      %v4217 = vunpack.c.l.b16 %v2729
      %v4218 = vunpack.c.l.b16 %v2730
      %v4219 = vunpack.c.h.b16 %v2730
      %v4220 = vunpack.c.l.b16 %v2731
      %v4221 = vunpack.c.l.b16 %v2732
      %v4222 = vunpack.c.h.b16 %v2732
      %v4223 = vunpack.c.l.b16 %v2733
      %v4224 = vunpack.c.l.b16 %v2734
      %v4225 = vunpack.c.h.b16 %v2734
      %v4226 = vunpack.c.l.b16 %v2735
      %v4227 = vunpack.c.l.b16 %v2736
      %v4228 = vunpack.c.h.b16 %v2736
      %v4229 = vunpack.c.l.b16 %v2737
      %v4230 = vunpack.c.l.b16 %v2738
      %v4231 = vunpack.c.h.b16 %v2738
      %v4232 = vunpack.c.l.b16 %v2739
      %v4233 = vunpack.c.l.b16 %v2740
      %v4234 = vunpack.c.h.b16 %v2740
      %v4235 = vunpack.c.l.b16 %v2741
      %v4236 = vunpack.c.l.b16 %v2742
      %v4237 = vunpack.c.h.b16 %v2742
      %v4238 = vunpack.c.l.b16 %v2743
      %v4239 = vunpack.c.l.b16 %v2744
      %v4240 = vunpack.c.h.b16 %v2744
      %v4241 = vunpack.c.l.b16 %v2745
      %v4242 = vunpack.c.l.b16 %v2746
      %v4243 = vunpack.c.h.b16 %v2746
      %v4244 = vunpack.c.l.b16 %v2747
      %v4245 = vunpack.c.l.b16 %v2748
      %v4246 = vunpack.c.h.b16 %v2748
      %v4247 = vunpack.c.l.b16 %v2749
      %v4248 = vunpack.c.l.b16 %v2750
      %v4249 = vunpack.c.h.b16 %v2750
      %v4250 = vunpack.c.l.b16 %v2751
      %v4251 = vunpack.c.l.b16 %v2752
      %v4252 = vunpack.c.h.b16 %v2752
      %v4253 = vunpack.c.l.b16 %v2753
      %v4254 = vpack.c.b16 %v3357, %v3354
      %v4255 = vpack.c.b16 %v3358, %v3355
      %v4256 = vpack.c.b16 %v3359, %v3356
      %v4257 = vpack.c.b16 %v3363, %v3360
      %v4258 = vpack.c.b16 %v3364, %v3361
      %v4259 = vpack.c.b16 %v3365, %v3362
      %v4260 = vpack.c.b16 %v3369, %v3366
      %v4261 = vpack.c.b16 %v3370, %v3367
      %v4262 = vpack.c.b16 %v3371, %v3368
      %v4263 = vpack.c.b16 %v3375, %v3372
      %v4264 = vpack.c.b16 %v3376, %v3373
      %v4265 = vpack.c.b16 %v3377, %v3374
      %v4266 = vpack.c.b16 %v3381, %v3378
      %v4267 = vpack.c.b16 %v3382, %v3379
      %v4268 = vpack.c.b16 %v3383, %v3380
      %v4269 = vpack.c.b16 %v3387, %v3384
      %v4270 = vpack.c.b16 %v3388, %v3385
      %v4271 = vpack.c.b16 %v3389, %v3386
      %v4272 = vpack.c.b16 %v3393, %v3390
      %v4273 = vpack.c.b16 %v3394, %v3391
      %v4274 = vpack.c.b16 %v3395, %v3392
      %v4275 = vpack.c.b16 %v3399, %v3396
      %v4276 = vpack.c.b16 %v3400, %v3397
      %v4277 = vpack.c.b16 %v3401, %v3398
      %v4278 = vpack.c.b16 %v3405, %v3402
      %v4279 = vpack.c.b16 %v3406, %v3403
      %v4280 = vpack.c.b16 %v3407, %v3404
      %v4281 = vpack.c.b16 %v3411, %v3408
      %v4282 = vpack.c.b16 %v3412, %v3409
      %v4283 = vpack.c.b16 %v3413, %v3410
      %v4284 = vpack.c.b16 %v3417, %v3414
      %v4285 = vpack.c.b16 %v3418, %v3415
      %v4286 = vpack.c.b16 %v3419, %v3416
      %v4287 = vpack.c.b16 %v3423, %v3420
      %v4288 = vpack.c.b16 %v3424, %v3421
      %v4289 = vpack.c.b16 %v3425, %v3422
      %v4290 = vpack.c.b16 %v3429, %v3426
      %v4291 = vpack.c.b16 %v3430, %v3427
      %v4292 = vpack.c.b16 %v3431, %v3428
      %v4293 = vpack.c.b16 %v3435, %v3432
      %v4294 = vpack.c.b16 %v3436, %v3433
      %v4295 = vpack.c.b16 %v3437, %v3434
      %v4296 = vpack.c.b16 %v3441, %v3438
      %v4297 = vpack.c.b16 %v3442, %v3439
      %v4298 = vpack.c.b16 %v3443, %v3440
      %v4299 = vpack.c.b16 %v3447, %v3444
      %v4300 = vpack.c.b16 %v3448, %v3445
      %v4301 = vpack.c.b16 %v3449, %v3446
      %v4302 = vpack.c.b16 %v3453, %v3450
      %v4303 = vpack.c.b16 %v3454, %v3451
      %v4304 = vpack.c.b16 %v3455, %v3452
      %v4305 = vpack.c.b16 %v3459, %v3456
      %v4306 = vpack.c.b16 %v3460, %v3457
      %v4307 = vpack.c.b16 %v3461, %v3458
      %v4308 = vpack.c.b16 %v3465, %v3462
      %v4309 = vpack.c.b16 %v3466, %v3463
      %v4310 = vpack.c.b16 %v3467, %v3464
      %v4311 = vpack.c.b16 %v3471, %v3468
      %v4312 = vpack.c.b16 %v3472, %v3469
      %v4313 = vpack.c.b16 %v3473, %v3470
      %v4314 = vpack.c.b16 %v3477, %v3474
      %v4315 = vpack.c.b16 %v3478, %v3475
      %v4316 = vpack.c.b16 %v3479, %v3476
      %v4317 = vpack.c.b16 %v3483, %v3480
      %v4318 = vpack.c.b16 %v3484, %v3481
      %v4319 = vpack.c.b16 %v3485, %v3482
      %v4320 = vpack.c.b16 %v3489, %v3486
      %v4321 = vpack.c.b16 %v3490, %v3487
      %v4322 = vpack.c.b16 %v3491, %v3488
      %v4323 = vpack.c.b16 %v3495, %v3492
      %v4324 = vpack.c.b16 %v3496, %v3493
      %v4325 = vpack.c.b16 %v3497, %v3494
      %v4326 = vpack.c.b16 %v3501, %v3498
      %v4327 = vpack.c.b16 %v3502, %v3499
      %v4328 = vpack.c.b16 %v3503, %v3500
      %v4329 = vpack.c.b16 %v3507, %v3504
      %v4330 = vpack.c.b16 %v3508, %v3505
      %v4331 = vpack.c.b16 %v3509, %v3506
      %v4332 = vpack.c.b16 %v3513, %v3510
      %v4333 = vpack.c.b16 %v3514, %v3511
      %v4334 = vpack.c.b16 %v3515, %v3512
      %v4335 = vpack.c.b16 %v3519, %v3516
      %v4336 = vpack.c.b16 %v3520, %v3517
      %v4337 = vpack.c.b16 %v3521, %v3518
      %v4338 = vpack.c.b16 %v3525, %v3522
      %v4339 = vpack.c.b16 %v3526, %v3523
      %v4340 = vpack.c.b16 %v3527, %v3524
      %v4341 = vpack.c.b16 %v3531, %v3528
      %v4342 = vpack.c.b16 %v3532, %v3529
      %v4343 = vpack.c.b16 %v3533, %v3530
      %v4344 = vpack.c.b16 %v3537, %v3534
      %v4345 = vpack.c.b16 %v3538, %v3535
      %v4346 = vpack.c.b16 %v3539, %v3536
      %v4347 = vpack.c.b16 %v3543, %v3540
      %v4348 = vpack.c.b16 %v3544, %v3541
      %v4349 = vpack.c.b16 %v3545, %v3542
      %v4350 = vpack.c.b16 %v3549, %v3546
      %v4351 = vpack.c.b16 %v3550, %v3547
      %v4352 = vpack.c.b16 %v3551, %v3548
      %v4353 = vpack.c.b16 %v3555, %v3552
      %v4354 = vpack.c.b16 %v3556, %v3553
      %v4355 = vpack.c.b16 %v3557, %v3554
      %v4356 = vpack.c.b16 %v3561, %v3558
      %v4357 = vpack.c.b16 %v3562, %v3559
      %v4358 = vpack.c.b16 %v3563, %v3560
      %v4359 = vpack.c.b16 %v3567, %v3564
      %v4360 = vpack.c.b16 %v3568, %v3565
      %v4361 = vpack.c.b16 %v3569, %v3566
      %v4362 = vpack.c.b16 %v3573, %v3570
      %v4363 = vpack.c.b16 %v3574, %v3571
      %v4364 = vpack.c.b16 %v3575, %v3572
      %v4365 = vpack.c.b16 %v3579, %v3576
      %v4366 = vpack.c.b16 %v3580, %v3577
      %v4367 = vpack.c.b16 %v3581, %v3578
      %v4368 = vpack.c.b16 %v3585, %v3582
      %v4369 = vpack.c.b16 %v3586, %v3583
      %v4370 = vpack.c.b16 %v3587, %v3584
      %v4371 = vpack.c.b16 %v3591, %v3588
      %v4372 = vpack.c.b16 %v3592, %v3589
      %v4373 = vpack.c.b16 %v3593, %v3590
      %v4374 = vpack.c.b16 %v3597, %v3594
      %v4375 = vpack.c.b16 %v3598, %v3595
      %v4376 = vpack.c.b16 %v3599, %v3596
      %v4377 = vpack.c.b16 %v3603, %v3600
      %v4378 = vpack.c.b16 %v3604, %v3601
      %v4379 = vpack.c.b16 %v3605, %v3602
      %v4380 = vpack.c.b16 %v3609, %v3606
      %v4381 = vpack.c.b16 %v3610, %v3607
      %v4382 = vpack.c.b16 %v3611, %v3608
      %v4383 = vpack.c.b16 %v3615, %v3612
      %v4384 = vpack.c.b16 %v3616, %v3613
      %v4385 = vpack.c.b16 %v3617, %v3614
      %v4386 = vpack.c.b16 %v3621, %v3618
      %v4387 = vpack.c.b16 %v3622, %v3619
      %v4388 = vpack.c.b16 %v3623, %v3620
      %v4389 = vpack.c.b16 %v3627, %v3624
      %v4390 = vpack.c.b16 %v3628, %v3625
      %v4391 = vpack.c.b16 %v3629, %v3626
      %v4392 = vpack.c.b16 %v3633, %v3630
      %v4393 = vpack.c.b16 %v3634, %v3631
      %v4394 = vpack.c.b16 %v3635, %v3632
      %v4395 = vpack.c.b16 %v3639, %v3636
      %v4396 = vpack.c.b16 %v3640, %v3637
      %v4397 = vpack.c.b16 %v3641, %v3638
      %v4398 = vpack.c.b16 %v3645, %v3642
      %v4399 = vpack.c.b16 %v3646, %v3643
      %v4400 = vpack.c.b16 %v3647, %v3644
      %v4401 = vpack.c.b16 %v3651, %v3648
      %v4402 = vpack.c.b16 %v3652, %v3649
      %v4403 = vpack.c.b16 %v3653, %v3650
      %v4404 = vpack.c.b16 %v3657, %v3654
      %v4405 = vpack.c.b16 %v3658, %v3655
      %v4406 = vpack.c.b16 %v3659, %v3656
      %v4407 = vpack.c.b16 %v3663, %v3660
      %v4408 = vpack.c.b16 %v3664, %v3661
      %v4409 = vpack.c.b16 %v3665, %v3662
      %v4410 = vpack.c.b16 %v3669, %v3666
      %v4411 = vpack.c.b16 %v3670, %v3667
      %v4412 = vpack.c.b16 %v3671, %v3668
      %v4413 = vpack.c.b16 %v3675, %v3672
      %v4414 = vpack.c.b16 %v3676, %v3673
      %v4415 = vpack.c.b16 %v3677, %v3674
      %v4416 = vpack.c.b16 %v3681, %v3678
      %v4417 = vpack.c.b16 %v3682, %v3679
      %v4418 = vpack.c.b16 %v3683, %v3680
      %v4419 = vpack.c.b16 %v3687, %v3684
      %v4420 = vpack.c.b16 %v3688, %v3685
      %v4421 = vpack.c.b16 %v3689, %v3686
      %v4422 = vpack.c.b16 %v3693, %v3690
      %v4423 = vpack.c.b16 %v3694, %v3691
      %v4424 = vpack.c.b16 %v3695, %v3692
      %v4425 = vpack.c.b16 %v3699, %v3696
      %v4426 = vpack.c.b16 %v3700, %v3697
      %v4427 = vpack.c.b16 %v3701, %v3698
      %v4428 = vpack.c.b16 %v3705, %v3702
      %v4429 = vpack.c.b16 %v3706, %v3703
      %v4430 = vpack.c.b16 %v3707, %v3704
      %v4431 = vpack.c.b16 %v3711, %v3708
      %v4432 = vpack.c.b16 %v3712, %v3709
      %v4433 = vpack.c.b16 %v3713, %v3710
      %v4434 = vpack.c.b16 %v3717, %v3714
      %v4435 = vpack.c.b16 %v3718, %v3715
      %v4436 = vpack.c.b16 %v3719, %v3716
      %v4437 = vpack.c.b16 %v3723, %v3720
      %v4438 = vpack.c.b16 %v3724, %v3721
      %v4439 = vpack.c.b16 %v3725, %v3722
      %v4440 = vpack.c.b16 %v3729, %v3726
      %v4441 = vpack.c.b16 %v3730, %v3727
      %v4442 = vpack.c.b16 %v3731, %v3728
      %v4443 = vpack.c.b16 %v3735, %v3732
      %v4444 = vpack.c.b16 %v3736, %v3733
      %v4445 = vpack.c.b16 %v3737, %v3734
      %v4446 = vpack.c.b16 %v3741, %v3738
      %v4447 = vpack.c.b16 %v3742, %v3739
      %v4448 = vpack.c.b16 %v3743, %v3740
      %v4449 = vpack.c.b16 %v3747, %v3744
      %v4450 = vpack.c.b16 %v3748, %v3745
      %v4451 = vpack.c.b16 %v3749, %v3746
      %v4452 = vpack.c.b16 %v3753, %v3750
      %v4453 = vpack.c.b16 %v3754, %v3751
      %v4454 = vpack.c.b16 %v3755, %v3752
      %v4455 = vpack.c.b16 %v3759, %v3756
      %v4456 = vpack.c.b16 %v3760, %v3757
      %v4457 = vpack.c.b16 %v3761, %v3758
      %v4458 = vpack.c.b16 %v3765, %v3762
      %v4459 = vpack.c.b16 %v3766, %v3763
      %v4460 = vpack.c.b16 %v3767, %v3764
      %v4461 = vpack.c.b16 %v3771, %v3768
      %v4462 = vpack.c.b16 %v3772, %v3769
      %v4463 = vpack.c.b16 %v3773, %v3770
      %v4464 = vpack.c.b16 %v3777, %v3774
      %v4465 = vpack.c.b16 %v3778, %v3775
      %v4466 = vpack.c.b16 %v3779, %v3776
      %v4467 = vpack.c.b16 %v3783, %v3780
      %v4468 = vpack.c.b16 %v3784, %v3781
      %v4469 = vpack.c.b16 %v3785, %v3782
      %v4470 = vpack.c.b16 %v3789, %v3786
      %v4471 = vpack.c.b16 %v3790, %v3787
      %v4472 = vpack.c.b16 %v3791, %v3788
      %v4473 = vpack.c.b16 %v3795, %v3792
      %v4474 = vpack.c.b16 %v3796, %v3793
      %v4475 = vpack.c.b16 %v3797, %v3794
      %v4476 = vpack.c.b16 %v3801, %v3798
      %v4477 = vpack.c.b16 %v3802, %v3799
      %v4478 = vpack.c.b16 %v3803, %v3800
      %v4479 = vpack.c.b16 %v3807, %v3804
      %v4480 = vpack.c.b16 %v3808, %v3805
      %v4481 = vpack.c.b16 %v3809, %v3806
      %v4482 = vpack.c.b16 %v3813, %v3810
      %v4483 = vpack.c.b16 %v3814, %v3811
      %v4484 = vpack.c.b16 %v3815, %v3812
      %v4485 = vpack.c.b16 %v3819, %v3816
      %v4486 = vpack.c.b16 %v3820, %v3817
      %v4487 = vpack.c.b16 %v3821, %v3818
      %v4488 = vpack.c.b16 %v3825, %v3822
      %v4489 = vpack.c.b16 %v3826, %v3823
      %v4490 = vpack.c.b16 %v3827, %v3824
      %v4491 = vpack.c.b16 %v3831, %v3828
      %v4492 = vpack.c.b16 %v3832, %v3829
      %v4493 = vpack.c.b16 %v3833, %v3830
      %v4494 = vpack.c.b16 %v3837, %v3834
      %v4495 = vpack.c.b16 %v3838, %v3835
      %v4496 = vpack.c.b16 %v3839, %v3836
      %v4497 = vpack.c.b16 %v3843, %v3840
      %v4498 = vpack.c.b16 %v3844, %v3841
      %v4499 = vpack.c.b16 %v3845, %v3842
      %v4500 = vpack.c.b16 %v3849, %v3846
      %v4501 = vpack.c.b16 %v3850, %v3847
      %v4502 = vpack.c.b16 %v3851, %v3848
      %v4503 = vpack.c.b16 %v3855, %v3852
      %v4504 = vpack.c.b16 %v3856, %v3853
      %v4505 = vpack.c.b16 %v3857, %v3854
      %v4506 = vpack.c.b16 %v3861, %v3858
      %v4507 = vpack.c.b16 %v3862, %v3859
      %v4508 = vpack.c.b16 %v3863, %v3860
      %v4509 = vpack.c.b16 %v3867, %v3864
      %v4510 = vpack.c.b16 %v3868, %v3865
      %v4511 = vpack.c.b16 %v3869, %v3866
      %v4512 = vpack.c.b16 %v3873, %v3870
      %v4513 = vpack.c.b16 %v3874, %v3871
      %v4514 = vpack.c.b16 %v3875, %v3872
      %v4515 = vpack.c.b16 %v3879, %v3876
      %v4516 = vpack.c.b16 %v3880, %v3877
      %v4517 = vpack.c.b16 %v3881, %v3878
      %v4518 = vpack.c.b16 %v3885, %v3882
      %v4519 = vpack.c.b16 %v3886, %v3883
      %v4520 = vpack.c.b16 %v3887, %v3884
      %v4521 = vpack.c.b16 %v3891, %v3888
      %v4522 = vpack.c.b16 %v3892, %v3889
      %v4523 = vpack.c.b16 %v3893, %v3890
      %v4524 = vpack.c.b16 %v3897, %v3894
      %v4525 = vpack.c.b16 %v3898, %v3895
      %v4526 = vpack.c.b16 %v3899, %v3896
      %v4527 = vpack.c.b16 %v3903, %v3900
      %v4528 = vpack.c.b16 %v3904, %v3901
      %v4529 = vpack.c.b16 %v3905, %v3902
      %v4530 = vpack.c.b16 %v3909, %v3906
      %v4531 = vpack.c.b16 %v3910, %v3907
      %v4532 = vpack.c.b16 %v3911, %v3908
      %v4533 = vpack.c.b16 %v3915, %v3912
      %v4534 = vpack.c.b16 %v3916, %v3913
      %v4535 = vpack.c.b16 %v3917, %v3914
      %v4536 = vpack.c.b16 %v3921, %v3918
      %v4537 = vpack.c.b16 %v3922, %v3919
      %v4538 = vpack.c.b16 %v3923, %v3920
      %v4539 = vpack.c.b16 %v3927, %v3924
      %v4540 = vpack.c.b16 %v3928, %v3925
      %v4541 = vpack.c.b16 %v3929, %v3926
      %v4542 = vpack.c.b16 %v3933, %v3930
      %v4543 = vpack.c.b16 %v3934, %v3931
      %v4544 = vpack.c.b16 %v3935, %v3932
      %v4545 = vpack.c.b16 %v3939, %v3936
      %v4546 = vpack.c.b16 %v3940, %v3937
      %v4547 = vpack.c.b16 %v3941, %v3938
      %v4548 = vpack.c.b16 %v3945, %v3942
      %v4549 = vpack.c.b16 %v3946, %v3943
      %v4550 = vpack.c.b16 %v3947, %v3944
      %v4551 = vpack.c.b16 %v3951, %v3948
      %v4552 = vpack.c.b16 %v3952, %v3949
      %v4553 = vpack.c.b16 %v3953, %v3950
      %v4554 = vpack.c.b16 %v3957, %v3954
      %v4555 = vpack.c.b16 %v3958, %v3955
      %v4556 = vpack.c.b16 %v3959, %v3956
      %v4557 = vpack.c.b16 %v3963, %v3960
      %v4558 = vpack.c.b16 %v3964, %v3961
      %v4559 = vpack.c.b16 %v3965, %v3962
      %v4560 = vpack.c.b16 %v3969, %v3966
      %v4561 = vpack.c.b16 %v3970, %v3967
      %v4562 = vpack.c.b16 %v3971, %v3968
      %v4563 = vpack.c.b16 %v3975, %v3972
      %v4564 = vpack.c.b16 %v3976, %v3973
      %v4565 = vpack.c.b16 %v3977, %v3974
      %v4566 = vpack.c.b16 %v3981, %v3978
      %v4567 = vpack.c.b16 %v3982, %v3979
      %v4568 = vpack.c.b16 %v3983, %v3980
      %v4569 = vpack.c.b16 %v3987, %v3984
      %v4570 = vpack.c.b16 %v3988, %v3985
      %v4571 = vpack.c.b16 %v3989, %v3986
      %v4572 = vpack.c.b16 %v3993, %v3990
      %v4573 = vpack.c.b16 %v3994, %v3991
      %v4574 = vpack.c.b16 %v3995, %v3992
      %v4575 = vpack.c.b16 %v3999, %v3996
      %v4576 = vpack.c.b16 %v4000, %v3997
      %v4577 = vpack.c.b16 %v4001, %v3998
      %v4578 = vpack.c.b16 %v4005, %v4002
      %v4579 = vpack.c.b16 %v4006, %v4003
      %v4580 = vpack.c.b16 %v4007, %v4004
      %v4581 = vpack.c.b16 %v4011, %v4008
      %v4582 = vpack.c.b16 %v4012, %v4009
      %v4583 = vpack.c.b16 %v4013, %v4010
      %v4584 = vpack.c.b16 %v4017, %v4014
      %v4585 = vpack.c.b16 %v4018, %v4015
      %v4586 = vpack.c.b16 %v4019, %v4016
      %v4587 = vpack.c.b16 %v4023, %v4020
      %v4588 = vpack.c.b16 %v4024, %v4021
      %v4589 = vpack.c.b16 %v4025, %v4022
      %v4590 = vpack.c.b16 %v4029, %v4026
      %v4591 = vpack.c.b16 %v4030, %v4027
      %v4592 = vpack.c.b16 %v4031, %v4028
      %v4593 = vpack.c.b16 %v4035, %v4032
      %v4594 = vpack.c.b16 %v4036, %v4033
      %v4595 = vpack.c.b16 %v4037, %v4034
      %v4596 = vpack.c.b16 %v4041, %v4038
      %v4597 = vpack.c.b16 %v4042, %v4039
      %v4598 = vpack.c.b16 %v4043, %v4040
      %v4599 = vpack.c.b16 %v4047, %v4044
      %v4600 = vpack.c.b16 %v4048, %v4045
      %v4601 = vpack.c.b16 %v4049, %v4046
      %v4602 = vpack.c.b16 %v4053, %v4050
      %v4603 = vpack.c.b16 %v4054, %v4051
      %v4604 = vpack.c.b16 %v4055, %v4052
      %v4605 = vpack.c.b16 %v4059, %v4056
      %v4606 = vpack.c.b16 %v4060, %v4057
      %v4607 = vpack.c.b16 %v4061, %v4058
      %v4608 = vpack.c.b16 %v4065, %v4062
      %v4609 = vpack.c.b16 %v4066, %v4063
      %v4610 = vpack.c.b16 %v4067, %v4064
      %v4611 = vpack.c.b16 %v4071, %v4068
      %v4612 = vpack.c.b16 %v4072, %v4069
      %v4613 = vpack.c.b16 %v4073, %v4070
      %v4614 = vpack.c.b16 %v4077, %v4074
      %v4615 = vpack.c.b16 %v4078, %v4075
      %v4616 = vpack.c.b16 %v4079, %v4076
      %v4617 = vpack.c.b16 %v4083, %v4080
      %v4618 = vpack.c.b16 %v4084, %v4081
      %v4619 = vpack.c.b16 %v4085, %v4082
      %v4620 = vpack.c.b16 %v4089, %v4086
      %v4621 = vpack.c.b16 %v4090, %v4087
      %v4622 = vpack.c.b16 %v4091, %v4088
      %v4623 = vpack.c.b16 %v4095, %v4092
      %v4624 = vpack.c.b16 %v4096, %v4093
      %v4625 = vpack.c.b16 %v4097, %v4094
      %v4626 = vpack.c.b16 %v4101, %v4098
      %v4627 = vpack.c.b16 %v4102, %v4099
      %v4628 = vpack.c.b16 %v4103, %v4100
      %v4629 = vpack.c.b16 %v4107, %v4104
      %v4630 = vpack.c.b16 %v4108, %v4105
      %v4631 = vpack.c.b16 %v4109, %v4106
      %v4632 = vpack.c.b16 %v4113, %v4110
      %v4633 = vpack.c.b16 %v4114, %v4111
      %v4634 = vpack.c.b16 %v4115, %v4112
      %v4635 = vpack.c.b16 %v4119, %v4116
      %v4636 = vpack.c.b16 %v4120, %v4117
      %v4637 = vpack.c.b16 %v4121, %v4118
      %v4638 = vpack.c.b16 %v4125, %v4122
      %v4639 = vpack.c.b16 %v4126, %v4123
      %v4640 = vpack.c.b16 %v4127, %v4124
      %v4641 = vpack.c.b16 %v4131, %v4128
      %v4642 = vpack.c.b16 %v4132, %v4129
      %v4643 = vpack.c.b16 %v4133, %v4130
      %v4644 = vpack.c.b16 %v4137, %v4134
      %v4645 = vpack.c.b16 %v4138, %v4135
      %v4646 = vpack.c.b16 %v4139, %v4136
      %v4647 = vpack.c.b16 %v4143, %v4140
      %v4648 = vpack.c.b16 %v4144, %v4141
      %v4649 = vpack.c.b16 %v4145, %v4142
      %v4650 = vpack.c.b16 %v4149, %v4146
      %v4651 = vpack.c.b16 %v4150, %v4147
      %v4652 = vpack.c.b16 %v4151, %v4148
      %v4653 = vpack.c.b16 %v4155, %v4152
      %v4654 = vpack.c.b16 %v4156, %v4153
      %v4655 = vpack.c.b16 %v4157, %v4154
      %v4656 = vpack.c.b16 %v4161, %v4158
      %v4657 = vpack.c.b16 %v4162, %v4159
      %v4658 = vpack.c.b16 %v4163, %v4160
      %v4659 = vpack.c.b16 %v4167, %v4164
      %v4660 = vpack.c.b16 %v4168, %v4165
      %v4661 = vpack.c.b16 %v4169, %v4166
      %v4662 = vpack.c.b16 %v4173, %v4170
      %v4663 = vpack.c.b16 %v4174, %v4171
      %v4664 = vpack.c.b16 %v4175, %v4172
      %v4665 = vpack.c.b16 %v4179, %v4176
      %v4666 = vpack.c.b16 %v4180, %v4177
      %v4667 = vpack.c.b16 %v4181, %v4178
      %v4668 = vpack.c.b16 %v4185, %v4182
      %v4669 = vpack.c.b16 %v4186, %v4183
      %v4670 = vpack.c.b16 %v4187, %v4184
      %v4671 = vpack.c.b16 %v4191, %v4188
      %v4672 = vpack.c.b16 %v4192, %v4189
      %v4673 = vpack.c.b16 %v4193, %v4190
      %v4674 = vpack.c.b16 %v4197, %v4194
      %v4675 = vpack.c.b16 %v4198, %v4195
      %v4676 = vpack.c.b16 %v4199, %v4196
      %v4677 = vpack.c.b16 %v4203, %v4200
      %v4678 = vpack.c.b16 %v4204, %v4201
      %v4679 = vpack.c.b16 %v4205, %v4202
      %v4680 = vpack.c.b16 %v4209, %v4206
      %v4681 = vpack.c.b16 %v4210, %v4207
      %v4682 = vpack.c.b16 %v4211, %v4208
      %v4683 = vpack.c.b16 %v4215, %v4212
      %v4684 = vpack.c.b16 %v4216, %v4213
      %v4685 = vpack.c.b16 %v4217, %v4214
      %v4686 = vpack.c.b16 %v4221, %v4218
      %v4687 = vpack.c.b16 %v4222, %v4219
      %v4688 = vpack.c.b16 %v4223, %v4220
      %v4689 = vpack.c.b16 %v4227, %v4224
      %v4690 = vpack.c.b16 %v4228, %v4225
      %v4691 = vpack.c.b16 %v4229, %v4226
      %v4692 = vpack.c.b16 %v4233, %v4230
      %v4693 = vpack.c.b16 %v4234, %v4231
      %v4694 = vpack.c.b16 %v4235, %v4232
      %v4695 = vpack.c.b16 %v4239, %v4236
      %v4696 = vpack.c.b16 %v4240, %v4237
      %v4697 = vpack.c.b16 %v4241, %v4238
      %v4698 = vpack.c.b16 %v4245, %v4242
      %v4699 = vpack.c.b16 %v4246, %v4243
      %v4700 = vpack.c.b16 %v4247, %v4244
      %v4701 = vpack.c.b16 %v4251, %v4248
      %v4702 = vpack.c.b16 %v4252, %v4249
      %v4703 = vpack.c.b16 %v4253, %v4250
      %5154 = vmatpush.bf16.msra.mxu0 %v2137
      %5155 = vmatpush.bf16.msra.mxu0 %v2136
      %5156 = vmatpush.bf16.msra.mxu0 %v2135
      %5157 = vmatpush.bf16.msra.mxu0 %v2134
      %5158 = vmatpush.bf16.msra.mxu0 %v2133
      %5159 = vmatpush.bf16.msra.mxu0 %v2132
      %5160 = vmatpush.bf16.msra.mxu0 %v2131
      %5161 = vmatpush.bf16.msra.mxu0 %v2130
      %5162 = vmatmul.bf16.gmra.mxu0 %v4254
      %v5163 = vpop.f32.mrf.mxu0
      %v5164 = vadd.f32 0.0, %v5163
      %v5165 = vpop.f32.mrf.mxu0
      %v5166 = vadd.f32 0.0, %v5165
      %5167 = vmatmul.bf16.gmra.mxu0 %v4257
      %v5168 = vpop.f32.mrf.mxu0
      %v5169 = vadd.f32 0.0, %v5168
      %v5170 = vpop.f32.mrf.mxu0
      %v5171 = vadd.f32 0.0, %v5170
      %5172 = vmatmul.bf16.gmra.mxu0 %v4260
      %v5173 = vpop.f32.mrf.mxu0
      %v5174 = vadd.f32 0.0, %v5173
      %v5175 = vpop.f32.mrf.mxu0
      %v5176 = vadd.f32 0.0, %v5175
      %5177 = vmatmul.bf16.gmra.mxu0 %v4263
      %v5178 = vpop.f32.mrf.mxu0
      %v5179 = vadd.f32 0.0, %v5178
      %v5180 = vpop.f32.mrf.mxu0
      %v5181 = vadd.f32 0.0, %v5180
      %5182 = vmatmul.bf16.gmra.mxu0 %v4266
      %v5183 = vpop.f32.mrf.mxu0
      %v5184 = vadd.f32 0.0, %v5183
      %v5185 = vpop.f32.mrf.mxu0
      %v5186 = vadd.f32 0.0, %v5185
      %5187 = vmatmul.bf16.gmra.mxu0 %v4269
      %v5188 = vpop.f32.mrf.mxu0
      %v5189 = vadd.f32 0.0, %v5188
      %v5190 = vpop.f32.mrf.mxu0
      %v5191 = vadd.f32 0.0, %v5190
      %5192 = vmatmul.bf16.gmra.mxu0 %v4272
      %v5193 = vpop.f32.mrf.mxu0
      %v5194 = vadd.f32 0.0, %v5193
      %v5195 = vpop.f32.mrf.mxu0
      %v5196 = vadd.f32 0.0, %v5195
      %5197 = vmatmul.bf16.gmra.mxu0 %v4275
      %v5198 = vpop.f32.mrf.mxu0
      %v5199 = vadd.f32 0.0, %v5198
      %v5200 = vpop.f32.mrf.mxu0
      %v5201 = vadd.f32 0.0, %v5200
      %5202 = vmatmul.bf16.gmra.mxu0 %v4278
      %v5203 = vpop.f32.mrf.mxu0
      %v5204 = vadd.f32 0.0, %v5203
      %v5205 = vpop.f32.mrf.mxu0
      %v5206 = vadd.f32 0.0, %v5205
      %5207 = vmatmul.bf16.gmra.mxu0 %v4281
      %v5208 = vpop.f32.mrf.mxu0
      %v5209 = vadd.f32 0.0, %v5208
      %v5210 = vpop.f32.mrf.mxu0
      %v5211 = vadd.f32 0.0, %v5210
      %5212 = vmatmul.bf16.gmra.mxu0 %v4284
      %v5213 = vpop.f32.mrf.mxu0
      %v5214 = vadd.f32 0.0, %v5213
      %v5215 = vpop.f32.mrf.mxu0
      %v5216 = vadd.f32 0.0, %v5215
      %5217 = vmatmul.bf16.gmra.mxu0 %v4287
      %v5218 = vpop.f32.mrf.mxu0
      %v5219 = vadd.f32 0.0, %v5218
      %v5220 = vpop.f32.mrf.mxu0
      %v5221 = vadd.f32 0.0, %v5220
      %5222 = vmatmul.bf16.gmra.mxu0 %v4290
      %v5223 = vpop.f32.mrf.mxu0
      %v5224 = vadd.f32 0.0, %v5223
      %v5225 = vpop.f32.mrf.mxu0
      %v5226 = vadd.f32 0.0, %v5225
      %5227 = vmatmul.bf16.gmra.mxu0 %v4293
      %v5228 = vpop.f32.mrf.mxu0
      %v5229 = vadd.f32 0.0, %v5228
      %v5230 = vpop.f32.mrf.mxu0
      %v5231 = vadd.f32 0.0, %v5230
      %5232 = vmatmul.bf16.gmra.mxu0 %v4296
      %v5233 = vpop.f32.mrf.mxu0
      %v5234 = vadd.f32 0.0, %v5233
      %v5235 = vpop.f32.mrf.mxu0
      %v5236 = vadd.f32 0.0, %v5235
      %5237 = vmatmul.bf16.gmra.mxu0 %v4299
      %v5238 = vpop.f32.mrf.mxu0
      %v5239 = vadd.f32 0.0, %v5238
      %v5240 = vpop.f32.mrf.mxu0
      %v5241 = vadd.f32 0.0, %v5240
      %5242 = vmatmul.bf16.gmra.mxu0 %v4302
      %v5243 = vpop.f32.mrf.mxu0
      %v5244 = vadd.f32 0.0, %v5243
      %v5245 = vpop.f32.mrf.mxu0
      %v5246 = vadd.f32 0.0, %v5245
      %5247 = vmatmul.bf16.gmra.mxu0 %v4305
      %v5248 = vpop.f32.mrf.mxu0
      %v5249 = vadd.f32 0.0, %v5248
      %v5250 = vpop.f32.mrf.mxu0
      %v5251 = vadd.f32 0.0, %v5250
      %5252 = vmatmul.bf16.gmra.mxu0 %v4308
      %v5253 = vpop.f32.mrf.mxu0
      %v5254 = vadd.f32 0.0, %v5253
      %v5255 = vpop.f32.mrf.mxu0
      %v5256 = vadd.f32 0.0, %v5255
      %5257 = vmatmul.bf16.gmra.mxu0 %v4311
      %v5258 = vpop.f32.mrf.mxu0
      %v5259 = vadd.f32 0.0, %v5258
      %v5260 = vpop.f32.mrf.mxu0
      %v5261 = vadd.f32 0.0, %v5260
      %5262 = vmatmul.bf16.gmra.mxu0 %v4314
      %v5263 = vpop.f32.mrf.mxu0
      %v5264 = vadd.f32 0.0, %v5263
      %v5265 = vpop.f32.mrf.mxu0
      %v5266 = vadd.f32 0.0, %v5265
      %5267 = vmatmul.bf16.gmra.mxu0 %v4317
      %v5268 = vpop.f32.mrf.mxu0
      %v5269 = vadd.f32 0.0, %v5268
      %v5270 = vpop.f32.mrf.mxu0
      %v5271 = vadd.f32 0.0, %v5270
      %5272 = vmatmul.bf16.gmra.mxu0 %v4320
      %v5273 = vpop.f32.mrf.mxu0
      %v5274 = vadd.f32 0.0, %v5273
      %v5275 = vpop.f32.mrf.mxu0
      %v5276 = vadd.f32 0.0, %v5275
      %5277 = vmatmul.bf16.gmra.mxu0 %v4323
      %v5278 = vpop.f32.mrf.mxu0
      %v5279 = vadd.f32 0.0, %v5278
      %v5280 = vpop.f32.mrf.mxu0
      %v5281 = vadd.f32 0.0, %v5280
      %5282 = vmatmul.bf16.gmra.mxu0 %v4326
      %v5283 = vpop.f32.mrf.mxu0
      %v5284 = vadd.f32 0.0, %v5283
      %v5285 = vpop.f32.mrf.mxu0
      %v5286 = vadd.f32 0.0, %v5285
      %5287 = vmatmul.bf16.gmra.mxu0 %v4329
      %v5288 = vpop.f32.mrf.mxu0
      %v5289 = vadd.f32 0.0, %v5288
      %v5290 = vpop.f32.mrf.mxu0
      %v5291 = vadd.f32 0.0, %v5290
      %5292 = vmatmul.bf16.gmra.mxu0 %v4332
      %v5293 = vpop.f32.mrf.mxu0
      %v5294 = vadd.f32 0.0, %v5293
      %v5295 = vpop.f32.mrf.mxu0
      %v5296 = vadd.f32 0.0, %v5295
      %5297 = vmatmul.bf16.gmra.mxu0 %v4335
      %v5298 = vpop.f32.mrf.mxu0
      %v5299 = vadd.f32 0.0, %v5298
      %v5300 = vpop.f32.mrf.mxu0
      %v5301 = vadd.f32 0.0, %v5300
      %5302 = vmatmul.bf16.gmra.mxu0 %v4338
      %v5303 = vpop.f32.mrf.mxu0
      %v5304 = vadd.f32 0.0, %v5303
      %v5305 = vpop.f32.mrf.mxu0
      %v5306 = vadd.f32 0.0, %v5305
      %5307 = vmatmul.bf16.gmra.mxu0 %v4341
      %v5308 = vpop.f32.mrf.mxu0
      %v5309 = vadd.f32 0.0, %v5308
      %v5310 = vpop.f32.mrf.mxu0
      %v5311 = vadd.f32 0.0, %v5310
      %5312 = vmatmul.bf16.gmra.mxu0 %v4344
      %v5313 = vpop.f32.mrf.mxu0
      %v5314 = vadd.f32 0.0, %v5313
      %v5315 = vpop.f32.mrf.mxu0
      %v5316 = vadd.f32 0.0, %v5315
      %5317 = vmatmul.bf16.gmra.mxu0 %v4347
      %v5318 = vpop.f32.mrf.mxu0
      %v5319 = vadd.f32 0.0, %v5318
      %v5320 = vpop.f32.mrf.mxu0
      %v5321 = vadd.f32 0.0, %v5320
      %5322 = vmatmul.bf16.gmra.mxu0 %v4350
      %v5323 = vpop.f32.mrf.mxu0
      %v5324 = vadd.f32 0.0, %v5323
      %v5325 = vpop.f32.mrf.mxu0
      %v5326 = vadd.f32 0.0, %v5325
      %5327 = vmatmul.bf16.gmra.mxu0 %v4353
      %v5328 = vpop.f32.mrf.mxu0
      %v5329 = vadd.f32 0.0, %v5328
      %v5330 = vpop.f32.mrf.mxu0
      %v5331 = vadd.f32 0.0, %v5330
      %5332 = vmatmul.bf16.gmra.mxu0 %v4356
      %v5333 = vpop.f32.mrf.mxu0
      %v5334 = vadd.f32 0.0, %v5333
      %v5335 = vpop.f32.mrf.mxu0
      %v5336 = vadd.f32 0.0, %v5335
      %5337 = vmatmul.bf16.gmra.mxu0 %v4359
      %v5338 = vpop.f32.mrf.mxu0
      %v5339 = vadd.f32 0.0, %v5338
      %v5340 = vpop.f32.mrf.mxu0
      %v5341 = vadd.f32 0.0, %v5340
      %5342 = vmatmul.bf16.gmra.mxu0 %v4362
      %v5343 = vpop.f32.mrf.mxu0
      %v5344 = vadd.f32 0.0, %v5343
      %v5345 = vpop.f32.mrf.mxu0
      %v5346 = vadd.f32 0.0, %v5345
      %5347 = vmatmul.bf16.gmra.mxu0 %v4365
      %v5348 = vpop.f32.mrf.mxu0
      %v5349 = vadd.f32 0.0, %v5348
      %v5350 = vpop.f32.mrf.mxu0
      %v5351 = vadd.f32 0.0, %v5350
      %5352 = vmatmul.bf16.gmra.mxu0 %v4368
      %v5353 = vpop.f32.mrf.mxu0
      %v5354 = vadd.f32 0.0, %v5353
      %v5355 = vpop.f32.mrf.mxu0
      %v5356 = vadd.f32 0.0, %v5355
      %5357 = vmatmul.bf16.gmra.mxu0 %v4371
      %v5358 = vpop.f32.mrf.mxu0
      %v5359 = vadd.f32 0.0, %v5358
      %v5360 = vpop.f32.mrf.mxu0
      %v5361 = vadd.f32 0.0, %v5360
      %5362 = vmatmul.bf16.gmra.mxu0 %v4374
      %v5363 = vpop.f32.mrf.mxu0
      %v5364 = vadd.f32 0.0, %v5363
      %v5365 = vpop.f32.mrf.mxu0
      %v5366 = vadd.f32 0.0, %v5365
      %5367 = vmatmul.bf16.gmra.mxu0 %v4377
      %v5368 = vpop.f32.mrf.mxu0
      %v5369 = vadd.f32 0.0, %v5368
      %v5370 = vpop.f32.mrf.mxu0
      %v5371 = vadd.f32 0.0, %v5370
      %5372 = vmatmul.bf16.gmra.mxu0 %v4380
      %v5373 = vpop.f32.mrf.mxu0
      %v5374 = vadd.f32 0.0, %v5373
      %v5375 = vpop.f32.mrf.mxu0
      %v5376 = vadd.f32 0.0, %v5375
      %5377 = vmatmul.bf16.gmra.mxu0 %v4383
      %v5378 = vpop.f32.mrf.mxu0
      %v5379 = vadd.f32 0.0, %v5378
      %v5380 = vpop.f32.mrf.mxu0
      %v5381 = vadd.f32 0.0, %v5380
      %5382 = vmatmul.bf16.gmra.mxu0 %v4386
      %v5383 = vpop.f32.mrf.mxu0
      %v5384 = vadd.f32 0.0, %v5383
      %v5385 = vpop.f32.mrf.mxu0
      %v5386 = vadd.f32 0.0, %v5385
      %5387 = vmatmul.bf16.gmra.mxu0 %v4389
      %v5388 = vpop.f32.mrf.mxu0
      %v5389 = vadd.f32 0.0, %v5388
      %v5390 = vpop.f32.mrf.mxu0
      %v5391 = vadd.f32 0.0, %v5390
      %5392 = vmatmul.bf16.gmra.mxu0 %v4392
      %v5393 = vpop.f32.mrf.mxu0
      %v5394 = vadd.f32 0.0, %v5393
      %v5395 = vpop.f32.mrf.mxu0
      %v5396 = vadd.f32 0.0, %v5395
      %5397 = vmatmul.bf16.gmra.mxu0 %v4395
      %v5398 = vpop.f32.mrf.mxu0
      %v5399 = vadd.f32 0.0, %v5398
      %v5400 = vpop.f32.mrf.mxu0
      %v5401 = vadd.f32 0.0, %v5400
      %5402 = vmatmul.bf16.gmra.mxu0 %v4398
      %v5403 = vpop.f32.mrf.mxu0
      %v5404 = vadd.f32 0.0, %v5403
      %v5405 = vpop.f32.mrf.mxu0
      %v5406 = vadd.f32 0.0, %v5405
      %5407 = vmatmul.bf16.gmra.mxu0 %v4401
      %v5408 = vpop.f32.mrf.mxu0
      %v5409 = vadd.f32 0.0, %v5408
      %v5410 = vpop.f32.mrf.mxu0
      %v5411 = vadd.f32 0.0, %v5410
      %5412 = vmatmul.bf16.gmra.mxu0 %v4404
      %v5413 = vpop.f32.mrf.mxu0
      %v5414 = vadd.f32 0.0, %v5413
      %v5415 = vpop.f32.mrf.mxu0
      %v5416 = vadd.f32 0.0, %v5415
      %5417 = vmatmul.bf16.gmra.mxu0 %v4407
      %v5418 = vpop.f32.mrf.mxu0
      %v5419 = vadd.f32 0.0, %v5418
      %v5420 = vpop.f32.mrf.mxu0
      %v5421 = vadd.f32 0.0, %v5420
      %5422 = vmatmul.bf16.gmra.mxu0 %v4410
      %v5423 = vpop.f32.mrf.mxu0
      %v5424 = vadd.f32 0.0, %v5423
      %v5425 = vpop.f32.mrf.mxu0
      %v5426 = vadd.f32 0.0, %v5425
      %5427 = vmatmul.bf16.gmra.mxu0 %v4413
      %v5428 = vpop.f32.mrf.mxu0
      %v5429 = vadd.f32 0.0, %v5428
      %v5430 = vpop.f32.mrf.mxu0
      %v5431 = vadd.f32 0.0, %v5430
      %5432 = vmatmul.bf16.gmra.mxu0 %v4416
      %v5433 = vpop.f32.mrf.mxu0
      %v5434 = vadd.f32 0.0, %v5433
      %v5435 = vpop.f32.mrf.mxu0
      %v5436 = vadd.f32 0.0, %v5435
      %5437 = vmatmul.bf16.gmra.mxu0 %v4419
      %v5438 = vpop.f32.mrf.mxu0
      %v5439 = vadd.f32 0.0, %v5438
      %v5440 = vpop.f32.mrf.mxu0
      %v5441 = vadd.f32 0.0, %v5440
      %5442 = vmatmul.bf16.gmra.mxu0 %v4422
      %v5443 = vpop.f32.mrf.mxu0
      %v5444 = vadd.f32 0.0, %v5443
      %v5445 = vpop.f32.mrf.mxu0
      %v5446 = vadd.f32 0.0, %v5445
      %5447 = vmatmul.bf16.gmra.mxu0 %v4425
      %v5448 = vpop.f32.mrf.mxu0
      %v5449 = vadd.f32 0.0, %v5448
      %v5450 = vpop.f32.mrf.mxu0
      %v5451 = vadd.f32 0.0, %v5450
      %5452 = vmatmul.bf16.gmra.mxu0 %v4428
      %v5453 = vpop.f32.mrf.mxu0
      %v5454 = vadd.f32 0.0, %v5453
      %v5455 = vpop.f32.mrf.mxu0
      %v5456 = vadd.f32 0.0, %v5455
      %5457 = vmatmul.bf16.gmra.mxu0 %v4431
      %v5458 = vpop.f32.mrf.mxu0
      %v5459 = vadd.f32 0.0, %v5458
      %v5460 = vpop.f32.mrf.mxu0
      %v5461 = vadd.f32 0.0, %v5460
      %5462 = vmatmul.bf16.gmra.mxu0 %v4434
      %v5463 = vpop.f32.mrf.mxu0
      %v5464 = vadd.f32 0.0, %v5463
      %v5465 = vpop.f32.mrf.mxu0
      %v5466 = vadd.f32 0.0, %v5465
      %5467 = vmatmul.bf16.gmra.mxu0 %v4437
      %v5468 = vpop.f32.mrf.mxu0
      %v5469 = vadd.f32 0.0, %v5468
      %v5470 = vpop.f32.mrf.mxu0
      %v5471 = vadd.f32 0.0, %v5470
      %5472 = vmatmul.bf16.gmra.mxu0 %v4440
      %v5473 = vpop.f32.mrf.mxu0
      %v5474 = vadd.f32 0.0, %v5473
      %v5475 = vpop.f32.mrf.mxu0
      %v5476 = vadd.f32 0.0, %v5475
      %5477 = vmatmul.bf16.gmra.mxu0 %v4443
      %v5478 = vpop.f32.mrf.mxu0
      %v5479 = vadd.f32 0.0, %v5478
      %v5480 = vpop.f32.mrf.mxu0
      %v5481 = vadd.f32 0.0, %v5480
      %5482 = vmatmul.bf16.gmra.mxu0 %v4446
      %v5483 = vpop.f32.mrf.mxu0
      %v5484 = vadd.f32 0.0, %v5483
      %v5485 = vpop.f32.mrf.mxu0
      %v5486 = vadd.f32 0.0, %v5485
      %5487 = vmatmul.bf16.gmra.mxu0 %v4449
      %v5488 = vpop.f32.mrf.mxu0
      %v5489 = vadd.f32 0.0, %v5488
      %v5490 = vpop.f32.mrf.mxu0
      %v5491 = vadd.f32 0.0, %v5490
      %5492 = vmatmul.bf16.gmra.mxu0 %v4452
      %v5493 = vpop.f32.mrf.mxu0
      %v5494 = vadd.f32 0.0, %v5493
      %v5495 = vpop.f32.mrf.mxu0
      %v5496 = vadd.f32 0.0, %v5495
      %5497 = vmatmul.bf16.gmra.mxu0 %v4455
      %v5498 = vpop.f32.mrf.mxu0
      %v5499 = vadd.f32 0.0, %v5498
      %v5500 = vpop.f32.mrf.mxu0
      %v5501 = vadd.f32 0.0, %v5500
      %5502 = vmatmul.bf16.gmra.mxu0 %v4458
      %v5503 = vpop.f32.mrf.mxu0
      %v5504 = vadd.f32 0.0, %v5503
      %v5505 = vpop.f32.mrf.mxu0
      %v5506 = vadd.f32 0.0, %v5505
      %5507 = vmatmul.bf16.gmra.mxu0 %v4461
      %v5508 = vpop.f32.mrf.mxu0
      %v5509 = vadd.f32 0.0, %v5508
      %v5510 = vpop.f32.mrf.mxu0
      %v5511 = vadd.f32 0.0, %v5510
      %5512 = vmatmul.bf16.gmra.mxu0 %v4464
      %v5513 = vpop.f32.mrf.mxu0
      %v5514 = vadd.f32 0.0, %v5513
      %v5515 = vpop.f32.mrf.mxu0
      %v5516 = vadd.f32 0.0, %v5515
      %5517 = vmatmul.bf16.gmra.mxu0 %v4467
      %v5518 = vpop.f32.mrf.mxu0
      %v5519 = vadd.f32 0.0, %v5518
      %v5520 = vpop.f32.mrf.mxu0
      %v5521 = vadd.f32 0.0, %v5520
      %5522 = vmatmul.bf16.gmra.mxu0 %v4470
      %v5523 = vpop.f32.mrf.mxu0
      %v5524 = vadd.f32 0.0, %v5523
      %v5525 = vpop.f32.mrf.mxu0
      %v5526 = vadd.f32 0.0, %v5525
      %5527 = vmatmul.bf16.gmra.mxu0 %v4473
      %v5528 = vpop.f32.mrf.mxu0
      %v5529 = vadd.f32 0.0, %v5528
      %v5530 = vpop.f32.mrf.mxu0
      %v5531 = vadd.f32 0.0, %v5530
      %5532 = vmatmul.bf16.gmra.mxu0 %v4476
      %v5533 = vpop.f32.mrf.mxu0
      %v5534 = vadd.f32 0.0, %v5533
      %v5535 = vpop.f32.mrf.mxu0
      %v5536 = vadd.f32 0.0, %v5535
      %5537 = vmatmul.bf16.gmra.mxu0 %v4479
      %v5538 = vpop.f32.mrf.mxu0
      %v5539 = vadd.f32 0.0, %v5538
      %v5540 = vpop.f32.mrf.mxu0
      %v5541 = vadd.f32 0.0, %v5540
      %5542 = vmatmul.bf16.gmra.mxu0 %v4482
      %v5543 = vpop.f32.mrf.mxu0
      %v5544 = vadd.f32 0.0, %v5543
      %v5545 = vpop.f32.mrf.mxu0
      %v5546 = vadd.f32 0.0, %v5545
      %5547 = vmatmul.bf16.gmra.mxu0 %v4485
      %v5548 = vpop.f32.mrf.mxu0
      %v5549 = vadd.f32 0.0, %v5548
      %v5550 = vpop.f32.mrf.mxu0
      %v5551 = vadd.f32 0.0, %v5550
      %5552 = vmatmul.bf16.gmra.mxu0 %v4488
      %v5553 = vpop.f32.mrf.mxu0
      %v5554 = vadd.f32 0.0, %v5553
      %v5555 = vpop.f32.mrf.mxu0
      %v5556 = vadd.f32 0.0, %v5555
      %5557 = vmatmul.bf16.gmra.mxu0 %v4491
      %v5558 = vpop.f32.mrf.mxu0
      %v5559 = vadd.f32 0.0, %v5558
      %v5560 = vpop.f32.mrf.mxu0
      %v5561 = vadd.f32 0.0, %v5560
      %5562 = vmatmul.bf16.gmra.mxu0 %v4494
      %v5563 = vpop.f32.mrf.mxu0
      %v5564 = vadd.f32 0.0, %v5563
      %v5565 = vpop.f32.mrf.mxu0
      %v5566 = vadd.f32 0.0, %v5565
      %5567 = vmatmul.bf16.gmra.mxu0 %v4497
      %v5568 = vpop.f32.mrf.mxu0
      %v5569 = vadd.f32 0.0, %v5568
      %v5570 = vpop.f32.mrf.mxu0
      %v5571 = vadd.f32 0.0, %v5570
      %5572 = vmatmul.bf16.gmra.mxu0 %v4500
      %v5573 = vpop.f32.mrf.mxu0
      %v5574 = vadd.f32 0.0, %v5573
      %v5575 = vpop.f32.mrf.mxu0
      %v5576 = vadd.f32 0.0, %v5575
      %5577 = vmatmul.bf16.gmra.mxu0 %v4503
      %v5578 = vpop.f32.mrf.mxu0
      %v5579 = vadd.f32 0.0, %v5578
      %v5580 = vpop.f32.mrf.mxu0
      %v5581 = vadd.f32 0.0, %v5580
      %5582 = vmatmul.bf16.gmra.mxu0 %v4506
      %v5583 = vpop.f32.mrf.mxu0
      %v5584 = vadd.f32 0.0, %v5583
      %v5585 = vpop.f32.mrf.mxu0
      %v5586 = vadd.f32 0.0, %v5585
      %5587 = vmatmul.bf16.gmra.mxu0 %v4509
      %v5588 = vpop.f32.mrf.mxu0
      %v5589 = vadd.f32 0.0, %v5588
      %v5590 = vpop.f32.mrf.mxu0
      %v5591 = vadd.f32 0.0, %v5590
      %5592 = vmatmul.bf16.gmra.mxu0 %v4512
      %v5593 = vpop.f32.mrf.mxu0
      %v5594 = vadd.f32 0.0, %v5593
      %v5595 = vpop.f32.mrf.mxu0
      %v5596 = vadd.f32 0.0, %v5595
      %5597 = vmatmul.bf16.gmra.mxu0 %v4515
      %v5598 = vpop.f32.mrf.mxu0
      %v5599 = vadd.f32 0.0, %v5598
      %v5600 = vpop.f32.mrf.mxu0
      %v5601 = vadd.f32 0.0, %v5600
      %5602 = vmatmul.bf16.gmra.mxu0 %v4518
      %v5603 = vpop.f32.mrf.mxu0
      %v5604 = vadd.f32 0.0, %v5603
      %v5605 = vpop.f32.mrf.mxu0
      %v5606 = vadd.f32 0.0, %v5605
      %5607 = vmatmul.bf16.gmra.mxu0 %v4521
      %v5608 = vpop.f32.mrf.mxu0
      %v5609 = vadd.f32 0.0, %v5608
      %v5610 = vpop.f32.mrf.mxu0
      %v5611 = vadd.f32 0.0, %v5610
      %5612 = vmatmul.bf16.gmra.mxu0 %v4524
      %v5613 = vpop.f32.mrf.mxu0
      %v5614 = vadd.f32 0.0, %v5613
      %v5615 = vpop.f32.mrf.mxu0
      %v5616 = vadd.f32 0.0, %v5615
      %5617 = vmatmul.bf16.gmra.mxu0 %v4527
      %v5618 = vpop.f32.mrf.mxu0
      %v5619 = vadd.f32 0.0, %v5618
      %v5620 = vpop.f32.mrf.mxu0
      %v5621 = vadd.f32 0.0, %v5620
      %5622 = vmatmul.bf16.gmra.mxu0 %v4530
      %v5623 = vpop.f32.mrf.mxu0
      %v5624 = vadd.f32 0.0, %v5623
      %v5625 = vpop.f32.mrf.mxu0
      %v5626 = vadd.f32 0.0, %v5625
      %5627 = vmatmul.bf16.gmra.mxu0 %v4533
      %v5628 = vpop.f32.mrf.mxu0
      %v5629 = vadd.f32 0.0, %v5628
      %v5630 = vpop.f32.mrf.mxu0
      %v5631 = vadd.f32 0.0, %v5630
      %5632 = vmatmul.bf16.gmra.mxu0 %v4536
      %v5633 = vpop.f32.mrf.mxu0
      %v5634 = vadd.f32 0.0, %v5633
      %v5635 = vpop.f32.mrf.mxu0
      %v5636 = vadd.f32 0.0, %v5635
      %5637 = vmatmul.bf16.gmra.mxu0 %v4539
      %v5638 = vpop.f32.mrf.mxu0
      %v5639 = vadd.f32 0.0, %v5638
      %v5640 = vpop.f32.mrf.mxu0
      %v5641 = vadd.f32 0.0, %v5640
      %5642 = vmatmul.bf16.gmra.mxu0 %v4542
      %v5643 = vpop.f32.mrf.mxu0
      %v5644 = vadd.f32 0.0, %v5643
      %v5645 = vpop.f32.mrf.mxu0
      %v5646 = vadd.f32 0.0, %v5645
      %5647 = vmatmul.bf16.gmra.mxu0 %v4545
      %v5648 = vpop.f32.mrf.mxu0
      %v5649 = vadd.f32 0.0, %v5648
      %v5650 = vpop.f32.mrf.mxu0
      %v5651 = vadd.f32 0.0, %v5650
      %5652 = vmatmul.bf16.gmra.mxu0 %v4548
      %v5653 = vpop.f32.mrf.mxu0
      %v5654 = vadd.f32 0.0, %v5653
      %v5655 = vpop.f32.mrf.mxu0
      %v5656 = vadd.f32 0.0, %v5655
      %5657 = vmatmul.bf16.gmra.mxu0 %v4551
      %v5658 = vpop.f32.mrf.mxu0
      %v5659 = vadd.f32 0.0, %v5658
      %v5660 = vpop.f32.mrf.mxu0
      %v5661 = vadd.f32 0.0, %v5660
      %5662 = vmatmul.bf16.gmra.mxu0 %v4554
      %v5663 = vpop.f32.mrf.mxu0
      %v5664 = vadd.f32 0.0, %v5663
      %v5665 = vpop.f32.mrf.mxu0
      %v5666 = vadd.f32 0.0, %v5665
      %5667 = vmatmul.bf16.gmra.mxu0 %v4557
      %v5668 = vpop.f32.mrf.mxu0
      %v5669 = vadd.f32 0.0, %v5668
      %v5670 = vpop.f32.mrf.mxu0
      %v5671 = vadd.f32 0.0, %v5670
      %5672 = vmatmul.bf16.gmra.mxu0 %v4560
      %v5673 = vpop.f32.mrf.mxu0
      %v5674 = vadd.f32 0.0, %v5673
      %v5675 = vpop.f32.mrf.mxu0
      %v5676 = vadd.f32 0.0, %v5675
      %5677 = vmatmul.bf16.gmra.mxu0 %v4563
      %v5678 = vpop.f32.mrf.mxu0
      %v5679 = vadd.f32 0.0, %v5678
      %v5680 = vpop.f32.mrf.mxu0
      %v5681 = vadd.f32 0.0, %v5680
      %5682 = vmatmul.bf16.gmra.mxu0 %v4566
      %v5683 = vpop.f32.mrf.mxu0
      %v5684 = vadd.f32 0.0, %v5683
      %v5685 = vpop.f32.mrf.mxu0
      %v5686 = vadd.f32 0.0, %v5685
      %5687 = vmatmul.bf16.gmra.mxu0 %v4569
      %v5688 = vpop.f32.mrf.mxu0
      %v5689 = vadd.f32 0.0, %v5688
      %v5690 = vpop.f32.mrf.mxu0
      %v5691 = vadd.f32 0.0, %v5690
      %5692 = vmatmul.bf16.gmra.mxu0 %v4572
      %v5693 = vpop.f32.mrf.mxu0
      %v5694 = vadd.f32 0.0, %v5693
      %v5695 = vpop.f32.mrf.mxu0
      %v5696 = vadd.f32 0.0, %v5695
      %5697 = vmatmul.bf16.gmra.mxu0 %v4575
      %v5698 = vpop.f32.mrf.mxu0
      %v5699 = vadd.f32 0.0, %v5698
      %v5700 = vpop.f32.mrf.mxu0
      %v5701 = vadd.f32 0.0, %v5700
      %5702 = vmatmul.bf16.gmra.mxu0 %v4578
      %v5703 = vpop.f32.mrf.mxu0
      %v5704 = vadd.f32 0.0, %v5703
      %v5705 = vpop.f32.mrf.mxu0
      %v5706 = vadd.f32 0.0, %v5705
      %5707 = vmatmul.bf16.gmra.mxu0 %v4581
      %v5708 = vpop.f32.mrf.mxu0
      %v5709 = vadd.f32 0.0, %v5708
      %v5710 = vpop.f32.mrf.mxu0
      %v5711 = vadd.f32 0.0, %v5710
      %5712 = vmatmul.bf16.gmra.mxu0 %v4584
      %v5713 = vpop.f32.mrf.mxu0
      %v5714 = vadd.f32 0.0, %v5713
      %v5715 = vpop.f32.mrf.mxu0
      %v5716 = vadd.f32 0.0, %v5715
      %5717 = vmatmul.bf16.gmra.mxu0 %v4587
      %v5718 = vpop.f32.mrf.mxu0
      %v5719 = vadd.f32 0.0, %v5718
      %v5720 = vpop.f32.mrf.mxu0
      %v5721 = vadd.f32 0.0, %v5720
      %5722 = vmatmul.bf16.gmra.mxu0 %v4590
      %v5723 = vpop.f32.mrf.mxu0
      %v5724 = vadd.f32 0.0, %v5723
      %v5725 = vpop.f32.mrf.mxu0
      %v5726 = vadd.f32 0.0, %v5725
      %5727 = vmatmul.bf16.gmra.mxu0 %v4593
      %v5728 = vpop.f32.mrf.mxu0
      %v5729 = vadd.f32 0.0, %v5728
      %v5730 = vpop.f32.mrf.mxu0
      %v5731 = vadd.f32 0.0, %v5730
      %5732 = vmatmul.bf16.gmra.mxu0 %v4596
      %v5733 = vpop.f32.mrf.mxu0
      %v5734 = vadd.f32 0.0, %v5733
      %v5735 = vpop.f32.mrf.mxu0
      %v5736 = vadd.f32 0.0, %v5735
      %5737 = vmatmul.bf16.gmra.mxu0 %v4599
      %v5738 = vpop.f32.mrf.mxu0
      %v5739 = vadd.f32 0.0, %v5738
      %v5740 = vpop.f32.mrf.mxu0
      %v5741 = vadd.f32 0.0, %v5740
      %5742 = vmatmul.bf16.gmra.mxu0 %v4602
      %v5743 = vpop.f32.mrf.mxu0
      %v5744 = vadd.f32 0.0, %v5743
      %v5745 = vpop.f32.mrf.mxu0
      %v5746 = vadd.f32 0.0, %v5745
      %5747 = vmatmul.bf16.gmra.mxu0 %v4605
      %v5748 = vpop.f32.mrf.mxu0
      %v5749 = vadd.f32 0.0, %v5748
      %v5750 = vpop.f32.mrf.mxu0
      %v5751 = vadd.f32 0.0, %v5750
      %5752 = vmatmul.bf16.gmra.mxu0 %v4608
      %v5753 = vpop.f32.mrf.mxu0
      %v5754 = vadd.f32 0.0, %v5753
      %v5755 = vpop.f32.mrf.mxu0
      %v5756 = vadd.f32 0.0, %v5755
      %5757 = vmatmul.bf16.gmra.mxu0 %v4611
      %v5758 = vpop.f32.mrf.mxu0
      %v5759 = vadd.f32 0.0, %v5758
      %v5760 = vpop.f32.mrf.mxu0
      %v5761 = vadd.f32 0.0, %v5760
      %5762 = vmatmul.bf16.gmra.mxu0 %v4614
      %v5763 = vpop.f32.mrf.mxu0
      %v5764 = vadd.f32 0.0, %v5763
      %v5765 = vpop.f32.mrf.mxu0
      %v5766 = vadd.f32 0.0, %v5765
      %5767 = vmatmul.bf16.gmra.mxu0 %v4617
      %v5768 = vpop.f32.mrf.mxu0
      %v5769 = vadd.f32 0.0, %v5768
      %v5770 = vpop.f32.mrf.mxu0
      %v5771 = vadd.f32 0.0, %v5770
      %5772 = vmatmul.bf16.gmra.mxu0 %v4620
      %v5773 = vpop.f32.mrf.mxu0
      %v5774 = vadd.f32 0.0, %v5773
      %v5775 = vpop.f32.mrf.mxu0
      %v5776 = vadd.f32 0.0, %v5775
      %5777 = vmatmul.bf16.gmra.mxu0 %v4623
      %v5778 = vpop.f32.mrf.mxu0
      %v5779 = vadd.f32 0.0, %v5778
      %v5780 = vpop.f32.mrf.mxu0
      %v5781 = vadd.f32 0.0, %v5780
      %5782 = vmatmul.bf16.gmra.mxu0 %v4626
      %v5783 = vpop.f32.mrf.mxu0
      %v5784 = vadd.f32 0.0, %v5783
      %v5785 = vpop.f32.mrf.mxu0
      %v5786 = vadd.f32 0.0, %v5785
      %5787 = vmatmul.bf16.gmra.mxu0 %v4629
      %v5788 = vpop.f32.mrf.mxu0
      %v5789 = vadd.f32 0.0, %v5788
      %v5790 = vpop.f32.mrf.mxu0
      %v5791 = vadd.f32 0.0, %v5790
      %5792 = vmatmul.bf16.gmra.mxu0 %v4632
      %v5793 = vpop.f32.mrf.mxu0
      %v5794 = vadd.f32 0.0, %v5793
      %v5795 = vpop.f32.mrf.mxu0
      %v5796 = vadd.f32 0.0, %v5795
      %5797 = vmatmul.bf16.gmra.mxu0 %v4635
      %v5798 = vpop.f32.mrf.mxu0
      %v5799 = vadd.f32 0.0, %v5798
      %v5800 = vpop.f32.mrf.mxu0
      %v5801 = vadd.f32 0.0, %v5800
      %5802 = vmatmul.bf16.gmra.mxu0 %v4638
      %v5803 = vpop.f32.mrf.mxu0
      %v5804 = vadd.f32 0.0, %v5803
      %v5805 = vpop.f32.mrf.mxu0
      %v5806 = vadd.f32 0.0, %v5805
      %5807 = vmatmul.bf16.gmra.mxu0 %v4641
      %v5808 = vpop.f32.mrf.mxu0
      %v5809 = vadd.f32 0.0, %v5808
      %v5810 = vpop.f32.mrf.mxu0
      %v5811 = vadd.f32 0.0, %v5810
      %5812 = vmatmul.bf16.gmra.mxu0 %v4644
      %v5813 = vpop.f32.mrf.mxu0
      %v5814 = vadd.f32 0.0, %v5813
      %v5815 = vpop.f32.mrf.mxu0
      %v5816 = vadd.f32 0.0, %v5815
      %5817 = vmatmul.bf16.gmra.mxu0 %v4647
      %v5818 = vpop.f32.mrf.mxu0
      %v5819 = vadd.f32 0.0, %v5818
      %v5820 = vpop.f32.mrf.mxu0
      %v5821 = vadd.f32 0.0, %v5820
      %5822 = vmatmul.bf16.gmra.mxu0 %v4650
      %v5823 = vpop.f32.mrf.mxu0
      %v5824 = vadd.f32 0.0, %v5823
      %v5825 = vpop.f32.mrf.mxu0
      %v5826 = vadd.f32 0.0, %v5825
      %5827 = vmatmul.bf16.gmra.mxu0 %v4653
      %v5828 = vpop.f32.mrf.mxu0
      %v5829 = vadd.f32 0.0, %v5828
      %v5830 = vpop.f32.mrf.mxu0
      %v5831 = vadd.f32 0.0, %v5830
      %5832 = vmatmul.bf16.gmra.mxu0 %v4656
      %v5833 = vpop.f32.mrf.mxu0
      %v5834 = vadd.f32 0.0, %v5833
      %v5835 = vpop.f32.mrf.mxu0
      %v5836 = vadd.f32 0.0, %v5835
      %5837 = vmatmul.bf16.gmra.mxu0 %v4659
      %v5838 = vpop.f32.mrf.mxu0
      %v5839 = vadd.f32 0.0, %v5838
      %v5840 = vpop.f32.mrf.mxu0
      %v5841 = vadd.f32 0.0, %v5840
      %5842 = vmatmul.bf16.gmra.mxu0 %v4662
      %v5843 = vpop.f32.mrf.mxu0
      %v5844 = vadd.f32 0.0, %v5843
      %v5845 = vpop.f32.mrf.mxu0
      %v5846 = vadd.f32 0.0, %v5845
      %5847 = vmatmul.bf16.gmra.mxu0 %v4665
      %v5848 = vpop.f32.mrf.mxu0
      %v5849 = vadd.f32 0.0, %v5848
      %v5850 = vpop.f32.mrf.mxu0
      %v5851 = vadd.f32 0.0, %v5850
      %5852 = vmatmul.bf16.gmra.mxu0 %v4668
      %v5853 = vpop.f32.mrf.mxu0
      %v5854 = vadd.f32 0.0, %v5853
      %v5855 = vpop.f32.mrf.mxu0
      %v5856 = vadd.f32 0.0, %v5855
      %5857 = vmatmul.bf16.gmra.mxu0 %v4671
      %v5858 = vpop.f32.mrf.mxu0
      %v5859 = vadd.f32 0.0, %v5858
      %v5860 = vpop.f32.mrf.mxu0
      %v5861 = vadd.f32 0.0, %v5860
      %5862 = vmatmul.bf16.gmra.mxu0 %v4674
      %v5863 = vpop.f32.mrf.mxu0
      %v5864 = vadd.f32 0.0, %v5863
      %v5865 = vpop.f32.mrf.mxu0
      %v5866 = vadd.f32 0.0, %v5865
      %5867 = vmatmul.bf16.gmra.mxu0 %v4677
      %v5868 = vpop.f32.mrf.mxu0
      %v5869 = vadd.f32 0.0, %v5868
      %v5870 = vpop.f32.mrf.mxu0
      %v5871 = vadd.f32 0.0, %v5870
      %5872 = vmatmul.bf16.gmra.mxu0 %v4680
      %v5873 = vpop.f32.mrf.mxu0
      %v5874 = vadd.f32 0.0, %v5873
      %v5875 = vpop.f32.mrf.mxu0
      %v5876 = vadd.f32 0.0, %v5875
      %5877 = vmatmul.bf16.gmra.mxu0 %v4683
      %v5878 = vpop.f32.mrf.mxu0
      %v5879 = vadd.f32 0.0, %v5878
      %v5880 = vpop.f32.mrf.mxu0
      %v5881 = vadd.f32 0.0, %v5880
      %5882 = vmatmul.bf16.gmra.mxu0 %v4686
      %v5883 = vpop.f32.mrf.mxu0
      %v5884 = vadd.f32 0.0, %v5883
      %v5885 = vpop.f32.mrf.mxu0
      %v5886 = vadd.f32 0.0, %v5885
      %5887 = vmatmul.bf16.gmra.mxu0 %v4689
      %v5888 = vpop.f32.mrf.mxu0
      %v5889 = vadd.f32 0.0, %v5888
      %v5890 = vpop.f32.mrf.mxu0
      %v5891 = vadd.f32 0.0, %v5890
      %5892 = vmatmul.bf16.gmra.mxu0 %v4692
      %v5893 = vpop.f32.mrf.mxu0
      %v5894 = vadd.f32 0.0, %v5893
      %v5895 = vpop.f32.mrf.mxu0
      %v5896 = vadd.f32 0.0, %v5895
      %5897 = vmatmul.bf16.gmra.mxu0 %v4695
      %v5898 = vpop.f32.mrf.mxu0
      %v5899 = vadd.f32 0.0, %v5898
      %v5900 = vpop.f32.mrf.mxu0
      %v5901 = vadd.f32 0.0, %v5900
      %5902 = vmatmul.bf16.gmra.mxu0 %v4698
      %v5903 = vpop.f32.mrf.mxu0
      %v5904 = vadd.f32 0.0, %v5903
      %v5905 = vpop.f32.mrf.mxu0
      %v5906 = vadd.f32 0.0, %v5905
      %5907 = vmatmul.bf16.gmra.mxu0 %v4701
      %v5908 = vpop.f32.mrf.mxu0
      %v5909 = vadd.f32 0.0, %v5908
      %v5910 = vpop.f32.mrf.mxu0
      %v5911 = vadd.f32 0.0, %v5910
      %5912 = vdwg.mxu0
      %5913 = vmatpush.bf16.msra.mxu0 %v2145
      %5914 = vmatpush.bf16.msra.mxu0 %v2144
      %5915 = vmatpush.bf16.msra.mxu0 %v2143
      %5916 = vmatpush.bf16.msra.mxu0 %v2142
      %5917 = vmatpush.bf16.msra.mxu0 %v2141
      %5918 = vmatpush.bf16.msra.mxu0 %v2140
      %5919 = vmatpush.bf16.msra.mxu0 %v2139
      %5920 = vmatpush.bf16.msra.mxu0 %v2138
      %5921 = vmatmul.bf16.gmra.mxu0 %v4255
      %v5922 = vpop.f32.mrf.mxu0
      %v5923 = vadd.f32 %v5164, %v5922
      %v5924 = vpop.f32.mrf.mxu0
      %v5925 = vadd.f32 %v5166, %v5924
      %5926 = vmatmul.bf16.gmra.mxu0 %v4258
      %v5927 = vpop.f32.mrf.mxu0
      %v5928 = vadd.f32 %v5169, %v5927
      %v5929 = vpop.f32.mrf.mxu0
      %v5930 = vadd.f32 %v5171, %v5929
      %5931 = vmatmul.bf16.gmra.mxu0 %v4261
      %v5932 = vpop.f32.mrf.mxu0
      %v5933 = vadd.f32 %v5174, %v5932
      %v5934 = vpop.f32.mrf.mxu0
      %v5935 = vadd.f32 %v5176, %v5934
      %5936 = vmatmul.bf16.gmra.mxu0 %v4264
      %v5937 = vpop.f32.mrf.mxu0
      %v5938 = vadd.f32 %v5179, %v5937
      %v5939 = vpop.f32.mrf.mxu0
      %v5940 = vadd.f32 %v5181, %v5939
      %5941 = vmatmul.bf16.gmra.mxu0 %v4267
      %v5942 = vpop.f32.mrf.mxu0
      %v5943 = vadd.f32 %v5184, %v5942
      %v5944 = vpop.f32.mrf.mxu0
      %v5945 = vadd.f32 %v5186, %v5944
      %5946 = vmatmul.bf16.gmra.mxu0 %v4270
      %v5947 = vpop.f32.mrf.mxu0
      %v5948 = vadd.f32 %v5189, %v5947
      %v5949 = vpop.f32.mrf.mxu0
      %v5950 = vadd.f32 %v5191, %v5949
      %5951 = vmatmul.bf16.gmra.mxu0 %v4273
      %v5952 = vpop.f32.mrf.mxu0
      %v5953 = vadd.f32 %v5194, %v5952
      %v5954 = vpop.f32.mrf.mxu0
      %v5955 = vadd.f32 %v5196, %v5954
      %5956 = vmatmul.bf16.gmra.mxu0 %v4276
      %v5957 = vpop.f32.mrf.mxu0
      %v5958 = vadd.f32 %v5199, %v5957
      %v5959 = vpop.f32.mrf.mxu0
      %v5960 = vadd.f32 %v5201, %v5959
      %5961 = vmatmul.bf16.gmra.mxu0 %v4279
      %v5962 = vpop.f32.mrf.mxu0
      %v5963 = vadd.f32 %v5204, %v5962
      %v5964 = vpop.f32.mrf.mxu0
      %v5965 = vadd.f32 %v5206, %v5964
      %5966 = vmatmul.bf16.gmra.mxu0 %v4282
      %v5967 = vpop.f32.mrf.mxu0
      %v5968 = vadd.f32 %v5209, %v5967
      %v5969 = vpop.f32.mrf.mxu0
      %v5970 = vadd.f32 %v5211, %v5969
      %5971 = vmatmul.bf16.gmra.mxu0 %v4285
      %v5972 = vpop.f32.mrf.mxu0
      %v5973 = vadd.f32 %v5214, %v5972
      %v5974 = vpop.f32.mrf.mxu0
      %v5975 = vadd.f32 %v5216, %v5974
      %5976 = vmatmul.bf16.gmra.mxu0 %v4288
      %v5977 = vpop.f32.mrf.mxu0
      %v5978 = vadd.f32 %v5219, %v5977
      %v5979 = vpop.f32.mrf.mxu0
      %v5980 = vadd.f32 %v5221, %v5979
      %5981 = vmatmul.bf16.gmra.mxu0 %v4291
      %v5982 = vpop.f32.mrf.mxu0
      %v5983 = vadd.f32 %v5224, %v5982
      %v5984 = vpop.f32.mrf.mxu0
      %v5985 = vadd.f32 %v5226, %v5984
      %5986 = vmatmul.bf16.gmra.mxu0 %v4294
      %v5987 = vpop.f32.mrf.mxu0
      %v5988 = vadd.f32 %v5229, %v5987
      %v5989 = vpop.f32.mrf.mxu0
      %v5990 = vadd.f32 %v5231, %v5989
      %5991 = vmatmul.bf16.gmra.mxu0 %v4297
      %v5992 = vpop.f32.mrf.mxu0
      %v5993 = vadd.f32 %v5234, %v5992
      %v5994 = vpop.f32.mrf.mxu0
      %v5995 = vadd.f32 %v5236, %v5994
      %5996 = vmatmul.bf16.gmra.mxu0 %v4300
      %v5997 = vpop.f32.mrf.mxu0
      %v5998 = vadd.f32 %v5239, %v5997
      %v5999 = vpop.f32.mrf.mxu0
      %v6000 = vadd.f32 %v5241, %v5999
      %6001 = vmatmul.bf16.gmra.mxu0 %v4303
      %v6002 = vpop.f32.mrf.mxu0
      %v6003 = vadd.f32 %v5244, %v6002
      %v6004 = vpop.f32.mrf.mxu0
      %v6005 = vadd.f32 %v5246, %v6004
      %6006 = vmatmul.bf16.gmra.mxu0 %v4306
      %v6007 = vpop.f32.mrf.mxu0
      %v6008 = vadd.f32 %v5249, %v6007
      %v6009 = vpop.f32.mrf.mxu0
      %v6010 = vadd.f32 %v5251, %v6009
      %6011 = vmatmul.bf16.gmra.mxu0 %v4309
      %v6012 = vpop.f32.mrf.mxu0
      %v6013 = vadd.f32 %v5254, %v6012
      %v6014 = vpop.f32.mrf.mxu0
      %v6015 = vadd.f32 %v5256, %v6014
      %6016 = vmatmul.bf16.gmra.mxu0 %v4312
      %v6017 = vpop.f32.mrf.mxu0
      %v6018 = vadd.f32 %v5259, %v6017
      %v6019 = vpop.f32.mrf.mxu0
      %v6020 = vadd.f32 %v5261, %v6019
      %6021 = vmatmul.bf16.gmra.mxu0 %v4315
      %v6022 = vpop.f32.mrf.mxu0
      %v6023 = vadd.f32 %v5264, %v6022
      %v6024 = vpop.f32.mrf.mxu0
      %v6025 = vadd.f32 %v5266, %v6024
      %6026 = vmatmul.bf16.gmra.mxu0 %v4318
      %v6027 = vpop.f32.mrf.mxu0
      %v6028 = vadd.f32 %v5269, %v6027
      %v6029 = vpop.f32.mrf.mxu0
      %v6030 = vadd.f32 %v5271, %v6029
      %6031 = vmatmul.bf16.gmra.mxu0 %v4321
      %v6032 = vpop.f32.mrf.mxu0
      %v6033 = vadd.f32 %v5274, %v6032
      %v6034 = vpop.f32.mrf.mxu0
      %v6035 = vadd.f32 %v5276, %v6034
      %6036 = vmatmul.bf16.gmra.mxu0 %v4324
      %v6037 = vpop.f32.mrf.mxu0
      %v6038 = vadd.f32 %v5279, %v6037
      %v6039 = vpop.f32.mrf.mxu0
      %v6040 = vadd.f32 %v5281, %v6039
      %6041 = vmatmul.bf16.gmra.mxu0 %v4327
      %v6042 = vpop.f32.mrf.mxu0
      %v6043 = vadd.f32 %v5284, %v6042
      %v6044 = vpop.f32.mrf.mxu0
      %v6045 = vadd.f32 %v5286, %v6044
      %6046 = vmatmul.bf16.gmra.mxu0 %v4330
      %v6047 = vpop.f32.mrf.mxu0
      %v6048 = vadd.f32 %v5289, %v6047
      %v6049 = vpop.f32.mrf.mxu0
      %v6050 = vadd.f32 %v5291, %v6049
      %6051 = vmatmul.bf16.gmra.mxu0 %v4333
      %v6052 = vpop.f32.mrf.mxu0
      %v6053 = vadd.f32 %v5294, %v6052
      %v6054 = vpop.f32.mrf.mxu0
      %v6055 = vadd.f32 %v5296, %v6054
      %6056 = vmatmul.bf16.gmra.mxu0 %v4336
      %v6057 = vpop.f32.mrf.mxu0
      %v6058 = vadd.f32 %v5299, %v6057
      %v6059 = vpop.f32.mrf.mxu0
      %v6060 = vadd.f32 %v5301, %v6059
      %6061 = vmatmul.bf16.gmra.mxu0 %v4339
      %v6062 = vpop.f32.mrf.mxu0
      %v6063 = vadd.f32 %v5304, %v6062
      %v6064 = vpop.f32.mrf.mxu0
      %v6065 = vadd.f32 %v5306, %v6064
      %6066 = vmatmul.bf16.gmra.mxu0 %v4342
      %v6067 = vpop.f32.mrf.mxu0
      %v6068 = vadd.f32 %v5309, %v6067
      %v6069 = vpop.f32.mrf.mxu0
      %v6070 = vadd.f32 %v5311, %v6069
      %6071 = vmatmul.bf16.gmra.mxu0 %v4345
      %v6072 = vpop.f32.mrf.mxu0
      %v6073 = vadd.f32 %v5314, %v6072
      %v6074 = vpop.f32.mrf.mxu0
      %v6075 = vadd.f32 %v5316, %v6074
      %6076 = vmatmul.bf16.gmra.mxu0 %v4348
      %v6077 = vpop.f32.mrf.mxu0
      %v6078 = vadd.f32 %v5319, %v6077
      %v6079 = vpop.f32.mrf.mxu0
      %v6080 = vadd.f32 %v5321, %v6079
      %6081 = vmatmul.bf16.gmra.mxu0 %v4351
      %v6082 = vpop.f32.mrf.mxu0
      %v6083 = vadd.f32 %v5324, %v6082
      %v6084 = vpop.f32.mrf.mxu0
      %v6085 = vadd.f32 %v5326, %v6084
      %6086 = vmatmul.bf16.gmra.mxu0 %v4354
      %v6087 = vpop.f32.mrf.mxu0
      %v6088 = vadd.f32 %v5329, %v6087
      %v6089 = vpop.f32.mrf.mxu0
      %v6090 = vadd.f32 %v5331, %v6089
      %6091 = vmatmul.bf16.gmra.mxu0 %v4357
      %v6092 = vpop.f32.mrf.mxu0
      %v6093 = vadd.f32 %v5334, %v6092
      %v6094 = vpop.f32.mrf.mxu0
      %v6095 = vadd.f32 %v5336, %v6094
      %6096 = vmatmul.bf16.gmra.mxu0 %v4360
      %v6097 = vpop.f32.mrf.mxu0
      %v6098 = vadd.f32 %v5339, %v6097
      %v6099 = vpop.f32.mrf.mxu0
      %v6100 = vadd.f32 %v5341, %v6099
      %6101 = vmatmul.bf16.gmra.mxu0 %v4363
      %v6102 = vpop.f32.mrf.mxu0
      %v6103 = vadd.f32 %v5344, %v6102
      %v6104 = vpop.f32.mrf.mxu0
      %v6105 = vadd.f32 %v5346, %v6104
      %6106 = vmatmul.bf16.gmra.mxu0 %v4366
      %v6107 = vpop.f32.mrf.mxu0
      %v6108 = vadd.f32 %v5349, %v6107
      %v6109 = vpop.f32.mrf.mxu0
      %v6110 = vadd.f32 %v5351, %v6109
      %6111 = vmatmul.bf16.gmra.mxu0 %v4369
      %v6112 = vpop.f32.mrf.mxu0
      %v6113 = vadd.f32 %v5354, %v6112
      %v6114 = vpop.f32.mrf.mxu0
      %v6115 = vadd.f32 %v5356, %v6114
      %6116 = vmatmul.bf16.gmra.mxu0 %v4372
      %v6117 = vpop.f32.mrf.mxu0
      %v6118 = vadd.f32 %v5359, %v6117
      %v6119 = vpop.f32.mrf.mxu0
      %v6120 = vadd.f32 %v5361, %v6119
      %6121 = vmatmul.bf16.gmra.mxu0 %v4375
      %v6122 = vpop.f32.mrf.mxu0
      %v6123 = vadd.f32 %v5364, %v6122
      %v6124 = vpop.f32.mrf.mxu0
      %v6125 = vadd.f32 %v5366, %v6124
      %6126 = vmatmul.bf16.gmra.mxu0 %v4378
      %v6127 = vpop.f32.mrf.mxu0
      %v6128 = vadd.f32 %v5369, %v6127
      %v6129 = vpop.f32.mrf.mxu0
      %v6130 = vadd.f32 %v5371, %v6129
      %6131 = vmatmul.bf16.gmra.mxu0 %v4381
      %v6132 = vpop.f32.mrf.mxu0
      %v6133 = vadd.f32 %v5374, %v6132
      %v6134 = vpop.f32.mrf.mxu0
      %v6135 = vadd.f32 %v5376, %v6134
      %6136 = vmatmul.bf16.gmra.mxu0 %v4384
      %v6137 = vpop.f32.mrf.mxu0
      %v6138 = vadd.f32 %v5379, %v6137
      %v6139 = vpop.f32.mrf.mxu0
      %v6140 = vadd.f32 %v5381, %v6139
      %6141 = vmatmul.bf16.gmra.mxu0 %v4387
      %v6142 = vpop.f32.mrf.mxu0
      %v6143 = vadd.f32 %v5384, %v6142
      %v6144 = vpop.f32.mrf.mxu0
      %v6145 = vadd.f32 %v5386, %v6144
      %6146 = vmatmul.bf16.gmra.mxu0 %v4390
      %v6147 = vpop.f32.mrf.mxu0
      %v6148 = vadd.f32 %v5389, %v6147
      %v6149 = vpop.f32.mrf.mxu0
      %v6150 = vadd.f32 %v5391, %v6149
      %6151 = vmatmul.bf16.gmra.mxu0 %v4393
      %v6152 = vpop.f32.mrf.mxu0
      %v6153 = vadd.f32 %v5394, %v6152
      %v6154 = vpop.f32.mrf.mxu0
      %v6155 = vadd.f32 %v5396, %v6154
      %6156 = vmatmul.bf16.gmra.mxu0 %v4396
      %v6157 = vpop.f32.mrf.mxu0
      %v6158 = vadd.f32 %v5399, %v6157
      %v6159 = vpop.f32.mrf.mxu0
      %v6160 = vadd.f32 %v5401, %v6159
      %6161 = vmatmul.bf16.gmra.mxu0 %v4399
      %v6162 = vpop.f32.mrf.mxu0
      %v6163 = vadd.f32 %v5404, %v6162
      %v6164 = vpop.f32.mrf.mxu0
      %v6165 = vadd.f32 %v5406, %v6164
      %6166 = vmatmul.bf16.gmra.mxu0 %v4402
      %v6167 = vpop.f32.mrf.mxu0
      %v6168 = vadd.f32 %v5409, %v6167
      %v6169 = vpop.f32.mrf.mxu0
      %v6170 = vadd.f32 %v5411, %v6169
      %6171 = vmatmul.bf16.gmra.mxu0 %v4405
      %v6172 = vpop.f32.mrf.mxu0
      %v6173 = vadd.f32 %v5414, %v6172
      %v6174 = vpop.f32.mrf.mxu0
      %v6175 = vadd.f32 %v5416, %v6174
      %6176 = vmatmul.bf16.gmra.mxu0 %v4408
      %v6177 = vpop.f32.mrf.mxu0
      %v6178 = vadd.f32 %v5419, %v6177
      %v6179 = vpop.f32.mrf.mxu0
      %v6180 = vadd.f32 %v5421, %v6179
      %6181 = vmatmul.bf16.gmra.mxu0 %v4411
      %v6182 = vpop.f32.mrf.mxu0
      %v6183 = vadd.f32 %v5424, %v6182
      %v6184 = vpop.f32.mrf.mxu0
      %v6185 = vadd.f32 %v5426, %v6184
      %6186 = vmatmul.bf16.gmra.mxu0 %v4414
      %v6187 = vpop.f32.mrf.mxu0
      %v6188 = vadd.f32 %v5429, %v6187
      %v6189 = vpop.f32.mrf.mxu0
      %v6190 = vadd.f32 %v5431, %v6189
      %6191 = vmatmul.bf16.gmra.mxu0 %v4417
      %v6192 = vpop.f32.mrf.mxu0
      %v6193 = vadd.f32 %v5434, %v6192
      %v6194 = vpop.f32.mrf.mxu0
      %v6195 = vadd.f32 %v5436, %v6194
      %6196 = vmatmul.bf16.gmra.mxu0 %v4420
      %v6197 = vpop.f32.mrf.mxu0
      %v6198 = vadd.f32 %v5439, %v6197
      %v6199 = vpop.f32.mrf.mxu0
      %v6200 = vadd.f32 %v5441, %v6199
      %6201 = vmatmul.bf16.gmra.mxu0 %v4423
      %v6202 = vpop.f32.mrf.mxu0
      %v6203 = vadd.f32 %v5444, %v6202
      %v6204 = vpop.f32.mrf.mxu0
      %v6205 = vadd.f32 %v5446, %v6204
      %6206 = vmatmul.bf16.gmra.mxu0 %v4426
      %v6207 = vpop.f32.mrf.mxu0
      %v6208 = vadd.f32 %v5449, %v6207
      %v6209 = vpop.f32.mrf.mxu0
      %v6210 = vadd.f32 %v5451, %v6209
      %6211 = vmatmul.bf16.gmra.mxu0 %v4429
      %v6212 = vpop.f32.mrf.mxu0
      %v6213 = vadd.f32 %v5454, %v6212
      %v6214 = vpop.f32.mrf.mxu0
      %v6215 = vadd.f32 %v5456, %v6214
      %6216 = vmatmul.bf16.gmra.mxu0 %v4432
      %v6217 = vpop.f32.mrf.mxu0
      %v6218 = vadd.f32 %v5459, %v6217
      %v6219 = vpop.f32.mrf.mxu0
      %v6220 = vadd.f32 %v5461, %v6219
      %6221 = vmatmul.bf16.gmra.mxu0 %v4435
      %v6222 = vpop.f32.mrf.mxu0
      %v6223 = vadd.f32 %v5464, %v6222
      %v6224 = vpop.f32.mrf.mxu0
      %v6225 = vadd.f32 %v5466, %v6224
      %6226 = vmatmul.bf16.gmra.mxu0 %v4438
      %v6227 = vpop.f32.mrf.mxu0
      %v6228 = vadd.f32 %v5469, %v6227
      %v6229 = vpop.f32.mrf.mxu0
      %v6230 = vadd.f32 %v5471, %v6229
      %6231 = vmatmul.bf16.gmra.mxu0 %v4441
      %v6232 = vpop.f32.mrf.mxu0
      %v6233 = vadd.f32 %v5474, %v6232
      %v6234 = vpop.f32.mrf.mxu0
      %v6235 = vadd.f32 %v5476, %v6234
      %6236 = vmatmul.bf16.gmra.mxu0 %v4444
      %v6237 = vpop.f32.mrf.mxu0
      %v6238 = vadd.f32 %v5479, %v6237
      %v6239 = vpop.f32.mrf.mxu0
      %v6240 = vadd.f32 %v5481, %v6239
      %6241 = vmatmul.bf16.gmra.mxu0 %v4447
      %v6242 = vpop.f32.mrf.mxu0
      %v6243 = vadd.f32 %v5484, %v6242
      %v6244 = vpop.f32.mrf.mxu0
      %v6245 = vadd.f32 %v5486, %v6244
      %6246 = vmatmul.bf16.gmra.mxu0 %v4450
      %v6247 = vpop.f32.mrf.mxu0
      %v6248 = vadd.f32 %v5489, %v6247
      %v6249 = vpop.f32.mrf.mxu0
      %v6250 = vadd.f32 %v5491, %v6249
      %6251 = vmatmul.bf16.gmra.mxu0 %v4453
      %v6252 = vpop.f32.mrf.mxu0
      %v6253 = vadd.f32 %v5494, %v6252
      %v6254 = vpop.f32.mrf.mxu0
      %v6255 = vadd.f32 %v5496, %v6254
      %6256 = vmatmul.bf16.gmra.mxu0 %v4456
      %v6257 = vpop.f32.mrf.mxu0
      %v6258 = vadd.f32 %v5499, %v6257
      %v6259 = vpop.f32.mrf.mxu0
      %v6260 = vadd.f32 %v5501, %v6259
      %6261 = vmatmul.bf16.gmra.mxu0 %v4459
      %v6262 = vpop.f32.mrf.mxu0
      %v6263 = vadd.f32 %v5504, %v6262
      %v6264 = vpop.f32.mrf.mxu0
      %v6265 = vadd.f32 %v5506, %v6264
      %6266 = vmatmul.bf16.gmra.mxu0 %v4462
      %v6267 = vpop.f32.mrf.mxu0
      %v6268 = vadd.f32 %v5509, %v6267
      %v6269 = vpop.f32.mrf.mxu0
      %v6270 = vadd.f32 %v5511, %v6269
      %6271 = vmatmul.bf16.gmra.mxu0 %v4465
      %v6272 = vpop.f32.mrf.mxu0
      %v6273 = vadd.f32 %v5514, %v6272
      %v6274 = vpop.f32.mrf.mxu0
      %v6275 = vadd.f32 %v5516, %v6274
      %6276 = vmatmul.bf16.gmra.mxu0 %v4468
      %v6277 = vpop.f32.mrf.mxu0
      %v6278 = vadd.f32 %v5519, %v6277
      %v6279 = vpop.f32.mrf.mxu0
      %v6280 = vadd.f32 %v5521, %v6279
      %6281 = vmatmul.bf16.gmra.mxu0 %v4471
      %v6282 = vpop.f32.mrf.mxu0
      %v6283 = vadd.f32 %v5524, %v6282
      %v6284 = vpop.f32.mrf.mxu0
      %v6285 = vadd.f32 %v5526, %v6284
      %6286 = vmatmul.bf16.gmra.mxu0 %v4474
      %v6287 = vpop.f32.mrf.mxu0
      %v6288 = vadd.f32 %v5529, %v6287
      %v6289 = vpop.f32.mrf.mxu0
      %v6290 = vadd.f32 %v5531, %v6289
      %6291 = vmatmul.bf16.gmra.mxu0 %v4477
      %v6292 = vpop.f32.mrf.mxu0
      %v6293 = vadd.f32 %v5534, %v6292
      %v6294 = vpop.f32.mrf.mxu0
      %v6295 = vadd.f32 %v5536, %v6294
      %6296 = vmatmul.bf16.gmra.mxu0 %v4480
      %v6297 = vpop.f32.mrf.mxu0
      %v6298 = vadd.f32 %v5539, %v6297
      %v6299 = vpop.f32.mrf.mxu0
      %v6300 = vadd.f32 %v5541, %v6299
      %6301 = vmatmul.bf16.gmra.mxu0 %v4483
      %v6302 = vpop.f32.mrf.mxu0
      %v6303 = vadd.f32 %v5544, %v6302
      %v6304 = vpop.f32.mrf.mxu0
      %v6305 = vadd.f32 %v5546, %v6304
      %6306 = vmatmul.bf16.gmra.mxu0 %v4486
      %v6307 = vpop.f32.mrf.mxu0
      %v6308 = vadd.f32 %v5549, %v6307
      %v6309 = vpop.f32.mrf.mxu0
      %v6310 = vadd.f32 %v5551, %v6309
      %6311 = vmatmul.bf16.gmra.mxu0 %v4489
      %v6312 = vpop.f32.mrf.mxu0
      %v6313 = vadd.f32 %v5554, %v6312
      %v6314 = vpop.f32.mrf.mxu0
      %v6315 = vadd.f32 %v5556, %v6314
      %6316 = vmatmul.bf16.gmra.mxu0 %v4492
      %v6317 = vpop.f32.mrf.mxu0
      %v6318 = vadd.f32 %v5559, %v6317
      %v6319 = vpop.f32.mrf.mxu0
      %v6320 = vadd.f32 %v5561, %v6319
      %6321 = vmatmul.bf16.gmra.mxu0 %v4495
      %v6322 = vpop.f32.mrf.mxu0
      %v6323 = vadd.f32 %v5564, %v6322
      %v6324 = vpop.f32.mrf.mxu0
      %v6325 = vadd.f32 %v5566, %v6324
      %6326 = vmatmul.bf16.gmra.mxu0 %v4498
      %v6327 = vpop.f32.mrf.mxu0
      %v6328 = vadd.f32 %v5569, %v6327
      %v6329 = vpop.f32.mrf.mxu0
      %v6330 = vadd.f32 %v5571, %v6329
      %6331 = vmatmul.bf16.gmra.mxu0 %v4501
      %v6332 = vpop.f32.mrf.mxu0
      %v6333 = vadd.f32 %v5574, %v6332
      %v6334 = vpop.f32.mrf.mxu0
      %v6335 = vadd.f32 %v5576, %v6334
      %6336 = vmatmul.bf16.gmra.mxu0 %v4504
      %v6337 = vpop.f32.mrf.mxu0
      %v6338 = vadd.f32 %v5579, %v6337
      %v6339 = vpop.f32.mrf.mxu0
      %v6340 = vadd.f32 %v5581, %v6339
      %6341 = vmatmul.bf16.gmra.mxu0 %v4507
      %v6342 = vpop.f32.mrf.mxu0
      %v6343 = vadd.f32 %v5584, %v6342
      %v6344 = vpop.f32.mrf.mxu0
      %v6345 = vadd.f32 %v5586, %v6344
      %6346 = vmatmul.bf16.gmra.mxu0 %v4510
      %v6347 = vpop.f32.mrf.mxu0
      %v6348 = vadd.f32 %v5589, %v6347
      %v6349 = vpop.f32.mrf.mxu0
      %v6350 = vadd.f32 %v5591, %v6349
      %6351 = vmatmul.bf16.gmra.mxu0 %v4513
      %v6352 = vpop.f32.mrf.mxu0
      %v6353 = vadd.f32 %v5594, %v6352
      %v6354 = vpop.f32.mrf.mxu0
      %v6355 = vadd.f32 %v5596, %v6354
      %6356 = vmatmul.bf16.gmra.mxu0 %v4516
      %v6357 = vpop.f32.mrf.mxu0
      %v6358 = vadd.f32 %v5599, %v6357
      %v6359 = vpop.f32.mrf.mxu0
      %v6360 = vadd.f32 %v5601, %v6359
      %6361 = vmatmul.bf16.gmra.mxu0 %v4519
      %v6362 = vpop.f32.mrf.mxu0
      %v6363 = vadd.f32 %v5604, %v6362
      %v6364 = vpop.f32.mrf.mxu0
      %v6365 = vadd.f32 %v5606, %v6364
      %6366 = vmatmul.bf16.gmra.mxu0 %v4522
      %v6367 = vpop.f32.mrf.mxu0
      %v6368 = vadd.f32 %v5609, %v6367
      %v6369 = vpop.f32.mrf.mxu0
      %v6370 = vadd.f32 %v5611, %v6369
      %6371 = vmatmul.bf16.gmra.mxu0 %v4525
      %v6372 = vpop.f32.mrf.mxu0
      %v6373 = vadd.f32 %v5614, %v6372
      %v6374 = vpop.f32.mrf.mxu0
      %v6375 = vadd.f32 %v5616, %v6374
      %6376 = vmatmul.bf16.gmra.mxu0 %v4528
      %v6377 = vpop.f32.mrf.mxu0
      %v6378 = vadd.f32 %v5619, %v6377
      %v6379 = vpop.f32.mrf.mxu0
      %v6380 = vadd.f32 %v5621, %v6379
      %6381 = vmatmul.bf16.gmra.mxu0 %v4531
      %v6382 = vpop.f32.mrf.mxu0
      %v6383 = vadd.f32 %v5624, %v6382
      %v6384 = vpop.f32.mrf.mxu0
      %v6385 = vadd.f32 %v5626, %v6384
      %6386 = vmatmul.bf16.gmra.mxu0 %v4534
      %v6387 = vpop.f32.mrf.mxu0
      %v6388 = vadd.f32 %v5629, %v6387
      %v6389 = vpop.f32.mrf.mxu0
      %v6390 = vadd.f32 %v5631, %v6389
      %6391 = vmatmul.bf16.gmra.mxu0 %v4537
      %v6392 = vpop.f32.mrf.mxu0
      %v6393 = vadd.f32 %v5634, %v6392
      %v6394 = vpop.f32.mrf.mxu0
      %v6395 = vadd.f32 %v5636, %v6394
      %6396 = vmatmul.bf16.gmra.mxu0 %v4540
      %v6397 = vpop.f32.mrf.mxu0
      %v6398 = vadd.f32 %v5639, %v6397
      %v6399 = vpop.f32.mrf.mxu0
      %v6400 = vadd.f32 %v5641, %v6399
      %6401 = vmatmul.bf16.gmra.mxu0 %v4543
      %v6402 = vpop.f32.mrf.mxu0
      %v6403 = vadd.f32 %v5644, %v6402
      %v6404 = vpop.f32.mrf.mxu0
      %v6405 = vadd.f32 %v5646, %v6404
      %6406 = vmatmul.bf16.gmra.mxu0 %v4546
      %v6407 = vpop.f32.mrf.mxu0
      %v6408 = vadd.f32 %v5649, %v6407
      %v6409 = vpop.f32.mrf.mxu0
      %v6410 = vadd.f32 %v5651, %v6409
      %6411 = vmatmul.bf16.gmra.mxu0 %v4549
      %v6412 = vpop.f32.mrf.mxu0
      %v6413 = vadd.f32 %v5654, %v6412
      %v6414 = vpop.f32.mrf.mxu0
      %v6415 = vadd.f32 %v5656, %v6414
      %6416 = vmatmul.bf16.gmra.mxu0 %v4552
      %v6417 = vpop.f32.mrf.mxu0
      %v6418 = vadd.f32 %v5659, %v6417
      %v6419 = vpop.f32.mrf.mxu0
      %v6420 = vadd.f32 %v5661, %v6419
      %6421 = vmatmul.bf16.gmra.mxu0 %v4555
      %v6422 = vpop.f32.mrf.mxu0
      %v6423 = vadd.f32 %v5664, %v6422
      %v6424 = vpop.f32.mrf.mxu0
      %v6425 = vadd.f32 %v5666, %v6424
      %6426 = vmatmul.bf16.gmra.mxu0 %v4558
      %v6427 = vpop.f32.mrf.mxu0
      %v6428 = vadd.f32 %v5669, %v6427
      %v6429 = vpop.f32.mrf.mxu0
      %v6430 = vadd.f32 %v5671, %v6429
      %6431 = vmatmul.bf16.gmra.mxu0 %v4561
      %v6432 = vpop.f32.mrf.mxu0
      %v6433 = vadd.f32 %v5674, %v6432
      %v6434 = vpop.f32.mrf.mxu0
      %v6435 = vadd.f32 %v5676, %v6434
      %6436 = vmatmul.bf16.gmra.mxu0 %v4564
      %v6437 = vpop.f32.mrf.mxu0
      %v6438 = vadd.f32 %v5679, %v6437
      %v6439 = vpop.f32.mrf.mxu0
      %v6440 = vadd.f32 %v5681, %v6439
      %6441 = vmatmul.bf16.gmra.mxu0 %v4567
      %v6442 = vpop.f32.mrf.mxu0
      %v6443 = vadd.f32 %v5684, %v6442
      %v6444 = vpop.f32.mrf.mxu0
      %v6445 = vadd.f32 %v5686, %v6444
      %6446 = vmatmul.bf16.gmra.mxu0 %v4570
      %v6447 = vpop.f32.mrf.mxu0
      %v6448 = vadd.f32 %v5689, %v6447
      %v6449 = vpop.f32.mrf.mxu0
      %v6450 = vadd.f32 %v5691, %v6449
      %6451 = vmatmul.bf16.gmra.mxu0 %v4573
      %v6452 = vpop.f32.mrf.mxu0
      %v6453 = vadd.f32 %v5694, %v6452
      %v6454 = vpop.f32.mrf.mxu0
      %v6455 = vadd.f32 %v5696, %v6454
      %6456 = vmatmul.bf16.gmra.mxu0 %v4576
      %v6457 = vpop.f32.mrf.mxu0
      %v6458 = vadd.f32 %v5699, %v6457
      %v6459 = vpop.f32.mrf.mxu0
      %v6460 = vadd.f32 %v5701, %v6459
      %6461 = vmatmul.bf16.gmra.mxu0 %v4579
      %v6462 = vpop.f32.mrf.mxu0
      %v6463 = vadd.f32 %v5704, %v6462
      %v6464 = vpop.f32.mrf.mxu0
      %v6465 = vadd.f32 %v5706, %v6464
      %6466 = vmatmul.bf16.gmra.mxu0 %v4582
      %v6467 = vpop.f32.mrf.mxu0
      %v6468 = vadd.f32 %v5709, %v6467
      %v6469 = vpop.f32.mrf.mxu0
      %v6470 = vadd.f32 %v5711, %v6469
      %6471 = vmatmul.bf16.gmra.mxu0 %v4585
      %v6472 = vpop.f32.mrf.mxu0
      %v6473 = vadd.f32 %v5714, %v6472
      %v6474 = vpop.f32.mrf.mxu0
      %v6475 = vadd.f32 %v5716, %v6474
      %6476 = vmatmul.bf16.gmra.mxu0 %v4588
      %v6477 = vpop.f32.mrf.mxu0
      %v6478 = vadd.f32 %v5719, %v6477
      %v6479 = vpop.f32.mrf.mxu0
      %v6480 = vadd.f32 %v5721, %v6479
      %6481 = vmatmul.bf16.gmra.mxu0 %v4591
      %v6482 = vpop.f32.mrf.mxu0
      %v6483 = vadd.f32 %v5724, %v6482
      %v6484 = vpop.f32.mrf.mxu0
      %v6485 = vadd.f32 %v5726, %v6484
      %6486 = vmatmul.bf16.gmra.mxu0 %v4594
      %v6487 = vpop.f32.mrf.mxu0
      %v6488 = vadd.f32 %v5729, %v6487
      %v6489 = vpop.f32.mrf.mxu0
      %v6490 = vadd.f32 %v5731, %v6489
      %6491 = vmatmul.bf16.gmra.mxu0 %v4597
      %v6492 = vpop.f32.mrf.mxu0
      %v6493 = vadd.f32 %v5734, %v6492
      %v6494 = vpop.f32.mrf.mxu0
      %v6495 = vadd.f32 %v5736, %v6494
      %6496 = vmatmul.bf16.gmra.mxu0 %v4600
      %v6497 = vpop.f32.mrf.mxu0
      %v6498 = vadd.f32 %v5739, %v6497
      %v6499 = vpop.f32.mrf.mxu0
      %v6500 = vadd.f32 %v5741, %v6499
      %6501 = vmatmul.bf16.gmra.mxu0 %v4603
      %v6502 = vpop.f32.mrf.mxu0
      %v6503 = vadd.f32 %v5744, %v6502
      %v6504 = vpop.f32.mrf.mxu0
      %v6505 = vadd.f32 %v5746, %v6504
      %6506 = vmatmul.bf16.gmra.mxu0 %v4606
      %v6507 = vpop.f32.mrf.mxu0
      %v6508 = vadd.f32 %v5749, %v6507
      %v6509 = vpop.f32.mrf.mxu0
      %v6510 = vadd.f32 %v5751, %v6509
      %6511 = vmatmul.bf16.gmra.mxu0 %v4609
      %v6512 = vpop.f32.mrf.mxu0
      %v6513 = vadd.f32 %v5754, %v6512
      %v6514 = vpop.f32.mrf.mxu0
      %v6515 = vadd.f32 %v5756, %v6514
      %6516 = vmatmul.bf16.gmra.mxu0 %v4612
      %v6517 = vpop.f32.mrf.mxu0
      %v6518 = vadd.f32 %v5759, %v6517
      %v6519 = vpop.f32.mrf.mxu0
      %v6520 = vadd.f32 %v5761, %v6519
      %6521 = vmatmul.bf16.gmra.mxu0 %v4615
      %v6522 = vpop.f32.mrf.mxu0
      %v6523 = vadd.f32 %v5764, %v6522
      %v6524 = vpop.f32.mrf.mxu0
      %v6525 = vadd.f32 %v5766, %v6524
      %6526 = vmatmul.bf16.gmra.mxu0 %v4618
      %v6527 = vpop.f32.mrf.mxu0
      %v6528 = vadd.f32 %v5769, %v6527
      %v6529 = vpop.f32.mrf.mxu0
      %v6530 = vadd.f32 %v5771, %v6529
      %6531 = vmatmul.bf16.gmra.mxu0 %v4621
      %v6532 = vpop.f32.mrf.mxu0
      %v6533 = vadd.f32 %v5774, %v6532
      %v6534 = vpop.f32.mrf.mxu0
      %v6535 = vadd.f32 %v5776, %v6534
      %6536 = vmatmul.bf16.gmra.mxu0 %v4624
      %v6537 = vpop.f32.mrf.mxu0
      %v6538 = vadd.f32 %v5779, %v6537
      %v6539 = vpop.f32.mrf.mxu0
      %v6540 = vadd.f32 %v5781, %v6539
      %6541 = vmatmul.bf16.gmra.mxu0 %v4627
      %v6542 = vpop.f32.mrf.mxu0
      %v6543 = vadd.f32 %v5784, %v6542
      %v6544 = vpop.f32.mrf.mxu0
      %v6545 = vadd.f32 %v5786, %v6544
      %6546 = vmatmul.bf16.gmra.mxu0 %v4630
      %v6547 = vpop.f32.mrf.mxu0
      %v6548 = vadd.f32 %v5789, %v6547
      %v6549 = vpop.f32.mrf.mxu0
      %v6550 = vadd.f32 %v5791, %v6549
      %6551 = vmatmul.bf16.gmra.mxu0 %v4633
      %v6552 = vpop.f32.mrf.mxu0
      %v6553 = vadd.f32 %v5794, %v6552
      %v6554 = vpop.f32.mrf.mxu0
      %v6555 = vadd.f32 %v5796, %v6554
      %6556 = vmatmul.bf16.gmra.mxu0 %v4636
      %v6557 = vpop.f32.mrf.mxu0
      %v6558 = vadd.f32 %v5799, %v6557
      %v6559 = vpop.f32.mrf.mxu0
      %v6560 = vadd.f32 %v5801, %v6559
      %6561 = vmatmul.bf16.gmra.mxu0 %v4639
      %v6562 = vpop.f32.mrf.mxu0
      %v6563 = vadd.f32 %v5804, %v6562
      %v6564 = vpop.f32.mrf.mxu0
      %v6565 = vadd.f32 %v5806, %v6564
      %6566 = vmatmul.bf16.gmra.mxu0 %v4642
      %v6567 = vpop.f32.mrf.mxu0
      %v6568 = vadd.f32 %v5809, %v6567
      %v6569 = vpop.f32.mrf.mxu0
      %v6570 = vadd.f32 %v5811, %v6569
      %6571 = vmatmul.bf16.gmra.mxu0 %v4645
      %v6572 = vpop.f32.mrf.mxu0
      %v6573 = vadd.f32 %v5814, %v6572
      %v6574 = vpop.f32.mrf.mxu0
      %v6575 = vadd.f32 %v5816, %v6574
      %6576 = vmatmul.bf16.gmra.mxu0 %v4648
      %v6577 = vpop.f32.mrf.mxu0
      %v6578 = vadd.f32 %v5819, %v6577
      %v6579 = vpop.f32.mrf.mxu0
      %v6580 = vadd.f32 %v5821, %v6579
      %6581 = vmatmul.bf16.gmra.mxu0 %v4651
      %v6582 = vpop.f32.mrf.mxu0
      %v6583 = vadd.f32 %v5824, %v6582
      %v6584 = vpop.f32.mrf.mxu0
      %v6585 = vadd.f32 %v5826, %v6584
      %6586 = vmatmul.bf16.gmra.mxu0 %v4654
      %v6587 = vpop.f32.mrf.mxu0
      %v6588 = vadd.f32 %v5829, %v6587
      %v6589 = vpop.f32.mrf.mxu0
      %v6590 = vadd.f32 %v5831, %v6589
      %6591 = vmatmul.bf16.gmra.mxu0 %v4657
      %v6592 = vpop.f32.mrf.mxu0
      %v6593 = vadd.f32 %v5834, %v6592
      %v6594 = vpop.f32.mrf.mxu0
      %v6595 = vadd.f32 %v5836, %v6594
      %6596 = vmatmul.bf16.gmra.mxu0 %v4660
      %v6597 = vpop.f32.mrf.mxu0
      %v6598 = vadd.f32 %v5839, %v6597
      %v6599 = vpop.f32.mrf.mxu0
      %v6600 = vadd.f32 %v5841, %v6599
      %6601 = vmatmul.bf16.gmra.mxu0 %v4663
      %v6602 = vpop.f32.mrf.mxu0
      %v6603 = vadd.f32 %v5844, %v6602
      %v6604 = vpop.f32.mrf.mxu0
      %v6605 = vadd.f32 %v5846, %v6604
      %6606 = vmatmul.bf16.gmra.mxu0 %v4666
      %v6607 = vpop.f32.mrf.mxu0
      %v6608 = vadd.f32 %v5849, %v6607
      %v6609 = vpop.f32.mrf.mxu0
      %v6610 = vadd.f32 %v5851, %v6609
      %6611 = vmatmul.bf16.gmra.mxu0 %v4669
      %v6612 = vpop.f32.mrf.mxu0
      %v6613 = vadd.f32 %v5854, %v6612
      %v6614 = vpop.f32.mrf.mxu0
      %v6615 = vadd.f32 %v5856, %v6614
      %6616 = vmatmul.bf16.gmra.mxu0 %v4672
      %v6617 = vpop.f32.mrf.mxu0
      %v6618 = vadd.f32 %v5859, %v6617
      %v6619 = vpop.f32.mrf.mxu0
      %v6620 = vadd.f32 %v5861, %v6619
      %6621 = vmatmul.bf16.gmra.mxu0 %v4675
      %v6622 = vpop.f32.mrf.mxu0
      %v6623 = vadd.f32 %v5864, %v6622
      %v6624 = vpop.f32.mrf.mxu0
      %v6625 = vadd.f32 %v5866, %v6624
      %6626 = vmatmul.bf16.gmra.mxu0 %v4678
      %v6627 = vpop.f32.mrf.mxu0
      %v6628 = vadd.f32 %v5869, %v6627
      %v6629 = vpop.f32.mrf.mxu0
      %v6630 = vadd.f32 %v5871, %v6629
      %6631 = vmatmul.bf16.gmra.mxu0 %v4681
      %v6632 = vpop.f32.mrf.mxu0
      %v6633 = vadd.f32 %v5874, %v6632
      %v6634 = vpop.f32.mrf.mxu0
      %v6635 = vadd.f32 %v5876, %v6634
      %6636 = vmatmul.bf16.gmra.mxu0 %v4684
      %v6637 = vpop.f32.mrf.mxu0
      %v6638 = vadd.f32 %v5879, %v6637
      %v6639 = vpop.f32.mrf.mxu0
      %v6640 = vadd.f32 %v5881, %v6639
      %6641 = vmatmul.bf16.gmra.mxu0 %v4687
      %v6642 = vpop.f32.mrf.mxu0
      %v6643 = vadd.f32 %v5884, %v6642
      %v6644 = vpop.f32.mrf.mxu0
      %v6645 = vadd.f32 %v5886, %v6644
      %6646 = vmatmul.bf16.gmra.mxu0 %v4690
      %v6647 = vpop.f32.mrf.mxu0
      %v6648 = vadd.f32 %v5889, %v6647
      %v6649 = vpop.f32.mrf.mxu0
      %v6650 = vadd.f32 %v5891, %v6649
      %6651 = vmatmul.bf16.gmra.mxu0 %v4693
      %v6652 = vpop.f32.mrf.mxu0
      %v6653 = vadd.f32 %v5894, %v6652
      %v6654 = vpop.f32.mrf.mxu0
      %v6655 = vadd.f32 %v5896, %v6654
      %6656 = vmatmul.bf16.gmra.mxu0 %v4696
      %v6657 = vpop.f32.mrf.mxu0
      %v6658 = vadd.f32 %v5899, %v6657
      %v6659 = vpop.f32.mrf.mxu0
      %v6660 = vadd.f32 %v5901, %v6659
      %6661 = vmatmul.bf16.gmra.mxu0 %v4699
      %v6662 = vpop.f32.mrf.mxu0
      %v6663 = vadd.f32 %v5904, %v6662
      %v6664 = vpop.f32.mrf.mxu0
      %v6665 = vadd.f32 %v5906, %v6664
      %6666 = vmatmul.bf16.gmra.mxu0 %v4702
      %v6667 = vpop.f32.mrf.mxu0
      %v6668 = vadd.f32 %v5909, %v6667
      %v6669 = vpop.f32.mrf.mxu0
      %v6670 = vadd.f32 %v5911, %v6669
      %6671 = vdwg.mxu0
      %6672 = vmatpush.bf16.msra.mxu0 %v2153
      %6673 = vmatpush.bf16.msra.mxu0 %v2152
      %6674 = vmatpush.bf16.msra.mxu0 %v2151
      %6675 = vmatpush.bf16.msra.mxu0 %v2150
      %6676 = vmatpush.bf16.msra.mxu0 %v2149
      %6677 = vmatpush.bf16.msra.mxu0 %v2148
      %6678 = vmatpush.bf16.msra.mxu0 %v2147
      %6679 = vmatpush.bf16.msra.mxu0 %v2146
      %6680 = vmatmul.bf16.gmra.mxu0 %v4256
      %v6681 = vpop.f32.mrf.mxu0
      %v6682 = vadd.f32 %v5923, %v6681
      %v6683 = vpop.f32.mrf.mxu0
      %v6684 = vadd.f32 %v5925, %v6683
      %6685 = vmatmul.bf16.gmra.mxu0 %v4259
      %v6686 = vpop.f32.mrf.mxu0
      %v6687 = vadd.f32 %v5928, %v6686
      %v6688 = vpop.f32.mrf.mxu0
      %v6689 = vadd.f32 %v5930, %v6688
      %6690 = vmatmul.bf16.gmra.mxu0 %v4262
      %v6691 = vpop.f32.mrf.mxu0
      %v6692 = vadd.f32 %v5933, %v6691
      %v6693 = vpop.f32.mrf.mxu0
      %v6694 = vadd.f32 %v5935, %v6693
      %6695 = vmatmul.bf16.gmra.mxu0 %v4265
      %v6696 = vpop.f32.mrf.mxu0
      %v6697 = vadd.f32 %v5938, %v6696
      %v6698 = vpop.f32.mrf.mxu0
      %v6699 = vadd.f32 %v5940, %v6698
      %6700 = vmatmul.bf16.gmra.mxu0 %v4268
      %v6701 = vpop.f32.mrf.mxu0
      %v6702 = vadd.f32 %v5943, %v6701
      %v6703 = vpop.f32.mrf.mxu0
      %v6704 = vadd.f32 %v5945, %v6703
      %6705 = vmatmul.bf16.gmra.mxu0 %v4271
      %v6706 = vpop.f32.mrf.mxu0
      %v6707 = vadd.f32 %v5948, %v6706
      %v6708 = vpop.f32.mrf.mxu0
      %v6709 = vadd.f32 %v5950, %v6708
      %6710 = vmatmul.bf16.gmra.mxu0 %v4274
      %v6711 = vpop.f32.mrf.mxu0
      %v6712 = vadd.f32 %v5953, %v6711
      %v6713 = vpop.f32.mrf.mxu0
      %v6714 = vadd.f32 %v5955, %v6713
      %6715 = vmatmul.bf16.gmra.mxu0 %v4277
      %v6716 = vpop.f32.mrf.mxu0
      %v6717 = vadd.f32 %v5958, %v6716
      %v6718 = vpop.f32.mrf.mxu0
      %v6719 = vadd.f32 %v5960, %v6718
      %6720 = vmatmul.bf16.gmra.mxu0 %v4280
      %v6721 = vpop.f32.mrf.mxu0
      %v6722 = vadd.f32 %v5963, %v6721
      %v6723 = vpop.f32.mrf.mxu0
      %v6724 = vadd.f32 %v5965, %v6723
      %6725 = vmatmul.bf16.gmra.mxu0 %v4283
      %v6726 = vpop.f32.mrf.mxu0
      %v6727 = vadd.f32 %v5968, %v6726
      %v6728 = vpop.f32.mrf.mxu0
      %v6729 = vadd.f32 %v5970, %v6728
      %6730 = vmatmul.bf16.gmra.mxu0 %v4286
      %v6731 = vpop.f32.mrf.mxu0
      %v6732 = vadd.f32 %v5973, %v6731
      %v6733 = vpop.f32.mrf.mxu0
      %v6734 = vadd.f32 %v5975, %v6733
      %6735 = vmatmul.bf16.gmra.mxu0 %v4289
      %v6736 = vpop.f32.mrf.mxu0
      %v6737 = vadd.f32 %v5978, %v6736
      %v6738 = vpop.f32.mrf.mxu0
      %v6739 = vadd.f32 %v5980, %v6738
      %6740 = vmatmul.bf16.gmra.mxu0 %v4292
      %v6741 = vpop.f32.mrf.mxu0
      %v6742 = vadd.f32 %v5983, %v6741
      %v6743 = vpop.f32.mrf.mxu0
      %v6744 = vadd.f32 %v5985, %v6743
      %6745 = vmatmul.bf16.gmra.mxu0 %v4295
      %v6746 = vpop.f32.mrf.mxu0
      %v6747 = vadd.f32 %v5988, %v6746
      %v6748 = vpop.f32.mrf.mxu0
      %v6749 = vadd.f32 %v5990, %v6748
      %6750 = vmatmul.bf16.gmra.mxu0 %v4298
      %v6751 = vpop.f32.mrf.mxu0
      %v6752 = vadd.f32 %v5993, %v6751
      %v6753 = vpop.f32.mrf.mxu0
      %v6754 = vadd.f32 %v5995, %v6753
      %6755 = vmatmul.bf16.gmra.mxu0 %v4301
      %v6756 = vpop.f32.mrf.mxu0
      %v6757 = vadd.f32 %v5998, %v6756
      %v6758 = vpop.f32.mrf.mxu0
      %v6759 = vadd.f32 %v6000, %v6758
      %6760 = vmatmul.bf16.gmra.mxu0 %v4304
      %v6761 = vpop.f32.mrf.mxu0
      %v6762 = vadd.f32 %v6003, %v6761
      %v6763 = vpop.f32.mrf.mxu0
      %v6764 = vadd.f32 %v6005, %v6763
      %6765 = vmatmul.bf16.gmra.mxu0 %v4307
      %v6766 = vpop.f32.mrf.mxu0
      %v6767 = vadd.f32 %v6008, %v6766
      %v6768 = vpop.f32.mrf.mxu0
      %v6769 = vadd.f32 %v6010, %v6768
      %6770 = vmatmul.bf16.gmra.mxu0 %v4310
      %v6771 = vpop.f32.mrf.mxu0
      %v6772 = vadd.f32 %v6013, %v6771
      %v6773 = vpop.f32.mrf.mxu0
      %v6774 = vadd.f32 %v6015, %v6773
      %6775 = vmatmul.bf16.gmra.mxu0 %v4313
      %v6776 = vpop.f32.mrf.mxu0
      %v6777 = vadd.f32 %v6018, %v6776
      %v6778 = vpop.f32.mrf.mxu0
      %v6779 = vadd.f32 %v6020, %v6778
      %6780 = vmatmul.bf16.gmra.mxu0 %v4316
      %v6781 = vpop.f32.mrf.mxu0
      %v6782 = vadd.f32 %v6023, %v6781
      %v6783 = vpop.f32.mrf.mxu0
      %v6784 = vadd.f32 %v6025, %v6783
      %6785 = vmatmul.bf16.gmra.mxu0 %v4319
      %v6786 = vpop.f32.mrf.mxu0
      %v6787 = vadd.f32 %v6028, %v6786
      %v6788 = vpop.f32.mrf.mxu0
      %v6789 = vadd.f32 %v6030, %v6788
      %6790 = vmatmul.bf16.gmra.mxu0 %v4322
      %v6791 = vpop.f32.mrf.mxu0
      %v6792 = vadd.f32 %v6033, %v6791
      %v6793 = vpop.f32.mrf.mxu0
      %v6794 = vadd.f32 %v6035, %v6793
      %6795 = vmatmul.bf16.gmra.mxu0 %v4325
      %v6796 = vpop.f32.mrf.mxu0
      %v6797 = vadd.f32 %v6038, %v6796
      %v6798 = vpop.f32.mrf.mxu0
      %v6799 = vadd.f32 %v6040, %v6798
      %6800 = vmatmul.bf16.gmra.mxu0 %v4328
      %v6801 = vpop.f32.mrf.mxu0
      %v6802 = vadd.f32 %v6043, %v6801
      %v6803 = vpop.f32.mrf.mxu0
      %v6804 = vadd.f32 %v6045, %v6803
      %6805 = vmatmul.bf16.gmra.mxu0 %v4331
      %v6806 = vpop.f32.mrf.mxu0
      %v6807 = vadd.f32 %v6048, %v6806
      %v6808 = vpop.f32.mrf.mxu0
      %v6809 = vadd.f32 %v6050, %v6808
      %6810 = vmatmul.bf16.gmra.mxu0 %v4334
      %v6811 = vpop.f32.mrf.mxu0
      %v6812 = vadd.f32 %v6053, %v6811
      %v6813 = vpop.f32.mrf.mxu0
      %v6814 = vadd.f32 %v6055, %v6813
      %6815 = vmatmul.bf16.gmra.mxu0 %v4337
      %v6816 = vpop.f32.mrf.mxu0
      %v6817 = vadd.f32 %v6058, %v6816
      %v6818 = vpop.f32.mrf.mxu0
      %v6819 = vadd.f32 %v6060, %v6818
      %6820 = vmatmul.bf16.gmra.mxu0 %v4340
      %v6821 = vpop.f32.mrf.mxu0
      %v6822 = vadd.f32 %v6063, %v6821
      %v6823 = vpop.f32.mrf.mxu0
      %v6824 = vadd.f32 %v6065, %v6823
      %6825 = vmatmul.bf16.gmra.mxu0 %v4343
      %v6826 = vpop.f32.mrf.mxu0
      %v6827 = vadd.f32 %v6068, %v6826
      %v6828 = vpop.f32.mrf.mxu0
      %v6829 = vadd.f32 %v6070, %v6828
      %6830 = vmatmul.bf16.gmra.mxu0 %v4346
      %v6831 = vpop.f32.mrf.mxu0
      %v6832 = vadd.f32 %v6073, %v6831
      %v6833 = vpop.f32.mrf.mxu0
      %v6834 = vadd.f32 %v6075, %v6833
      %6835 = vmatmul.bf16.gmra.mxu0 %v4349
      %v6836 = vpop.f32.mrf.mxu0
      %v6837 = vadd.f32 %v6078, %v6836
      %v6838 = vpop.f32.mrf.mxu0
      %v6839 = vadd.f32 %v6080, %v6838
      %6840 = vmatmul.bf16.gmra.mxu0 %v4352
      %v6841 = vpop.f32.mrf.mxu0
      %v6842 = vadd.f32 %v6083, %v6841
      %v6843 = vpop.f32.mrf.mxu0
      %v6844 = vadd.f32 %v6085, %v6843
      %6845 = vmatmul.bf16.gmra.mxu0 %v4355
      %v6846 = vpop.f32.mrf.mxu0
      %v6847 = vadd.f32 %v6088, %v6846
      %v6848 = vpop.f32.mrf.mxu0
      %v6849 = vadd.f32 %v6090, %v6848
      %6850 = vmatmul.bf16.gmra.mxu0 %v4358
      %v6851 = vpop.f32.mrf.mxu0
      %v6852 = vadd.f32 %v6093, %v6851
      %v6853 = vpop.f32.mrf.mxu0
      %v6854 = vadd.f32 %v6095, %v6853
      %6855 = vmatmul.bf16.gmra.mxu0 %v4361
      %v6856 = vpop.f32.mrf.mxu0
      %v6857 = vadd.f32 %v6098, %v6856
      %v6858 = vpop.f32.mrf.mxu0
      %v6859 = vadd.f32 %v6100, %v6858
      %6860 = vmatmul.bf16.gmra.mxu0 %v4364
      %v6861 = vpop.f32.mrf.mxu0
      %v6862 = vadd.f32 %v6103, %v6861
      %v6863 = vpop.f32.mrf.mxu0
      %v6864 = vadd.f32 %v6105, %v6863
      %6865 = vmatmul.bf16.gmra.mxu0 %v4367
      %v6866 = vpop.f32.mrf.mxu0
      %v6867 = vadd.f32 %v6108, %v6866
      %v6868 = vpop.f32.mrf.mxu0
      %v6869 = vadd.f32 %v6110, %v6868
      %6870 = vmatmul.bf16.gmra.mxu0 %v4370
      %v6871 = vpop.f32.mrf.mxu0
      %v6872 = vadd.f32 %v6113, %v6871
      %v6873 = vpop.f32.mrf.mxu0
      %v6874 = vadd.f32 %v6115, %v6873
      %6875 = vmatmul.bf16.gmra.mxu0 %v4373
      %v6876 = vpop.f32.mrf.mxu0
      %v6877 = vadd.f32 %v6118, %v6876
      %v6878 = vpop.f32.mrf.mxu0
      %v6879 = vadd.f32 %v6120, %v6878
      %6880 = vmatmul.bf16.gmra.mxu0 %v4376
      %v6881 = vpop.f32.mrf.mxu0
      %v6882 = vadd.f32 %v6123, %v6881
      %v6883 = vpop.f32.mrf.mxu0
      %v6884 = vadd.f32 %v6125, %v6883
      %6885 = vmatmul.bf16.gmra.mxu0 %v4379
      %v6886 = vpop.f32.mrf.mxu0
      %v6887 = vadd.f32 %v6128, %v6886
      %v6888 = vpop.f32.mrf.mxu0
      %v6889 = vadd.f32 %v6130, %v6888
      %6890 = vmatmul.bf16.gmra.mxu0 %v4382
      %v6891 = vpop.f32.mrf.mxu0
      %v6892 = vadd.f32 %v6133, %v6891
      %v6893 = vpop.f32.mrf.mxu0
      %v6894 = vadd.f32 %v6135, %v6893
      %6895 = vmatmul.bf16.gmra.mxu0 %v4385
      %v6896 = vpop.f32.mrf.mxu0
      %v6897 = vadd.f32 %v6138, %v6896
      %v6898 = vpop.f32.mrf.mxu0
      %v6899 = vadd.f32 %v6140, %v6898
      %6900 = vmatmul.bf16.gmra.mxu0 %v4388
      %v6901 = vpop.f32.mrf.mxu0
      %v6902 = vadd.f32 %v6143, %v6901
      %v6903 = vpop.f32.mrf.mxu0
      %v6904 = vadd.f32 %v6145, %v6903
      %6905 = vmatmul.bf16.gmra.mxu0 %v4391
      %v6906 = vpop.f32.mrf.mxu0
      %v6907 = vadd.f32 %v6148, %v6906
      %v6908 = vpop.f32.mrf.mxu0
      %v6909 = vadd.f32 %v6150, %v6908
      %6910 = vmatmul.bf16.gmra.mxu0 %v4394
      %v6911 = vpop.f32.mrf.mxu0
      %v6912 = vadd.f32 %v6153, %v6911
      %v6913 = vpop.f32.mrf.mxu0
      %v6914 = vadd.f32 %v6155, %v6913
      %6915 = vmatmul.bf16.gmra.mxu0 %v4397
      %v6916 = vpop.f32.mrf.mxu0
      %v6917 = vadd.f32 %v6158, %v6916
      %v6918 = vpop.f32.mrf.mxu0
      %v6919 = vadd.f32 %v6160, %v6918
      %6920 = vmatmul.bf16.gmra.mxu0 %v4400
      %v6921 = vpop.f32.mrf.mxu0
      %v6922 = vadd.f32 %v6163, %v6921
      %v6923 = vpop.f32.mrf.mxu0
      %v6924 = vadd.f32 %v6165, %v6923
      %6925 = vmatmul.bf16.gmra.mxu0 %v4403
      %v6926 = vpop.f32.mrf.mxu0
      %v6927 = vadd.f32 %v6168, %v6926
      %v6928 = vpop.f32.mrf.mxu0
      %v6929 = vadd.f32 %v6170, %v6928
      %6930 = vmatmul.bf16.gmra.mxu0 %v4406
      %v6931 = vpop.f32.mrf.mxu0
      %v6932 = vadd.f32 %v6173, %v6931
      %v6933 = vpop.f32.mrf.mxu0
      %v6934 = vadd.f32 %v6175, %v6933
      %6935 = vmatmul.bf16.gmra.mxu0 %v4409
      %v6936 = vpop.f32.mrf.mxu0
      %v6937 = vadd.f32 %v6178, %v6936
      %v6938 = vpop.f32.mrf.mxu0
      %v6939 = vadd.f32 %v6180, %v6938
      %6940 = vmatmul.bf16.gmra.mxu0 %v4412
      %v6941 = vpop.f32.mrf.mxu0
      %v6942 = vadd.f32 %v6183, %v6941
      %v6943 = vpop.f32.mrf.mxu0
      %v6944 = vadd.f32 %v6185, %v6943
      %6945 = vmatmul.bf16.gmra.mxu0 %v4415
      %v6946 = vpop.f32.mrf.mxu0
      %v6947 = vadd.f32 %v6188, %v6946
      %v6948 = vpop.f32.mrf.mxu0
      %v6949 = vadd.f32 %v6190, %v6948
      %6950 = vmatmul.bf16.gmra.mxu0 %v4418
      %v6951 = vpop.f32.mrf.mxu0
      %v6952 = vadd.f32 %v6193, %v6951
      %v6953 = vpop.f32.mrf.mxu0
      %v6954 = vadd.f32 %v6195, %v6953
      %6955 = vmatmul.bf16.gmra.mxu0 %v4421
      %v6956 = vpop.f32.mrf.mxu0
      %v6957 = vadd.f32 %v6198, %v6956
      %v6958 = vpop.f32.mrf.mxu0
      %v6959 = vadd.f32 %v6200, %v6958
      %6960 = vmatmul.bf16.gmra.mxu0 %v4424
      %v6961 = vpop.f32.mrf.mxu0
      %v6962 = vadd.f32 %v6203, %v6961
      %v6963 = vpop.f32.mrf.mxu0
      %v6964 = vadd.f32 %v6205, %v6963
      %6965 = vmatmul.bf16.gmra.mxu0 %v4427
      %v6966 = vpop.f32.mrf.mxu0
      %v6967 = vadd.f32 %v6208, %v6966
      %v6968 = vpop.f32.mrf.mxu0
      %v6969 = vadd.f32 %v6210, %v6968
      %6970 = vmatmul.bf16.gmra.mxu0 %v4430
      %v6971 = vpop.f32.mrf.mxu0
      %v6972 = vadd.f32 %v6213, %v6971
      %v6973 = vpop.f32.mrf.mxu0
      %v6974 = vadd.f32 %v6215, %v6973
      %6975 = vmatmul.bf16.gmra.mxu0 %v4433
      %v6976 = vpop.f32.mrf.mxu0
      %v6977 = vadd.f32 %v6218, %v6976
      %v6978 = vpop.f32.mrf.mxu0
      %v6979 = vadd.f32 %v6220, %v6978
      %6980 = vmatmul.bf16.gmra.mxu0 %v4436
      %v6981 = vpop.f32.mrf.mxu0
      %v6982 = vadd.f32 %v6223, %v6981
      %v6983 = vpop.f32.mrf.mxu0
      %v6984 = vadd.f32 %v6225, %v6983
      %6985 = vmatmul.bf16.gmra.mxu0 %v4439
      %v6986 = vpop.f32.mrf.mxu0
      %v6987 = vadd.f32 %v6228, %v6986
      %v6988 = vpop.f32.mrf.mxu0
      %v6989 = vadd.f32 %v6230, %v6988
      %6990 = vmatmul.bf16.gmra.mxu0 %v4442
      %v6991 = vpop.f32.mrf.mxu0
      %v6992 = vadd.f32 %v6233, %v6991
      %v6993 = vpop.f32.mrf.mxu0
      %v6994 = vadd.f32 %v6235, %v6993
      %6995 = vmatmul.bf16.gmra.mxu0 %v4445
      %v6996 = vpop.f32.mrf.mxu0
      %v6997 = vadd.f32 %v6238, %v6996
      %v6998 = vpop.f32.mrf.mxu0
      %v6999 = vadd.f32 %v6240, %v6998
      %7000 = vmatmul.bf16.gmra.mxu0 %v4448
      %v7001 = vpop.f32.mrf.mxu0
      %v7002 = vadd.f32 %v6243, %v7001
      %v7003 = vpop.f32.mrf.mxu0
      %v7004 = vadd.f32 %v6245, %v7003
      %7005 = vmatmul.bf16.gmra.mxu0 %v4451
      %v7006 = vpop.f32.mrf.mxu0
      %v7007 = vadd.f32 %v6248, %v7006
      %v7008 = vpop.f32.mrf.mxu0
      %v7009 = vadd.f32 %v6250, %v7008
      %7010 = vmatmul.bf16.gmra.mxu0 %v4454
      %v7011 = vpop.f32.mrf.mxu0
      %v7012 = vadd.f32 %v6253, %v7011
      %v7013 = vpop.f32.mrf.mxu0
      %v7014 = vadd.f32 %v6255, %v7013
      %7015 = vmatmul.bf16.gmra.mxu0 %v4457
      %v7016 = vpop.f32.mrf.mxu0
      %v7017 = vadd.f32 %v6258, %v7016
      %v7018 = vpop.f32.mrf.mxu0
      %v7019 = vadd.f32 %v6260, %v7018
      %7020 = vmatmul.bf16.gmra.mxu0 %v4460
      %v7021 = vpop.f32.mrf.mxu0
      %v7022 = vadd.f32 %v6263, %v7021
      %v7023 = vpop.f32.mrf.mxu0
      %v7024 = vadd.f32 %v6265, %v7023
      %7025 = vmatmul.bf16.gmra.mxu0 %v4463
      %v7026 = vpop.f32.mrf.mxu0
      %v7027 = vadd.f32 %v6268, %v7026
      %v7028 = vpop.f32.mrf.mxu0
      %v7029 = vadd.f32 %v6270, %v7028
      %7030 = vmatmul.bf16.gmra.mxu0 %v4466
      %v7031 = vpop.f32.mrf.mxu0
      %v7032 = vadd.f32 %v6273, %v7031
      %v7033 = vpop.f32.mrf.mxu0
      %v7034 = vadd.f32 %v6275, %v7033
      %7035 = vmatmul.bf16.gmra.mxu0 %v4469
      %v7036 = vpop.f32.mrf.mxu0
      %v7037 = vadd.f32 %v6278, %v7036
      %v7038 = vpop.f32.mrf.mxu0
      %v7039 = vadd.f32 %v6280, %v7038
      %7040 = vmatmul.bf16.gmra.mxu0 %v4472
      %v7041 = vpop.f32.mrf.mxu0
      %v7042 = vadd.f32 %v6283, %v7041
      %v7043 = vpop.f32.mrf.mxu0
      %v7044 = vadd.f32 %v6285, %v7043
      %7045 = vmatmul.bf16.gmra.mxu0 %v4475
      %v7046 = vpop.f32.mrf.mxu0
      %v7047 = vadd.f32 %v6288, %v7046
      %v7048 = vpop.f32.mrf.mxu0
      %v7049 = vadd.f32 %v6290, %v7048
      %7050 = vmatmul.bf16.gmra.mxu0 %v4478
      %v7051 = vpop.f32.mrf.mxu0
      %v7052 = vadd.f32 %v6293, %v7051
      %v7053 = vpop.f32.mrf.mxu0
      %v7054 = vadd.f32 %v6295, %v7053
      %7055 = vmatmul.bf16.gmra.mxu0 %v4481
      %v7056 = vpop.f32.mrf.mxu0
      %v7057 = vadd.f32 %v6298, %v7056
      %v7058 = vpop.f32.mrf.mxu0
      %v7059 = vadd.f32 %v6300, %v7058
      %7060 = vmatmul.bf16.gmra.mxu0 %v4484
      %v7061 = vpop.f32.mrf.mxu0
      %v7062 = vadd.f32 %v6303, %v7061
      %v7063 = vpop.f32.mrf.mxu0
      %v7064 = vadd.f32 %v6305, %v7063
      %7065 = vmatmul.bf16.gmra.mxu0 %v4487
      %v7066 = vpop.f32.mrf.mxu0
      %v7067 = vadd.f32 %v6308, %v7066
      %v7068 = vpop.f32.mrf.mxu0
      %v7069 = vadd.f32 %v6310, %v7068
      %7070 = vmatmul.bf16.gmra.mxu0 %v4490
      %v7071 = vpop.f32.mrf.mxu0
      %v7072 = vadd.f32 %v6313, %v7071
      %v7073 = vpop.f32.mrf.mxu0
      %v7074 = vadd.f32 %v6315, %v7073
      %7075 = vmatmul.bf16.gmra.mxu0 %v4493
      %v7076 = vpop.f32.mrf.mxu0
      %v7077 = vadd.f32 %v6318, %v7076
      %v7078 = vpop.f32.mrf.mxu0
      %v7079 = vadd.f32 %v6320, %v7078
      %7080 = vmatmul.bf16.gmra.mxu0 %v4496
      %v7081 = vpop.f32.mrf.mxu0
      %v7082 = vadd.f32 %v6323, %v7081
      %v7083 = vpop.f32.mrf.mxu0
      %v7084 = vadd.f32 %v6325, %v7083
      %7085 = vmatmul.bf16.gmra.mxu0 %v4499
      %v7086 = vpop.f32.mrf.mxu0
      %v7087 = vadd.f32 %v6328, %v7086
      %v7088 = vpop.f32.mrf.mxu0
      %v7089 = vadd.f32 %v6330, %v7088
      %7090 = vmatmul.bf16.gmra.mxu0 %v4502
      %v7091 = vpop.f32.mrf.mxu0
      %v7092 = vadd.f32 %v6333, %v7091
      %v7093 = vpop.f32.mrf.mxu0
      %v7094 = vadd.f32 %v6335, %v7093
      %7095 = vmatmul.bf16.gmra.mxu0 %v4505
      %v7096 = vpop.f32.mrf.mxu0
      %v7097 = vadd.f32 %v6338, %v7096
      %v7098 = vpop.f32.mrf.mxu0
      %v7099 = vadd.f32 %v6340, %v7098
      %7100 = vmatmul.bf16.gmra.mxu0 %v4508
      %v7101 = vpop.f32.mrf.mxu0
      %v7102 = vadd.f32 %v6343, %v7101
      %v7103 = vpop.f32.mrf.mxu0
      %v7104 = vadd.f32 %v6345, %v7103
      %7105 = vmatmul.bf16.gmra.mxu0 %v4511
      %v7106 = vpop.f32.mrf.mxu0
      %v7107 = vadd.f32 %v6348, %v7106
      %v7108 = vpop.f32.mrf.mxu0
      %v7109 = vadd.f32 %v6350, %v7108
      %7110 = vmatmul.bf16.gmra.mxu0 %v4514
      %v7111 = vpop.f32.mrf.mxu0
      %v7112 = vadd.f32 %v6353, %v7111
      %v7113 = vpop.f32.mrf.mxu0
      %v7114 = vadd.f32 %v6355, %v7113
      %7115 = vmatmul.bf16.gmra.mxu0 %v4517
      %v7116 = vpop.f32.mrf.mxu0
      %v7117 = vadd.f32 %v6358, %v7116
      %v7118 = vpop.f32.mrf.mxu0
      %v7119 = vadd.f32 %v6360, %v7118
      %7120 = vmatmul.bf16.gmra.mxu0 %v4520
      %v7121 = vpop.f32.mrf.mxu0
      %v7122 = vadd.f32 %v6363, %v7121
      %v7123 = vpop.f32.mrf.mxu0
      %v7124 = vadd.f32 %v6365, %v7123
      %7125 = vmatmul.bf16.gmra.mxu0 %v4523
      %v7126 = vpop.f32.mrf.mxu0
      %v7127 = vadd.f32 %v6368, %v7126
      %v7128 = vpop.f32.mrf.mxu0
      %v7129 = vadd.f32 %v6370, %v7128
      %7130 = vmatmul.bf16.gmra.mxu0 %v4526
      %v7131 = vpop.f32.mrf.mxu0
      %v7132 = vadd.f32 %v6373, %v7131
      %v7133 = vpop.f32.mrf.mxu0
      %v7134 = vadd.f32 %v6375, %v7133
      %7135 = vmatmul.bf16.gmra.mxu0 %v4529
      %v7136 = vpop.f32.mrf.mxu0
      %v7137 = vadd.f32 %v6378, %v7136
      %v7138 = vpop.f32.mrf.mxu0
      %v7139 = vadd.f32 %v6380, %v7138
      %7140 = vmatmul.bf16.gmra.mxu0 %v4532
      %v7141 = vpop.f32.mrf.mxu0
      %v7142 = vadd.f32 %v6383, %v7141
      %v7143 = vpop.f32.mrf.mxu0
      %v7144 = vadd.f32 %v6385, %v7143
      %7145 = vmatmul.bf16.gmra.mxu0 %v4535
      %v7146 = vpop.f32.mrf.mxu0
      %v7147 = vadd.f32 %v6388, %v7146
      %v7148 = vpop.f32.mrf.mxu0
      %v7149 = vadd.f32 %v6390, %v7148
      %7150 = vmatmul.bf16.gmra.mxu0 %v4538
      %v7151 = vpop.f32.mrf.mxu0
      %v7152 = vadd.f32 %v6393, %v7151
      %v7153 = vpop.f32.mrf.mxu0
      %v7154 = vadd.f32 %v6395, %v7153
      %7155 = vmatmul.bf16.gmra.mxu0 %v4541
      %v7156 = vpop.f32.mrf.mxu0
      %v7157 = vadd.f32 %v6398, %v7156
      %v7158 = vpop.f32.mrf.mxu0
      %v7159 = vadd.f32 %v6400, %v7158
      %7160 = vmatmul.bf16.gmra.mxu0 %v4544
      %v7161 = vpop.f32.mrf.mxu0
      %v7162 = vadd.f32 %v6403, %v7161
      %v7163 = vpop.f32.mrf.mxu0
      %v7164 = vadd.f32 %v6405, %v7163
      %7165 = vmatmul.bf16.gmra.mxu0 %v4547
      %v7166 = vpop.f32.mrf.mxu0
      %v7167 = vadd.f32 %v6408, %v7166
      %v7168 = vpop.f32.mrf.mxu0
      %v7169 = vadd.f32 %v6410, %v7168
      %7170 = vmatmul.bf16.gmra.mxu0 %v4550
      %v7171 = vpop.f32.mrf.mxu0
      %v7172 = vadd.f32 %v6413, %v7171
      %v7173 = vpop.f32.mrf.mxu0
      %v7174 = vadd.f32 %v6415, %v7173
      %7175 = vmatmul.bf16.gmra.mxu0 %v4553
      %v7176 = vpop.f32.mrf.mxu0
      %v7177 = vadd.f32 %v6418, %v7176
      %v7178 = vpop.f32.mrf.mxu0
      %v7179 = vadd.f32 %v6420, %v7178
      %7180 = vmatmul.bf16.gmra.mxu0 %v4556
      %v7181 = vpop.f32.mrf.mxu0
      %v7182 = vadd.f32 %v6423, %v7181
      %v7183 = vpop.f32.mrf.mxu0
      %v7184 = vadd.f32 %v6425, %v7183
      %7185 = vmatmul.bf16.gmra.mxu0 %v4559
      %v7186 = vpop.f32.mrf.mxu0
      %v7187 = vadd.f32 %v6428, %v7186
      %v7188 = vpop.f32.mrf.mxu0
      %v7189 = vadd.f32 %v6430, %v7188
      %7190 = vmatmul.bf16.gmra.mxu0 %v4562
      %v7191 = vpop.f32.mrf.mxu0
      %v7192 = vadd.f32 %v6433, %v7191
      %v7193 = vpop.f32.mrf.mxu0
      %v7194 = vadd.f32 %v6435, %v7193
      %7195 = vmatmul.bf16.gmra.mxu0 %v4565
      %v7196 = vpop.f32.mrf.mxu0
      %v7197 = vadd.f32 %v6438, %v7196
      %v7198 = vpop.f32.mrf.mxu0
      %v7199 = vadd.f32 %v6440, %v7198
      %7200 = vmatmul.bf16.gmra.mxu0 %v4568
      %v7201 = vpop.f32.mrf.mxu0
      %v7202 = vadd.f32 %v6443, %v7201
      %v7203 = vpop.f32.mrf.mxu0
      %v7204 = vadd.f32 %v6445, %v7203
      %7205 = vmatmul.bf16.gmra.mxu0 %v4571
      %v7206 = vpop.f32.mrf.mxu0
      %v7207 = vadd.f32 %v6448, %v7206
      %v7208 = vpop.f32.mrf.mxu0
      %v7209 = vadd.f32 %v6450, %v7208
      %7210 = vmatmul.bf16.gmra.mxu0 %v4574
      %v7211 = vpop.f32.mrf.mxu0
      %v7212 = vadd.f32 %v6453, %v7211
      %v7213 = vpop.f32.mrf.mxu0
      %v7214 = vadd.f32 %v6455, %v7213
      %7215 = vmatmul.bf16.gmra.mxu0 %v4577
      %v7216 = vpop.f32.mrf.mxu0
      %v7217 = vadd.f32 %v6458, %v7216
      %v7218 = vpop.f32.mrf.mxu0
      %v7219 = vadd.f32 %v6460, %v7218
      %7220 = vmatmul.bf16.gmra.mxu0 %v4580
      %v7221 = vpop.f32.mrf.mxu0
      %v7222 = vadd.f32 %v6463, %v7221
      %v7223 = vpop.f32.mrf.mxu0
      %v7224 = vadd.f32 %v6465, %v7223
      %7225 = vmatmul.bf16.gmra.mxu0 %v4583
      %v7226 = vpop.f32.mrf.mxu0
      %v7227 = vadd.f32 %v6468, %v7226
      %v7228 = vpop.f32.mrf.mxu0
      %v7229 = vadd.f32 %v6470, %v7228
      %7230 = vmatmul.bf16.gmra.mxu0 %v4586
      %v7231 = vpop.f32.mrf.mxu0
      %v7232 = vadd.f32 %v6473, %v7231
      %v7233 = vpop.f32.mrf.mxu0
      %v7234 = vadd.f32 %v6475, %v7233
      %7235 = vmatmul.bf16.gmra.mxu0 %v4589
      %v7236 = vpop.f32.mrf.mxu0
      %v7237 = vadd.f32 %v6478, %v7236
      %v7238 = vpop.f32.mrf.mxu0
      %v7239 = vadd.f32 %v6480, %v7238
      %7240 = vmatmul.bf16.gmra.mxu0 %v4592
      %v7241 = vpop.f32.mrf.mxu0
      %v7242 = vadd.f32 %v6483, %v7241
      %v7243 = vpop.f32.mrf.mxu0
      %v7244 = vadd.f32 %v6485, %v7243
      %7245 = vmatmul.bf16.gmra.mxu0 %v4595
      %v7246 = vpop.f32.mrf.mxu0
      %v7247 = vadd.f32 %v6488, %v7246
      %v7248 = vpop.f32.mrf.mxu0
      %v7249 = vadd.f32 %v6490, %v7248
      %7250 = vmatmul.bf16.gmra.mxu0 %v4598
      %v7251 = vpop.f32.mrf.mxu0
      %v7252 = vadd.f32 %v6493, %v7251
      %v7253 = vpop.f32.mrf.mxu0
      %v7254 = vadd.f32 %v6495, %v7253
      %7255 = vmatmul.bf16.gmra.mxu0 %v4601
      %v7256 = vpop.f32.mrf.mxu0
      %v7257 = vadd.f32 %v6498, %v7256
      %v7258 = vpop.f32.mrf.mxu0
      %v7259 = vadd.f32 %v6500, %v7258
      %7260 = vmatmul.bf16.gmra.mxu0 %v4604
      %v7261 = vpop.f32.mrf.mxu0
      %v7262 = vadd.f32 %v6503, %v7261
      %v7263 = vpop.f32.mrf.mxu0
      %v7264 = vadd.f32 %v6505, %v7263
      %7265 = vmatmul.bf16.gmra.mxu0 %v4607
      %v7266 = vpop.f32.mrf.mxu0
      %v7267 = vadd.f32 %v6508, %v7266
      %v7268 = vpop.f32.mrf.mxu0
      %v7269 = vadd.f32 %v6510, %v7268
      %7270 = vmatmul.bf16.gmra.mxu0 %v4610
      %v7271 = vpop.f32.mrf.mxu0
      %v7272 = vadd.f32 %v6513, %v7271
      %v7273 = vpop.f32.mrf.mxu0
      %v7274 = vadd.f32 %v6515, %v7273
      %7275 = vmatmul.bf16.gmra.mxu0 %v4613
      %v7276 = vpop.f32.mrf.mxu0
      %v7277 = vadd.f32 %v6518, %v7276
      %v7278 = vpop.f32.mrf.mxu0
      %v7279 = vadd.f32 %v6520, %v7278
      %7280 = vmatmul.bf16.gmra.mxu0 %v4616
      %v7281 = vpop.f32.mrf.mxu0
      %v7282 = vadd.f32 %v6523, %v7281
      %v7283 = vpop.f32.mrf.mxu0
      %v7284 = vadd.f32 %v6525, %v7283
      %7285 = vmatmul.bf16.gmra.mxu0 %v4619
      %v7286 = vpop.f32.mrf.mxu0
      %v7287 = vadd.f32 %v6528, %v7286
      %v7288 = vpop.f32.mrf.mxu0
      %v7289 = vadd.f32 %v6530, %v7288
      %7290 = vmatmul.bf16.gmra.mxu0 %v4622
      %v7291 = vpop.f32.mrf.mxu0
      %v7292 = vadd.f32 %v6533, %v7291
      %v7293 = vpop.f32.mrf.mxu0
      %v7294 = vadd.f32 %v6535, %v7293
      %7295 = vmatmul.bf16.gmra.mxu0 %v4625
      %v7296 = vpop.f32.mrf.mxu0
      %v7297 = vadd.f32 %v6538, %v7296
      %v7298 = vpop.f32.mrf.mxu0
      %v7299 = vadd.f32 %v6540, %v7298
      %7300 = vmatmul.bf16.gmra.mxu0 %v4628
      %v7301 = vpop.f32.mrf.mxu0
      %v7302 = vadd.f32 %v6543, %v7301
      %v7303 = vpop.f32.mrf.mxu0
      %v7304 = vadd.f32 %v6545, %v7303
      %7305 = vmatmul.bf16.gmra.mxu0 %v4631
      %v7306 = vpop.f32.mrf.mxu0
      %v7307 = vadd.f32 %v6548, %v7306
      %v7308 = vpop.f32.mrf.mxu0
      %v7309 = vadd.f32 %v6550, %v7308
      %7310 = vmatmul.bf16.gmra.mxu0 %v4634
      %v7311 = vpop.f32.mrf.mxu0
      %v7312 = vadd.f32 %v6553, %v7311
      %v7313 = vpop.f32.mrf.mxu0
      %v7314 = vadd.f32 %v6555, %v7313
      %7315 = vmatmul.bf16.gmra.mxu0 %v4637
      %v7316 = vpop.f32.mrf.mxu0
      %v7317 = vadd.f32 %v6558, %v7316
      %v7318 = vpop.f32.mrf.mxu0
      %v7319 = vadd.f32 %v6560, %v7318
      %7320 = vmatmul.bf16.gmra.mxu0 %v4640
      %v7321 = vpop.f32.mrf.mxu0
      %v7322 = vadd.f32 %v6563, %v7321
      %v7323 = vpop.f32.mrf.mxu0
      %v7324 = vadd.f32 %v6565, %v7323
      %7325 = vmatmul.bf16.gmra.mxu0 %v4643
      %v7326 = vpop.f32.mrf.mxu0
      %v7327 = vadd.f32 %v6568, %v7326
      %v7328 = vpop.f32.mrf.mxu0
      %v7329 = vadd.f32 %v6570, %v7328
      %7330 = vmatmul.bf16.gmra.mxu0 %v4646
      %v7331 = vpop.f32.mrf.mxu0
      %v7332 = vadd.f32 %v6573, %v7331
      %v7333 = vpop.f32.mrf.mxu0
      %v7334 = vadd.f32 %v6575, %v7333
      %7335 = vmatmul.bf16.gmra.mxu0 %v4649
      %v7336 = vpop.f32.mrf.mxu0
      %v7337 = vadd.f32 %v6578, %v7336
      %v7338 = vpop.f32.mrf.mxu0
      %v7339 = vadd.f32 %v6580, %v7338
      %7340 = vmatmul.bf16.gmra.mxu0 %v4652
      %v7341 = vpop.f32.mrf.mxu0
      %v7342 = vadd.f32 %v6583, %v7341
      %v7343 = vpop.f32.mrf.mxu0
      %v7344 = vadd.f32 %v6585, %v7343
      %7345 = vmatmul.bf16.gmra.mxu0 %v4655
      %v7346 = vpop.f32.mrf.mxu0
      %v7347 = vadd.f32 %v6588, %v7346
      %v7348 = vpop.f32.mrf.mxu0
      %v7349 = vadd.f32 %v6590, %v7348
      %7350 = vmatmul.bf16.gmra.mxu0 %v4658
      %v7351 = vpop.f32.mrf.mxu0
      %v7352 = vadd.f32 %v6593, %v7351
      %v7353 = vpop.f32.mrf.mxu0
      %v7354 = vadd.f32 %v6595, %v7353
      %7355 = vmatmul.bf16.gmra.mxu0 %v4661
      %v7356 = vpop.f32.mrf.mxu0
      %v7357 = vadd.f32 %v6598, %v7356
      %v7358 = vpop.f32.mrf.mxu0
      %v7359 = vadd.f32 %v6600, %v7358
      %7360 = vmatmul.bf16.gmra.mxu0 %v4664
      %v7361 = vpop.f32.mrf.mxu0
      %v7362 = vadd.f32 %v6603, %v7361
      %v7363 = vpop.f32.mrf.mxu0
      %v7364 = vadd.f32 %v6605, %v7363
      %7365 = vmatmul.bf16.gmra.mxu0 %v4667
      %v7366 = vpop.f32.mrf.mxu0
      %v7367 = vadd.f32 %v6608, %v7366
      %v7368 = vpop.f32.mrf.mxu0
      %v7369 = vadd.f32 %v6610, %v7368
      %7370 = vmatmul.bf16.gmra.mxu0 %v4670
      %v7371 = vpop.f32.mrf.mxu0
      %v7372 = vadd.f32 %v6613, %v7371
      %v7373 = vpop.f32.mrf.mxu0
      %v7374 = vadd.f32 %v6615, %v7373
      %7375 = vmatmul.bf16.gmra.mxu0 %v4673
      %v7376 = vpop.f32.mrf.mxu0
      %v7377 = vadd.f32 %v6618, %v7376
      %v7378 = vpop.f32.mrf.mxu0
      %v7379 = vadd.f32 %v6620, %v7378
      %7380 = vmatmul.bf16.gmra.mxu0 %v4676
      %v7381 = vpop.f32.mrf.mxu0
      %v7382 = vadd.f32 %v6623, %v7381
      %v7383 = vpop.f32.mrf.mxu0
      %v7384 = vadd.f32 %v6625, %v7383
      %7385 = vmatmul.bf16.gmra.mxu0 %v4679
      %v7386 = vpop.f32.mrf.mxu0
      %v7387 = vadd.f32 %v6628, %v7386
      %v7388 = vpop.f32.mrf.mxu0
      %v7389 = vadd.f32 %v6630, %v7388
      %7390 = vmatmul.bf16.gmra.mxu0 %v4682
      %v7391 = vpop.f32.mrf.mxu0
      %v7392 = vadd.f32 %v6633, %v7391
      %v7393 = vpop.f32.mrf.mxu0
      %v7394 = vadd.f32 %v6635, %v7393
      %7395 = vmatmul.bf16.gmra.mxu0 %v4685
      %v7396 = vpop.f32.mrf.mxu0
      %v7397 = vadd.f32 %v6638, %v7396
      %v7398 = vpop.f32.mrf.mxu0
      %v7399 = vadd.f32 %v6640, %v7398
      %7400 = vmatmul.bf16.gmra.mxu0 %v4688
      %v7401 = vpop.f32.mrf.mxu0
      %v7402 = vadd.f32 %v6643, %v7401
      %v7403 = vpop.f32.mrf.mxu0
      %v7404 = vadd.f32 %v6645, %v7403
      %7405 = vmatmul.bf16.gmra.mxu0 %v4691
      %v7406 = vpop.f32.mrf.mxu0
      %v7407 = vadd.f32 %v6648, %v7406
      %v7408 = vpop.f32.mrf.mxu0
      %v7409 = vadd.f32 %v6650, %v7408
      %7410 = vmatmul.bf16.gmra.mxu0 %v4694
      %v7411 = vpop.f32.mrf.mxu0
      %v7412 = vadd.f32 %v6653, %v7411
      %v7413 = vpop.f32.mrf.mxu0
      %v7414 = vadd.f32 %v6655, %v7413
      %7415 = vmatmul.bf16.gmra.mxu0 %v4697
      %v7416 = vpop.f32.mrf.mxu0
      %v7417 = vadd.f32 %v6658, %v7416
      %v7418 = vpop.f32.mrf.mxu0
      %v7419 = vadd.f32 %v6660, %v7418
      %7420 = vmatmul.bf16.gmra.mxu0 %v4700
      %v7421 = vpop.f32.mrf.mxu0
      %v7422 = vadd.f32 %v6663, %v7421
      %v7423 = vpop.f32.mrf.mxu0
      %v7424 = vadd.f32 %v6665, %v7423
      %7425 = vmatmul.bf16.gmra.mxu0 %v4703
      %v7426 = vpop.f32.mrf.mxu0
      %v7427 = vadd.f32 %v6668, %v7426
      %v7428 = vpop.f32.mrf.mxu0
      %v7429 = vadd.f32 %v6670, %v7428
      %7430 = vdwg.mxu0
      %v7431 = vpack.c.bf16 %v6682, %v6682
      %v7432 = vpack.c.bf16 %v6684, %v6684
      %v7433 = vpack.c.bf16 %v6687, %v6687
      %v7434 = vpack.c.bf16 %v6689, %v6689
      %v7435 = vpack.c.bf16 %v6692, %v6692
      %v7436 = vpack.c.bf16 %v6694, %v6694
      %v7437 = vpack.c.bf16 %v6697, %v6697
      %v7438 = vpack.c.bf16 %v6699, %v6699
      %v7439 = vpack.c.bf16 %v6702, %v6702
      %v7440 = vpack.c.bf16 %v6704, %v6704
      %v7441 = vpack.c.bf16 %v6707, %v6707
      %v7442 = vpack.c.bf16 %v6709, %v6709
      %v7443 = vpack.c.bf16 %v6712, %v6712
      %v7444 = vpack.c.bf16 %v6714, %v6714
      %v7445 = vpack.c.bf16 %v6717, %v6717
      %v7446 = vpack.c.bf16 %v6719, %v6719
      %v7447 = vpack.c.bf16 %v6722, %v6722
      %v7448 = vpack.c.bf16 %v6724, %v6724
      %v7449 = vpack.c.bf16 %v6727, %v6727
      %v7450 = vpack.c.bf16 %v6729, %v6729
      %v7451 = vpack.c.bf16 %v6732, %v6732
      %v7452 = vpack.c.bf16 %v6734, %v6734
      %v7453 = vpack.c.bf16 %v6737, %v6737
      %v7454 = vpack.c.bf16 %v6739, %v6739
      %v7455 = vpack.c.bf16 %v6742, %v6742
      %v7456 = vpack.c.bf16 %v6744, %v6744
      %v7457 = vpack.c.bf16 %v6747, %v6747
      %v7458 = vpack.c.bf16 %v6749, %v6749
      %v7459 = vpack.c.bf16 %v6752, %v6752
      %v7460 = vpack.c.bf16 %v6754, %v6754
      %v7461 = vpack.c.bf16 %v6757, %v6757
      %v7462 = vpack.c.bf16 %v6759, %v6759
      %v7463 = vpack.c.bf16 %v6762, %v6762
      %v7464 = vpack.c.bf16 %v6764, %v6764
      %v7465 = vpack.c.bf16 %v6767, %v6767
      %v7466 = vpack.c.bf16 %v6769, %v6769
      %v7467 = vpack.c.bf16 %v6772, %v6772
      %v7468 = vpack.c.bf16 %v6774, %v6774
      %v7469 = vpack.c.bf16 %v6777, %v6777
      %v7470 = vpack.c.bf16 %v6779, %v6779
      %v7471 = vpack.c.bf16 %v6782, %v6782
      %v7472 = vpack.c.bf16 %v6784, %v6784
      %v7473 = vpack.c.bf16 %v6787, %v6787
      %v7474 = vpack.c.bf16 %v6789, %v6789
      %v7475 = vpack.c.bf16 %v6792, %v6792
      %v7476 = vpack.c.bf16 %v6794, %v6794
      %v7477 = vpack.c.bf16 %v6797, %v6797
      %v7478 = vpack.c.bf16 %v6799, %v6799
      %v7479 = vpack.c.bf16 %v6802, %v6802
      %v7480 = vpack.c.bf16 %v6804, %v6804
      %v7481 = vpack.c.bf16 %v6807, %v6807
      %v7482 = vpack.c.bf16 %v6809, %v6809
      %v7483 = vpack.c.bf16 %v6812, %v6812
      %v7484 = vpack.c.bf16 %v6814, %v6814
      %v7485 = vpack.c.bf16 %v6817, %v6817
      %v7486 = vpack.c.bf16 %v6819, %v6819
      %v7487 = vpack.c.bf16 %v6822, %v6822
      %v7488 = vpack.c.bf16 %v6824, %v6824
      %v7489 = vpack.c.bf16 %v6827, %v6827
      %v7490 = vpack.c.bf16 %v6829, %v6829
      %v7491 = vpack.c.bf16 %v6832, %v6832
      %v7492 = vpack.c.bf16 %v6834, %v6834
      %v7493 = vpack.c.bf16 %v6837, %v6837
      %v7494 = vpack.c.bf16 %v6839, %v6839
      %v7495 = vpack.c.bf16 %v6842, %v6842
      %v7496 = vpack.c.bf16 %v6844, %v6844
      %v7497 = vpack.c.bf16 %v6847, %v6847
      %v7498 = vpack.c.bf16 %v6849, %v6849
      %v7499 = vpack.c.bf16 %v6852, %v6852
      %v7500 = vpack.c.bf16 %v6854, %v6854
      %v7501 = vpack.c.bf16 %v6857, %v6857
      %v7502 = vpack.c.bf16 %v6859, %v6859
      %v7503 = vpack.c.bf16 %v6862, %v6862
      %v7504 = vpack.c.bf16 %v6864, %v6864
      %v7505 = vpack.c.bf16 %v6867, %v6867
      %v7506 = vpack.c.bf16 %v6869, %v6869
      %v7507 = vpack.c.bf16 %v6872, %v6872
      %v7508 = vpack.c.bf16 %v6874, %v6874
      %v7509 = vpack.c.bf16 %v6877, %v6877
      %v7510 = vpack.c.bf16 %v6879, %v6879
      %v7511 = vpack.c.bf16 %v6882, %v6882
      %v7512 = vpack.c.bf16 %v6884, %v6884
      %v7513 = vpack.c.bf16 %v6887, %v6887
      %v7514 = vpack.c.bf16 %v6889, %v6889
      %v7515 = vpack.c.bf16 %v6892, %v6892
      %v7516 = vpack.c.bf16 %v6894, %v6894
      %v7517 = vpack.c.bf16 %v6897, %v6897
      %v7518 = vpack.c.bf16 %v6899, %v6899
      %v7519 = vpack.c.bf16 %v6902, %v6902
      %v7520 = vpack.c.bf16 %v6904, %v6904
      %v7521 = vpack.c.bf16 %v6907, %v6907
      %v7522 = vpack.c.bf16 %v6909, %v6909
      %v7523 = vpack.c.bf16 %v6912, %v6912
      %v7524 = vpack.c.bf16 %v6914, %v6914
      %v7525 = vpack.c.bf16 %v6917, %v6917
      %v7526 = vpack.c.bf16 %v6919, %v6919
      %v7527 = vpack.c.bf16 %v6922, %v6922
      %v7528 = vpack.c.bf16 %v6924, %v6924
      %v7529 = vpack.c.bf16 %v6927, %v6927
      %v7530 = vpack.c.bf16 %v6929, %v6929
      %v7531 = vpack.c.bf16 %v6932, %v6932
      %v7532 = vpack.c.bf16 %v6934, %v6934
      %v7533 = vpack.c.bf16 %v6937, %v6937
      %v7534 = vpack.c.bf16 %v6939, %v6939
      %v7535 = vpack.c.bf16 %v6942, %v6942
      %v7536 = vpack.c.bf16 %v6944, %v6944
      %v7537 = vpack.c.bf16 %v6947, %v6947
      %v7538 = vpack.c.bf16 %v6949, %v6949
      %v7539 = vpack.c.bf16 %v6952, %v6952
      %v7540 = vpack.c.bf16 %v6954, %v6954
      %v7541 = vpack.c.bf16 %v6957, %v6957
      %v7542 = vpack.c.bf16 %v6959, %v6959
      %v7543 = vpack.c.bf16 %v6962, %v6962
      %v7544 = vpack.c.bf16 %v6964, %v6964
      %v7545 = vpack.c.bf16 %v6967, %v6967
      %v7546 = vpack.c.bf16 %v6969, %v6969
      %v7547 = vpack.c.bf16 %v6972, %v6972
      %v7548 = vpack.c.bf16 %v6974, %v6974
      %v7549 = vpack.c.bf16 %v6977, %v6977
      %v7550 = vpack.c.bf16 %v6979, %v6979
      %v7551 = vpack.c.bf16 %v6982, %v6982
      %v7552 = vpack.c.bf16 %v6984, %v6984
      %v7553 = vpack.c.bf16 %v6987, %v6987
      %v7554 = vpack.c.bf16 %v6989, %v6989
      %v7555 = vpack.c.bf16 %v6992, %v6992
      %v7556 = vpack.c.bf16 %v6994, %v6994
      %v7557 = vpack.c.bf16 %v6997, %v6997
      %v7558 = vpack.c.bf16 %v6999, %v6999
      %v7559 = vpack.c.bf16 %v7002, %v7002
      %v7560 = vpack.c.bf16 %v7004, %v7004
      %v7561 = vpack.c.bf16 %v7007, %v7007
      %v7562 = vpack.c.bf16 %v7009, %v7009
      %v7563 = vpack.c.bf16 %v7012, %v7012
      %v7564 = vpack.c.bf16 %v7014, %v7014
      %v7565 = vpack.c.bf16 %v7017, %v7017
      %v7566 = vpack.c.bf16 %v7019, %v7019
      %v7567 = vpack.c.bf16 %v7022, %v7022
      %v7568 = vpack.c.bf16 %v7024, %v7024
      %v7569 = vpack.c.bf16 %v7027, %v7027
      %v7570 = vpack.c.bf16 %v7029, %v7029
      %v7571 = vpack.c.bf16 %v7032, %v7032
      %v7572 = vpack.c.bf16 %v7034, %v7034
      %v7573 = vpack.c.bf16 %v7037, %v7037
      %v7574 = vpack.c.bf16 %v7039, %v7039
      %v7575 = vpack.c.bf16 %v7042, %v7042
      %v7576 = vpack.c.bf16 %v7044, %v7044
      %v7577 = vpack.c.bf16 %v7047, %v7047
      %v7578 = vpack.c.bf16 %v7049, %v7049
      %v7579 = vpack.c.bf16 %v7052, %v7052
      %v7580 = vpack.c.bf16 %v7054, %v7054
      %v7581 = vpack.c.bf16 %v7057, %v7057
      %v7582 = vpack.c.bf16 %v7059, %v7059
      %v7583 = vpack.c.bf16 %v7062, %v7062
      %v7584 = vpack.c.bf16 %v7064, %v7064
      %v7585 = vpack.c.bf16 %v7067, %v7067
      %v7586 = vpack.c.bf16 %v7069, %v7069
      %v7587 = vpack.c.bf16 %v7072, %v7072
      %v7588 = vpack.c.bf16 %v7074, %v7074
      %v7589 = vpack.c.bf16 %v7077, %v7077
      %v7590 = vpack.c.bf16 %v7079, %v7079
      %v7591 = vpack.c.bf16 %v7082, %v7082
      %v7592 = vpack.c.bf16 %v7084, %v7084
      %v7593 = vpack.c.bf16 %v7087, %v7087
      %v7594 = vpack.c.bf16 %v7089, %v7089
      %v7595 = vpack.c.bf16 %v7092, %v7092
      %v7596 = vpack.c.bf16 %v7094, %v7094
      %v7597 = vpack.c.bf16 %v7097, %v7097
      %v7598 = vpack.c.bf16 %v7099, %v7099
      %v7599 = vpack.c.bf16 %v7102, %v7102
      %v7600 = vpack.c.bf16 %v7104, %v7104
      %v7601 = vpack.c.bf16 %v7107, %v7107
      %v7602 = vpack.c.bf16 %v7109, %v7109
      %v7603 = vpack.c.bf16 %v7112, %v7112
      %v7604 = vpack.c.bf16 %v7114, %v7114
      %v7605 = vpack.c.bf16 %v7117, %v7117
      %v7606 = vpack.c.bf16 %v7119, %v7119
      %v7607 = vpack.c.bf16 %v7122, %v7122
      %v7608 = vpack.c.bf16 %v7124, %v7124
      %v7609 = vpack.c.bf16 %v7127, %v7127
      %v7610 = vpack.c.bf16 %v7129, %v7129
      %v7611 = vpack.c.bf16 %v7132, %v7132
      %v7612 = vpack.c.bf16 %v7134, %v7134
      %v7613 = vpack.c.bf16 %v7137, %v7137
      %v7614 = vpack.c.bf16 %v7139, %v7139
      %v7615 = vpack.c.bf16 %v7142, %v7142
      %v7616 = vpack.c.bf16 %v7144, %v7144
      %v7617 = vpack.c.bf16 %v7147, %v7147
      %v7618 = vpack.c.bf16 %v7149, %v7149
      %v7619 = vpack.c.bf16 %v7152, %v7152
      %v7620 = vpack.c.bf16 %v7154, %v7154
      %v7621 = vpack.c.bf16 %v7157, %v7157
      %v7622 = vpack.c.bf16 %v7159, %v7159
      %v7623 = vpack.c.bf16 %v7162, %v7162
      %v7624 = vpack.c.bf16 %v7164, %v7164
      %v7625 = vpack.c.bf16 %v7167, %v7167
      %v7626 = vpack.c.bf16 %v7169, %v7169
      %v7627 = vpack.c.bf16 %v7172, %v7172
      %v7628 = vpack.c.bf16 %v7174, %v7174
      %v7629 = vpack.c.bf16 %v7177, %v7177
      %v7630 = vpack.c.bf16 %v7179, %v7179
      %v7631 = vpack.c.bf16 %v7182, %v7182
      %v7632 = vpack.c.bf16 %v7184, %v7184
      %v7633 = vpack.c.bf16 %v7187, %v7187
      %v7634 = vpack.c.bf16 %v7189, %v7189
      %v7635 = vpack.c.bf16 %v7192, %v7192
      %v7636 = vpack.c.bf16 %v7194, %v7194
      %v7637 = vpack.c.bf16 %v7197, %v7197
      %v7638 = vpack.c.bf16 %v7199, %v7199
      %v7639 = vpack.c.bf16 %v7202, %v7202
      %v7640 = vpack.c.bf16 %v7204, %v7204
      %v7641 = vpack.c.bf16 %v7207, %v7207
      %v7642 = vpack.c.bf16 %v7209, %v7209
      %v7643 = vpack.c.bf16 %v7212, %v7212
      %v7644 = vpack.c.bf16 %v7214, %v7214
      %v7645 = vpack.c.bf16 %v7217, %v7217
      %v7646 = vpack.c.bf16 %v7219, %v7219
      %v7647 = vpack.c.bf16 %v7222, %v7222
      %v7648 = vpack.c.bf16 %v7224, %v7224
      %v7649 = vpack.c.bf16 %v7227, %v7227
      %v7650 = vpack.c.bf16 %v7229, %v7229
      %v7651 = vpack.c.bf16 %v7232, %v7232
      %v7652 = vpack.c.bf16 %v7234, %v7234
      %v7653 = vpack.c.bf16 %v7237, %v7237
      %v7654 = vpack.c.bf16 %v7239, %v7239
      %v7655 = vpack.c.bf16 %v7242, %v7242
      %v7656 = vpack.c.bf16 %v7244, %v7244
      %v7657 = vpack.c.bf16 %v7247, %v7247
      %v7658 = vpack.c.bf16 %v7249, %v7249
      %v7659 = vpack.c.bf16 %v7252, %v7252
      %v7660 = vpack.c.bf16 %v7254, %v7254
      %v7661 = vpack.c.bf16 %v7257, %v7257
      %v7662 = vpack.c.bf16 %v7259, %v7259
      %v7663 = vpack.c.bf16 %v7262, %v7262
      %v7664 = vpack.c.bf16 %v7264, %v7264
      %v7665 = vpack.c.bf16 %v7267, %v7267
      %v7666 = vpack.c.bf16 %v7269, %v7269
      %v7667 = vpack.c.bf16 %v7272, %v7272
      %v7668 = vpack.c.bf16 %v7274, %v7274
      %v7669 = vpack.c.bf16 %v7277, %v7277
      %v7670 = vpack.c.bf16 %v7279, %v7279
      %v7671 = vpack.c.bf16 %v7282, %v7282
      %v7672 = vpack.c.bf16 %v7284, %v7284
      %v7673 = vpack.c.bf16 %v7287, %v7287
      %v7674 = vpack.c.bf16 %v7289, %v7289
      %v7675 = vpack.c.bf16 %v7292, %v7292
      %v7676 = vpack.c.bf16 %v7294, %v7294
      %v7677 = vpack.c.bf16 %v7297, %v7297
      %v7678 = vpack.c.bf16 %v7299, %v7299
      %v7679 = vpack.c.bf16 %v7302, %v7302
      %v7680 = vpack.c.bf16 %v7304, %v7304
      %v7681 = vpack.c.bf16 %v7307, %v7307
      %v7682 = vpack.c.bf16 %v7309, %v7309
      %v7683 = vpack.c.bf16 %v7312, %v7312
      %v7684 = vpack.c.bf16 %v7314, %v7314
      %v7685 = vpack.c.bf16 %v7317, %v7317
      %v7686 = vpack.c.bf16 %v7319, %v7319
      %v7687 = vpack.c.bf16 %v7322, %v7322
      %v7688 = vpack.c.bf16 %v7324, %v7324
      %v7689 = vpack.c.bf16 %v7327, %v7327
      %v7690 = vpack.c.bf16 %v7329, %v7329
      %v7691 = vpack.c.bf16 %v7332, %v7332
      %v7692 = vpack.c.bf16 %v7334, %v7334
      %v7693 = vpack.c.bf16 %v7337, %v7337
      %v7694 = vpack.c.bf16 %v7339, %v7339
      %v7695 = vpack.c.bf16 %v7342, %v7342
      %v7696 = vpack.c.bf16 %v7344, %v7344
      %v7697 = vpack.c.bf16 %v7347, %v7347
      %v7698 = vpack.c.bf16 %v7349, %v7349
      %v7699 = vpack.c.bf16 %v7352, %v7352
      %v7700 = vpack.c.bf16 %v7354, %v7354
      %v7701 = vpack.c.bf16 %v7357, %v7357
      %v7702 = vpack.c.bf16 %v7359, %v7359
      %v7703 = vpack.c.bf16 %v7362, %v7362
      %v7704 = vpack.c.bf16 %v7364, %v7364
      %v7705 = vpack.c.bf16 %v7367, %v7367
      %v7706 = vpack.c.bf16 %v7369, %v7369
      %v7707 = vpack.c.bf16 %v7372, %v7372
      %v7708 = vpack.c.bf16 %v7374, %v7374
      %v7709 = vpack.c.bf16 %v7377, %v7377
      %v7710 = vpack.c.bf16 %v7379, %v7379
      %v7711 = vpack.c.bf16 %v7382, %v7382
      %v7712 = vpack.c.bf16 %v7384, %v7384
      %v7713 = vpack.c.bf16 %v7387, %v7387
      %v7714 = vpack.c.bf16 %v7389, %v7389
      %v7715 = vpack.c.bf16 %v7392, %v7392
      %v7716 = vpack.c.bf16 %v7394, %v7394
      %v7717 = vpack.c.bf16 %v7397, %v7397
      %v7718 = vpack.c.bf16 %v7399, %v7399
      %v7719 = vpack.c.bf16 %v7402, %v7402
      %v7720 = vpack.c.bf16 %v7404, %v7404
      %v7721 = vpack.c.bf16 %v7407, %v7407
      %v7722 = vpack.c.bf16 %v7409, %v7409
      %v7723 = vpack.c.bf16 %v7412, %v7412
      %v7724 = vpack.c.bf16 %v7414, %v7414
      %v7725 = vpack.c.bf16 %v7417, %v7417
      %v7726 = vpack.c.bf16 %v7419, %v7419
      %v7727 = vpack.c.bf16 %v7422, %v7422
      %v7728 = vpack.c.bf16 %v7424, %v7424
      %v7729 = vpack.c.bf16 %v7427, %v7427
      %v7730 = vpack.c.bf16 %v7429, %v7429
      %v7731 = vld [vmem:[%s6] sm:$0xf]
      %v7732 = vld [vmem:[%s6 + $0x4] sm:$0xf]
      %v7733 = vld [vmem:[%s6 + $0x8] sm:$0xf]
      %v7734 = vld [vmem:[%s6 + $0xc] sm:$0xf]
      %v7735 = vld [vmem:[%s6 + $0x10] sm:$0xf]
      %v7736 = vld [vmem:[%s6 + $0x14] sm:$0xf]
      %v7737 = vld [vmem:[%s6 + $0x18] sm:$0xf]
      %v7738 = vld [vmem:[%s6 + $0x1c] sm:$0xf]
      %v7751 = vunpack.c.l.b16 %v7443
      %v7752 = vunpack.c.l.b16 %v7444
      %v7753 = vunpack.c.l.b16 %v7445
      %v7754 = vunpack.c.l.b16 %v7446
      %v7755 = vunpack.c.l.b16 %v7447
      %v7756 = vunpack.c.l.b16 %v7448
      %v7757 = vunpack.c.l.b16 %v7449
      %v7758 = vunpack.c.l.b16 %v7450
      %v7759 = vunpack.c.l.b16 %v7451
      %v7760 = vunpack.c.l.b16 %v7452
      %v7761 = vunpack.c.l.b16 %v7453
      %v7762 = vunpack.c.l.b16 %v7454
      %v7763 = vpack.c.b16 %v7752, %v7751
      %v7764 = vpack.c.b16 %v7754, %v7753
      %v7765 = vpack.c.b16 %v7756, %v7755
      %v7766 = vpack.c.b16 %v7758, %v7757
      %v7767 = vpack.c.b16 %v7760, %v7759
      %v7768 = vpack.c.b16 %v7762, %v7761
      %v7773 = vunpack.c.l.b16 %v7735
      %v7774 = vunpack.c.l.b16 %v7736
      %v7775 = vunpack.c.l.b16 %v7737
      %v7776 = vunpack.c.l.b16 %v7738
      %v7777 = vpack.c.b16 %v7774, %v7773
      %v7778 = vpack.c.b16 %v7776, %v7775
      %vm7781 = vcmask 261120
      %v7783 = vsel %vm7781, %v7763, 0
      %v7786 = vsel %vm7781, %v7764, 0
      %v7789 = vsel %vm7781, %v7765, 0
      %v7792 = vsel %vm7781, %v7766, 0
      %v7795 = vsel %vm7781, %v7767, 0
      %v7798 = vsel %vm7781, %v7768, 0
      %7800 = vmatpush.bf16.msra.mxu0 0
      %7801 = vmatpush.bf16.msra.mxu0 0
      %7802 = vmatpush.bf16.msra.mxu0 0
      %7803 = vmatpush.bf16.msra.mxu0 0
      %7804 = vmatpush.bf16.msra.mxu0 0
      %7805 = vmatpush.bf16.msra.mxu0 0
      %7806 = vmatpush.bf16.msra.mxu0 %v7778
      %7807 = vmatpush.bf16.msra.mxu0 %v7777
      %7808 = vmatmul.bf16.gmra.mxu0 %v7783
      %v7809 = vpop.f32.mrf.mxu0
      %v7810 = vadd.f32 0.0, %v7809
      %v7811 = vpop.f32.mrf.mxu0
      %v7812 = vadd.f32 0.0, %v7811
      %7813 = vmatmul.bf16.gmra.mxu0 %v7786
      %v7814 = vpop.f32.mrf.mxu0
      %v7815 = vadd.f32 0.0, %v7814
      %v7816 = vpop.f32.mrf.mxu0
      %v7817 = vadd.f32 0.0, %v7816
      %7818 = vmatmul.bf16.gmra.mxu0 %v7789
      %v7819 = vpop.f32.mrf.mxu0
      %v7820 = vadd.f32 0.0, %v7819
      %v7821 = vpop.f32.mrf.mxu0
      %v7822 = vadd.f32 0.0, %v7821
      %7823 = vmatmul.bf16.gmra.mxu0 %v7792
      %v7824 = vpop.f32.mrf.mxu0
      %v7825 = vadd.f32 0.0, %v7824
      %v7826 = vpop.f32.mrf.mxu0
      %v7827 = vadd.f32 0.0, %v7826
      %7828 = vmatmul.bf16.gmra.mxu0 %v7795
      %v7829 = vpop.f32.mrf.mxu0
      %v7830 = vadd.f32 0.0, %v7829
      %v7831 = vpop.f32.mrf.mxu0
      %v7832 = vadd.f32 0.0, %v7831
      %7833 = vmatmul.bf16.gmra.mxu0 %v7798
      %v7834 = vpop.f32.mrf.mxu0
      %v7835 = vadd.f32 0.0, %v7834
      %v7836 = vpop.f32.mrf.mxu0
      %v7837 = vadd.f32 0.0, %v7836
      %7838 = vdwg.mxu0
      %v7851 = vunpack.c.l.b16 %v7431
      %v7852 = vunpack.c.l.b16 %v7432
      %v7853 = vunpack.c.l.b16 %v7433
      %v7854 = vunpack.c.l.b16 %v7434
      %v7855 = vunpack.c.l.b16 %v7435
      %v7856 = vunpack.c.l.b16 %v7436
      %v7857 = vunpack.c.l.b16 %v7437
      %v7858 = vunpack.c.l.b16 %v7438
      %v7859 = vunpack.c.l.b16 %v7439
      %v7860 = vunpack.c.l.b16 %v7440
      %v7861 = vunpack.c.l.b16 %v7441
      %v7862 = vunpack.c.l.b16 %v7442
      %v7863 = vpack.c.b16 %v7852, %v7851
      %v7864 = vpack.c.b16 %v7854, %v7853
      %v7865 = vpack.c.b16 %v7856, %v7855
      %v7866 = vpack.c.b16 %v7858, %v7857
      %v7867 = vpack.c.b16 %v7860, %v7859
      %v7868 = vpack.c.b16 %v7862, %v7861
      %v7873 = vunpack.c.l.b16 %v7731
      %v7874 = vunpack.c.l.b16 %v7732
      %v7875 = vunpack.c.l.b16 %v7733
      %v7876 = vunpack.c.l.b16 %v7734
      %v7877 = vpack.c.b16 %v7874, %v7873
      %v7878 = vpack.c.b16 %v7876, %v7875
      %v7882 = vsel %vm7781, %v7863, 0
      %v7885 = vsel %vm7781, %v7864, 0
      %v7888 = vsel %vm7781, %v7865, 0
      %v7891 = vsel %vm7781, %v7866, 0
      %v7894 = vsel %vm7781, %v7867, 0
      %v7897 = vsel %vm7781, %v7868, 0
      %7899 = vmatpush.bf16.msra.mxu0 0
      %7900 = vmatpush.bf16.msra.mxu0 0
      %7901 = vmatpush.bf16.msra.mxu0 0
      %7902 = vmatpush.bf16.msra.mxu0 0
      %7903 = vmatpush.bf16.msra.mxu0 0
      %7904 = vmatpush.bf16.msra.mxu0 0
      %7905 = vmatpush.bf16.msra.mxu0 %v7878
      %7906 = vmatpush.bf16.msra.mxu0 %v7877
      %7907 = vmatmul.bf16.gmra.mxu0 %v7882
      %v7908 = vpop.f32.mrf.mxu0
      %v7909 = vadd.f32 %v7810, %v7908
      %v7910 = vpop.f32.mrf.mxu0
      %v7911 = vadd.f32 %v7812, %v7910
      %7912 = vmatmul.bf16.gmra.mxu0 %v7885
      %v7913 = vpop.f32.mrf.mxu0
      %v7914 = vadd.f32 %v7815, %v7913
      %v7915 = vpop.f32.mrf.mxu0
      %v7916 = vadd.f32 %v7817, %v7915
      %7917 = vmatmul.bf16.gmra.mxu0 %v7888
      %v7918 = vpop.f32.mrf.mxu0
      %v7919 = vadd.f32 %v7820, %v7918
      %v7920 = vpop.f32.mrf.mxu0
      %v7921 = vadd.f32 %v7822, %v7920
      %7922 = vmatmul.bf16.gmra.mxu0 %v7891
      %v7923 = vpop.f32.mrf.mxu0
      %v7924 = vadd.f32 %v7825, %v7923
      %v7925 = vpop.f32.mrf.mxu0
      %v7926 = vadd.f32 %v7827, %v7925
      %7927 = vmatmul.bf16.gmra.mxu0 %v7894
      %v7928 = vpop.f32.mrf.mxu0
      %v7929 = vadd.f32 %v7830, %v7928
      %v7930 = vpop.f32.mrf.mxu0
      %v7931 = vadd.f32 %v7832, %v7930
      %7932 = vmatmul.bf16.gmra.mxu0 %v7897
      %v7933 = vpop.f32.mrf.mxu0
      %v7934 = vadd.f32 %v7835, %v7933
      %v7935 = vpop.f32.mrf.mxu0
      %v7936 = vadd.f32 %v7837, %v7935
      %7937 = vdwg.mxu0
      %v7938 = vld [vmem:[%s6 + $0x20] sm:$0xf]
      %v7939 = vld [vmem:[%s6 + $0x24] sm:$0xf]
      %v7940 = vld [vmem:[%s6 + $0x28] sm:$0xf]
      %v7941 = vld [vmem:[%s6 + $0x2c] sm:$0xf]
      %v7954 = vunpack.c.l.b16 %v7455
      %v7955 = vunpack.c.l.b16 %v7456
      %v7956 = vunpack.c.l.b16 %v7457
      %v7957 = vunpack.c.l.b16 %v7458
      %v7958 = vunpack.c.l.b16 %v7459
      %v7959 = vunpack.c.l.b16 %v7460
      %v7960 = vunpack.c.l.b16 %v7461
      %v7961 = vunpack.c.l.b16 %v7462
      %v7962 = vunpack.c.l.b16 %v7463
      %v7963 = vunpack.c.l.b16 %v7464
      %v7964 = vunpack.c.l.b16 %v7465
      %v7965 = vunpack.c.l.b16 %v7466
      %v7966 = vpack.c.b16 %v7955, %v7954
      %v7967 = vpack.c.b16 %v7957, %v7956
      %v7968 = vpack.c.b16 %v7959, %v7958
      %v7969 = vpack.c.b16 %v7961, %v7960
      %v7970 = vpack.c.b16 %v7963, %v7962
      %v7971 = vpack.c.b16 %v7965, %v7964
      %v7976 = vunpack.c.l.b16 %v7938
      %v7977 = vunpack.c.l.b16 %v7939
      %v7978 = vunpack.c.l.b16 %v7940
      %v7979 = vunpack.c.l.b16 %v7941
      %v7980 = vpack.c.b16 %v7977, %v7976
      %v7981 = vpack.c.b16 %v7979, %v7978
      %v7985 = vsel %vm7781, %v7966, 0
      %v7988 = vsel %vm7781, %v7967, 0
      %v7991 = vsel %vm7781, %v7968, 0
      %v7994 = vsel %vm7781, %v7969, 0
      %v7997 = vsel %vm7781, %v7970, 0
      %v8000 = vsel %vm7781, %v7971, 0
      %8002 = vmatpush.bf16.msra.mxu0 0
      %8003 = vmatpush.bf16.msra.mxu0 0
      %8004 = vmatpush.bf16.msra.mxu0 0
      %8005 = vmatpush.bf16.msra.mxu0 0
      %8006 = vmatpush.bf16.msra.mxu0 0
      %8007 = vmatpush.bf16.msra.mxu0 0
      %8008 = vmatpush.bf16.msra.mxu0 %v7981
      %8009 = vmatpush.bf16.msra.mxu0 %v7980
      %8010 = vmatmul.bf16.gmra.mxu0 %v7985
      %v8011 = vpop.f32.mrf.mxu0
      %v8012 = vadd.f32 0.0, %v8011
      %v8013 = vpop.f32.mrf.mxu0
      %v8014 = vadd.f32 0.0, %v8013
      %8015 = vmatmul.bf16.gmra.mxu0 %v7988
      %v8016 = vpop.f32.mrf.mxu0
      %v8017 = vadd.f32 0.0, %v8016
      %v8018 = vpop.f32.mrf.mxu0
      %v8019 = vadd.f32 0.0, %v8018
      %8020 = vmatmul.bf16.gmra.mxu0 %v7991
      %v8021 = vpop.f32.mrf.mxu0
      %v8022 = vadd.f32 0.0, %v8021
      %v8023 = vpop.f32.mrf.mxu0
      %v8024 = vadd.f32 0.0, %v8023
      %8025 = vmatmul.bf16.gmra.mxu0 %v7994
      %v8026 = vpop.f32.mrf.mxu0
      %v8027 = vadd.f32 0.0, %v8026
      %v8028 = vpop.f32.mrf.mxu0
      %v8029 = vadd.f32 0.0, %v8028
      %8030 = vmatmul.bf16.gmra.mxu0 %v7997
      %v8031 = vpop.f32.mrf.mxu0
      %v8032 = vadd.f32 0.0, %v8031
      %v8033 = vpop.f32.mrf.mxu0
      %v8034 = vadd.f32 0.0, %v8033
      %8035 = vmatmul.bf16.gmra.mxu0 %v8000
      %v8036 = vpop.f32.mrf.mxu0
      %v8037 = vadd.f32 0.0, %v8036
      %v8038 = vpop.f32.mrf.mxu0
      %v8039 = vadd.f32 0.0, %v8038
      %8040 = vdwg.mxu0
      %v8041 = vadd.f32 %v7909, %v8012
      %v8042 = vadd.f32 %v7911, %v8014
      %v8043 = vadd.f32 %v7914, %v8017
      %v8044 = vadd.f32 %v7916, %v8019
      %v8045 = vadd.f32 %v7919, %v8022
      %v8046 = vadd.f32 %v7921, %v8024
      %v8047 = vadd.f32 %v7924, %v8027
      %v8048 = vadd.f32 %v7926, %v8029
      %v8049 = vadd.f32 %v7929, %v8032
      %v8050 = vadd.f32 %v7931, %v8034
      %v8051 = vadd.f32 %v7934, %v8037
      %v8052 = vadd.f32 %v7936, %v8039
      %v8053 = vld [vmem:[%s6 + $0x30] sm:$0xf]
      %v8054 = vld [vmem:[%s6 + $0x34] sm:$0xf]
      %v8055 = vld [vmem:[%s6 + $0x38] sm:$0xf]
      %v8056 = vld [vmem:[%s6 + $0x3c] sm:$0xf]
      %v8069 = vunpack.c.l.b16 %v7467
      %v8070 = vunpack.c.l.b16 %v7468
      %v8071 = vunpack.c.l.b16 %v7469
      %v8072 = vunpack.c.l.b16 %v7470
      %v8073 = vunpack.c.l.b16 %v7471
      %v8074 = vunpack.c.l.b16 %v7472
      %v8075 = vunpack.c.l.b16 %v7473
      %v8076 = vunpack.c.l.b16 %v7474
      %v8077 = vunpack.c.l.b16 %v7475
      %v8078 = vunpack.c.l.b16 %v7476
      %v8079 = vunpack.c.l.b16 %v7477
      %v8080 = vunpack.c.l.b16 %v7478
      %v8081 = vpack.c.b16 %v8070, %v8069
      %v8082 = vpack.c.b16 %v8072, %v8071
      %v8083 = vpack.c.b16 %v8074, %v8073
      %v8084 = vpack.c.b16 %v8076, %v8075
      %v8085 = vpack.c.b16 %v8078, %v8077
      %v8086 = vpack.c.b16 %v8080, %v8079
      %v8091 = vunpack.c.l.b16 %v8053
      %v8092 = vunpack.c.l.b16 %v8054
      %v8093 = vunpack.c.l.b16 %v8055
      %v8094 = vunpack.c.l.b16 %v8056
      %v8095 = vpack.c.b16 %v8092, %v8091
      %v8096 = vpack.c.b16 %v8094, %v8093
      %v8100 = vsel %vm7781, %v8081, 0
      %v8103 = vsel %vm7781, %v8082, 0
      %v8106 = vsel %vm7781, %v8083, 0
      %v8109 = vsel %vm7781, %v8084, 0
      %v8112 = vsel %vm7781, %v8085, 0
      %v8115 = vsel %vm7781, %v8086, 0
      %8117 = vmatpush.bf16.msra.mxu0 0
      %8118 = vmatpush.bf16.msra.mxu0 0
      %8119 = vmatpush.bf16.msra.mxu0 0
      %8120 = vmatpush.bf16.msra.mxu0 0
      %8121 = vmatpush.bf16.msra.mxu0 0
      %8122 = vmatpush.bf16.msra.mxu0 0
      %8123 = vmatpush.bf16.msra.mxu0 %v8096
      %8124 = vmatpush.bf16.msra.mxu0 %v8095
      %8125 = vmatmul.bf16.gmra.mxu0 %v8100
      %v8126 = vpop.f32.mrf.mxu0
      %v8127 = vadd.f32 0.0, %v8126
      %v8128 = vpop.f32.mrf.mxu0
      %v8129 = vadd.f32 0.0, %v8128
      %8130 = vmatmul.bf16.gmra.mxu0 %v8103
      %v8131 = vpop.f32.mrf.mxu0
      %v8132 = vadd.f32 0.0, %v8131
      %v8133 = vpop.f32.mrf.mxu0
      %v8134 = vadd.f32 0.0, %v8133
      %8135 = vmatmul.bf16.gmra.mxu0 %v8106
      %v8136 = vpop.f32.mrf.mxu0
      %v8137 = vadd.f32 0.0, %v8136
      %v8138 = vpop.f32.mrf.mxu0
      %v8139 = vadd.f32 0.0, %v8138
      %8140 = vmatmul.bf16.gmra.mxu0 %v8109
      %v8141 = vpop.f32.mrf.mxu0
      %v8142 = vadd.f32 0.0, %v8141
      %v8143 = vpop.f32.mrf.mxu0
      %v8144 = vadd.f32 0.0, %v8143
      %8145 = vmatmul.bf16.gmra.mxu0 %v8112
      %v8146 = vpop.f32.mrf.mxu0
      %v8147 = vadd.f32 0.0, %v8146
      %v8148 = vpop.f32.mrf.mxu0
      %v8149 = vadd.f32 0.0, %v8148
      %8150 = vmatmul.bf16.gmra.mxu0 %v8115
      %v8151 = vpop.f32.mrf.mxu0
      %v8152 = vadd.f32 0.0, %v8151
      %v8153 = vpop.f32.mrf.mxu0
      %v8154 = vadd.f32 0.0, %v8153
      %8155 = vdwg.mxu0
      %v8156 = vadd.f32 %v8041, %v8127
      %v8157 = vadd.f32 %v8042, %v8129
      %v8158 = vadd.f32 %v8043, %v8132
      %v8159 = vadd.f32 %v8044, %v8134
      %v8160 = vadd.f32 %v8045, %v8137
      %v8161 = vadd.f32 %v8046, %v8139
      %v8162 = vadd.f32 %v8047, %v8142
      %v8163 = vadd.f32 %v8048, %v8144
      %v8164 = vadd.f32 %v8049, %v8147
      %v8165 = vadd.f32 %v8050, %v8149
      %v8166 = vadd.f32 %v8051, %v8152
      %v8167 = vadd.f32 %v8052, %v8154
      %v8168 = vld [vmem:[%s6 + $0x40] sm:$0xf]
      %v8169 = vld [vmem:[%s6 + $0x44] sm:$0xf]
      %v8170 = vld [vmem:[%s6 + $0x48] sm:$0xf]
      %v8171 = vld [vmem:[%s6 + $0x4c] sm:$0xf]
      %v8184 = vunpack.c.l.b16 %v7479
      %v8185 = vunpack.c.l.b16 %v7480
      %v8186 = vunpack.c.l.b16 %v7481
      %v8187 = vunpack.c.l.b16 %v7482
      %v8188 = vunpack.c.l.b16 %v7483
      %v8189 = vunpack.c.l.b16 %v7484
      %v8190 = vunpack.c.l.b16 %v7485
      %v8191 = vunpack.c.l.b16 %v7486
      %v8192 = vunpack.c.l.b16 %v7487
      %v8193 = vunpack.c.l.b16 %v7488
      %v8194 = vunpack.c.l.b16 %v7489
      %v8195 = vunpack.c.l.b16 %v7490
      %v8196 = vpack.c.b16 %v8185, %v8184
      %v8197 = vpack.c.b16 %v8187, %v8186
      %v8198 = vpack.c.b16 %v8189, %v8188
      %v8199 = vpack.c.b16 %v8191, %v8190
      %v8200 = vpack.c.b16 %v8193, %v8192
      %v8201 = vpack.c.b16 %v8195, %v8194
      %v8206 = vunpack.c.l.b16 %v8168
      %v8207 = vunpack.c.l.b16 %v8169
      %v8208 = vunpack.c.l.b16 %v8170
      %v8209 = vunpack.c.l.b16 %v8171
      %v8210 = vpack.c.b16 %v8207, %v8206
      %v8211 = vpack.c.b16 %v8209, %v8208
      %v8215 = vsel %vm7781, %v8196, 0
      %v8218 = vsel %vm7781, %v8197, 0
      %v8221 = vsel %vm7781, %v8198, 0
      %v8224 = vsel %vm7781, %v8199, 0
      %v8227 = vsel %vm7781, %v8200, 0
      %v8230 = vsel %vm7781, %v8201, 0
      %8232 = vmatpush.bf16.msra.mxu0 0
      %8233 = vmatpush.bf16.msra.mxu0 0
      %8234 = vmatpush.bf16.msra.mxu0 0
      %8235 = vmatpush.bf16.msra.mxu0 0
      %8236 = vmatpush.bf16.msra.mxu0 0
      %8237 = vmatpush.bf16.msra.mxu0 0
      %8238 = vmatpush.bf16.msra.mxu0 %v8211
      %8239 = vmatpush.bf16.msra.mxu0 %v8210
      %8240 = vmatmul.bf16.gmra.mxu0 %v8215
      %v8241 = vpop.f32.mrf.mxu0
      %v8242 = vadd.f32 0.0, %v8241
      %v8243 = vpop.f32.mrf.mxu0
      %v8244 = vadd.f32 0.0, %v8243
      %8245 = vmatmul.bf16.gmra.mxu0 %v8218
      %v8246 = vpop.f32.mrf.mxu0
      %v8247 = vadd.f32 0.0, %v8246
      %v8248 = vpop.f32.mrf.mxu0
      %v8249 = vadd.f32 0.0, %v8248
      %8250 = vmatmul.bf16.gmra.mxu0 %v8221
      %v8251 = vpop.f32.mrf.mxu0
      %v8252 = vadd.f32 0.0, %v8251
      %v8253 = vpop.f32.mrf.mxu0
      %v8254 = vadd.f32 0.0, %v8253
      %8255 = vmatmul.bf16.gmra.mxu0 %v8224
      %v8256 = vpop.f32.mrf.mxu0
      %v8257 = vadd.f32 0.0, %v8256
      %v8258 = vpop.f32.mrf.mxu0
      %v8259 = vadd.f32 0.0, %v8258
      %8260 = vmatmul.bf16.gmra.mxu0 %v8227
      %v8261 = vpop.f32.mrf.mxu0
      %v8262 = vadd.f32 0.0, %v8261
      %v8263 = vpop.f32.mrf.mxu0
      %v8264 = vadd.f32 0.0, %v8263
      %8265 = vmatmul.bf16.gmra.mxu0 %v8230
      %v8266 = vpop.f32.mrf.mxu0
      %v8267 = vadd.f32 0.0, %v8266
      %v8268 = vpop.f32.mrf.mxu0
      %v8269 = vadd.f32 0.0, %v8268
      %8270 = vdwg.mxu0
      %v8271 = vadd.f32 %v8156, %v8242
      %v8272 = vadd.f32 %v8157, %v8244
      %v8273 = vadd.f32 %v8158, %v8247
      %v8274 = vadd.f32 %v8159, %v8249
      %v8275 = vadd.f32 %v8160, %v8252
      %v8276 = vadd.f32 %v8161, %v8254
      %v8277 = vadd.f32 %v8162, %v8257
      %v8278 = vadd.f32 %v8163, %v8259
      %v8279 = vadd.f32 %v8164, %v8262
      %v8280 = vadd.f32 %v8165, %v8264
      %v8281 = vadd.f32 %v8166, %v8267
      %v8282 = vadd.f32 %v8167, %v8269
      %v8283 = vld [vmem:[%s6 + $0x50] sm:$0xf]
      %v8284 = vld [vmem:[%s6 + $0x54] sm:$0xf]
      %v8285 = vld [vmem:[%s6 + $0x58] sm:$0xf]
      %v8286 = vld [vmem:[%s6 + $0x5c] sm:$0xf]
      %v8299 = vunpack.c.l.b16 %v7491
      %v8300 = vunpack.c.l.b16 %v7492
      %v8301 = vunpack.c.l.b16 %v7493
      %v8302 = vunpack.c.l.b16 %v7494
      %v8303 = vunpack.c.l.b16 %v7495
      %v8304 = vunpack.c.l.b16 %v7496
      %v8305 = vunpack.c.l.b16 %v7497
      %v8306 = vunpack.c.l.b16 %v7498
      %v8307 = vunpack.c.l.b16 %v7499
      %v8308 = vunpack.c.l.b16 %v7500
      %v8309 = vunpack.c.l.b16 %v7501
      %v8310 = vunpack.c.l.b16 %v7502
      %v8311 = vpack.c.b16 %v8300, %v8299
      %v8312 = vpack.c.b16 %v8302, %v8301
      %v8313 = vpack.c.b16 %v8304, %v8303
      %v8314 = vpack.c.b16 %v8306, %v8305
      %v8315 = vpack.c.b16 %v8308, %v8307
      %v8316 = vpack.c.b16 %v8310, %v8309
      %v8321 = vunpack.c.l.b16 %v8283
      %v8322 = vunpack.c.l.b16 %v8284
      %v8323 = vunpack.c.l.b16 %v8285
      %v8324 = vunpack.c.l.b16 %v8286
      %v8325 = vpack.c.b16 %v8322, %v8321
      %v8326 = vpack.c.b16 %v8324, %v8323
      %v8330 = vsel %vm7781, %v8311, 0
      %v8333 = vsel %vm7781, %v8312, 0
      %v8336 = vsel %vm7781, %v8313, 0
      %v8339 = vsel %vm7781, %v8314, 0
      %v8342 = vsel %vm7781, %v8315, 0
      %v8345 = vsel %vm7781, %v8316, 0
      %8347 = vmatpush.bf16.msra.mxu0 0
      %8348 = vmatpush.bf16.msra.mxu0 0
      %8349 = vmatpush.bf16.msra.mxu0 0
      %8350 = vmatpush.bf16.msra.mxu0 0
      %8351 = vmatpush.bf16.msra.mxu0 0
      %8352 = vmatpush.bf16.msra.mxu0 0
      %8353 = vmatpush.bf16.msra.mxu0 %v8326
      %8354 = vmatpush.bf16.msra.mxu0 %v8325
      %8355 = vmatmul.bf16.gmra.mxu0 %v8330
      %v8356 = vpop.f32.mrf.mxu0
      %v8357 = vadd.f32 0.0, %v8356
      %v8358 = vpop.f32.mrf.mxu0
      %v8359 = vadd.f32 0.0, %v8358
      %8360 = vmatmul.bf16.gmra.mxu0 %v8333
      %v8361 = vpop.f32.mrf.mxu0
      %v8362 = vadd.f32 0.0, %v8361
      %v8363 = vpop.f32.mrf.mxu0
      %v8364 = vadd.f32 0.0, %v8363
      %8365 = vmatmul.bf16.gmra.mxu0 %v8336
      %v8366 = vpop.f32.mrf.mxu0
      %v8367 = vadd.f32 0.0, %v8366
      %v8368 = vpop.f32.mrf.mxu0
      %v8369 = vadd.f32 0.0, %v8368
      %8370 = vmatmul.bf16.gmra.mxu0 %v8339
      %v8371 = vpop.f32.mrf.mxu0
      %v8372 = vadd.f32 0.0, %v8371
      %v8373 = vpop.f32.mrf.mxu0
      %v8374 = vadd.f32 0.0, %v8373
      %8375 = vmatmul.bf16.gmra.mxu0 %v8342
      %v8376 = vpop.f32.mrf.mxu0
      %v8377 = vadd.f32 0.0, %v8376
      %v8378 = vpop.f32.mrf.mxu0
      %v8379 = vadd.f32 0.0, %v8378
      %8380 = vmatmul.bf16.gmra.mxu0 %v8345
      %v8381 = vpop.f32.mrf.mxu0
      %v8382 = vadd.f32 0.0, %v8381
      %v8383 = vpop.f32.mrf.mxu0
      %v8384 = vadd.f32 0.0, %v8383
      %8385 = vdwg.mxu0
      %v8386 = vadd.f32 %v8271, %v8357
      %v8387 = vadd.f32 %v8272, %v8359
      %v8388 = vadd.f32 %v8273, %v8362
      %v8389 = vadd.f32 %v8274, %v8364
      %v8390 = vadd.f32 %v8275, %v8367
      %v8391 = vadd.f32 %v8276, %v8369
      %v8392 = vadd.f32 %v8277, %v8372
      %v8393 = vadd.f32 %v8278, %v8374
      %v8394 = vadd.f32 %v8279, %v8377
      %v8395 = vadd.f32 %v8280, %v8379
      %v8396 = vadd.f32 %v8281, %v8382
      %v8397 = vadd.f32 %v8282, %v8384
      %v8398 = vld [vmem:[%s6 + $0x60] sm:$0xf]
      %v8399 = vld [vmem:[%s6 + $0x64] sm:$0xf]
      %v8400 = vld [vmem:[%s6 + $0x68] sm:$0xf]
      %v8401 = vld [vmem:[%s6 + $0x6c] sm:$0xf]
      %v8414 = vunpack.c.l.b16 %v7503
      %v8415 = vunpack.c.l.b16 %v7504
      %v8416 = vunpack.c.l.b16 %v7505
      %v8417 = vunpack.c.l.b16 %v7506
      %v8418 = vunpack.c.l.b16 %v7507
      %v8419 = vunpack.c.l.b16 %v7508
      %v8420 = vunpack.c.l.b16 %v7509
      %v8421 = vunpack.c.l.b16 %v7510
      %v8422 = vunpack.c.l.b16 %v7511
      %v8423 = vunpack.c.l.b16 %v7512
      %v8424 = vunpack.c.l.b16 %v7513
      %v8425 = vunpack.c.l.b16 %v7514
      %v8426 = vpack.c.b16 %v8415, %v8414
      %v8427 = vpack.c.b16 %v8417, %v8416
      %v8428 = vpack.c.b16 %v8419, %v8418
      %v8429 = vpack.c.b16 %v8421, %v8420
      %v8430 = vpack.c.b16 %v8423, %v8422
      %v8431 = vpack.c.b16 %v8425, %v8424
      %v8436 = vunpack.c.l.b16 %v8398
      %v8437 = vunpack.c.l.b16 %v8399
      %v8438 = vunpack.c.l.b16 %v8400
      %v8439 = vunpack.c.l.b16 %v8401
      %v8440 = vpack.c.b16 %v8437, %v8436
      %v8441 = vpack.c.b16 %v8439, %v8438
      %v8445 = vsel %vm7781, %v8426, 0
      %v8448 = vsel %vm7781, %v8427, 0
      %v8451 = vsel %vm7781, %v8428, 0
      %v8454 = vsel %vm7781, %v8429, 0
      %v8457 = vsel %vm7781, %v8430, 0
      %v8460 = vsel %vm7781, %v8431, 0
      %8462 = vmatpush.bf16.msra.mxu0 0
      %8463 = vmatpush.bf16.msra.mxu0 0
      %8464 = vmatpush.bf16.msra.mxu0 0
      %8465 = vmatpush.bf16.msra.mxu0 0
      %8466 = vmatpush.bf16.msra.mxu0 0
      %8467 = vmatpush.bf16.msra.mxu0 0
      %8468 = vmatpush.bf16.msra.mxu0 %v8441
      %8469 = vmatpush.bf16.msra.mxu0 %v8440
      %8470 = vmatmul.bf16.gmra.mxu0 %v8445
      %v8471 = vpop.f32.mrf.mxu0
      %v8472 = vadd.f32 0.0, %v8471
      %v8473 = vpop.f32.mrf.mxu0
      %v8474 = vadd.f32 0.0, %v8473
      %8475 = vmatmul.bf16.gmra.mxu0 %v8448
      %v8476 = vpop.f32.mrf.mxu0
      %v8477 = vadd.f32 0.0, %v8476
      %v8478 = vpop.f32.mrf.mxu0
      %v8479 = vadd.f32 0.0, %v8478
      %8480 = vmatmul.bf16.gmra.mxu0 %v8451
      %v8481 = vpop.f32.mrf.mxu0
      %v8482 = vadd.f32 0.0, %v8481
      %v8483 = vpop.f32.mrf.mxu0
      %v8484 = vadd.f32 0.0, %v8483
      %8485 = vmatmul.bf16.gmra.mxu0 %v8454
      %v8486 = vpop.f32.mrf.mxu0
      %v8487 = vadd.f32 0.0, %v8486
      %v8488 = vpop.f32.mrf.mxu0
      %v8489 = vadd.f32 0.0, %v8488
      %8490 = vmatmul.bf16.gmra.mxu0 %v8457
      %v8491 = vpop.f32.mrf.mxu0
      %v8492 = vadd.f32 0.0, %v8491
      %v8493 = vpop.f32.mrf.mxu0
      %v8494 = vadd.f32 0.0, %v8493
      %8495 = vmatmul.bf16.gmra.mxu0 %v8460
      %v8496 = vpop.f32.mrf.mxu0
      %v8497 = vadd.f32 0.0, %v8496
      %v8498 = vpop.f32.mrf.mxu0
      %v8499 = vadd.f32 0.0, %v8498
      %8500 = vdwg.mxu0
      %v8501 = vadd.f32 %v8386, %v8472
      %v8502 = vadd.f32 %v8387, %v8474
      %v8503 = vadd.f32 %v8388, %v8477
      %v8504 = vadd.f32 %v8389, %v8479
      %v8505 = vadd.f32 %v8390, %v8482
      %v8506 = vadd.f32 %v8391, %v8484
      %v8507 = vadd.f32 %v8392, %v8487
      %v8508 = vadd.f32 %v8393, %v8489
      %v8509 = vadd.f32 %v8394, %v8492
      %v8510 = vadd.f32 %v8395, %v8494
      %v8511 = vadd.f32 %v8396, %v8497
      %v8512 = vadd.f32 %v8397, %v8499
      %v8513 = vld [vmem:[%s6 + $0x70] sm:$0xf]
      %v8514 = vld [vmem:[%s6 + $0x74] sm:$0xf]
      %v8515 = vld [vmem:[%s6 + $0x78] sm:$0xf]
      %v8516 = vld [vmem:[%s6 + $0x7c] sm:$0xf]
      %v8529 = vunpack.c.l.b16 %v7515
      %v8530 = vunpack.c.l.b16 %v7516
      %v8531 = vunpack.c.l.b16 %v7517
      %v8532 = vunpack.c.l.b16 %v7518
      %v8533 = vunpack.c.l.b16 %v7519
      %v8534 = vunpack.c.l.b16 %v7520
      %v8535 = vunpack.c.l.b16 %v7521
      %v8536 = vunpack.c.l.b16 %v7522
      %v8537 = vunpack.c.l.b16 %v7523
      %v8538 = vunpack.c.l.b16 %v7524
      %v8539 = vunpack.c.l.b16 %v7525
      %v8540 = vunpack.c.l.b16 %v7526
      %v8541 = vpack.c.b16 %v8530, %v8529
      %v8542 = vpack.c.b16 %v8532, %v8531
      %v8543 = vpack.c.b16 %v8534, %v8533
      %v8544 = vpack.c.b16 %v8536, %v8535
      %v8545 = vpack.c.b16 %v8538, %v8537
      %v8546 = vpack.c.b16 %v8540, %v8539
      %v8551 = vunpack.c.l.b16 %v8513
      %v8552 = vunpack.c.l.b16 %v8514
      %v8553 = vunpack.c.l.b16 %v8515
      %v8554 = vunpack.c.l.b16 %v8516
      %v8555 = vpack.c.b16 %v8552, %v8551
      %v8556 = vpack.c.b16 %v8554, %v8553
      %v8560 = vsel %vm7781, %v8541, 0
      %v8563 = vsel %vm7781, %v8542, 0
      %v8566 = vsel %vm7781, %v8543, 0
      %v8569 = vsel %vm7781, %v8544, 0
      %v8572 = vsel %vm7781, %v8545, 0
      %v8575 = vsel %vm7781, %v8546, 0
      %8577 = vmatpush.bf16.msra.mxu0 0
      %8578 = vmatpush.bf16.msra.mxu0 0
      %8579 = vmatpush.bf16.msra.mxu0 0
      %8580 = vmatpush.bf16.msra.mxu0 0
      %8581 = vmatpush.bf16.msra.mxu0 0
      %8582 = vmatpush.bf16.msra.mxu0 0
      %8583 = vmatpush.bf16.msra.mxu0 %v8556
      %8584 = vmatpush.bf16.msra.mxu0 %v8555
      %8585 = vmatmul.bf16.gmra.mxu0 %v8560
      %v8586 = vpop.f32.mrf.mxu0
      %v8587 = vadd.f32 0.0, %v8586
      %v8588 = vpop.f32.mrf.mxu0
      %v8589 = vadd.f32 0.0, %v8588
      %8590 = vmatmul.bf16.gmra.mxu0 %v8563
      %v8591 = vpop.f32.mrf.mxu0
      %v8592 = vadd.f32 0.0, %v8591
      %v8593 = vpop.f32.mrf.mxu0
      %v8594 = vadd.f32 0.0, %v8593
      %8595 = vmatmul.bf16.gmra.mxu0 %v8566
      %v8596 = vpop.f32.mrf.mxu0
      %v8597 = vadd.f32 0.0, %v8596
      %v8598 = vpop.f32.mrf.mxu0
      %v8599 = vadd.f32 0.0, %v8598
      %8600 = vmatmul.bf16.gmra.mxu0 %v8569
      %v8601 = vpop.f32.mrf.mxu0
      %v8602 = vadd.f32 0.0, %v8601
      %v8603 = vpop.f32.mrf.mxu0
      %v8604 = vadd.f32 0.0, %v8603
      %8605 = vmatmul.bf16.gmra.mxu0 %v8572
      %v8606 = vpop.f32.mrf.mxu0
      %v8607 = vadd.f32 0.0, %v8606
      %v8608 = vpop.f32.mrf.mxu0
      %v8609 = vadd.f32 0.0, %v8608
      %8610 = vmatmul.bf16.gmra.mxu0 %v8575
      %v8611 = vpop.f32.mrf.mxu0
      %v8612 = vadd.f32 0.0, %v8611
      %v8613 = vpop.f32.mrf.mxu0
      %v8614 = vadd.f32 0.0, %v8613
      %8615 = vdwg.mxu0
      %v8616 = vadd.f32 %v8501, %v8587
      %v8617 = vadd.f32 %v8502, %v8589
      %v8618 = vadd.f32 %v8503, %v8592
      %v8619 = vadd.f32 %v8504, %v8594
      %v8620 = vadd.f32 %v8505, %v8597
      %v8621 = vadd.f32 %v8506, %v8599
      %v8622 = vadd.f32 %v8507, %v8602
      %v8623 = vadd.f32 %v8508, %v8604
      %v8624 = vadd.f32 %v8509, %v8607
      %v8625 = vadd.f32 %v8510, %v8609
      %v8626 = vadd.f32 %v8511, %v8612
      %v8627 = vadd.f32 %v8512, %v8614
      %v8628 = vld [vmem:[%s6 + $0x80] sm:$0xf]
      %v8629 = vld [vmem:[%s6 + $0x84] sm:$0xf]
      %v8630 = vld [vmem:[%s6 + $0x88] sm:$0xf]
      %v8631 = vld [vmem:[%s6 + $0x8c] sm:$0xf]
      %v8644 = vunpack.c.l.b16 %v7527
      %v8645 = vunpack.c.l.b16 %v7528
      %v8646 = vunpack.c.l.b16 %v7529
      %v8647 = vunpack.c.l.b16 %v7530
      %v8648 = vunpack.c.l.b16 %v7531
      %v8649 = vunpack.c.l.b16 %v7532
      %v8650 = vunpack.c.l.b16 %v7533
      %v8651 = vunpack.c.l.b16 %v7534
      %v8652 = vunpack.c.l.b16 %v7535
      %v8653 = vunpack.c.l.b16 %v7536
      %v8654 = vunpack.c.l.b16 %v7537
      %v8655 = vunpack.c.l.b16 %v7538
      %v8656 = vpack.c.b16 %v8645, %v8644
      %v8657 = vpack.c.b16 %v8647, %v8646
      %v8658 = vpack.c.b16 %v8649, %v8648
      %v8659 = vpack.c.b16 %v8651, %v8650
      %v8660 = vpack.c.b16 %v8653, %v8652
      %v8661 = vpack.c.b16 %v8655, %v8654
      %v8666 = vunpack.c.l.b16 %v8628
      %v8667 = vunpack.c.l.b16 %v8629
      %v8668 = vunpack.c.l.b16 %v8630
      %v8669 = vunpack.c.l.b16 %v8631
      %v8670 = vpack.c.b16 %v8667, %v8666
      %v8671 = vpack.c.b16 %v8669, %v8668
      %v8675 = vsel %vm7781, %v8656, 0
      %v8678 = vsel %vm7781, %v8657, 0
      %v8681 = vsel %vm7781, %v8658, 0
      %v8684 = vsel %vm7781, %v8659, 0
      %v8687 = vsel %vm7781, %v8660, 0
      %v8690 = vsel %vm7781, %v8661, 0
      %8692 = vmatpush.bf16.msra.mxu0 0
      %8693 = vmatpush.bf16.msra.mxu0 0
      %8694 = vmatpush.bf16.msra.mxu0 0
      %8695 = vmatpush.bf16.msra.mxu0 0
      %8696 = vmatpush.bf16.msra.mxu0 0
      %8697 = vmatpush.bf16.msra.mxu0 0
      %8698 = vmatpush.bf16.msra.mxu0 %v8671
      %8699 = vmatpush.bf16.msra.mxu0 %v8670
      %8700 = vmatmul.bf16.gmra.mxu0 %v8675
      %v8701 = vpop.f32.mrf.mxu0
      %v8702 = vadd.f32 0.0, %v8701
      %v8703 = vpop.f32.mrf.mxu0
      %v8704 = vadd.f32 0.0, %v8703
      %8705 = vmatmul.bf16.gmra.mxu0 %v8678
      %v8706 = vpop.f32.mrf.mxu0
      %v8707 = vadd.f32 0.0, %v8706
      %v8708 = vpop.f32.mrf.mxu0
      %v8709 = vadd.f32 0.0, %v8708
      %8710 = vmatmul.bf16.gmra.mxu0 %v8681
      %v8711 = vpop.f32.mrf.mxu0
      %v8712 = vadd.f32 0.0, %v8711
      %v8713 = vpop.f32.mrf.mxu0
      %v8714 = vadd.f32 0.0, %v8713
      %8715 = vmatmul.bf16.gmra.mxu0 %v8684
      %v8716 = vpop.f32.mrf.mxu0
      %v8717 = vadd.f32 0.0, %v8716
      %v8718 = vpop.f32.mrf.mxu0
      %v8719 = vadd.f32 0.0, %v8718
      %8720 = vmatmul.bf16.gmra.mxu0 %v8687
      %v8721 = vpop.f32.mrf.mxu0
      %v8722 = vadd.f32 0.0, %v8721
      %v8723 = vpop.f32.mrf.mxu0
      %v8724 = vadd.f32 0.0, %v8723
      %8725 = vmatmul.bf16.gmra.mxu0 %v8690
      %v8726 = vpop.f32.mrf.mxu0
      %v8727 = vadd.f32 0.0, %v8726
      %v8728 = vpop.f32.mrf.mxu0
      %v8729 = vadd.f32 0.0, %v8728
      %8730 = vdwg.mxu0
      %v8731 = vadd.f32 %v8616, %v8702
      %v8732 = vadd.f32 %v8617, %v8704
      %v8733 = vadd.f32 %v8618, %v8707
      %v8734 = vadd.f32 %v8619, %v8709
      %v8735 = vadd.f32 %v8620, %v8712
      %v8736 = vadd.f32 %v8621, %v8714
      %v8737 = vadd.f32 %v8622, %v8717
      %v8738 = vadd.f32 %v8623, %v8719
      %v8739 = vadd.f32 %v8624, %v8722
      %v8740 = vadd.f32 %v8625, %v8724
      %v8741 = vadd.f32 %v8626, %v8727
      %v8742 = vadd.f32 %v8627, %v8729
      %v8743 = vld [vmem:[%s6 + $0x90] sm:$0xf]
      %v8744 = vld [vmem:[%s6 + $0x94] sm:$0xf]
      %v8745 = vld [vmem:[%s6 + $0x98] sm:$0xf]
      %v8746 = vld [vmem:[%s6 + $0x9c] sm:$0xf]
      %v8759 = vunpack.c.l.b16 %v7539
      %v8760 = vunpack.c.l.b16 %v7540
      %v8761 = vunpack.c.l.b16 %v7541
      %v8762 = vunpack.c.l.b16 %v7542
      %v8763 = vunpack.c.l.b16 %v7543
      %v8764 = vunpack.c.l.b16 %v7544
      %v8765 = vunpack.c.l.b16 %v7545
      %v8766 = vunpack.c.l.b16 %v7546
      %v8767 = vunpack.c.l.b16 %v7547
      %v8768 = vunpack.c.l.b16 %v7548
      %v8769 = vunpack.c.l.b16 %v7549
      %v8770 = vunpack.c.l.b16 %v7550
      %v8771 = vpack.c.b16 %v8760, %v8759
      %v8772 = vpack.c.b16 %v8762, %v8761
      %v8773 = vpack.c.b16 %v8764, %v8763
      %v8774 = vpack.c.b16 %v8766, %v8765
      %v8775 = vpack.c.b16 %v8768, %v8767
      %v8776 = vpack.c.b16 %v8770, %v8769
      %v8781 = vunpack.c.l.b16 %v8743
      %v8782 = vunpack.c.l.b16 %v8744
      %v8783 = vunpack.c.l.b16 %v8745
      %v8784 = vunpack.c.l.b16 %v8746
      %v8785 = vpack.c.b16 %v8782, %v8781
      %v8786 = vpack.c.b16 %v8784, %v8783
      %v8790 = vsel %vm7781, %v8771, 0
      %v8793 = vsel %vm7781, %v8772, 0
      %v8796 = vsel %vm7781, %v8773, 0
      %v8799 = vsel %vm7781, %v8774, 0
      %v8802 = vsel %vm7781, %v8775, 0
      %v8805 = vsel %vm7781, %v8776, 0
      %8807 = vmatpush.bf16.msra.mxu0 0
      %8808 = vmatpush.bf16.msra.mxu0 0
      %8809 = vmatpush.bf16.msra.mxu0 0
      %8810 = vmatpush.bf16.msra.mxu0 0
      %8811 = vmatpush.bf16.msra.mxu0 0
      %8812 = vmatpush.bf16.msra.mxu0 0
      %8813 = vmatpush.bf16.msra.mxu0 %v8786
      %8814 = vmatpush.bf16.msra.mxu0 %v8785
      %8815 = vmatmul.bf16.gmra.mxu0 %v8790
      %v8816 = vpop.f32.mrf.mxu0
      %v8817 = vadd.f32 0.0, %v8816
      %v8818 = vpop.f32.mrf.mxu0
      %v8819 = vadd.f32 0.0, %v8818
      %8820 = vmatmul.bf16.gmra.mxu0 %v8793
      %v8821 = vpop.f32.mrf.mxu0
      %v8822 = vadd.f32 0.0, %v8821
      %v8823 = vpop.f32.mrf.mxu0
      %v8824 = vadd.f32 0.0, %v8823
      %8825 = vmatmul.bf16.gmra.mxu0 %v8796
      %v8826 = vpop.f32.mrf.mxu0
      %v8827 = vadd.f32 0.0, %v8826
      %v8828 = vpop.f32.mrf.mxu0
      %v8829 = vadd.f32 0.0, %v8828
      %8830 = vmatmul.bf16.gmra.mxu0 %v8799
      %v8831 = vpop.f32.mrf.mxu0
      %v8832 = vadd.f32 0.0, %v8831
      %v8833 = vpop.f32.mrf.mxu0
      %v8834 = vadd.f32 0.0, %v8833
      %8835 = vmatmul.bf16.gmra.mxu0 %v8802
      %v8836 = vpop.f32.mrf.mxu0
      %v8837 = vadd.f32 0.0, %v8836
      %v8838 = vpop.f32.mrf.mxu0
      %v8839 = vadd.f32 0.0, %v8838
      %8840 = vmatmul.bf16.gmra.mxu0 %v8805
      %v8841 = vpop.f32.mrf.mxu0
      %v8842 = vadd.f32 0.0, %v8841
      %v8843 = vpop.f32.mrf.mxu0
      %v8844 = vadd.f32 0.0, %v8843
      %8845 = vdwg.mxu0
      %v8846 = vadd.f32 %v8731, %v8817
      %v8847 = vadd.f32 %v8732, %v8819
      %v8848 = vadd.f32 %v8733, %v8822
      %v8849 = vadd.f32 %v8734, %v8824
      %v8850 = vadd.f32 %v8735, %v8827
      %v8851 = vadd.f32 %v8736, %v8829
      %v8852 = vadd.f32 %v8737, %v8832
      %v8853 = vadd.f32 %v8738, %v8834
      %v8854 = vadd.f32 %v8739, %v8837
      %v8855 = vadd.f32 %v8740, %v8839
      %v8856 = vadd.f32 %v8741, %v8842
      %v8857 = vadd.f32 %v8742, %v8844
      %v8858 = vld [vmem:[%s6 + $0xa0] sm:$0xf]
      %v8859 = vld [vmem:[%s6 + $0xa4] sm:$0xf]
      %v8860 = vld [vmem:[%s6 + $0xa8] sm:$0xf]
      %v8861 = vld [vmem:[%s6 + $0xac] sm:$0xf]
      %v8874 = vunpack.c.l.b16 %v7551
      %v8875 = vunpack.c.l.b16 %v7552
      %v8876 = vunpack.c.l.b16 %v7553
      %v8877 = vunpack.c.l.b16 %v7554
      %v8878 = vunpack.c.l.b16 %v7555
      %v8879 = vunpack.c.l.b16 %v7556
      %v8880 = vunpack.c.l.b16 %v7557
      %v8881 = vunpack.c.l.b16 %v7558
      %v8882 = vunpack.c.l.b16 %v7559
      %v8883 = vunpack.c.l.b16 %v7560
      %v8884 = vunpack.c.l.b16 %v7561
      %v8885 = vunpack.c.l.b16 %v7562
      %v8886 = vpack.c.b16 %v8875, %v8874
      %v8887 = vpack.c.b16 %v8877, %v8876
      %v8888 = vpack.c.b16 %v8879, %v8878
      %v8889 = vpack.c.b16 %v8881, %v8880
      %v8890 = vpack.c.b16 %v8883, %v8882
      %v8891 = vpack.c.b16 %v8885, %v8884
      %v8896 = vunpack.c.l.b16 %v8858
      %v8897 = vunpack.c.l.b16 %v8859
      %v8898 = vunpack.c.l.b16 %v8860
      %v8899 = vunpack.c.l.b16 %v8861
      %v8900 = vpack.c.b16 %v8897, %v8896
      %v8901 = vpack.c.b16 %v8899, %v8898
      %v8905 = vsel %vm7781, %v8886, 0
      %v8908 = vsel %vm7781, %v8887, 0
      %v8911 = vsel %vm7781, %v8888, 0
      %v8914 = vsel %vm7781, %v8889, 0
      %v8917 = vsel %vm7781, %v8890, 0
      %v8920 = vsel %vm7781, %v8891, 0
      %8922 = vmatpush.bf16.msra.mxu0 0
      %8923 = vmatpush.bf16.msra.mxu0 0
      %8924 = vmatpush.bf16.msra.mxu0 0
      %8925 = vmatpush.bf16.msra.mxu0 0
      %8926 = vmatpush.bf16.msra.mxu0 0
      %8927 = vmatpush.bf16.msra.mxu0 0
      %8928 = vmatpush.bf16.msra.mxu0 %v8901
      %8929 = vmatpush.bf16.msra.mxu0 %v8900
      %8930 = vmatmul.bf16.gmra.mxu0 %v8905
      %v8931 = vpop.f32.mrf.mxu0
      %v8932 = vadd.f32 0.0, %v8931
      %v8933 = vpop.f32.mrf.mxu0
      %v8934 = vadd.f32 0.0, %v8933
      %8935 = vmatmul.bf16.gmra.mxu0 %v8908
      %v8936 = vpop.f32.mrf.mxu0
      %v8937 = vadd.f32 0.0, %v8936
      %v8938 = vpop.f32.mrf.mxu0
      %v8939 = vadd.f32 0.0, %v8938
      %8940 = vmatmul.bf16.gmra.mxu0 %v8911
      %v8941 = vpop.f32.mrf.mxu0
      %v8942 = vadd.f32 0.0, %v8941
      %v8943 = vpop.f32.mrf.mxu0
      %v8944 = vadd.f32 0.0, %v8943
      %8945 = vmatmul.bf16.gmra.mxu0 %v8914
      %v8946 = vpop.f32.mrf.mxu0
      %v8947 = vadd.f32 0.0, %v8946
      %v8948 = vpop.f32.mrf.mxu0
      %v8949 = vadd.f32 0.0, %v8948
      %8950 = vmatmul.bf16.gmra.mxu0 %v8917
      %v8951 = vpop.f32.mrf.mxu0
      %v8952 = vadd.f32 0.0, %v8951
      %v8953 = vpop.f32.mrf.mxu0
      %v8954 = vadd.f32 0.0, %v8953
      %8955 = vmatmul.bf16.gmra.mxu0 %v8920
      %v8956 = vpop.f32.mrf.mxu0
      %v8957 = vadd.f32 0.0, %v8956
      %v8958 = vpop.f32.mrf.mxu0
      %v8959 = vadd.f32 0.0, %v8958
      %8960 = vdwg.mxu0
      %v8961 = vadd.f32 %v8846, %v8932
      %v8962 = vadd.f32 %v8847, %v8934
      %v8963 = vadd.f32 %v8848, %v8937
      %v8964 = vadd.f32 %v8849, %v8939
      %v8965 = vadd.f32 %v8850, %v8942
      %v8966 = vadd.f32 %v8851, %v8944
      %v8967 = vadd.f32 %v8852, %v8947
      %v8968 = vadd.f32 %v8853, %v8949
      %v8969 = vadd.f32 %v8854, %v8952
      %v8970 = vadd.f32 %v8855, %v8954
      %v8971 = vadd.f32 %v8856, %v8957
      %v8972 = vadd.f32 %v8857, %v8959
      %v8973 = vld [vmem:[%s6 + $0xb0] sm:$0xf]
      %v8974 = vld [vmem:[%s6 + $0xb4] sm:$0xf]
      %v8975 = vld [vmem:[%s6 + $0xb8] sm:$0xf]
      %v8976 = vld [vmem:[%s6 + $0xbc] sm:$0xf]
      %v8989 = vunpack.c.l.b16 %v7563
      %v8990 = vunpack.c.l.b16 %v7564
      %v8991 = vunpack.c.l.b16 %v7565
      %v8992 = vunpack.c.l.b16 %v7566
      %v8993 = vunpack.c.l.b16 %v7567
      %v8994 = vunpack.c.l.b16 %v7568
      %v8995 = vunpack.c.l.b16 %v7569
      %v8996 = vunpack.c.l.b16 %v7570
      %v8997 = vunpack.c.l.b16 %v7571
      %v8998 = vunpack.c.l.b16 %v7572
      %v8999 = vunpack.c.l.b16 %v7573
      %v9000 = vunpack.c.l.b16 %v7574
      %v9001 = vpack.c.b16 %v8990, %v8989
      %v9002 = vpack.c.b16 %v8992, %v8991
      %v9003 = vpack.c.b16 %v8994, %v8993
      %v9004 = vpack.c.b16 %v8996, %v8995
      %v9005 = vpack.c.b16 %v8998, %v8997
      %v9006 = vpack.c.b16 %v9000, %v8999
      %v9011 = vunpack.c.l.b16 %v8973
      %v9012 = vunpack.c.l.b16 %v8974
      %v9013 = vunpack.c.l.b16 %v8975
      %v9014 = vunpack.c.l.b16 %v8976
      %v9015 = vpack.c.b16 %v9012, %v9011
      %v9016 = vpack.c.b16 %v9014, %v9013
      %v9020 = vsel %vm7781, %v9001, 0
      %v9023 = vsel %vm7781, %v9002, 0
      %v9026 = vsel %vm7781, %v9003, 0
      %v9029 = vsel %vm7781, %v9004, 0
      %v9032 = vsel %vm7781, %v9005, 0
      %v9035 = vsel %vm7781, %v9006, 0
      %9037 = vmatpush.bf16.msra.mxu0 0
      %9038 = vmatpush.bf16.msra.mxu0 0
      %9039 = vmatpush.bf16.msra.mxu0 0
      %9040 = vmatpush.bf16.msra.mxu0 0
      %9041 = vmatpush.bf16.msra.mxu0 0
      %9042 = vmatpush.bf16.msra.mxu0 0
      %9043 = vmatpush.bf16.msra.mxu0 %v9016
      %9044 = vmatpush.bf16.msra.mxu0 %v9015
      %9045 = vmatmul.bf16.gmra.mxu0 %v9020
      %v9046 = vpop.f32.mrf.mxu0
      %v9047 = vadd.f32 0.0, %v9046
      %v9048 = vpop.f32.mrf.mxu0
      %v9049 = vadd.f32 0.0, %v9048
      %9050 = vmatmul.bf16.gmra.mxu0 %v9023
      %v9051 = vpop.f32.mrf.mxu0
      %v9052 = vadd.f32 0.0, %v9051
      %v9053 = vpop.f32.mrf.mxu0
      %v9054 = vadd.f32 0.0, %v9053
      %9055 = vmatmul.bf16.gmra.mxu0 %v9026
      %v9056 = vpop.f32.mrf.mxu0
      %v9057 = vadd.f32 0.0, %v9056
      %v9058 = vpop.f32.mrf.mxu0
      %v9059 = vadd.f32 0.0, %v9058
      %9060 = vmatmul.bf16.gmra.mxu0 %v9029
      %v9061 = vpop.f32.mrf.mxu0
      %v9062 = vadd.f32 0.0, %v9061
      %v9063 = vpop.f32.mrf.mxu0
      %v9064 = vadd.f32 0.0, %v9063
      %9065 = vmatmul.bf16.gmra.mxu0 %v9032
      %v9066 = vpop.f32.mrf.mxu0
      %v9067 = vadd.f32 0.0, %v9066
      %v9068 = vpop.f32.mrf.mxu0
      %v9069 = vadd.f32 0.0, %v9068
      %9070 = vmatmul.bf16.gmra.mxu0 %v9035
      %v9071 = vpop.f32.mrf.mxu0
      %v9072 = vadd.f32 0.0, %v9071
      %v9073 = vpop.f32.mrf.mxu0
      %v9074 = vadd.f32 0.0, %v9073
      %9075 = vdwg.mxu0
      %v9076 = vadd.f32 %v8961, %v9047
      %v9077 = vadd.f32 %v8962, %v9049
      %v9078 = vadd.f32 %v8963, %v9052
      %v9079 = vadd.f32 %v8964, %v9054
      %v9080 = vadd.f32 %v8965, %v9057
      %v9081 = vadd.f32 %v8966, %v9059
      %v9082 = vadd.f32 %v8967, %v9062
      %v9083 = vadd.f32 %v8968, %v9064
      %v9084 = vadd.f32 %v8969, %v9067
      %v9085 = vadd.f32 %v8970, %v9069
      %v9086 = vadd.f32 %v8971, %v9072
      %v9087 = vadd.f32 %v8972, %v9074
      %v9088 = vld [vmem:[%s6 + $0xc0] sm:$0xf]
      %v9089 = vld [vmem:[%s6 + $0xc4] sm:$0xf]
      %v9090 = vld [vmem:[%s6 + $0xc8] sm:$0xf]
      %v9091 = vld [vmem:[%s6 + $0xcc] sm:$0xf]
      %v9104 = vunpack.c.l.b16 %v7575
      %v9105 = vunpack.c.l.b16 %v7576
      %v9106 = vunpack.c.l.b16 %v7577
      %v9107 = vunpack.c.l.b16 %v7578
      %v9108 = vunpack.c.l.b16 %v7579
      %v9109 = vunpack.c.l.b16 %v7580
      %v9110 = vunpack.c.l.b16 %v7581
      %v9111 = vunpack.c.l.b16 %v7582
      %v9112 = vunpack.c.l.b16 %v7583
      %v9113 = vunpack.c.l.b16 %v7584
      %v9114 = vunpack.c.l.b16 %v7585
      %v9115 = vunpack.c.l.b16 %v7586
      %v9116 = vpack.c.b16 %v9105, %v9104
      %v9117 = vpack.c.b16 %v9107, %v9106
      %v9118 = vpack.c.b16 %v9109, %v9108
      %v9119 = vpack.c.b16 %v9111, %v9110
      %v9120 = vpack.c.b16 %v9113, %v9112
      %v9121 = vpack.c.b16 %v9115, %v9114
      %v9126 = vunpack.c.l.b16 %v9088
      %v9127 = vunpack.c.l.b16 %v9089
      %v9128 = vunpack.c.l.b16 %v9090
      %v9129 = vunpack.c.l.b16 %v9091
      %v9130 = vpack.c.b16 %v9127, %v9126
      %v9131 = vpack.c.b16 %v9129, %v9128
      %v9135 = vsel %vm7781, %v9116, 0
      %v9138 = vsel %vm7781, %v9117, 0
      %v9141 = vsel %vm7781, %v9118, 0
      %v9144 = vsel %vm7781, %v9119, 0
      %v9147 = vsel %vm7781, %v9120, 0
      %v9150 = vsel %vm7781, %v9121, 0
      %9152 = vmatpush.bf16.msra.mxu0 0
      %9153 = vmatpush.bf16.msra.mxu0 0
      %9154 = vmatpush.bf16.msra.mxu0 0
      %9155 = vmatpush.bf16.msra.mxu0 0
      %9156 = vmatpush.bf16.msra.mxu0 0
      %9157 = vmatpush.bf16.msra.mxu0 0
      %9158 = vmatpush.bf16.msra.mxu0 %v9131
      %9159 = vmatpush.bf16.msra.mxu0 %v9130
      %9160 = vmatmul.bf16.gmra.mxu0 %v9135
      %v9161 = vpop.f32.mrf.mxu0
      %v9162 = vadd.f32 0.0, %v9161
      %v9163 = vpop.f32.mrf.mxu0
      %v9164 = vadd.f32 0.0, %v9163
      %9165 = vmatmul.bf16.gmra.mxu0 %v9138
      %v9166 = vpop.f32.mrf.mxu0
      %v9167 = vadd.f32 0.0, %v9166
      %v9168 = vpop.f32.mrf.mxu0
      %v9169 = vadd.f32 0.0, %v9168
      %9170 = vmatmul.bf16.gmra.mxu0 %v9141
      %v9171 = vpop.f32.mrf.mxu0
      %v9172 = vadd.f32 0.0, %v9171
      %v9173 = vpop.f32.mrf.mxu0
      %v9174 = vadd.f32 0.0, %v9173
      %9175 = vmatmul.bf16.gmra.mxu0 %v9144
      %v9176 = vpop.f32.mrf.mxu0
      %v9177 = vadd.f32 0.0, %v9176
      %v9178 = vpop.f32.mrf.mxu0
      %v9179 = vadd.f32 0.0, %v9178
      %9180 = vmatmul.bf16.gmra.mxu0 %v9147
      %v9181 = vpop.f32.mrf.mxu0
      %v9182 = vadd.f32 0.0, %v9181
      %v9183 = vpop.f32.mrf.mxu0
      %v9184 = vadd.f32 0.0, %v9183
      %9185 = vmatmul.bf16.gmra.mxu0 %v9150
      %v9186 = vpop.f32.mrf.mxu0
      %v9187 = vadd.f32 0.0, %v9186
      %v9188 = vpop.f32.mrf.mxu0
      %v9189 = vadd.f32 0.0, %v9188
      %9190 = vdwg.mxu0
      %v9191 = vadd.f32 %v9076, %v9162
      %v9192 = vadd.f32 %v9077, %v9164
      %v9193 = vadd.f32 %v9078, %v9167
      %v9194 = vadd.f32 %v9079, %v9169
      %v9195 = vadd.f32 %v9080, %v9172
      %v9196 = vadd.f32 %v9081, %v9174
      %v9197 = vadd.f32 %v9082, %v9177
      %v9198 = vadd.f32 %v9083, %v9179
      %v9199 = vadd.f32 %v9084, %v9182
      %v9200 = vadd.f32 %v9085, %v9184
      %v9201 = vadd.f32 %v9086, %v9187
      %v9202 = vadd.f32 %v9087, %v9189
      %v9203 = vld [vmem:[%s6 + $0xd0] sm:$0xf]
      %v9204 = vld [vmem:[%s6 + $0xd4] sm:$0xf]
      %v9205 = vld [vmem:[%s6 + $0xd8] sm:$0xf]
      %v9206 = vld [vmem:[%s6 + $0xdc] sm:$0xf]
      %v9219 = vunpack.c.l.b16 %v7587
      %v9220 = vunpack.c.l.b16 %v7588
      %v9221 = vunpack.c.l.b16 %v7589
      %v9222 = vunpack.c.l.b16 %v7590
      %v9223 = vunpack.c.l.b16 %v7591
      %v9224 = vunpack.c.l.b16 %v7592
      %v9225 = vunpack.c.l.b16 %v7593
      %v9226 = vunpack.c.l.b16 %v7594
      %v9227 = vunpack.c.l.b16 %v7595
      %v9228 = vunpack.c.l.b16 %v7596
      %v9229 = vunpack.c.l.b16 %v7597
      %v9230 = vunpack.c.l.b16 %v7598
      %v9231 = vpack.c.b16 %v9220, %v9219
      %v9232 = vpack.c.b16 %v9222, %v9221
      %v9233 = vpack.c.b16 %v9224, %v9223
      %v9234 = vpack.c.b16 %v9226, %v9225
      %v9235 = vpack.c.b16 %v9228, %v9227
      %v9236 = vpack.c.b16 %v9230, %v9229
      %v9241 = vunpack.c.l.b16 %v9203
      %v9242 = vunpack.c.l.b16 %v9204
      %v9243 = vunpack.c.l.b16 %v9205
      %v9244 = vunpack.c.l.b16 %v9206
      %v9245 = vpack.c.b16 %v9242, %v9241
      %v9246 = vpack.c.b16 %v9244, %v9243
      %v9250 = vsel %vm7781, %v9231, 0
      %v9253 = vsel %vm7781, %v9232, 0
      %v9256 = vsel %vm7781, %v9233, 0
      %v9259 = vsel %vm7781, %v9234, 0
      %v9262 = vsel %vm7781, %v9235, 0
      %v9265 = vsel %vm7781, %v9236, 0
      %9267 = vmatpush.bf16.msra.mxu0 0
      %9268 = vmatpush.bf16.msra.mxu0 0
      %9269 = vmatpush.bf16.msra.mxu0 0
      %9270 = vmatpush.bf16.msra.mxu0 0
      %9271 = vmatpush.bf16.msra.mxu0 0
      %9272 = vmatpush.bf16.msra.mxu0 0
      %9273 = vmatpush.bf16.msra.mxu0 %v9246
      %9274 = vmatpush.bf16.msra.mxu0 %v9245
      %9275 = vmatmul.bf16.gmra.mxu0 %v9250
      %v9276 = vpop.f32.mrf.mxu0
      %v9277 = vadd.f32 0.0, %v9276
      %v9278 = vpop.f32.mrf.mxu0
      %v9279 = vadd.f32 0.0, %v9278
      %9280 = vmatmul.bf16.gmra.mxu0 %v9253
      %v9281 = vpop.f32.mrf.mxu0
      %v9282 = vadd.f32 0.0, %v9281
      %v9283 = vpop.f32.mrf.mxu0
      %v9284 = vadd.f32 0.0, %v9283
      %9285 = vmatmul.bf16.gmra.mxu0 %v9256
      %v9286 = vpop.f32.mrf.mxu0
      %v9287 = vadd.f32 0.0, %v9286
      %v9288 = vpop.f32.mrf.mxu0
      %v9289 = vadd.f32 0.0, %v9288
      %9290 = vmatmul.bf16.gmra.mxu0 %v9259
      %v9291 = vpop.f32.mrf.mxu0
      %v9292 = vadd.f32 0.0, %v9291
      %v9293 = vpop.f32.mrf.mxu0
      %v9294 = vadd.f32 0.0, %v9293
      %9295 = vmatmul.bf16.gmra.mxu0 %v9262
      %v9296 = vpop.f32.mrf.mxu0
      %v9297 = vadd.f32 0.0, %v9296
      %v9298 = vpop.f32.mrf.mxu0
      %v9299 = vadd.f32 0.0, %v9298
      %9300 = vmatmul.bf16.gmra.mxu0 %v9265
      %v9301 = vpop.f32.mrf.mxu0
      %v9302 = vadd.f32 0.0, %v9301
      %v9303 = vpop.f32.mrf.mxu0
      %v9304 = vadd.f32 0.0, %v9303
      %9305 = vdwg.mxu0
      %v9306 = vadd.f32 %v9191, %v9277
      %v9307 = vadd.f32 %v9192, %v9279
      %v9308 = vadd.f32 %v9193, %v9282
      %v9309 = vadd.f32 %v9194, %v9284
      %v9310 = vadd.f32 %v9195, %v9287
      %v9311 = vadd.f32 %v9196, %v9289
      %v9312 = vadd.f32 %v9197, %v9292
      %v9313 = vadd.f32 %v9198, %v9294
      %v9314 = vadd.f32 %v9199, %v9297
      %v9315 = vadd.f32 %v9200, %v9299
      %v9316 = vadd.f32 %v9201, %v9302
      %v9317 = vadd.f32 %v9202, %v9304
      %v9318 = vld [vmem:[%s6 + $0xe0] sm:$0xf]
      %v9319 = vld [vmem:[%s6 + $0xe4] sm:$0xf]
      %v9320 = vld [vmem:[%s6 + $0xe8] sm:$0xf]
      %v9321 = vld [vmem:[%s6 + $0xec] sm:$0xf]
      %v9334 = vunpack.c.l.b16 %v7599
      %v9335 = vunpack.c.l.b16 %v7600
      %v9336 = vunpack.c.l.b16 %v7601
      %v9337 = vunpack.c.l.b16 %v7602
      %v9338 = vunpack.c.l.b16 %v7603
      %v9339 = vunpack.c.l.b16 %v7604
      %v9340 = vunpack.c.l.b16 %v7605
      %v9341 = vunpack.c.l.b16 %v7606
      %v9342 = vunpack.c.l.b16 %v7607
      %v9343 = vunpack.c.l.b16 %v7608
      %v9344 = vunpack.c.l.b16 %v7609
      %v9345 = vunpack.c.l.b16 %v7610
      %v9346 = vpack.c.b16 %v9335, %v9334
      %v9347 = vpack.c.b16 %v9337, %v9336
      %v9348 = vpack.c.b16 %v9339, %v9338
      %v9349 = vpack.c.b16 %v9341, %v9340
      %v9350 = vpack.c.b16 %v9343, %v9342
      %v9351 = vpack.c.b16 %v9345, %v9344
      %v9356 = vunpack.c.l.b16 %v9318
      %v9357 = vunpack.c.l.b16 %v9319
      %v9358 = vunpack.c.l.b16 %v9320
      %v9359 = vunpack.c.l.b16 %v9321
      %v9360 = vpack.c.b16 %v9357, %v9356
      %v9361 = vpack.c.b16 %v9359, %v9358
      %v9365 = vsel %vm7781, %v9346, 0
      %v9368 = vsel %vm7781, %v9347, 0
      %v9371 = vsel %vm7781, %v9348, 0
      %v9374 = vsel %vm7781, %v9349, 0
      %v9377 = vsel %vm7781, %v9350, 0
      %v9380 = vsel %vm7781, %v9351, 0
      %9382 = vmatpush.bf16.msra.mxu0 0
      %9383 = vmatpush.bf16.msra.mxu0 0
      %9384 = vmatpush.bf16.msra.mxu0 0
      %9385 = vmatpush.bf16.msra.mxu0 0
      %9386 = vmatpush.bf16.msra.mxu0 0
      %9387 = vmatpush.bf16.msra.mxu0 0
      %9388 = vmatpush.bf16.msra.mxu0 %v9361
      %9389 = vmatpush.bf16.msra.mxu0 %v9360
      %9390 = vmatmul.bf16.gmra.mxu0 %v9365
      %v9391 = vpop.f32.mrf.mxu0
      %v9392 = vadd.f32 0.0, %v9391
      %v9393 = vpop.f32.mrf.mxu0
      %v9394 = vadd.f32 0.0, %v9393
      %9395 = vmatmul.bf16.gmra.mxu0 %v9368
      %v9396 = vpop.f32.mrf.mxu0
      %v9397 = vadd.f32 0.0, %v9396
      %v9398 = vpop.f32.mrf.mxu0
      %v9399 = vadd.f32 0.0, %v9398
      %9400 = vmatmul.bf16.gmra.mxu0 %v9371
      %v9401 = vpop.f32.mrf.mxu0
      %v9402 = vadd.f32 0.0, %v9401
      %v9403 = vpop.f32.mrf.mxu0
      %v9404 = vadd.f32 0.0, %v9403
      %9405 = vmatmul.bf16.gmra.mxu0 %v9374
      %v9406 = vpop.f32.mrf.mxu0
      %v9407 = vadd.f32 0.0, %v9406
      %v9408 = vpop.f32.mrf.mxu0
      %v9409 = vadd.f32 0.0, %v9408
      %9410 = vmatmul.bf16.gmra.mxu0 %v9377
      %v9411 = vpop.f32.mrf.mxu0
      %v9412 = vadd.f32 0.0, %v9411
      %v9413 = vpop.f32.mrf.mxu0
      %v9414 = vadd.f32 0.0, %v9413
      %9415 = vmatmul.bf16.gmra.mxu0 %v9380
      %v9416 = vpop.f32.mrf.mxu0
      %v9417 = vadd.f32 0.0, %v9416
      %v9418 = vpop.f32.mrf.mxu0
      %v9419 = vadd.f32 0.0, %v9418
      %9420 = vdwg.mxu0
      %v9421 = vadd.f32 %v9306, %v9392
      %v9422 = vadd.f32 %v9307, %v9394
      %v9423 = vadd.f32 %v9308, %v9397
      %v9424 = vadd.f32 %v9309, %v9399
      %v9425 = vadd.f32 %v9310, %v9402
      %v9426 = vadd.f32 %v9311, %v9404
      %v9427 = vadd.f32 %v9312, %v9407
      %v9428 = vadd.f32 %v9313, %v9409
      %v9429 = vadd.f32 %v9314, %v9412
      %v9430 = vadd.f32 %v9315, %v9414
      %v9431 = vadd.f32 %v9316, %v9417
      %v9432 = vadd.f32 %v9317, %v9419
      %v9433 = vld [vmem:[%s6 + $0xf0] sm:$0xf]
      %v9434 = vld [vmem:[%s6 + $0xf4] sm:$0xf]
      %v9435 = vld [vmem:[%s6 + $0xf8] sm:$0xf]
      %v9436 = vld [vmem:[%s6 + $0xfc] sm:$0xf]
      %v9449 = vunpack.c.l.b16 %v7611
      %v9450 = vunpack.c.l.b16 %v7612
      %v9451 = vunpack.c.l.b16 %v7613
      %v9452 = vunpack.c.l.b16 %v7614
      %v9453 = vunpack.c.l.b16 %v7615
      %v9454 = vunpack.c.l.b16 %v7616
      %v9455 = vunpack.c.l.b16 %v7617
      %v9456 = vunpack.c.l.b16 %v7618
      %v9457 = vunpack.c.l.b16 %v7619
      %v9458 = vunpack.c.l.b16 %v7620
      %v9459 = vunpack.c.l.b16 %v7621
      %v9460 = vunpack.c.l.b16 %v7622
      %v9461 = vpack.c.b16 %v9450, %v9449
      %v9462 = vpack.c.b16 %v9452, %v9451
      %v9463 = vpack.c.b16 %v9454, %v9453
      %v9464 = vpack.c.b16 %v9456, %v9455
      %v9465 = vpack.c.b16 %v9458, %v9457
      %v9466 = vpack.c.b16 %v9460, %v9459
      %v9471 = vunpack.c.l.b16 %v9433
      %v9472 = vunpack.c.l.b16 %v9434
      %v9473 = vunpack.c.l.b16 %v9435
      %v9474 = vunpack.c.l.b16 %v9436
      %v9475 = vpack.c.b16 %v9472, %v9471
      %v9476 = vpack.c.b16 %v9474, %v9473
      %v9480 = vsel %vm7781, %v9461, 0
      %v9483 = vsel %vm7781, %v9462, 0
      %v9486 = vsel %vm7781, %v9463, 0
      %v9489 = vsel %vm7781, %v9464, 0
      %v9492 = vsel %vm7781, %v9465, 0
      %v9495 = vsel %vm7781, %v9466, 0
      %9497 = vmatpush.bf16.msra.mxu0 0
      %9498 = vmatpush.bf16.msra.mxu0 0
      %9499 = vmatpush.bf16.msra.mxu0 0
      %9500 = vmatpush.bf16.msra.mxu0 0
      %9501 = vmatpush.bf16.msra.mxu0 0
      %9502 = vmatpush.bf16.msra.mxu0 0
      %9503 = vmatpush.bf16.msra.mxu0 %v9476
      %9504 = vmatpush.bf16.msra.mxu0 %v9475
      %9505 = vmatmul.bf16.gmra.mxu0 %v9480
      %v9506 = vpop.f32.mrf.mxu0
      %v9507 = vadd.f32 0.0, %v9506
      %v9508 = vpop.f32.mrf.mxu0
      %v9509 = vadd.f32 0.0, %v9508
      %9510 = vmatmul.bf16.gmra.mxu0 %v9483
      %v9511 = vpop.f32.mrf.mxu0
      %v9512 = vadd.f32 0.0, %v9511
      %v9513 = vpop.f32.mrf.mxu0
      %v9514 = vadd.f32 0.0, %v9513
      %9515 = vmatmul.bf16.gmra.mxu0 %v9486
      %v9516 = vpop.f32.mrf.mxu0
      %v9517 = vadd.f32 0.0, %v9516
      %v9518 = vpop.f32.mrf.mxu0
      %v9519 = vadd.f32 0.0, %v9518
      %9520 = vmatmul.bf16.gmra.mxu0 %v9489
      %v9521 = vpop.f32.mrf.mxu0
      %v9522 = vadd.f32 0.0, %v9521
      %v9523 = vpop.f32.mrf.mxu0
      %v9524 = vadd.f32 0.0, %v9523
      %9525 = vmatmul.bf16.gmra.mxu0 %v9492
      %v9526 = vpop.f32.mrf.mxu0
      %v9527 = vadd.f32 0.0, %v9526
      %v9528 = vpop.f32.mrf.mxu0
      %v9529 = vadd.f32 0.0, %v9528
      %9530 = vmatmul.bf16.gmra.mxu0 %v9495
      %v9531 = vpop.f32.mrf.mxu0
      %v9532 = vadd.f32 0.0, %v9531
      %v9533 = vpop.f32.mrf.mxu0
      %v9534 = vadd.f32 0.0, %v9533
      %9535 = vdwg.mxu0
      %v9536 = vadd.f32 %v9421, %v9507
      %v9537 = vadd.f32 %v9422, %v9509
      %v9538 = vadd.f32 %v9423, %v9512
      %v9539 = vadd.f32 %v9424, %v9514
      %v9540 = vadd.f32 %v9425, %v9517
      %v9541 = vadd.f32 %v9426, %v9519
      %v9542 = vadd.f32 %v9427, %v9522
      %v9543 = vadd.f32 %v9428, %v9524
      %v9544 = vadd.f32 %v9429, %v9527
      %v9545 = vadd.f32 %v9430, %v9529
      %v9546 = vadd.f32 %v9431, %v9532
      %v9547 = vadd.f32 %v9432, %v9534
      %v9548 = vld [vmem:[%s6 + $0x100] sm:$0xf]
      %v9549 = vld [vmem:[%s6 + $0x104] sm:$0xf]
      %v9550 = vld [vmem:[%s6 + $0x108] sm:$0xf]
      %v9551 = vld [vmem:[%s6 + $0x10c] sm:$0xf]
      %v9564 = vunpack.c.l.b16 %v7623
      %v9565 = vunpack.c.l.b16 %v7624
      %v9566 = vunpack.c.l.b16 %v7625
      %v9567 = vunpack.c.l.b16 %v7626
      %v9568 = vunpack.c.l.b16 %v7627
      %v9569 = vunpack.c.l.b16 %v7628
      %v9570 = vunpack.c.l.b16 %v7629
      %v9571 = vunpack.c.l.b16 %v7630
      %v9572 = vunpack.c.l.b16 %v7631
      %v9573 = vunpack.c.l.b16 %v7632
      %v9574 = vunpack.c.l.b16 %v7633
      %v9575 = vunpack.c.l.b16 %v7634
      %v9576 = vpack.c.b16 %v9565, %v9564
      %v9577 = vpack.c.b16 %v9567, %v9566
      %v9578 = vpack.c.b16 %v9569, %v9568
      %v9579 = vpack.c.b16 %v9571, %v9570
      %v9580 = vpack.c.b16 %v9573, %v9572
      %v9581 = vpack.c.b16 %v9575, %v9574
      %v9586 = vunpack.c.l.b16 %v9548
      %v9587 = vunpack.c.l.b16 %v9549
      %v9588 = vunpack.c.l.b16 %v9550
      %v9589 = vunpack.c.l.b16 %v9551
      %v9590 = vpack.c.b16 %v9587, %v9586
      %v9591 = vpack.c.b16 %v9589, %v9588
      %v9595 = vsel %vm7781, %v9576, 0
      %v9598 = vsel %vm7781, %v9577, 0
      %v9601 = vsel %vm7781, %v9578, 0
      %v9604 = vsel %vm7781, %v9579, 0
      %v9607 = vsel %vm7781, %v9580, 0
      %v9610 = vsel %vm7781, %v9581, 0
      %9612 = vmatpush.bf16.msra.mxu0 0
      %9613 = vmatpush.bf16.msra.mxu0 0
      %9614 = vmatpush.bf16.msra.mxu0 0
      %9615 = vmatpush.bf16.msra.mxu0 0
      %9616 = vmatpush.bf16.msra.mxu0 0
      %9617 = vmatpush.bf16.msra.mxu0 0
      %9618 = vmatpush.bf16.msra.mxu0 %v9591
      %9619 = vmatpush.bf16.msra.mxu0 %v9590
      %9620 = vmatmul.bf16.gmra.mxu0 %v9595
      %v9621 = vpop.f32.mrf.mxu0
      %v9622 = vadd.f32 0.0, %v9621
      %v9623 = vpop.f32.mrf.mxu0
      %v9624 = vadd.f32 0.0, %v9623
      %9625 = vmatmul.bf16.gmra.mxu0 %v9598
      %v9626 = vpop.f32.mrf.mxu0
      %v9627 = vadd.f32 0.0, %v9626
      %v9628 = vpop.f32.mrf.mxu0
      %v9629 = vadd.f32 0.0, %v9628
      %9630 = vmatmul.bf16.gmra.mxu0 %v9601
      %v9631 = vpop.f32.mrf.mxu0
      %v9632 = vadd.f32 0.0, %v9631
      %v9633 = vpop.f32.mrf.mxu0
      %v9634 = vadd.f32 0.0, %v9633
      %9635 = vmatmul.bf16.gmra.mxu0 %v9604
      %v9636 = vpop.f32.mrf.mxu0
      %v9637 = vadd.f32 0.0, %v9636
      %v9638 = vpop.f32.mrf.mxu0
      %v9639 = vadd.f32 0.0, %v9638
      %9640 = vmatmul.bf16.gmra.mxu0 %v9607
      %v9641 = vpop.f32.mrf.mxu0
      %v9642 = vadd.f32 0.0, %v9641
      %v9643 = vpop.f32.mrf.mxu0
      %v9644 = vadd.f32 0.0, %v9643
      %9645 = vmatmul.bf16.gmra.mxu0 %v9610
      %v9646 = vpop.f32.mrf.mxu0
      %v9647 = vadd.f32 0.0, %v9646
      %v9648 = vpop.f32.mrf.mxu0
      %v9649 = vadd.f32 0.0, %v9648
      %9650 = vdwg.mxu0
      %v9651 = vadd.f32 %v9536, %v9622
      %v9652 = vadd.f32 %v9537, %v9624
      %v9653 = vadd.f32 %v9538, %v9627
      %v9654 = vadd.f32 %v9539, %v9629
      %v9655 = vadd.f32 %v9540, %v9632
      %v9656 = vadd.f32 %v9541, %v9634
      %v9657 = vadd.f32 %v9542, %v9637
      %v9658 = vadd.f32 %v9543, %v9639
      %v9659 = vadd.f32 %v9544, %v9642
      %v9660 = vadd.f32 %v9545, %v9644
      %v9661 = vadd.f32 %v9546, %v9647
      %v9662 = vadd.f32 %v9547, %v9649
      %v9663 = vld [vmem:[%s6 + $0x110] sm:$0xf]
      %v9664 = vld [vmem:[%s6 + $0x114] sm:$0xf]
      %v9665 = vld [vmem:[%s6 + $0x118] sm:$0xf]
      %v9666 = vld [vmem:[%s6 + $0x11c] sm:$0xf]
      %v9679 = vunpack.c.l.b16 %v7635
      %v9680 = vunpack.c.l.b16 %v7636
      %v9681 = vunpack.c.l.b16 %v7637
      %v9682 = vunpack.c.l.b16 %v7638
      %v9683 = vunpack.c.l.b16 %v7639
      %v9684 = vunpack.c.l.b16 %v7640
      %v9685 = vunpack.c.l.b16 %v7641
      %v9686 = vunpack.c.l.b16 %v7642
      %v9687 = vunpack.c.l.b16 %v7643
      %v9688 = vunpack.c.l.b16 %v7644
      %v9689 = vunpack.c.l.b16 %v7645
      %v9690 = vunpack.c.l.b16 %v7646
      %v9691 = vpack.c.b16 %v9680, %v9679
      %v9692 = vpack.c.b16 %v9682, %v9681
      %v9693 = vpack.c.b16 %v9684, %v9683
      %v9694 = vpack.c.b16 %v9686, %v9685
      %v9695 = vpack.c.b16 %v9688, %v9687
      %v9696 = vpack.c.b16 %v9690, %v9689
      %v9701 = vunpack.c.l.b16 %v9663
      %v9702 = vunpack.c.l.b16 %v9664
      %v9703 = vunpack.c.l.b16 %v9665
      %v9704 = vunpack.c.l.b16 %v9666
      %v9705 = vpack.c.b16 %v9702, %v9701
      %v9706 = vpack.c.b16 %v9704, %v9703
      %v9710 = vsel %vm7781, %v9691, 0
      %v9713 = vsel %vm7781, %v9692, 0
      %v9716 = vsel %vm7781, %v9693, 0
      %v9719 = vsel %vm7781, %v9694, 0
      %v9722 = vsel %vm7781, %v9695, 0
      %v9725 = vsel %vm7781, %v9696, 0
      %9727 = vmatpush.bf16.msra.mxu0 0
      %9728 = vmatpush.bf16.msra.mxu0 0
      %9729 = vmatpush.bf16.msra.mxu0 0
      %9730 = vmatpush.bf16.msra.mxu0 0
      %9731 = vmatpush.bf16.msra.mxu0 0
      %9732 = vmatpush.bf16.msra.mxu0 0
      %9733 = vmatpush.bf16.msra.mxu0 %v9706
      %9734 = vmatpush.bf16.msra.mxu0 %v9705
      %9735 = vmatmul.bf16.gmra.mxu0 %v9710
      %v9736 = vpop.f32.mrf.mxu0
      %v9737 = vadd.f32 0.0, %v9736
      %v9738 = vpop.f32.mrf.mxu0
      %v9739 = vadd.f32 0.0, %v9738
      %9740 = vmatmul.bf16.gmra.mxu0 %v9713
      %v9741 = vpop.f32.mrf.mxu0
      %v9742 = vadd.f32 0.0, %v9741
      %v9743 = vpop.f32.mrf.mxu0
      %v9744 = vadd.f32 0.0, %v9743
      %9745 = vmatmul.bf16.gmra.mxu0 %v9716
      %v9746 = vpop.f32.mrf.mxu0
      %v9747 = vadd.f32 0.0, %v9746
      %v9748 = vpop.f32.mrf.mxu0
      %v9749 = vadd.f32 0.0, %v9748
      %9750 = vmatmul.bf16.gmra.mxu0 %v9719
      %v9751 = vpop.f32.mrf.mxu0
      %v9752 = vadd.f32 0.0, %v9751
      %v9753 = vpop.f32.mrf.mxu0
      %v9754 = vadd.f32 0.0, %v9753
      %9755 = vmatmul.bf16.gmra.mxu0 %v9722
      %v9756 = vpop.f32.mrf.mxu0
      %v9757 = vadd.f32 0.0, %v9756
      %v9758 = vpop.f32.mrf.mxu0
      %v9759 = vadd.f32 0.0, %v9758
      %9760 = vmatmul.bf16.gmra.mxu0 %v9725
      %v9761 = vpop.f32.mrf.mxu0
      %v9762 = vadd.f32 0.0, %v9761
      %v9763 = vpop.f32.mrf.mxu0
      %v9764 = vadd.f32 0.0, %v9763
      %9765 = vdwg.mxu0
      %v9766 = vadd.f32 %v9651, %v9737
      %v9767 = vadd.f32 %v9652, %v9739
      %v9768 = vadd.f32 %v9653, %v9742
      %v9769 = vadd.f32 %v9654, %v9744
      %v9770 = vadd.f32 %v9655, %v9747
      %v9771 = vadd.f32 %v9656, %v9749
      %v9772 = vadd.f32 %v9657, %v9752
      %v9773 = vadd.f32 %v9658, %v9754
      %v9774 = vadd.f32 %v9659, %v9757
      %v9775 = vadd.f32 %v9660, %v9759
      %v9776 = vadd.f32 %v9661, %v9762
      %v9777 = vadd.f32 %v9662, %v9764
      %v9778 = vld [vmem:[%s6 + $0x120] sm:$0xf]
      %v9779 = vld [vmem:[%s6 + $0x124] sm:$0xf]
      %v9780 = vld [vmem:[%s6 + $0x128] sm:$0xf]
      %v9781 = vld [vmem:[%s6 + $0x12c] sm:$0xf]
      %v9794 = vunpack.c.l.b16 %v7647
      %v9795 = vunpack.c.l.b16 %v7648
      %v9796 = vunpack.c.l.b16 %v7649
      %v9797 = vunpack.c.l.b16 %v7650
      %v9798 = vunpack.c.l.b16 %v7651
      %v9799 = vunpack.c.l.b16 %v7652
      %v9800 = vunpack.c.l.b16 %v7653
      %v9801 = vunpack.c.l.b16 %v7654
      %v9802 = vunpack.c.l.b16 %v7655
      %v9803 = vunpack.c.l.b16 %v7656
      %v9804 = vunpack.c.l.b16 %v7657
      %v9805 = vunpack.c.l.b16 %v7658
      %v9806 = vpack.c.b16 %v9795, %v9794
      %v9807 = vpack.c.b16 %v9797, %v9796
      %v9808 = vpack.c.b16 %v9799, %v9798
      %v9809 = vpack.c.b16 %v9801, %v9800
      %v9810 = vpack.c.b16 %v9803, %v9802
      %v9811 = vpack.c.b16 %v9805, %v9804
      %v9816 = vunpack.c.l.b16 %v9778
      %v9817 = vunpack.c.l.b16 %v9779
      %v9818 = vunpack.c.l.b16 %v9780
      %v9819 = vunpack.c.l.b16 %v9781
      %v9820 = vpack.c.b16 %v9817, %v9816
      %v9821 = vpack.c.b16 %v9819, %v9818
      %v9825 = vsel %vm7781, %v9806, 0
      %v9828 = vsel %vm7781, %v9807, 0
      %v9831 = vsel %vm7781, %v9808, 0
      %v9834 = vsel %vm7781, %v9809, 0
      %v9837 = vsel %vm7781, %v9810, 0
      %v9840 = vsel %vm7781, %v9811, 0
      %9842 = vmatpush.bf16.msra.mxu0 0
      %9843 = vmatpush.bf16.msra.mxu0 0
      %9844 = vmatpush.bf16.msra.mxu0 0
      %9845 = vmatpush.bf16.msra.mxu0 0
      %9846 = vmatpush.bf16.msra.mxu0 0
      %9847 = vmatpush.bf16.msra.mxu0 0
      %9848 = vmatpush.bf16.msra.mxu0 %v9821
      %9849 = vmatpush.bf16.msra.mxu0 %v9820
      %9850 = vmatmul.bf16.gmra.mxu0 %v9825
      %v9851 = vpop.f32.mrf.mxu0
      %v9852 = vadd.f32 0.0, %v9851
      %v9853 = vpop.f32.mrf.mxu0
      %v9854 = vadd.f32 0.0, %v9853
      %9855 = vmatmul.bf16.gmra.mxu0 %v9828
      %v9856 = vpop.f32.mrf.mxu0
      %v9857 = vadd.f32 0.0, %v9856
      %v9858 = vpop.f32.mrf.mxu0
      %v9859 = vadd.f32 0.0, %v9858
      %9860 = vmatmul.bf16.gmra.mxu0 %v9831
      %v9861 = vpop.f32.mrf.mxu0
      %v9862 = vadd.f32 0.0, %v9861
      %v9863 = vpop.f32.mrf.mxu0
      %v9864 = vadd.f32 0.0, %v9863
      %9865 = vmatmul.bf16.gmra.mxu0 %v9834
      %v9866 = vpop.f32.mrf.mxu0
      %v9867 = vadd.f32 0.0, %v9866
      %v9868 = vpop.f32.mrf.mxu0
      %v9869 = vadd.f32 0.0, %v9868
      %9870 = vmatmul.bf16.gmra.mxu0 %v9837
      %v9871 = vpop.f32.mrf.mxu0
      %v9872 = vadd.f32 0.0, %v9871
      %v9873 = vpop.f32.mrf.mxu0
      %v9874 = vadd.f32 0.0, %v9873
      %9875 = vmatmul.bf16.gmra.mxu0 %v9840
      %v9876 = vpop.f32.mrf.mxu0
      %v9877 = vadd.f32 0.0, %v9876
      %v9878 = vpop.f32.mrf.mxu0
      %v9879 = vadd.f32 0.0, %v9878
      %9880 = vdwg.mxu0
      %v9881 = vadd.f32 %v9766, %v9852
      %v9882 = vadd.f32 %v9767, %v9854
      %v9883 = vadd.f32 %v9768, %v9857
      %v9884 = vadd.f32 %v9769, %v9859
      %v9885 = vadd.f32 %v9770, %v9862
      %v9886 = vadd.f32 %v9771, %v9864
      %v9887 = vadd.f32 %v9772, %v9867
      %v9888 = vadd.f32 %v9773, %v9869
      %v9889 = vadd.f32 %v9774, %v9872
      %v9890 = vadd.f32 %v9775, %v9874
      %v9891 = vadd.f32 %v9776, %v9877
      %v9892 = vadd.f32 %v9777, %v9879
      %v9893 = vld [vmem:[%s6 + $0x130] sm:$0xf]
      %v9894 = vld [vmem:[%s6 + $0x134] sm:$0xf]
      %v9895 = vld [vmem:[%s6 + $0x138] sm:$0xf]
      %v9896 = vld [vmem:[%s6 + $0x13c] sm:$0xf]
      %v9909 = vunpack.c.l.b16 %v7659
      %v9910 = vunpack.c.l.b16 %v7660
      %v9911 = vunpack.c.l.b16 %v7661
      %v9912 = vunpack.c.l.b16 %v7662
      %v9913 = vunpack.c.l.b16 %v7663
      %v9914 = vunpack.c.l.b16 %v7664
      %v9915 = vunpack.c.l.b16 %v7665
      %v9916 = vunpack.c.l.b16 %v7666
      %v9917 = vunpack.c.l.b16 %v7667
      %v9918 = vunpack.c.l.b16 %v7668
      %v9919 = vunpack.c.l.b16 %v7669
      %v9920 = vunpack.c.l.b16 %v7670
      %v9921 = vpack.c.b16 %v9910, %v9909
      %v9922 = vpack.c.b16 %v9912, %v9911
      %v9923 = vpack.c.b16 %v9914, %v9913
      %v9924 = vpack.c.b16 %v9916, %v9915
      %v9925 = vpack.c.b16 %v9918, %v9917
      %v9926 = vpack.c.b16 %v9920, %v9919
      %v9931 = vunpack.c.l.b16 %v9893
      %v9932 = vunpack.c.l.b16 %v9894
      %v9933 = vunpack.c.l.b16 %v9895
      %v9934 = vunpack.c.l.b16 %v9896
      %v9935 = vpack.c.b16 %v9932, %v9931
      %v9936 = vpack.c.b16 %v9934, %v9933
      %v9940 = vsel %vm7781, %v9921, 0
      %v9943 = vsel %vm7781, %v9922, 0
      %v9946 = vsel %vm7781, %v9923, 0
      %v9949 = vsel %vm7781, %v9924, 0
      %v9952 = vsel %vm7781, %v9925, 0
      %v9955 = vsel %vm7781, %v9926, 0
      %9957 = vmatpush.bf16.msra.mxu0 0
      %9958 = vmatpush.bf16.msra.mxu0 0
      %9959 = vmatpush.bf16.msra.mxu0 0
      %9960 = vmatpush.bf16.msra.mxu0 0
      %9961 = vmatpush.bf16.msra.mxu0 0
      %9962 = vmatpush.bf16.msra.mxu0 0
      %9963 = vmatpush.bf16.msra.mxu0 %v9936
      %9964 = vmatpush.bf16.msra.mxu0 %v9935
      %9965 = vmatmul.bf16.gmra.mxu0 %v9940
      %v9966 = vpop.f32.mrf.mxu0
      %v9967 = vadd.f32 0.0, %v9966
      %v9968 = vpop.f32.mrf.mxu0
      %v9969 = vadd.f32 0.0, %v9968
      %9970 = vmatmul.bf16.gmra.mxu0 %v9943
      %v9971 = vpop.f32.mrf.mxu0
      %v9972 = vadd.f32 0.0, %v9971
      %v9973 = vpop.f32.mrf.mxu0
      %v9974 = vadd.f32 0.0, %v9973
      %9975 = vmatmul.bf16.gmra.mxu0 %v9946
      %v9976 = vpop.f32.mrf.mxu0
      %v9977 = vadd.f32 0.0, %v9976
      %v9978 = vpop.f32.mrf.mxu0
      %v9979 = vadd.f32 0.0, %v9978
      %9980 = vmatmul.bf16.gmra.mxu0 %v9949
      %v9981 = vpop.f32.mrf.mxu0
      %v9982 = vadd.f32 0.0, %v9981
      %v9983 = vpop.f32.mrf.mxu0
      %v9984 = vadd.f32 0.0, %v9983
      %9985 = vmatmul.bf16.gmra.mxu0 %v9952
      %v9986 = vpop.f32.mrf.mxu0
      %v9987 = vadd.f32 0.0, %v9986
      %v9988 = vpop.f32.mrf.mxu0
      %v9989 = vadd.f32 0.0, %v9988
      %9990 = vmatmul.bf16.gmra.mxu0 %v9955
      %v9991 = vpop.f32.mrf.mxu0
      %v9992 = vadd.f32 0.0, %v9991
      %v9993 = vpop.f32.mrf.mxu0
      %v9994 = vadd.f32 0.0, %v9993
      %9995 = vdwg.mxu0
      %v9996 = vadd.f32 %v9881, %v9967
      %v9997 = vadd.f32 %v9882, %v9969
      %v9998 = vadd.f32 %v9883, %v9972
      %v9999 = vadd.f32 %v9884, %v9974
      %v10000 = vadd.f32 %v9885, %v9977
      %v10001 = vadd.f32 %v9886, %v9979
      %v10002 = vadd.f32 %v9887, %v9982
      %v10003 = vadd.f32 %v9888, %v9984
      %v10004 = vadd.f32 %v9889, %v9987
      %v10005 = vadd.f32 %v9890, %v9989
      %v10006 = vadd.f32 %v9891, %v9992
      %v10007 = vadd.f32 %v9892, %v9994
      %v10008 = vld [vmem:[%s6 + $0x140] sm:$0xf]
      %v10009 = vld [vmem:[%s6 + $0x144] sm:$0xf]
      %v10010 = vld [vmem:[%s6 + $0x148] sm:$0xf]
      %v10011 = vld [vmem:[%s6 + $0x14c] sm:$0xf]
      %v10024 = vunpack.c.l.b16 %v7671
      %v10025 = vunpack.c.l.b16 %v7672
      %v10026 = vunpack.c.l.b16 %v7673
      %v10027 = vunpack.c.l.b16 %v7674
      %v10028 = vunpack.c.l.b16 %v7675
      %v10029 = vunpack.c.l.b16 %v7676
      %v10030 = vunpack.c.l.b16 %v7677
      %v10031 = vunpack.c.l.b16 %v7678
      %v10032 = vunpack.c.l.b16 %v7679
      %v10033 = vunpack.c.l.b16 %v7680
      %v10034 = vunpack.c.l.b16 %v7681
      %v10035 = vunpack.c.l.b16 %v7682
      %v10036 = vpack.c.b16 %v10025, %v10024
      %v10037 = vpack.c.b16 %v10027, %v10026
      %v10038 = vpack.c.b16 %v10029, %v10028
      %v10039 = vpack.c.b16 %v10031, %v10030
      %v10040 = vpack.c.b16 %v10033, %v10032
      %v10041 = vpack.c.b16 %v10035, %v10034
      %v10046 = vunpack.c.l.b16 %v10008
      %v10047 = vunpack.c.l.b16 %v10009
      %v10048 = vunpack.c.l.b16 %v10010
      %v10049 = vunpack.c.l.b16 %v10011
      %v10050 = vpack.c.b16 %v10047, %v10046
      %v10051 = vpack.c.b16 %v10049, %v10048
      %v10055 = vsel %vm7781, %v10036, 0
      %v10058 = vsel %vm7781, %v10037, 0
      %v10061 = vsel %vm7781, %v10038, 0
      %v10064 = vsel %vm7781, %v10039, 0
      %v10067 = vsel %vm7781, %v10040, 0
      %v10070 = vsel %vm7781, %v10041, 0
      %10072 = vmatpush.bf16.msra.mxu0 0
      %10073 = vmatpush.bf16.msra.mxu0 0
      %10074 = vmatpush.bf16.msra.mxu0 0
      %10075 = vmatpush.bf16.msra.mxu0 0
      %10076 = vmatpush.bf16.msra.mxu0 0
      %10077 = vmatpush.bf16.msra.mxu0 0
      %10078 = vmatpush.bf16.msra.mxu0 %v10051
      %10079 = vmatpush.bf16.msra.mxu0 %v10050
      %10080 = vmatmul.bf16.gmra.mxu0 %v10055
      %v10081 = vpop.f32.mrf.mxu0
      %v10082 = vadd.f32 0.0, %v10081
      %v10083 = vpop.f32.mrf.mxu0
      %v10084 = vadd.f32 0.0, %v10083
      %10085 = vmatmul.bf16.gmra.mxu0 %v10058
      %v10086 = vpop.f32.mrf.mxu0
      %v10087 = vadd.f32 0.0, %v10086
      %v10088 = vpop.f32.mrf.mxu0
      %v10089 = vadd.f32 0.0, %v10088
      %10090 = vmatmul.bf16.gmra.mxu0 %v10061
      %v10091 = vpop.f32.mrf.mxu0
      %v10092 = vadd.f32 0.0, %v10091
      %v10093 = vpop.f32.mrf.mxu0
      %v10094 = vadd.f32 0.0, %v10093
      %10095 = vmatmul.bf16.gmra.mxu0 %v10064
      %v10096 = vpop.f32.mrf.mxu0
      %v10097 = vadd.f32 0.0, %v10096
      %v10098 = vpop.f32.mrf.mxu0
      %v10099 = vadd.f32 0.0, %v10098
      %10100 = vmatmul.bf16.gmra.mxu0 %v10067
      %v10101 = vpop.f32.mrf.mxu0
      %v10102 = vadd.f32 0.0, %v10101
      %v10103 = vpop.f32.mrf.mxu0
      %v10104 = vadd.f32 0.0, %v10103
      %10105 = vmatmul.bf16.gmra.mxu0 %v10070
      %v10106 = vpop.f32.mrf.mxu0
      %v10107 = vadd.f32 0.0, %v10106
      %v10108 = vpop.f32.mrf.mxu0
      %v10109 = vadd.f32 0.0, %v10108
      %10110 = vdwg.mxu0
      %v10111 = vadd.f32 %v9996, %v10082
      %v10112 = vadd.f32 %v9997, %v10084
      %v10113 = vadd.f32 %v9998, %v10087
      %v10114 = vadd.f32 %v9999, %v10089
      %v10115 = vadd.f32 %v10000, %v10092
      %v10116 = vadd.f32 %v10001, %v10094
      %v10117 = vadd.f32 %v10002, %v10097
      %v10118 = vadd.f32 %v10003, %v10099
      %v10119 = vadd.f32 %v10004, %v10102
      %v10120 = vadd.f32 %v10005, %v10104
      %v10121 = vadd.f32 %v10006, %v10107
      %v10122 = vadd.f32 %v10007, %v10109
      %v10123 = vld [vmem:[%s6 + $0x150] sm:$0xf]
      %v10124 = vld [vmem:[%s6 + $0x154] sm:$0xf]
      %v10125 = vld [vmem:[%s6 + $0x158] sm:$0xf]
      %v10126 = vld [vmem:[%s6 + $0x15c] sm:$0xf]
      %v10139 = vunpack.c.l.b16 %v7683
      %v10140 = vunpack.c.l.b16 %v7684
      %v10141 = vunpack.c.l.b16 %v7685
      %v10142 = vunpack.c.l.b16 %v7686
      %v10143 = vunpack.c.l.b16 %v7687
      %v10144 = vunpack.c.l.b16 %v7688
      %v10145 = vunpack.c.l.b16 %v7689
      %v10146 = vunpack.c.l.b16 %v7690
      %v10147 = vunpack.c.l.b16 %v7691
      %v10148 = vunpack.c.l.b16 %v7692
      %v10149 = vunpack.c.l.b16 %v7693
      %v10150 = vunpack.c.l.b16 %v7694
      %v10151 = vpack.c.b16 %v10140, %v10139
      %v10152 = vpack.c.b16 %v10142, %v10141
      %v10153 = vpack.c.b16 %v10144, %v10143
      %v10154 = vpack.c.b16 %v10146, %v10145
      %v10155 = vpack.c.b16 %v10148, %v10147
      %v10156 = vpack.c.b16 %v10150, %v10149
      %v10161 = vunpack.c.l.b16 %v10123
      %v10162 = vunpack.c.l.b16 %v10124
      %v10163 = vunpack.c.l.b16 %v10125
      %v10164 = vunpack.c.l.b16 %v10126
      %v10165 = vpack.c.b16 %v10162, %v10161
      %v10166 = vpack.c.b16 %v10164, %v10163
      %v10170 = vsel %vm7781, %v10151, 0
      %v10173 = vsel %vm7781, %v10152, 0
      %v10176 = vsel %vm7781, %v10153, 0
      %v10179 = vsel %vm7781, %v10154, 0
      %v10182 = vsel %vm7781, %v10155, 0
      %v10185 = vsel %vm7781, %v10156, 0
      %10187 = vmatpush.bf16.msra.mxu0 0
      %10188 = vmatpush.bf16.msra.mxu0 0
      %10189 = vmatpush.bf16.msra.mxu0 0
      %10190 = vmatpush.bf16.msra.mxu0 0
      %10191 = vmatpush.bf16.msra.mxu0 0
      %10192 = vmatpush.bf16.msra.mxu0 0
      %10193 = vmatpush.bf16.msra.mxu0 %v10166
      %10194 = vmatpush.bf16.msra.mxu0 %v10165
      %10195 = vmatmul.bf16.gmra.mxu0 %v10170
      %v10196 = vpop.f32.mrf.mxu0
      %v10197 = vadd.f32 0.0, %v10196
      %v10198 = vpop.f32.mrf.mxu0
      %v10199 = vadd.f32 0.0, %v10198
      %10200 = vmatmul.bf16.gmra.mxu0 %v10173
      %v10201 = vpop.f32.mrf.mxu0
      %v10202 = vadd.f32 0.0, %v10201
      %v10203 = vpop.f32.mrf.mxu0
      %v10204 = vadd.f32 0.0, %v10203
      %10205 = vmatmul.bf16.gmra.mxu0 %v10176
      %v10206 = vpop.f32.mrf.mxu0
      %v10207 = vadd.f32 0.0, %v10206
      %v10208 = vpop.f32.mrf.mxu0
      %v10209 = vadd.f32 0.0, %v10208
      %10210 = vmatmul.bf16.gmra.mxu0 %v10179
      %v10211 = vpop.f32.mrf.mxu0
      %v10212 = vadd.f32 0.0, %v10211
      %v10213 = vpop.f32.mrf.mxu0
      %v10214 = vadd.f32 0.0, %v10213
      %10215 = vmatmul.bf16.gmra.mxu0 %v10182
      %v10216 = vpop.f32.mrf.mxu0
      %v10217 = vadd.f32 0.0, %v10216
      %v10218 = vpop.f32.mrf.mxu0
      %v10219 = vadd.f32 0.0, %v10218
      %10220 = vmatmul.bf16.gmra.mxu0 %v10185
      %v10221 = vpop.f32.mrf.mxu0
      %v10222 = vadd.f32 0.0, %v10221
      %v10223 = vpop.f32.mrf.mxu0
      %v10224 = vadd.f32 0.0, %v10223
      %10225 = vdwg.mxu0
      %v10226 = vadd.f32 %v10111, %v10197
      %v10227 = vadd.f32 %v10112, %v10199
      %v10228 = vadd.f32 %v10113, %v10202
      %v10229 = vadd.f32 %v10114, %v10204
      %v10230 = vadd.f32 %v10115, %v10207
      %v10231 = vadd.f32 %v10116, %v10209
      %v10232 = vadd.f32 %v10117, %v10212
      %v10233 = vadd.f32 %v10118, %v10214
      %v10234 = vadd.f32 %v10119, %v10217
      %v10235 = vadd.f32 %v10120, %v10219
      %v10236 = vadd.f32 %v10121, %v10222
      %v10237 = vadd.f32 %v10122, %v10224
      %v10238 = vld [vmem:[%s6 + $0x160] sm:$0xf]
      %v10239 = vld [vmem:[%s6 + $0x164] sm:$0xf]
      %v10240 = vld [vmem:[%s6 + $0x168] sm:$0xf]
      %v10241 = vld [vmem:[%s6 + $0x16c] sm:$0xf]
      %v10254 = vunpack.c.l.b16 %v7695
      %v10255 = vunpack.c.l.b16 %v7696
      %v10256 = vunpack.c.l.b16 %v7697
      %v10257 = vunpack.c.l.b16 %v7698
      %v10258 = vunpack.c.l.b16 %v7699
      %v10259 = vunpack.c.l.b16 %v7700
      %v10260 = vunpack.c.l.b16 %v7701
      %v10261 = vunpack.c.l.b16 %v7702
      %v10262 = vunpack.c.l.b16 %v7703
      %v10263 = vunpack.c.l.b16 %v7704
      %v10264 = vunpack.c.l.b16 %v7705
      %v10265 = vunpack.c.l.b16 %v7706
      %v10266 = vpack.c.b16 %v10255, %v10254
      %v10267 = vpack.c.b16 %v10257, %v10256
      %v10268 = vpack.c.b16 %v10259, %v10258
      %v10269 = vpack.c.b16 %v10261, %v10260
      %v10270 = vpack.c.b16 %v10263, %v10262
      %v10271 = vpack.c.b16 %v10265, %v10264
      %v10276 = vunpack.c.l.b16 %v10238
      %v10277 = vunpack.c.l.b16 %v10239
      %v10278 = vunpack.c.l.b16 %v10240
      %v10279 = vunpack.c.l.b16 %v10241
      %v10280 = vpack.c.b16 %v10277, %v10276
      %v10281 = vpack.c.b16 %v10279, %v10278
      %v10285 = vsel %vm7781, %v10266, 0
      %v10288 = vsel %vm7781, %v10267, 0
      %v10291 = vsel %vm7781, %v10268, 0
      %v10294 = vsel %vm7781, %v10269, 0
      %v10297 = vsel %vm7781, %v10270, 0
      %v10300 = vsel %vm7781, %v10271, 0
      %10302 = vmatpush.bf16.msra.mxu0 0
      %10303 = vmatpush.bf16.msra.mxu0 0
      %10304 = vmatpush.bf16.msra.mxu0 0
      %10305 = vmatpush.bf16.msra.mxu0 0
      %10306 = vmatpush.bf16.msra.mxu0 0
      %10307 = vmatpush.bf16.msra.mxu0 0
      %10308 = vmatpush.bf16.msra.mxu0 %v10281
      %10309 = vmatpush.bf16.msra.mxu0 %v10280
      %10310 = vmatmul.bf16.gmra.mxu0 %v10285
      %v10311 = vpop.f32.mrf.mxu0
      %v10312 = vadd.f32 0.0, %v10311
      %v10313 = vpop.f32.mrf.mxu0
      %v10314 = vadd.f32 0.0, %v10313
      %10315 = vmatmul.bf16.gmra.mxu0 %v10288
      %v10316 = vpop.f32.mrf.mxu0
      %v10317 = vadd.f32 0.0, %v10316
      %v10318 = vpop.f32.mrf.mxu0
      %v10319 = vadd.f32 0.0, %v10318
      %10320 = vmatmul.bf16.gmra.mxu0 %v10291
      %v10321 = vpop.f32.mrf.mxu0
      %v10322 = vadd.f32 0.0, %v10321
      %v10323 = vpop.f32.mrf.mxu0
      %v10324 = vadd.f32 0.0, %v10323
      %10325 = vmatmul.bf16.gmra.mxu0 %v10294
      %v10326 = vpop.f32.mrf.mxu0
      %v10327 = vadd.f32 0.0, %v10326
      %v10328 = vpop.f32.mrf.mxu0
      %v10329 = vadd.f32 0.0, %v10328
      %10330 = vmatmul.bf16.gmra.mxu0 %v10297
      %v10331 = vpop.f32.mrf.mxu0
      %v10332 = vadd.f32 0.0, %v10331
      %v10333 = vpop.f32.mrf.mxu0
      %v10334 = vadd.f32 0.0, %v10333
      %10335 = vmatmul.bf16.gmra.mxu0 %v10300
      %v10336 = vpop.f32.mrf.mxu0
      %v10337 = vadd.f32 0.0, %v10336
      %v10338 = vpop.f32.mrf.mxu0
      %v10339 = vadd.f32 0.0, %v10338
      %10340 = vdwg.mxu0
      %v10341 = vadd.f32 %v10226, %v10312
      %v10342 = vadd.f32 %v10227, %v10314
      %v10343 = vadd.f32 %v10228, %v10317
      %v10344 = vadd.f32 %v10229, %v10319
      %v10345 = vadd.f32 %v10230, %v10322
      %v10346 = vadd.f32 %v10231, %v10324
      %v10347 = vadd.f32 %v10232, %v10327
      %v10348 = vadd.f32 %v10233, %v10329
      %v10349 = vadd.f32 %v10234, %v10332
      %v10350 = vadd.f32 %v10235, %v10334
      %v10351 = vadd.f32 %v10236, %v10337
      %v10352 = vadd.f32 %v10237, %v10339
      %v10353 = vld [vmem:[%s6 + $0x170] sm:$0xf]
      %v10354 = vld [vmem:[%s6 + $0x174] sm:$0xf]
      %v10355 = vld [vmem:[%s6 + $0x178] sm:$0xf]
      %v10356 = vld [vmem:[%s6 + $0x17c] sm:$0xf]
      %v10369 = vunpack.c.l.b16 %v7707
      %v10370 = vunpack.c.l.b16 %v7708
      %v10371 = vunpack.c.l.b16 %v7709
      %v10372 = vunpack.c.l.b16 %v7710
      %v10373 = vunpack.c.l.b16 %v7711
      %v10374 = vunpack.c.l.b16 %v7712
      %v10375 = vunpack.c.l.b16 %v7713
      %v10376 = vunpack.c.l.b16 %v7714
      %v10377 = vunpack.c.l.b16 %v7715
      %v10378 = vunpack.c.l.b16 %v7716
      %v10379 = vunpack.c.l.b16 %v7717
      %v10380 = vunpack.c.l.b16 %v7718
      %v10381 = vpack.c.b16 %v10370, %v10369
      %v10382 = vpack.c.b16 %v10372, %v10371
      %v10383 = vpack.c.b16 %v10374, %v10373
      %v10384 = vpack.c.b16 %v10376, %v10375
      %v10385 = vpack.c.b16 %v10378, %v10377
      %v10386 = vpack.c.b16 %v10380, %v10379
      %v10391 = vunpack.c.l.b16 %v10353
      %v10392 = vunpack.c.l.b16 %v10354
      %v10393 = vunpack.c.l.b16 %v10355
      %v10394 = vunpack.c.l.b16 %v10356
      %v10395 = vpack.c.b16 %v10392, %v10391
      %v10396 = vpack.c.b16 %v10394, %v10393
      %v10400 = vsel %vm7781, %v10381, 0
      %v10403 = vsel %vm7781, %v10382, 0
      %v10406 = vsel %vm7781, %v10383, 0
      %v10409 = vsel %vm7781, %v10384, 0
      %v10412 = vsel %vm7781, %v10385, 0
      %v10415 = vsel %vm7781, %v10386, 0
      %10417 = vmatpush.bf16.msra.mxu0 0
      %10418 = vmatpush.bf16.msra.mxu0 0
      %10419 = vmatpush.bf16.msra.mxu0 0
      %10420 = vmatpush.bf16.msra.mxu0 0
      %10421 = vmatpush.bf16.msra.mxu0 0
      %10422 = vmatpush.bf16.msra.mxu0 0
      %10423 = vmatpush.bf16.msra.mxu0 %v10396
      %10424 = vmatpush.bf16.msra.mxu0 %v10395
      %10425 = vmatmul.bf16.gmra.mxu0 %v10400
      %v10426 = vpop.f32.mrf.mxu0
      %v10427 = vadd.f32 0.0, %v10426
      %v10428 = vpop.f32.mrf.mxu0
      %v10429 = vadd.f32 0.0, %v10428
      %10430 = vmatmul.bf16.gmra.mxu0 %v10403
      %v10431 = vpop.f32.mrf.mxu0
      %v10432 = vadd.f32 0.0, %v10431
      %v10433 = vpop.f32.mrf.mxu0
      %v10434 = vadd.f32 0.0, %v10433
      %10435 = vmatmul.bf16.gmra.mxu0 %v10406
      %v10436 = vpop.f32.mrf.mxu0
      %v10437 = vadd.f32 0.0, %v10436
      %v10438 = vpop.f32.mrf.mxu0
      %v10439 = vadd.f32 0.0, %v10438
      %10440 = vmatmul.bf16.gmra.mxu0 %v10409
      %v10441 = vpop.f32.mrf.mxu0
      %v10442 = vadd.f32 0.0, %v10441
      %v10443 = vpop.f32.mrf.mxu0
      %v10444 = vadd.f32 0.0, %v10443
      %10445 = vmatmul.bf16.gmra.mxu0 %v10412
      %v10446 = vpop.f32.mrf.mxu0
      %v10447 = vadd.f32 0.0, %v10446
      %v10448 = vpop.f32.mrf.mxu0
      %v10449 = vadd.f32 0.0, %v10448
      %10450 = vmatmul.bf16.gmra.mxu0 %v10415
      %v10451 = vpop.f32.mrf.mxu0
      %v10452 = vadd.f32 0.0, %v10451
      %v10453 = vpop.f32.mrf.mxu0
      %v10454 = vadd.f32 0.0, %v10453
      %10455 = vdwg.mxu0
      %v10456 = vadd.f32 %v10341, %v10427
      %v10457 = vadd.f32 %v10342, %v10429
      %v10458 = vadd.f32 %v10343, %v10432
      %v10459 = vadd.f32 %v10344, %v10434
      %v10460 = vadd.f32 %v10345, %v10437
      %v10461 = vadd.f32 %v10346, %v10439
      %v10462 = vadd.f32 %v10347, %v10442
      %v10463 = vadd.f32 %v10348, %v10444
      %v10464 = vadd.f32 %v10349, %v10447
      %v10465 = vadd.f32 %v10350, %v10449
      %v10466 = vadd.f32 %v10351, %v10452
      %v10467 = vadd.f32 %v10352, %v10454
      %v10468 = vld [vmem:[%s6 + $0x180] sm:$0xf]
      %v10469 = vld [vmem:[%s6 + $0x184] sm:$0xf]
      %v10470 = vld [vmem:[%s6 + $0x188] sm:$0xf]
      %v10471 = vld [vmem:[%s6 + $0x18c] sm:$0xf]
      %v10484 = vunpack.c.l.b16 %v7719
      %v10485 = vunpack.c.l.b16 %v7720
      %v10486 = vunpack.c.l.b16 %v7721
      %v10487 = vunpack.c.l.b16 %v7722
      %v10488 = vunpack.c.l.b16 %v7723
      %v10489 = vunpack.c.l.b16 %v7724
      %v10490 = vunpack.c.l.b16 %v7725
      %v10491 = vunpack.c.l.b16 %v7726
      %v10492 = vunpack.c.l.b16 %v7727
      %v10493 = vunpack.c.l.b16 %v7728
      %v10494 = vunpack.c.l.b16 %v7729
      %v10495 = vunpack.c.l.b16 %v7730
      %v10496 = vpack.c.b16 %v10485, %v10484
      %v10497 = vpack.c.b16 %v10487, %v10486
      %v10498 = vpack.c.b16 %v10489, %v10488
      %v10499 = vpack.c.b16 %v10491, %v10490
      %v10500 = vpack.c.b16 %v10493, %v10492
      %v10501 = vpack.c.b16 %v10495, %v10494
      %v10506 = vunpack.c.l.b16 %v10468
      %v10507 = vunpack.c.l.b16 %v10469
      %v10508 = vunpack.c.l.b16 %v10470
      %v10509 = vunpack.c.l.b16 %v10471
      %v10510 = vpack.c.b16 %v10507, %v10506
      %v10511 = vpack.c.b16 %v10509, %v10508
      %v10515 = vsel %vm7781, %v10496, 0
      %v10518 = vsel %vm7781, %v10497, 0
      %v10521 = vsel %vm7781, %v10498, 0
      %v10524 = vsel %vm7781, %v10499, 0
      %v10527 = vsel %vm7781, %v10500, 0
      %v10530 = vsel %vm7781, %v10501, 0
      %10532 = vmatpush.bf16.msra.mxu0 0
      %10533 = vmatpush.bf16.msra.mxu0 0
      %10534 = vmatpush.bf16.msra.mxu0 0
      %10535 = vmatpush.bf16.msra.mxu0 0
      %10536 = vmatpush.bf16.msra.mxu0 0
      %10537 = vmatpush.bf16.msra.mxu0 0
      %10538 = vmatpush.bf16.msra.mxu0 %v10511
      %10539 = vmatpush.bf16.msra.mxu0 %v10510
      %10540 = vmatmul.bf16.gmra.mxu0 %v10515
      %v10541 = vpop.f32.mrf.mxu0
      %v10542 = vadd.f32 0.0, %v10541
      %v10543 = vpop.f32.mrf.mxu0
      %v10544 = vadd.f32 0.0, %v10543
      %10545 = vmatmul.bf16.gmra.mxu0 %v10518
      %v10546 = vpop.f32.mrf.mxu0
      %v10547 = vadd.f32 0.0, %v10546
      %v10548 = vpop.f32.mrf.mxu0
      %v10549 = vadd.f32 0.0, %v10548
      %10550 = vmatmul.bf16.gmra.mxu0 %v10521
      %v10551 = vpop.f32.mrf.mxu0
      %v10552 = vadd.f32 0.0, %v10551
      %v10553 = vpop.f32.mrf.mxu0
      %v10554 = vadd.f32 0.0, %v10553
      %10555 = vmatmul.bf16.gmra.mxu0 %v10524
      %v10556 = vpop.f32.mrf.mxu0
      %v10557 = vadd.f32 0.0, %v10556
      %v10558 = vpop.f32.mrf.mxu0
      %v10559 = vadd.f32 0.0, %v10558
      %10560 = vmatmul.bf16.gmra.mxu0 %v10527
      %v10561 = vpop.f32.mrf.mxu0
      %v10562 = vadd.f32 0.0, %v10561
      %v10563 = vpop.f32.mrf.mxu0
      %v10564 = vadd.f32 0.0, %v10563
      %10565 = vmatmul.bf16.gmra.mxu0 %v10530
      %v10566 = vpop.f32.mrf.mxu0
      %v10567 = vadd.f32 0.0, %v10566
      %v10568 = vpop.f32.mrf.mxu0
      %v10569 = vadd.f32 0.0, %v10568
      %10570 = vdwg.mxu0
      %v10571 = vadd.f32 %v10456, %v10542
      %v10572 = vadd.f32 %v10457, %v10544
      %v10573 = vadd.f32 %v10458, %v10547
      %v10574 = vadd.f32 %v10459, %v10549
      %v10575 = vadd.f32 %v10460, %v10552
      %v10576 = vadd.f32 %v10461, %v10554
      %v10577 = vadd.f32 %v10462, %v10557
      %v10578 = vadd.f32 %v10463, %v10559
      %v10579 = vadd.f32 %v10464, %v10562
      %v10580 = vadd.f32 %v10465, %v10564
      %v10581 = vadd.f32 %v10466, %v10567
      %v10582 = vadd.f32 %v10467, %v10569
      %v10583 = vld [vmem:[%s7] sm:$0x1]
      %v10585 = vperm.slane %v10583, 0
      %v10587 = vadd.f32 %v10571, %v10585
      %v10588 = vadd.f32 %v10572, %v10585
      %v10589 = vadd.f32 %v10573, %v10585
      %v10590 = vadd.f32 %v10574, %v10585
      %v10591 = vadd.f32 %v10575, %v10585
      %v10592 = vadd.f32 %v10576, %v10585
      %v10593 = vadd.f32 %v10577, %v10585
      %v10594 = vadd.f32 %v10578, %v10585
      %v10595 = vadd.f32 %v10579, %v10585
      %v10596 = vadd.f32 %v10580, %v10585
      %v10597 = vadd.f32 %v10581, %v10585
      %v10598 = vadd.f32 %v10582, %v10585
      %v10599 = vmax.f32 %v10587, 0.0
      %v10600 = vmax.f32 %v10588, 0.0
      %v10601 = vmax.f32 %v10589, 0.0
      %v10602 = vmax.f32 %v10590, 0.0
      %v10603 = vmax.f32 %v10591, 0.0
      %v10604 = vmax.f32 %v10592, 0.0
      %v10605 = vmax.f32 %v10593, 0.0
      %v10606 = vmax.f32 %v10594, 0.0
      %v10607 = vmax.f32 %v10595, 0.0
      %v10608 = vmax.f32 %v10596, 0.0
      %v10609 = vmax.f32 %v10597, 0.0
      %v10610 = vmax.f32 %v10598, 0.0
      %v10611 = vmax.f32 %v10599, %v10602
      %v10612 = vmax.f32 %v10600, %v10603
      %v10613 = vmax.f32 %v10601, %v10604
      %v10614 = vmax.f32 %v10605, %v10608
      %v10615 = vmax.f32 %v10606, %v10609
      %v10616 = vmax.f32 %v10607, %v10610
      %v10617 = vmax.f32 %v10611, %v10614
      %v10618 = vmax.f32 %v10612, %v10615
      %v10619 = vmax.f32 %v10613, %v10616
      %v10620 = vpack.c.bf16 %v10618, %v10617
      %v10621 = vpack.c.bf16 %v10619, %v10619
      %v10622 = vld [vmem:[%s2] sm:$0xf]
      %v10623 = vld [vmem:[%s2 + $0x4] sm:$0xf]
      %v10624 = vld [vmem:[%s2 + $0x8] sm:$0xf]
      %v10625 = vld [vmem:[%s2 + $0xc] sm:$0xf]
      %v10626 = vld [vmem:[%s2 + $0x10] sm:$0xf]
      %v10627 = vld [vmem:[%s2 + $0x14] sm:$0xf]
      %v10628 = vld [vmem:[%s2 + $0x18] sm:$0xf]
      %v10629 = vld [vmem:[%s2 + $0x1c] sm:$0xf]
      %v10630 = vld [vmem:[%s2 + $0x20] sm:$0xf]
      %v10631 = vld [vmem:[%s2 + $0x24] sm:$0xf]
      %v10632 = vld [vmem:[%s2 + $0x28] sm:$0xf]
      %v10633 = vld [vmem:[%s2 + $0x2c] sm:$0xf]
      %v10634 = vld [vmem:[%s2 + $0x30] sm:$0xf]
      %v10635 = vld [vmem:[%s2 + $0x34] sm:$0xf]
      %v10636 = vld [vmem:[%s2 + $0x38] sm:$0xf]
      %v10637 = vld [vmem:[%s2 + $0x3c] sm:$0xf]
      %v10638 = vld [vmem:[%s2 + $0x40] sm:$0xf]
      %v10639 = vld [vmem:[%s2 + $0x44] sm:$0xf]
      %v10640 = vld [vmem:[%s2 + $0x48] sm:$0xf]
      %v10641 = vld [vmem:[%s2 + $0x4c] sm:$0xf]
      %v10642 = vld [vmem:[%s2 + $0x50] sm:$0xf]
      %v10643 = vld [vmem:[%s2 + $0x54] sm:$0xf]
      %v10644 = vld [vmem:[%s2 + $0x58] sm:$0xf]
      %v10645 = vld [vmem:[%s2 + $0x5c] sm:$0xf]
      %v10646 = vld [vmem:[%s2 + $0x60] sm:$0xf]
      %v10647 = vld [vmem:[%s2 + $0x64] sm:$0xf]
      %v10648 = vld [vmem:[%s2 + $0x68] sm:$0xf]
      %v10649 = vld [vmem:[%s2 + $0x6c] sm:$0xf]
      %v10650 = vld [vmem:[%s2 + $0x70] sm:$0xf]
      %v10651 = vld [vmem:[%s2 + $0x74] sm:$0xf]
      %v10652 = vld [vmem:[%s2 + $0x78] sm:$0xf]
      %v10653 = vld [vmem:[%s2 + $0x7c] sm:$0xf]
      %v10654 = vld [vmem:[%s2 + $0x80] sm:$0xf]
      %v10655 = vld [vmem:[%s2 + $0x84] sm:$0xf]
      %v10656 = vld [vmem:[%s2 + $0x88] sm:$0xf]
      %v10657 = vld [vmem:[%s2 + $0x8c] sm:$0xf]
      %v10694 = vunpack.c.l.b16 %v10622
      %v10695 = vunpack.c.l.b16 %v10623
      %v10696 = vunpack.c.l.b16 %v10624
      %v10697 = vunpack.c.l.b16 %v10625
      %v10698 = vunpack.c.l.b16 %v10626
      %v10699 = vunpack.c.l.b16 %v10627
      %v10700 = vunpack.c.l.b16 %v10628
      %v10701 = vunpack.c.l.b16 %v10629
      %v10702 = vunpack.c.l.b16 %v10630
      %v10703 = vunpack.c.l.b16 %v10631
      %v10704 = vunpack.c.l.b16 %v10632
      %v10705 = vunpack.c.l.b16 %v10633
      %v10706 = vunpack.c.l.b16 %v10634
      %v10707 = vunpack.c.l.b16 %v10635
      %v10708 = vunpack.c.l.b16 %v10636
      %v10709 = vunpack.c.l.b16 %v10637
      %v10710 = vunpack.c.l.b16 %v10638
      %v10711 = vunpack.c.l.b16 %v10639
      %v10712 = vunpack.c.l.b16 %v10640
      %v10713 = vunpack.c.l.b16 %v10641
      %v10714 = vunpack.c.l.b16 %v10642
      %v10715 = vunpack.c.l.b16 %v10643
      %v10716 = vunpack.c.l.b16 %v10644
      %v10717 = vunpack.c.l.b16 %v10645
      %v10718 = vunpack.c.l.b16 %v10646
      %v10719 = vunpack.c.l.b16 %v10647
      %v10720 = vunpack.c.l.b16 %v10648
      %v10721 = vunpack.c.l.b16 %v10649
      %v10722 = vunpack.c.l.b16 %v10650
      %v10723 = vunpack.c.l.b16 %v10651
      %v10724 = vunpack.c.l.b16 %v10652
      %v10725 = vunpack.c.l.b16 %v10653
      %v10726 = vunpack.c.l.b16 %v10654
      %v10727 = vunpack.c.l.b16 %v10655
      %v10728 = vunpack.c.l.b16 %v10656
      %v10729 = vunpack.c.l.b16 %v10657
      %v10730 = vpack.c.b16 %v10695, %v10694
      %v10731 = vpack.c.b16 %v10697, %v10696
      %v10732 = vpack.c.b16 %v10699, %v10698
      %v10733 = vpack.c.b16 %v10701, %v10700
      %v10734 = vpack.c.b16 %v10703, %v10702
      %v10735 = vpack.c.b16 %v10705, %v10704
      %v10736 = vpack.c.b16 %v10707, %v10706
      %v10737 = vpack.c.b16 %v10709, %v10708
      %v10738 = vpack.c.b16 %v10711, %v10710
      %v10739 = vpack.c.b16 %v10713, %v10712
      %v10740 = vpack.c.b16 %v10715, %v10714
      %v10741 = vpack.c.b16 %v10717, %v10716
      %v10742 = vpack.c.b16 %v10719, %v10718
      %v10743 = vpack.c.b16 %v10721, %v10720
      %v10744 = vpack.c.b16 %v10723, %v10722
      %v10745 = vpack.c.b16 %v10725, %v10724
      %v10746 = vpack.c.b16 %v10727, %v10726
      %v10747 = vpack.c.b16 %v10729, %v10728
      %vm10748 = vcmask 195584
      %v10750 = vsel %vm10748, %v10730, 0
      %v10753 = vsel %vm10748, %v10731, 0
      %v10756 = vsel %vm10748, %v10732, 0
      %v10759 = vsel %vm10748, %v10733, 0
      %v10762 = vsel %vm10748, %v10734, 0
      %v10765 = vsel %vm10748, %v10735, 0
      %v10768 = vsel %vm10748, %v10736, 0
      %v10771 = vsel %vm10748, %v10737, 0
      %v10774 = vsel %vm10748, %v10738, 0
      %v10777 = vsel %vm10748, %v10739, 0
      %v10780 = vsel %vm10748, %v10740, 0
      %v10783 = vsel %vm10748, %v10741, 0
      %v10786 = vsel %vm10748, %v10742, 0
      %v10789 = vsel %vm10748, %v10743, 0
      %v10792 = vsel %vm10748, %v10744, 0
      %v10795 = vsel %vm10748, %v10745, 0
      %v10798 = vsel %vm10748, %v10746, 0
      %v10801 = vsel %vm10748, %v10747, 0
      %vm10803 = vcmask 1043456
      %v10805 = vsel %vm10803, %v10621, 0
      %10807 = vmatpush.bf16.msra.mxu0 0
      %10808 = vmatpush.bf16.msra.mxu0 0
      %10809 = vmatpush.bf16.msra.mxu0 0
      %10810 = vmatpush.bf16.msra.mxu0 0
      %10811 = vmatpush.bf16.msra.mxu0 0
      %10812 = vmatpush.bf16.msra.mxu0 0
      %10813 = vmatpush.bf16.msra.mxu0 %v10805
      %10814 = vmatpush.bf16.msra.mxu0 %v10620
      %10815 = vmatmul.bf16.gmra.mxu0 %v10750
      %v10816 = vpop.f32.mrf.mxu0
      %v10817 = vadd.f32 0.0, %v10816
      %v10818 = vpop.f32.mrf.mxu0
      %v10819 = vadd.f32 0.0, %v10818
      %10820 = vmatmul.bf16.gmra.mxu0 %v10753
      %v10821 = vpop.f32.mrf.mxu0
      %v10822 = vadd.f32 0.0, %v10821
      %v10823 = vpop.f32.mrf.mxu0
      %v10824 = vadd.f32 0.0, %v10823
      %10825 = vmatmul.bf16.gmra.mxu0 %v10756
      %v10826 = vpop.f32.mrf.mxu0
      %v10827 = vadd.f32 0.0, %v10826
      %v10828 = vpop.f32.mrf.mxu0
      %v10829 = vadd.f32 0.0, %v10828
      %10830 = vmatmul.bf16.gmra.mxu0 %v10759
      %v10831 = vpop.f32.mrf.mxu0
      %v10832 = vadd.f32 0.0, %v10831
      %v10833 = vpop.f32.mrf.mxu0
      %v10834 = vadd.f32 0.0, %v10833
      %10835 = vmatmul.bf16.gmra.mxu0 %v10762
      %v10836 = vpop.f32.mrf.mxu0
      %v10837 = vadd.f32 0.0, %v10836
      %v10838 = vpop.f32.mrf.mxu0
      %v10839 = vadd.f32 0.0, %v10838
      %10840 = vmatmul.bf16.gmra.mxu0 %v10765
      %v10841 = vpop.f32.mrf.mxu0
      %v10842 = vadd.f32 0.0, %v10841
      %v10843 = vpop.f32.mrf.mxu0
      %v10844 = vadd.f32 0.0, %v10843
      %10845 = vmatmul.bf16.gmra.mxu0 %v10768
      %v10846 = vpop.f32.mrf.mxu0
      %v10847 = vadd.f32 0.0, %v10846
      %v10848 = vpop.f32.mrf.mxu0
      %v10849 = vadd.f32 0.0, %v10848
      %10850 = vmatmul.bf16.gmra.mxu0 %v10771
      %v10851 = vpop.f32.mrf.mxu0
      %v10852 = vadd.f32 0.0, %v10851
      %v10853 = vpop.f32.mrf.mxu0
      %v10854 = vadd.f32 0.0, %v10853
      %10855 = vmatmul.bf16.gmra.mxu0 %v10774
      %v10856 = vpop.f32.mrf.mxu0
      %v10857 = vadd.f32 0.0, %v10856
      %v10858 = vpop.f32.mrf.mxu0
      %v10859 = vadd.f32 0.0, %v10858
      %10860 = vmatmul.bf16.gmra.mxu0 %v10777
      %v10861 = vpop.f32.mrf.mxu0
      %v10862 = vadd.f32 0.0, %v10861
      %v10863 = vpop.f32.mrf.mxu0
      %v10864 = vadd.f32 0.0, %v10863
      %10865 = vmatmul.bf16.gmra.mxu0 %v10780
      %v10866 = vpop.f32.mrf.mxu0
      %v10867 = vadd.f32 0.0, %v10866
      %v10868 = vpop.f32.mrf.mxu0
      %v10869 = vadd.f32 0.0, %v10868
      %10870 = vmatmul.bf16.gmra.mxu0 %v10783
      %v10871 = vpop.f32.mrf.mxu0
      %v10872 = vadd.f32 0.0, %v10871
      %v10873 = vpop.f32.mrf.mxu0
      %v10874 = vadd.f32 0.0, %v10873
      %10875 = vmatmul.bf16.gmra.mxu0 %v10786
      %v10876 = vpop.f32.mrf.mxu0
      %v10877 = vadd.f32 0.0, %v10876
      %v10878 = vpop.f32.mrf.mxu0
      %v10879 = vadd.f32 0.0, %v10878
      %10880 = vmatmul.bf16.gmra.mxu0 %v10789
      %v10881 = vpop.f32.mrf.mxu0
      %v10882 = vadd.f32 0.0, %v10881
      %v10883 = vpop.f32.mrf.mxu0
      %v10884 = vadd.f32 0.0, %v10883
      %10885 = vmatmul.bf16.gmra.mxu0 %v10792
      %v10886 = vpop.f32.mrf.mxu0
      %v10887 = vadd.f32 0.0, %v10886
      %v10888 = vpop.f32.mrf.mxu0
      %v10889 = vadd.f32 0.0, %v10888
      %10890 = vmatmul.bf16.gmra.mxu0 %v10795
      %v10891 = vpop.f32.mrf.mxu0
      %v10892 = vadd.f32 0.0, %v10891
      %v10893 = vpop.f32.mrf.mxu0
      %v10894 = vadd.f32 0.0, %v10893
      %10895 = vmatmul.bf16.gmra.mxu0 %v10798
      %v10896 = vpop.f32.mrf.mxu0
      %v10897 = vadd.f32 0.0, %v10896
      %v10898 = vpop.f32.mrf.mxu0
      %v10899 = vadd.f32 0.0, %v10898
      %10900 = vmatmul.bf16.gmra.mxu0 %v10801
      %v10901 = vpop.f32.mrf.mxu0
      %v10902 = vadd.f32 0.0, %v10901
      %v10903 = vpop.f32.mrf.mxu0
      %v10904 = vadd.f32 0.0, %v10903
      %10905 = vdwg.mxu0
      %v10906 = vpack.c.bf16 %v10817, %v10817
      %v10907 = vpack.c.bf16 %v10819, %v10819
      %v10908 = vpack.c.bf16 %v10822, %v10822
      %v10909 = vpack.c.bf16 %v10824, %v10824
      %v10910 = vpack.c.bf16 %v10827, %v10827
      %v10911 = vpack.c.bf16 %v10829, %v10829
      %v10912 = vpack.c.bf16 %v10832, %v10832
      %v10913 = vpack.c.bf16 %v10834, %v10834
      %v10914 = vpack.c.bf16 %v10837, %v10837
      %v10915 = vpack.c.bf16 %v10839, %v10839
      %v10916 = vpack.c.bf16 %v10842, %v10842
      %v10917 = vpack.c.bf16 %v10844, %v10844
      %v10918 = vpack.c.bf16 %v10847, %v10847
      %v10919 = vpack.c.bf16 %v10849, %v10849
      %v10920 = vpack.c.bf16 %v10852, %v10852
      %v10921 = vpack.c.bf16 %v10854, %v10854
      %v10922 = vpack.c.bf16 %v10857, %v10857
      %v10923 = vpack.c.bf16 %v10859, %v10859
      %v10924 = vpack.c.bf16 %v10862, %v10862
      %v10925 = vpack.c.bf16 %v10864, %v10864
      %v10926 = vpack.c.bf16 %v10867, %v10867
      %v10927 = vpack.c.bf16 %v10869, %v10869
      %v10928 = vpack.c.bf16 %v10872, %v10872
      %v10929 = vpack.c.bf16 %v10874, %v10874
      %v10930 = vpack.c.bf16 %v10877, %v10877
      %v10931 = vpack.c.bf16 %v10879, %v10879
      %v10932 = vpack.c.bf16 %v10882, %v10882
      %v10933 = vpack.c.bf16 %v10884, %v10884
      %v10934 = vpack.c.bf16 %v10887, %v10887
      %v10935 = vpack.c.bf16 %v10889, %v10889
      %v10936 = vpack.c.bf16 %v10892, %v10892
      %v10937 = vpack.c.bf16 %v10894, %v10894
      %v10938 = vpack.c.bf16 %v10897, %v10897
      %v10939 = vpack.c.bf16 %v10899, %v10899
      %v10940 = vpack.c.bf16 %v10902, %v10902
      %v10941 = vpack.c.bf16 %v10904, %v10904
      %v10942 = vld [vmem:[%s8] sm:$0xf]
      %v10943 = vld [vmem:[%s8 + $0x4] sm:$0xf]
      %v10944 = vld [vmem:[%s8 + $0x8] sm:$0xf]
      %v10945 = vld [vmem:[%s8 + $0xc] sm:$0xf]
      %v10946 = vld [vmem:[%s8 + $0x10] sm:$0xf]
      %v10947 = vld [vmem:[%s8 + $0x14] sm:$0xf]
      %v10948 = vld [vmem:[%s8 + $0x18] sm:$0xf]
      %v10949 = vld [vmem:[%s8 + $0x1c] sm:$0xf]
      %v10950 = vld [vmem:[%s8 + $0x20] sm:$0xf]
      %v10951 = vld [vmem:[%s8 + $0x24] sm:$0xf]
      %v10952 = vld [vmem:[%s8 + $0x28] sm:$0xf]
      %v10953 = vld [vmem:[%s8 + $0x2c] sm:$0xf]
      %v10954 = vld [vmem:[%s8 + $0x30] sm:$0xf]
      %v10955 = vld [vmem:[%s8 + $0x34] sm:$0xf]
      %v10956 = vld [vmem:[%s8 + $0x38] sm:$0xf]
      %v10957 = vld [vmem:[%s8 + $0x3c] sm:$0xf]
      %v10962 = vunpack.c.l.b16 %v10910
      %v10963 = vunpack.c.l.b16 %v10911
      %v10964 = vunpack.c.l.b16 %v10912
      %v10965 = vunpack.c.l.b16 %v10913
      %v10966 = vpack.c.b16 %v10963, %v10962
      %v10967 = vpack.c.b16 %v10965, %v10964
      %v10976 = vunpack.c.l.b16 %v10950
      %v10977 = vunpack.c.l.b16 %v10951
      %v10978 = vunpack.c.l.b16 %v10952
      %v10979 = vunpack.c.l.b16 %v10953
      %v10980 = vunpack.c.l.b16 %v10954
      %v10981 = vunpack.c.l.b16 %v10955
      %v10982 = vunpack.c.l.b16 %v10956
      %v10983 = vunpack.c.l.b16 %v10957
      %v10984 = vpack.c.b16 %v10977, %v10976
      %v10985 = vpack.c.b16 %v10979, %v10978
      %v10986 = vpack.c.b16 %v10981, %v10980
      %v10987 = vpack.c.b16 %v10983, %v10982
      %vm10992 = vcmask 523264
      %v10994 = vsel %vm10992, %v10966, 0
      %v10997 = vsel %vm10992, %v10967, 0
      %10999 = vmatpush.bf16.msra.mxu0 0
      %11000 = vmatpush.bf16.msra.mxu0 0
      %11001 = vmatpush.bf16.msra.mxu0 0
      %11002 = vmatpush.bf16.msra.mxu0 0
      %11003 = vmatpush.bf16.msra.mxu0 %v10987
      %11004 = vmatpush.bf16.msra.mxu0 %v10986
      %11005 = vmatpush.bf16.msra.mxu0 %v10985
      %11006 = vmatpush.bf16.msra.mxu0 %v10984
      %11007 = vmatmul.bf16.gmra.mxu0 %v10994
      %v11008 = vpop.f32.mrf.mxu0
      %v11009 = vadd.f32 0.0, %v11008
      %v11010 = vpop.f32.mrf.mxu0
      %v11011 = vadd.f32 0.0, %v11010
      %11012 = vmatmul.bf16.gmra.mxu0 %v10997
      %v11013 = vpop.f32.mrf.mxu0
      %v11014 = vadd.f32 0.0, %v11013
      %v11015 = vpop.f32.mrf.mxu0
      %v11016 = vadd.f32 0.0, %v11015
      %11017 = vdwg.mxu0
      %v11022 = vunpack.c.l.b16 %v10906
      %v11023 = vunpack.c.l.b16 %v10907
      %v11024 = vunpack.c.l.b16 %v10908
      %v11025 = vunpack.c.l.b16 %v10909
      %v11026 = vpack.c.b16 %v11023, %v11022
      %v11027 = vpack.c.b16 %v11025, %v11024
      %v11036 = vunpack.c.l.b16 %v10942
      %v11037 = vunpack.c.l.b16 %v10943
      %v11038 = vunpack.c.l.b16 %v10944
      %v11039 = vunpack.c.l.b16 %v10945
      %v11040 = vunpack.c.l.b16 %v10946
      %v11041 = vunpack.c.l.b16 %v10947
      %v11042 = vunpack.c.l.b16 %v10948
      %v11043 = vunpack.c.l.b16 %v10949
      %v11044 = vpack.c.b16 %v11037, %v11036
      %v11045 = vpack.c.b16 %v11039, %v11038
      %v11046 = vpack.c.b16 %v11041, %v11040
      %v11047 = vpack.c.b16 %v11043, %v11042
      %v11053 = vsel %vm10992, %v11026, 0
      %v11056 = vsel %vm10992, %v11027, 0
      %11058 = vmatpush.bf16.msra.mxu0 0
      %11059 = vmatpush.bf16.msra.mxu0 0
      %11060 = vmatpush.bf16.msra.mxu0 0
      %11061 = vmatpush.bf16.msra.mxu0 0
      %11062 = vmatpush.bf16.msra.mxu0 %v11047
      %11063 = vmatpush.bf16.msra.mxu0 %v11046
      %11064 = vmatpush.bf16.msra.mxu0 %v11045
      %11065 = vmatpush.bf16.msra.mxu0 %v11044
      %11066 = vmatmul.bf16.gmra.mxu0 %v11053
      %v11067 = vpop.f32.mrf.mxu0
      %v11068 = vadd.f32 %v11009, %v11067
      %v11069 = vpop.f32.mrf.mxu0
      %v11070 = vadd.f32 %v11011, %v11069
      %11071 = vmatmul.bf16.gmra.mxu0 %v11056
      %v11072 = vpop.f32.mrf.mxu0
      %v11073 = vadd.f32 %v11014, %v11072
      %v11074 = vpop.f32.mrf.mxu0
      %v11075 = vadd.f32 %v11016, %v11074
      %11076 = vdwg.mxu0
      %v11077 = vld [vmem:[%s8 + $0x40] sm:$0xf]
      %v11078 = vld [vmem:[%s8 + $0x44] sm:$0xf]
      %v11079 = vld [vmem:[%s8 + $0x48] sm:$0xf]
      %v11080 = vld [vmem:[%s8 + $0x4c] sm:$0xf]
      %v11081 = vld [vmem:[%s8 + $0x50] sm:$0xf]
      %v11082 = vld [vmem:[%s8 + $0x54] sm:$0xf]
      %v11083 = vld [vmem:[%s8 + $0x58] sm:$0xf]
      %v11084 = vld [vmem:[%s8 + $0x5c] sm:$0xf]
      %v11089 = vunpack.c.l.b16 %v10914
      %v11090 = vunpack.c.l.b16 %v10915
      %v11091 = vunpack.c.l.b16 %v10916
      %v11092 = vunpack.c.l.b16 %v10917
      %v11093 = vpack.c.b16 %v11090, %v11089
      %v11094 = vpack.c.b16 %v11092, %v11091
      %v11103 = vunpack.c.l.b16 %v11077
      %v11104 = vunpack.c.l.b16 %v11078
      %v11105 = vunpack.c.l.b16 %v11079
      %v11106 = vunpack.c.l.b16 %v11080
      %v11107 = vunpack.c.l.b16 %v11081
      %v11108 = vunpack.c.l.b16 %v11082
      %v11109 = vunpack.c.l.b16 %v11083
      %v11110 = vunpack.c.l.b16 %v11084
      %v11111 = vpack.c.b16 %v11104, %v11103
      %v11112 = vpack.c.b16 %v11106, %v11105
      %v11113 = vpack.c.b16 %v11108, %v11107
      %v11114 = vpack.c.b16 %v11110, %v11109
      %v11120 = vsel %vm10992, %v11093, 0
      %v11123 = vsel %vm10992, %v11094, 0
      %11125 = vmatpush.bf16.msra.mxu0 0
      %11126 = vmatpush.bf16.msra.mxu0 0
      %11127 = vmatpush.bf16.msra.mxu0 0
      %11128 = vmatpush.bf16.msra.mxu0 0
      %11129 = vmatpush.bf16.msra.mxu0 %v11114
      %11130 = vmatpush.bf16.msra.mxu0 %v11113
      %11131 = vmatpush.bf16.msra.mxu0 %v11112
      %11132 = vmatpush.bf16.msra.mxu0 %v11111
      %11133 = vmatmul.bf16.gmra.mxu0 %v11120
      %v11134 = vpop.f32.mrf.mxu0
      %v11135 = vadd.f32 0.0, %v11134
      %v11136 = vpop.f32.mrf.mxu0
      %v11137 = vadd.f32 0.0, %v11136
      %11138 = vmatmul.bf16.gmra.mxu0 %v11123
      %v11139 = vpop.f32.mrf.mxu0
      %v11140 = vadd.f32 0.0, %v11139
      %v11141 = vpop.f32.mrf.mxu0
      %v11142 = vadd.f32 0.0, %v11141
      %11143 = vdwg.mxu0
      %v11144 = vadd.f32 %v11068, %v11135
      %v11145 = vadd.f32 %v11070, %v11137
      %v11146 = vadd.f32 %v11073, %v11140
      %v11147 = vadd.f32 %v11075, %v11142
      %v11148 = vld [vmem:[%s8 + $0x60] sm:$0xf]
      %v11149 = vld [vmem:[%s8 + $0x64] sm:$0xf]
      %v11150 = vld [vmem:[%s8 + $0x68] sm:$0xf]
      %v11151 = vld [vmem:[%s8 + $0x6c] sm:$0xf]
      %v11152 = vld [vmem:[%s8 + $0x70] sm:$0xf]
      %v11153 = vld [vmem:[%s8 + $0x74] sm:$0xf]
      %v11154 = vld [vmem:[%s8 + $0x78] sm:$0xf]
      %v11155 = vld [vmem:[%s8 + $0x7c] sm:$0xf]
      %v11160 = vunpack.c.l.b16 %v10918
      %v11161 = vunpack.c.l.b16 %v10919
      %v11162 = vunpack.c.l.b16 %v10920
      %v11163 = vunpack.c.l.b16 %v10921
      %v11164 = vpack.c.b16 %v11161, %v11160
      %v11165 = vpack.c.b16 %v11163, %v11162
      %v11174 = vunpack.c.l.b16 %v11148
      %v11175 = vunpack.c.l.b16 %v11149
      %v11176 = vunpack.c.l.b16 %v11150
      %v11177 = vunpack.c.l.b16 %v11151
      %v11178 = vunpack.c.l.b16 %v11152
      %v11179 = vunpack.c.l.b16 %v11153
      %v11180 = vunpack.c.l.b16 %v11154
      %v11181 = vunpack.c.l.b16 %v11155
      %v11182 = vpack.c.b16 %v11175, %v11174
      %v11183 = vpack.c.b16 %v11177, %v11176
      %v11184 = vpack.c.b16 %v11179, %v11178
      %v11185 = vpack.c.b16 %v11181, %v11180
      %v11191 = vsel %vm10992, %v11164, 0
      %v11194 = vsel %vm10992, %v11165, 0
      %11196 = vmatpush.bf16.msra.mxu0 0
      %11197 = vmatpush.bf16.msra.mxu0 0
      %11198 = vmatpush.bf16.msra.mxu0 0
      %11199 = vmatpush.bf16.msra.mxu0 0
      %11200 = vmatpush.bf16.msra.mxu0 %v11185
      %11201 = vmatpush.bf16.msra.mxu0 %v11184
      %11202 = vmatpush.bf16.msra.mxu0 %v11183
      %11203 = vmatpush.bf16.msra.mxu0 %v11182
      %11204 = vmatmul.bf16.gmra.mxu0 %v11191
      %v11205 = vpop.f32.mrf.mxu0
      %v11206 = vadd.f32 0.0, %v11205
      %v11207 = vpop.f32.mrf.mxu0
      %v11208 = vadd.f32 0.0, %v11207
      %11209 = vmatmul.bf16.gmra.mxu0 %v11194
      %v11210 = vpop.f32.mrf.mxu0
      %v11211 = vadd.f32 0.0, %v11210
      %v11212 = vpop.f32.mrf.mxu0
      %v11213 = vadd.f32 0.0, %v11212
      %11214 = vdwg.mxu0
      %v11215 = vadd.f32 %v11144, %v11206
      %v11216 = vadd.f32 %v11145, %v11208
      %v11217 = vadd.f32 %v11146, %v11211
      %v11218 = vadd.f32 %v11147, %v11213
      %v11219 = vld [vmem:[%s8 + $0x80] sm:$0xf]
      %v11220 = vld [vmem:[%s8 + $0x84] sm:$0xf]
      %v11221 = vld [vmem:[%s8 + $0x88] sm:$0xf]
      %v11222 = vld [vmem:[%s8 + $0x8c] sm:$0xf]
      %v11223 = vld [vmem:[%s8 + $0x90] sm:$0xf]
      %v11224 = vld [vmem:[%s8 + $0x94] sm:$0xf]
      %v11225 = vld [vmem:[%s8 + $0x98] sm:$0xf]
      %v11226 = vld [vmem:[%s8 + $0x9c] sm:$0xf]
      %v11231 = vunpack.c.l.b16 %v10922
      %v11232 = vunpack.c.l.b16 %v10923
      %v11233 = vunpack.c.l.b16 %v10924
      %v11234 = vunpack.c.l.b16 %v10925
      %v11235 = vpack.c.b16 %v11232, %v11231
      %v11236 = vpack.c.b16 %v11234, %v11233
      %v11245 = vunpack.c.l.b16 %v11219
      %v11246 = vunpack.c.l.b16 %v11220
      %v11247 = vunpack.c.l.b16 %v11221
      %v11248 = vunpack.c.l.b16 %v11222
      %v11249 = vunpack.c.l.b16 %v11223
      %v11250 = vunpack.c.l.b16 %v11224
      %v11251 = vunpack.c.l.b16 %v11225
      %v11252 = vunpack.c.l.b16 %v11226
      %v11253 = vpack.c.b16 %v11246, %v11245
      %v11254 = vpack.c.b16 %v11248, %v11247
      %v11255 = vpack.c.b16 %v11250, %v11249
      %v11256 = vpack.c.b16 %v11252, %v11251
      %v11262 = vsel %vm10992, %v11235, 0
      %v11265 = vsel %vm10992, %v11236, 0
      %11267 = vmatpush.bf16.msra.mxu0 0
      %11268 = vmatpush.bf16.msra.mxu0 0
      %11269 = vmatpush.bf16.msra.mxu0 0
      %11270 = vmatpush.bf16.msra.mxu0 0
      %11271 = vmatpush.bf16.msra.mxu0 %v11256
      %11272 = vmatpush.bf16.msra.mxu0 %v11255
      %11273 = vmatpush.bf16.msra.mxu0 %v11254
      %11274 = vmatpush.bf16.msra.mxu0 %v11253
      %11275 = vmatmul.bf16.gmra.mxu0 %v11262
      %v11276 = vpop.f32.mrf.mxu0
      %v11277 = vadd.f32 0.0, %v11276
      %v11278 = vpop.f32.mrf.mxu0
      %v11279 = vadd.f32 0.0, %v11278
      %11280 = vmatmul.bf16.gmra.mxu0 %v11265
      %v11281 = vpop.f32.mrf.mxu0
      %v11282 = vadd.f32 0.0, %v11281
      %v11283 = vpop.f32.mrf.mxu0
      %v11284 = vadd.f32 0.0, %v11283
      %11285 = vdwg.mxu0
      %v11286 = vadd.f32 %v11215, %v11277
      %v11287 = vadd.f32 %v11216, %v11279
      %v11288 = vadd.f32 %v11217, %v11282
      %v11289 = vadd.f32 %v11218, %v11284
      %v11290 = vld [vmem:[%s8 + $0xa0] sm:$0xf]
      %v11291 = vld [vmem:[%s8 + $0xa4] sm:$0xf]
      %v11292 = vld [vmem:[%s8 + $0xa8] sm:$0xf]
      %v11293 = vld [vmem:[%s8 + $0xac] sm:$0xf]
      %v11294 = vld [vmem:[%s8 + $0xb0] sm:$0xf]
      %v11295 = vld [vmem:[%s8 + $0xb4] sm:$0xf]
      %v11296 = vld [vmem:[%s8 + $0xb8] sm:$0xf]
      %v11297 = vld [vmem:[%s8 + $0xbc] sm:$0xf]
      %v11302 = vunpack.c.l.b16 %v10926
      %v11303 = vunpack.c.l.b16 %v10927
      %v11304 = vunpack.c.l.b16 %v10928
      %v11305 = vunpack.c.l.b16 %v10929
      %v11306 = vpack.c.b16 %v11303, %v11302
      %v11307 = vpack.c.b16 %v11305, %v11304
      %v11316 = vunpack.c.l.b16 %v11290
      %v11317 = vunpack.c.l.b16 %v11291
      %v11318 = vunpack.c.l.b16 %v11292
      %v11319 = vunpack.c.l.b16 %v11293
      %v11320 = vunpack.c.l.b16 %v11294
      %v11321 = vunpack.c.l.b16 %v11295
      %v11322 = vunpack.c.l.b16 %v11296
      %v11323 = vunpack.c.l.b16 %v11297
      %v11324 = vpack.c.b16 %v11317, %v11316
      %v11325 = vpack.c.b16 %v11319, %v11318
      %v11326 = vpack.c.b16 %v11321, %v11320
      %v11327 = vpack.c.b16 %v11323, %v11322
      %v11333 = vsel %vm10992, %v11306, 0
      %v11336 = vsel %vm10992, %v11307, 0
      %11338 = vmatpush.bf16.msra.mxu0 0
      %11339 = vmatpush.bf16.msra.mxu0 0
      %11340 = vmatpush.bf16.msra.mxu0 0
      %11341 = vmatpush.bf16.msra.mxu0 0
      %11342 = vmatpush.bf16.msra.mxu0 %v11327
      %11343 = vmatpush.bf16.msra.mxu0 %v11326
      %11344 = vmatpush.bf16.msra.mxu0 %v11325
      %11345 = vmatpush.bf16.msra.mxu0 %v11324
      %11346 = vmatmul.bf16.gmra.mxu0 %v11333
      %v11347 = vpop.f32.mrf.mxu0
      %v11348 = vadd.f32 0.0, %v11347
      %v11349 = vpop.f32.mrf.mxu0
      %v11350 = vadd.f32 0.0, %v11349
      %11351 = vmatmul.bf16.gmra.mxu0 %v11336
      %v11352 = vpop.f32.mrf.mxu0
      %v11353 = vadd.f32 0.0, %v11352
      %v11354 = vpop.f32.mrf.mxu0
      %v11355 = vadd.f32 0.0, %v11354
      %11356 = vdwg.mxu0
      %v11357 = vadd.f32 %v11286, %v11348
      %v11358 = vadd.f32 %v11287, %v11350
      %v11359 = vadd.f32 %v11288, %v11353
      %v11360 = vadd.f32 %v11289, %v11355
      %v11361 = vld [vmem:[%s8 + $0xc0] sm:$0xf]
      %v11362 = vld [vmem:[%s8 + $0xc4] sm:$0xf]
      %v11363 = vld [vmem:[%s8 + $0xc8] sm:$0xf]
      %v11364 = vld [vmem:[%s8 + $0xcc] sm:$0xf]
      %v11365 = vld [vmem:[%s8 + $0xd0] sm:$0xf]
      %v11366 = vld [vmem:[%s8 + $0xd4] sm:$0xf]
      %v11367 = vld [vmem:[%s8 + $0xd8] sm:$0xf]
      %v11368 = vld [vmem:[%s8 + $0xdc] sm:$0xf]
      %v11373 = vunpack.c.l.b16 %v10930
      %v11374 = vunpack.c.l.b16 %v10931
      %v11375 = vunpack.c.l.b16 %v10932
      %v11376 = vunpack.c.l.b16 %v10933
      %v11377 = vpack.c.b16 %v11374, %v11373
      %v11378 = vpack.c.b16 %v11376, %v11375
      %v11387 = vunpack.c.l.b16 %v11361
      %v11388 = vunpack.c.l.b16 %v11362
      %v11389 = vunpack.c.l.b16 %v11363
      %v11390 = vunpack.c.l.b16 %v11364
      %v11391 = vunpack.c.l.b16 %v11365
      %v11392 = vunpack.c.l.b16 %v11366
      %v11393 = vunpack.c.l.b16 %v11367
      %v11394 = vunpack.c.l.b16 %v11368
      %v11395 = vpack.c.b16 %v11388, %v11387
      %v11396 = vpack.c.b16 %v11390, %v11389
      %v11397 = vpack.c.b16 %v11392, %v11391
      %v11398 = vpack.c.b16 %v11394, %v11393
      %v11404 = vsel %vm10992, %v11377, 0
      %v11407 = vsel %vm10992, %v11378, 0
      %11409 = vmatpush.bf16.msra.mxu0 0
      %11410 = vmatpush.bf16.msra.mxu0 0
      %11411 = vmatpush.bf16.msra.mxu0 0
      %11412 = vmatpush.bf16.msra.mxu0 0
      %11413 = vmatpush.bf16.msra.mxu0 %v11398
      %11414 = vmatpush.bf16.msra.mxu0 %v11397
      %11415 = vmatpush.bf16.msra.mxu0 %v11396
      %11416 = vmatpush.bf16.msra.mxu0 %v11395
      %11417 = vmatmul.bf16.gmra.mxu0 %v11404
      %v11418 = vpop.f32.mrf.mxu0
      %v11419 = vadd.f32 0.0, %v11418
      %v11420 = vpop.f32.mrf.mxu0
      %v11421 = vadd.f32 0.0, %v11420
      %11422 = vmatmul.bf16.gmra.mxu0 %v11407
      %v11423 = vpop.f32.mrf.mxu0
      %v11424 = vadd.f32 0.0, %v11423
      %v11425 = vpop.f32.mrf.mxu0
      %v11426 = vadd.f32 0.0, %v11425
      %11427 = vdwg.mxu0
      %v11428 = vadd.f32 %v11357, %v11419
      %v11429 = vadd.f32 %v11358, %v11421
      %v11430 = vadd.f32 %v11359, %v11424
      %v11431 = vadd.f32 %v11360, %v11426
      %v11432 = vld [vmem:[%s8 + $0xe0] sm:$0xf]
      %v11433 = vld [vmem:[%s8 + $0xe4] sm:$0xf]
      %v11434 = vld [vmem:[%s8 + $0xe8] sm:$0xf]
      %v11435 = vld [vmem:[%s8 + $0xec] sm:$0xf]
      %v11436 = vld [vmem:[%s8 + $0xf0] sm:$0xf]
      %v11437 = vld [vmem:[%s8 + $0xf4] sm:$0xf]
      %v11438 = vld [vmem:[%s8 + $0xf8] sm:$0xf]
      %v11439 = vld [vmem:[%s8 + $0xfc] sm:$0xf]
      %v11444 = vunpack.c.l.b16 %v10934
      %v11445 = vunpack.c.l.b16 %v10935
      %v11446 = vunpack.c.l.b16 %v10936
      %v11447 = vunpack.c.l.b16 %v10937
      %v11448 = vpack.c.b16 %v11445, %v11444
      %v11449 = vpack.c.b16 %v11447, %v11446
      %v11458 = vunpack.c.l.b16 %v11432
      %v11459 = vunpack.c.l.b16 %v11433
      %v11460 = vunpack.c.l.b16 %v11434
      %v11461 = vunpack.c.l.b16 %v11435
      %v11462 = vunpack.c.l.b16 %v11436
      %v11463 = vunpack.c.l.b16 %v11437
      %v11464 = vunpack.c.l.b16 %v11438
      %v11465 = vunpack.c.l.b16 %v11439
      %v11466 = vpack.c.b16 %v11459, %v11458
      %v11467 = vpack.c.b16 %v11461, %v11460
      %v11468 = vpack.c.b16 %v11463, %v11462
      %v11469 = vpack.c.b16 %v11465, %v11464
      %v11475 = vsel %vm10992, %v11448, 0
      %v11478 = vsel %vm10992, %v11449, 0
      %11480 = vmatpush.bf16.msra.mxu0 0
      %11481 = vmatpush.bf16.msra.mxu0 0
      %11482 = vmatpush.bf16.msra.mxu0 0
      %11483 = vmatpush.bf16.msra.mxu0 0
      %11484 = vmatpush.bf16.msra.mxu0 %v11469
      %11485 = vmatpush.bf16.msra.mxu0 %v11468
      %11486 = vmatpush.bf16.msra.mxu0 %v11467
      %11487 = vmatpush.bf16.msra.mxu0 %v11466
      %11488 = vmatmul.bf16.gmra.mxu0 %v11475
      %v11489 = vpop.f32.mrf.mxu0
      %v11490 = vadd.f32 0.0, %v11489
      %v11491 = vpop.f32.mrf.mxu0
      %v11492 = vadd.f32 0.0, %v11491
      %11493 = vmatmul.bf16.gmra.mxu0 %v11478
      %v11494 = vpop.f32.mrf.mxu0
      %v11495 = vadd.f32 0.0, %v11494
      %v11496 = vpop.f32.mrf.mxu0
      %v11497 = vadd.f32 0.0, %v11496
      %11498 = vdwg.mxu0
      %v11499 = vadd.f32 %v11428, %v11490
      %v11500 = vadd.f32 %v11429, %v11492
      %v11501 = vadd.f32 %v11430, %v11495
      %v11502 = vadd.f32 %v11431, %v11497
      %v11503 = vld [vmem:[%s8 + $0x100] sm:$0xf]
      %v11504 = vld [vmem:[%s8 + $0x104] sm:$0xf]
      %v11505 = vld [vmem:[%s8 + $0x108] sm:$0xf]
      %v11506 = vld [vmem:[%s8 + $0x10c] sm:$0xf]
      %v11507 = vld [vmem:[%s8 + $0x110] sm:$0xf]
      %v11508 = vld [vmem:[%s8 + $0x114] sm:$0xf]
      %v11509 = vld [vmem:[%s8 + $0x118] sm:$0xf]
      %v11510 = vld [vmem:[%s8 + $0x11c] sm:$0xf]
      %v11515 = vunpack.c.l.b16 %v10938
      %v11516 = vunpack.c.l.b16 %v10939
      %v11517 = vunpack.c.l.b16 %v10940
      %v11518 = vunpack.c.l.b16 %v10941
      %v11519 = vpack.c.b16 %v11516, %v11515
      %v11520 = vpack.c.b16 %v11518, %v11517
      %v11529 = vunpack.c.l.b16 %v11503
      %v11530 = vunpack.c.l.b16 %v11504
      %v11531 = vunpack.c.l.b16 %v11505
      %v11532 = vunpack.c.l.b16 %v11506
      %v11533 = vunpack.c.l.b16 %v11507
      %v11534 = vunpack.c.l.b16 %v11508
      %v11535 = vunpack.c.l.b16 %v11509
      %v11536 = vunpack.c.l.b16 %v11510
      %v11537 = vpack.c.b16 %v11530, %v11529
      %v11538 = vpack.c.b16 %v11532, %v11531
      %v11539 = vpack.c.b16 %v11534, %v11533
      %v11540 = vpack.c.b16 %v11536, %v11535
      %v11546 = vsel %vm10992, %v11519, 0
      %v11549 = vsel %vm10992, %v11520, 0
      %11551 = vmatpush.bf16.msra.mxu0 0
      %11552 = vmatpush.bf16.msra.mxu0 0
      %11553 = vmatpush.bf16.msra.mxu0 0
      %11554 = vmatpush.bf16.msra.mxu0 0
      %11555 = vmatpush.bf16.msra.mxu0 %v11540
      %11556 = vmatpush.bf16.msra.mxu0 %v11539
      %11557 = vmatpush.bf16.msra.mxu0 %v11538
      %11558 = vmatpush.bf16.msra.mxu0 %v11537
      %11559 = vmatmul.bf16.gmra.mxu0 %v11546
      %v11560 = vpop.f32.mrf.mxu0
      %v11561 = vadd.f32 0.0, %v11560
      %v11562 = vpop.f32.mrf.mxu0
      %v11563 = vadd.f32 0.0, %v11562
      %11564 = vmatmul.bf16.gmra.mxu0 %v11549
      %v11565 = vpop.f32.mrf.mxu0
      %v11566 = vadd.f32 0.0, %v11565
      %v11567 = vpop.f32.mrf.mxu0
      %v11568 = vadd.f32 0.0, %v11567
      %11569 = vdwg.mxu0
      %v11570 = vadd.f32 %v11499, %v11561
      %v11571 = vadd.f32 %v11500, %v11563
      %v11572 = vadd.f32 %v11501, %v11566
      %v11573 = vadd.f32 %v11502, %v11568
      %v11574 = vld [vmem:[%s9] sm:$0x1]
      %v11576 = vperm.slane %v11574, 0
      %v11578 = vadd.f32 %v11570, %v11576
      %v11579 = vadd.f32 %v11571, %v11576
      %v11580 = vadd.f32 %v11572, %v11576
      %v11581 = vadd.f32 %v11573, %v11576
      %v11582 = vmax.f32 %v11578, 0.0
      %v11583 = vmax.f32 %v11579, 0.0
      %v11584 = vmax.f32 %v11580, 0.0
      %v11585 = vmax.f32 %v11581, 0.0
      %v11586 = vmax.f32 %v11582, %v11583
      %v11587 = vmax.f32 %v11584, %v11585
      %v11588 = vmax.f32 %v11586, %v11587
      %v11589 = vpack.c.bf16 %v11588, %v11588
      %v11590 = vld [vmem:[%s3] sm:$0xf]
      %vm11591 = vcmask 64512
      %v11593 = vsel %vm11591, %v11590, 0
      %v11596 = vsel %vm10803, %v11589, 0
      %11598 = vmatpush.bf16.msra.mxu0 0
      %11599 = vmatpush.bf16.msra.mxu0 0
      %11600 = vmatpush.bf16.msra.mxu0 0
      %11601 = vmatpush.bf16.msra.mxu0 0
      %11602 = vmatpush.bf16.msra.mxu0 0
      %11603 = vmatpush.bf16.msra.mxu0 0
      %11604 = vmatpush.bf16.msra.mxu0 0
      %11605 = vmatpush.bf16.msra.mxu0 %v11596
      %11606 = vmatmul.bf16.gmra.mxu0 %v11593
      %v11607 = vpop.f32.mrf.mxu0
      %v11608 = vadd.f32 0.0, %v11607
      %v11609 = vpop.f32.mrf.mxu0
      %11610 = vdwg.mxu0
      %v11611 = vpack.c.bf16 %v11608, %v11608
      %v11612 = vld [vmem:[%s10] sm:$0xff]
      %v11613 = vld [vmem:[%s10 + $0x8] sm:$0xff]
      %v11614 = vld [vmem:[%s10 + $0x10] sm:$0xff]
      %v11615 = vld [vmem:[%s10 + $0x18] sm:$0xff]
      %v11616 = vld [vmem:[%s10 + $0x20] sm:$0xff]
      %v11617 = vld [vmem:[%s10 + $0x28] sm:$0xff]
      %v11618 = vld [vmem:[%s10 + $0x30] sm:$0xff]
      %v11619 = vld [vmem:[%s10 + $0x38] sm:$0xff]
      %v11620 = vld [vmem:[%s11] sm:$0x3]
      %v11622 = vperm.slane %v11620, 0
      %v11623 = vperm.slane %v11620, 1
      %v11634 = vunpack.c.l.b16 %v11612
      %v11635 = vunpack.c.h.b16 %v11612
      %v11636 = vunpack.c.l.b16 %v11613
      %v11637 = vunpack.c.h.b16 %v11613
      %v11638 = vunpack.c.l.b16 %v11614
      %v11639 = vunpack.c.h.b16 %v11614
      %v11640 = vunpack.c.l.b16 %v11615
      %v11641 = vunpack.c.h.b16 %v11615
      %v11642 = vunpack.c.l.b16 %v11616
      %v11643 = vunpack.c.h.b16 %v11616
      %v11644 = vunpack.c.l.b16 %v11617
      %v11645 = vunpack.c.h.b16 %v11617
      %v11646 = vunpack.c.l.b16 %v11618
      %v11647 = vunpack.c.h.b16 %v11618
      %v11648 = vunpack.c.l.b16 %v11619
      %v11649 = vunpack.c.h.b16 %v11619
      %v11650 = vpack.c.b16 %v11636, %v11634
      %v11651 = vpack.c.b16 %v11637, %v11635
      %v11652 = vpack.c.b16 %v11640, %v11638
      %v11653 = vpack.c.b16 %v11641, %v11639
      %v11654 = vpack.c.b16 %v11644, %v11642
      %v11655 = vpack.c.b16 %v11645, %v11643
      %v11656 = vpack.c.b16 %v11648, %v11646
      %v11657 = vpack.c.b16 %v11649, %v11647
      %v11667 = vsel %vm10992, %v11611, 0
      %11669 = vmatpush.bf16.msra.mxu0 0
      %11670 = vmatpush.bf16.msra.mxu0 0
      %11671 = vmatpush.bf16.msra.mxu0 0
      %11672 = vmatpush.bf16.msra.mxu0 0
      %11673 = vmatpush.bf16.msra.mxu0 %v11656
      %11674 = vmatpush.bf16.msra.mxu0 %v11654
      %11675 = vmatpush.bf16.msra.mxu0 %v11652
      %11676 = vmatpush.bf16.msra.mxu0 %v11650
      %11677 = vmatmul.bf16.gmra.mxu0 %v11667
      %v11678 = vpop.f32.mrf.mxu0
      %v11679 = vadd.f32 %v11622, %v11678
      %v11680 = vpop.f32.mrf.mxu0
      %11681 = vdwg.mxu0
      %11682 = vmatpush.bf16.msra.mxu0 0
      %11683 = vmatpush.bf16.msra.mxu0 0
      %11684 = vmatpush.bf16.msra.mxu0 0
      %11685 = vmatpush.bf16.msra.mxu0 0
      %11686 = vmatpush.bf16.msra.mxu0 %v11657
      %11687 = vmatpush.bf16.msra.mxu0 %v11655
      %11688 = vmatpush.bf16.msra.mxu0 %v11653
      %11689 = vmatpush.bf16.msra.mxu0 %v11651
      %11690 = vmatmul.bf16.gmra.mxu0 %v11667
      %v11691 = vpop.f32.mrf.mxu0
      %v11692 = vadd.f32 %v11623, %v11691
      %v11693 = vpop.f32.mrf.mxu0
      %11694 = vdwg.mxu0
      %v11695 = vmax.f32 %v11679, 0.0
      %v11696 = vmax.f32 %v11692, 0.0
      %v11697 = vpack.c.bf16 %v11695, %v11695
      %v11698 = vpack.c.bf16 %v11696, %v11696
      %v11699 = vld [vmem:[%s12] sm:$0xf]
      %v11700 = vld [vmem:[%s12 + $0x4] sm:$0xf]
      %v11701 = vld [vmem:[%s12 + $0x8] sm:$0xf]
      %v11702 = vld [vmem:[%s12 + $0xc] sm:$0xf]
      %v11703 = vld [vmem:[%s12 + $0x10] sm:$0xf]
      %v11704 = vld [vmem:[%s12 + $0x14] sm:$0xf]
      %v11705 = vld [vmem:[%s12 + $0x18] sm:$0xf]
      %v11706 = vld [vmem:[%s12 + $0x1c] sm:$0xf]
      %v11707 = vld [vmem:[%s12 + $0x20] sm:$0xf]
      %v11708 = vld [vmem:[%s12 + $0x24] sm:$0xf]
      %v11709 = vld [vmem:[%s12 + $0x28] sm:$0xf]
      %v11710 = vld [vmem:[%s12 + $0x2c] sm:$0xf]
      %v11711 = vld [vmem:[%s12 + $0x30] sm:$0xf]
      %v11712 = vld [vmem:[%s12 + $0x34] sm:$0xf]
      %v11713 = vld [vmem:[%s12 + $0x38] sm:$0xf]
      %v11714 = vld [vmem:[%s12 + $0x3c] sm:$0xf]
      %v11715 = vld [vmem:[%s12 + $0x40] sm:$0xf]
      %v11716 = vld [vmem:[%s12 + $0x44] sm:$0xf]
      %v11717 = vld [vmem:[%s12 + $0x48] sm:$0xf]
      %v11718 = vld [vmem:[%s12 + $0x4c] sm:$0xf]
      %v11719 = vld [vmem:[%s12 + $0x50] sm:$0xf]
      %v11720 = vld [vmem:[%s12 + $0x54] sm:$0xf]
      %v11721 = vld [vmem:[%s12 + $0x58] sm:$0xf]
      %v11722 = vld [vmem:[%s12 + $0x5c] sm:$0xf]
      %v11723 = vld [vmem:[%s12 + $0x60] sm:$0xf]
      %v11724 = vld [vmem:[%s12 + $0x64] sm:$0xf]
      %v11725 = vld [vmem:[%s12 + $0x68] sm:$0xf]
      %v11726 = vld [vmem:[%s12 + $0x6c] sm:$0xf]
      %v11727 = vld [vmem:[%s12 + $0x70] sm:$0xf]
      %v11728 = vld [vmem:[%s12 + $0x74] sm:$0xf]
      %v11729 = vld [vmem:[%s12 + $0x78] sm:$0xf]
      %v11730 = vld [vmem:[%s12 + $0x7c] sm:$0xf]
      %v11731 = vld [vmem:[%s13] sm:$0x1]
      %v11733 = vperm.slane %v11731, 0
      %v11767 = vunpack.c.l.b16 %v11699
      %v11768 = vunpack.c.l.b16 %v11700
      %v11769 = vunpack.c.l.b16 %v11701
      %v11770 = vunpack.c.l.b16 %v11702
      %v11771 = vunpack.c.l.b16 %v11703
      %v11772 = vunpack.c.l.b16 %v11704
      %v11773 = vunpack.c.l.b16 %v11705
      %v11774 = vunpack.c.l.b16 %v11706
      %v11775 = vunpack.c.l.b16 %v11707
      %v11776 = vunpack.c.l.b16 %v11708
      %v11777 = vunpack.c.l.b16 %v11709
      %v11778 = vunpack.c.l.b16 %v11710
      %v11779 = vunpack.c.l.b16 %v11711
      %v11780 = vunpack.c.l.b16 %v11712
      %v11781 = vunpack.c.l.b16 %v11713
      %v11782 = vunpack.c.l.b16 %v11714
      %v11783 = vunpack.c.l.b16 %v11715
      %v11784 = vunpack.c.l.b16 %v11716
      %v11785 = vunpack.c.l.b16 %v11717
      %v11786 = vunpack.c.l.b16 %v11718
      %v11787 = vunpack.c.l.b16 %v11719
      %v11788 = vunpack.c.l.b16 %v11720
      %v11789 = vunpack.c.l.b16 %v11721
      %v11790 = vunpack.c.l.b16 %v11722
      %v11791 = vunpack.c.l.b16 %v11723
      %v11792 = vunpack.c.l.b16 %v11724
      %v11793 = vunpack.c.l.b16 %v11725
      %v11794 = vunpack.c.l.b16 %v11726
      %v11795 = vunpack.c.l.b16 %v11727
      %v11796 = vunpack.c.l.b16 %v11728
      %v11797 = vunpack.c.l.b16 %v11729
      %v11798 = vunpack.c.l.b16 %v11730
      %v11799 = vpack.c.b16 %v11768, %v11767
      %v11800 = vpack.c.b16 %v11770, %v11769
      %v11801 = vpack.c.b16 %v11772, %v11771
      %v11802 = vpack.c.b16 %v11774, %v11773
      %v11803 = vpack.c.b16 %v11776, %v11775
      %v11804 = vpack.c.b16 %v11778, %v11777
      %v11805 = vpack.c.b16 %v11780, %v11779
      %v11806 = vpack.c.b16 %v11782, %v11781
      %v11807 = vpack.c.b16 %v11784, %v11783
      %v11808 = vpack.c.b16 %v11786, %v11785
      %v11809 = vpack.c.b16 %v11788, %v11787
      %v11810 = vpack.c.b16 %v11790, %v11789
      %v11811 = vpack.c.b16 %v11792, %v11791
      %v11812 = vpack.c.b16 %v11794, %v11793
      %v11813 = vpack.c.b16 %v11796, %v11795
      %v11814 = vpack.c.b16 %v11798, %v11797
      %11831 = vmatpush.bf16.msra.mxu0 %v11806
      %11832 = vmatpush.bf16.msra.mxu0 %v11805
      %11833 = vmatpush.bf16.msra.mxu0 %v11804
      %11834 = vmatpush.bf16.msra.mxu0 %v11803
      %11835 = vmatpush.bf16.msra.mxu0 %v11802
      %11836 = vmatpush.bf16.msra.mxu0 %v11801
      %11837 = vmatpush.bf16.msra.mxu0 %v11800
      %11838 = vmatpush.bf16.msra.mxu0 %v11799
      %11839 = vmatmul.bf16.gmra.mxu0 %v11697
      %v11840 = vpop.f32.mrf.mxu0
      %v11841 = vadd.f32 %v11733, %v11840
      %v11842 = vpop.f32.mrf.mxu0
      %11843 = vdwg.mxu0
      %11844 = vmatpush.bf16.msra.mxu0 %v11814
      %11845 = vmatpush.bf16.msra.mxu0 %v11813
      %11846 = vmatpush.bf16.msra.mxu0 %v11812
      %11847 = vmatpush.bf16.msra.mxu0 %v11811
      %11848 = vmatpush.bf16.msra.mxu0 %v11810
      %11849 = vmatpush.bf16.msra.mxu0 %v11809
      %11850 = vmatpush.bf16.msra.mxu0 %v11808
      %11851 = vmatpush.bf16.msra.mxu0 %v11807
      %11852 = vmatmul.bf16.gmra.mxu0 %v11698
      %v11853 = vpop.f32.mrf.mxu0
      %v11854 = vadd.f32 %v11841, %v11853
      %v11855 = vpop.f32.mrf.mxu0
      %11856 = vdwg.mxu0
      %11857 = vst [vmem:[%s467] sm:$0xff] %v11854
      %p11858 = scmp.lt.s32.totalorder %s25, 1
      %s11859 = scalar_select %p11858, %s25, 1
      %s11860 = smul.addr %s11859, 8
      %s11861 = scalar_lea.vmem %s14, %s11860
      // Predicated region
      $region77: #{_forward_impl.1} parent=75 // pred_check
        %p11862 = pneg %p342
      $region78: #{_forward_impl.1} parent=75 // pred_check_branch
        %11864 = sbr.rel (%p11862) target = $region80
      $region79: #{_forward_impl.1} parent=75 // pred_region
        _
      $region80: #{_forward_impl.1} parent=75 // pred_fallthru
        _
    $region76: #{_forward_impl.1} parent=5 // pred_fallthru
      _
    %p11865 = scmp.le.s32.totalorder 2, %s20
    // Predicated region
    $region81: #{_forward_impl.1} parent=5 // pred_check
      %p11866 = pneg %p11865
    $region82: #{_forward_impl.1} parent=5 // pred_check_branch
      %11868 = sbr.rel (%p11866) target = $region84
    $region83: #{_forward_impl.1} parent=5 // pred_region
      %s11869 = ssub.s32 %s20, 2
      // Predicated region
      $region85: #{_forward_impl.1} parent=83 // pred_check
        %p11870 = pneg %p348
      $region86: #{_forward_impl.1} parent=83 // pred_check_branch
        %11872 = sbr.rel (%p11870) target = $region88
      $region87: #{_forward_impl.1} parent=83 // pred_region
        %p11873 = scmp.lt.s32.totalorder %s26, 1
        %s11874 = scalar_select %p11873, %s26, 1
        %s11875 = smul.addr %s11874, 8
        %s11876 = scalar_lea.vmem %s14, %s11875
      $region88: #{_forward_impl.1} parent=83 // pred_fallthru
        _
    $region84: #{_forward_impl.1} parent=5 // pred_fallthru
      _
  $region6: #{_forward_impl.1} parent=0 // loop_footer
    %s24 = sadd.s32 1, %s20
  $region7: #{_forward_impl.1} parent=0 // loop_footer_branch
    %19 = sbr.rel target = $region3
  $region8: #{_forward_impl.1} parent=0 // loop_exit
    _

</llo_original>
